<compile_context>
chip_gen: v6e
topology: v6e:2x2x1
jax: 0.10.0
libtpu: 0.0.40
codegen_flags: <defaults>
</compile_context>

<pallas_src>
import functools

import jax
import jax.numpy as jnp
from jax.experimental import pallas as pl
from jax.experimental.pallas import tpu as pltpu


# ------------------------------- kernel -----------------------------------

def _bottleneck_kernel(x_ref, w1_ref, b1_ref, w2_ref, b2_ref, w3_ref, b3_ref,
                       o_ref, *, w_valid, use_roll):
    """One (batch, H-tile) step of the fused bottleneck.

    x_ref  : (1, H, W, Cin)    full (W-padded) image, resident across H tiles
    w1_ref : (Cin, P)          conv1 weight, BN1 scale folded, planes padded
    b1_ref : (1, P)            BN1 bias (f32, zero in padded planes)
    w2_ref : (3, 3P, P)        conv2 weight (HWIO reshaped), BN2 scale folded
    b2_ref : (1, P)            BN2 bias (f32)
    w3_ref : (P, Cout)         conv3 weight, BN3 scale folded
    b3_ref : (1, Cout)         BN3 bias (f32)
    o_ref  : (1, TH, W, Cout)  output tile
    w_valid: original (unpadded) width; columns >= w_valid are scratch
    """
    H, W, Cin = x_ref.shape[1], x_ref.shape[2], x_ref.shape[3]
    P = w1_ref.shape[1]
    Cout = w3_ref.shape[1]
    TH = o_ref.shape[1]
    f32 = jnp.float32
    mm = (((1,), (0,)), ((), ()))            # (M, K) @ (K, N)

    w1 = w1_ref[...]
    w2 = w2_ref[...]
    w3 = w3_ref[...]
    b1 = b1_ref[...]
    b2 = b2_ref[...]
    b3 = b3_ref[...]
    cdt = w2.dtype                           # matmul operand dtype

    h0 = pl.multiple_of(pl.program_id(1) * TH, TH)

    def conv1_bn_relu(rows2d):               # (M, Cin) -> (M, P), f32
        t = jax.lax.dot_general(rows2d, w1, mm, preferred_element_type=f32)
        return jnp.maximum(t + b1, 0.0)

    # ---- conv1 + bn1 + relu on this tile's rows + its two 1-row halos -----
    t1 = conv1_bn_relu(
        x_ref[0, pl.ds(h0, TH)].reshape(TH * W, Cin)).reshape(TH, W, P)
    halo = jnp.concatenate(
        [x_ref[0, pl.ds(jnp.maximum(h0 - 1, 0), 1)],
         x_ref[0, pl.ds(jnp.minimum(h0 + TH, H - 1), 1)]],
        axis=0).reshape(2 * W, Cin)
    hh = conv1_bn_relu(halo).reshape(2, W, P)
    # conv2 zero-pads its *input* (the relu output), so halos that fall
    # outside the image are zeroed.
    top = hh[0:1] * (h0 > 0).astype(f32)
    bot = hh[1:2] * (h0 + TH < H).astype(f32)
    cp = jnp.concatenate([top, t1, bot], axis=0)            # (TH+2, W, P) f32

    # ---- conv2 (3x3, pad 1) + bn2 + relu ----------------------------------
    # W-neighbour taps as XLU rotations + border masks (no misaligned width
    # slices); channel-concatenated (lane-aligned, P % 128 == 0) so the 3x3
    # conv is 3 MXU matmuls with K = 3P, one per kernel row.
    col = jax.lax.broadcasted_iota(jnp.int32, (1, W, 1), 1)
    mask_l = (col > 0).astype(f32)                 # in[w-1] is zero-pad at w==0
    mask_r = (col < w_valid - 1).astype(f32)       # in[w+1] is zero-pad / W-pad
    if use_roll:
        left = pltpu.roll(cp, 1, axis=1)           # left[w]  = cp[w-1]
        right = pltpu.roll(cp, W - 1, axis=1)      # right[w] = cp[w+1]
    else:
        zcol = jnp.zeros((TH + 2, 1, P), f32)
        cpw = jnp.concatenate([zcol, cp, zcol], axis=1)
        left, right = cpw[:, 0:W, :], cpw[:, 2:W + 2, :]
    left = left * mask_l
    right = right * mask_r
    c3 = jnp.concatenate([left, cp, right], axis=-1)        # (TH+2, W, 3P) f32

    def tap(i):                                             # kernel row i
        return c3[i:i + TH].reshape(TH * W, 3 * P).astype(cdt)

    acc = jax.lax.dot_general(tap(0), w2[0], mm, preferred_element_type=f32)
    acc = acc + jax.lax.dot_general(tap(1), w2[1], mm,
                                    preferred_element_type=f32)
    acc = acc + jax.lax.dot_general(tap(2), w2[2], mm,
                                    preferred_element_type=f32)
    t2 = jnp.maximum(acc + b2, 0.0).astype(w3.dtype)        # (TH*W, P)

    # ---- conv3 (1x1) + bn3 + residual add + relu --------------------------
    t3 = jax.lax.dot_general(t2, w3, mm, preferred_element_type=f32) + b3
    # Re-read the residual tile from the VMEM-resident input.
    res = x_ref[0, pl.ds(h0, TH)].reshape(TH * W, Cin).astype(f32)
    o_ref[0] = jnp.maximum(t3 + res, 0.0).reshape(TH, W, Cout).astype(o_ref.dtype)


# ------------------------------- wrappers ----------------------------------

def fold_bn(gamma, beta, mean, var, eps=1e-5):
    """Inference-mode BatchNorm as per-channel (scale, bias)."""
    scale = gamma * jax.lax.rsqrt(var + eps)
    bias = beta - mean * scale
    return scale, bias


def _round_up(v, m):
    return (v + m - 1) // m * m


def _prepare(params, compute_dtype, lane=128):
    """Fold BN scales into conv weights; pad planes to a lane multiple."""
    w1, w2, w3, bn1, bn2, bn3 = params
    s1, b1 = fold_bn(*bn1)
    s2, b2 = fold_bn(*bn2)
    s3, b3 = fold_bn(*bn3)
    P = w1.shape[1]
    Pp = _round_up(P, lane)
    pad = Pp - P
    w1f = w1 * s1[None, :]                              # (Cin, P)
    w2f = w2 * s2[None, None, None, :]                  # (3, 3, P, P)  HWIO
    w3f = w3 * s3[None, :]                              # (P, Cout)
    if pad:
        # Zero-padded planes stay exactly zero through conv1+relu and conv2
        # (their weights and biases are zero) and add nothing to conv3.
        w1f = jnp.pad(w1f, ((0, 0), (0, pad)))
        w2f = jnp.pad(w2f, ((0, 0), (0, 0), (0, pad), (0, pad)))
        w3f = jnp.pad(w3f, ((0, pad), (0, 0)))
        b1 = jnp.pad(b1, (0, pad))
        b2 = jnp.pad(b2, (0, pad))
    w1f = w1f.astype(compute_dtype)
    w2f = w2f.reshape(3, 3 * Pp, Pp).astype(compute_dtype)
    w3f = w3f.astype(compute_dtype)
    b1r = b1.reshape(1, -1).astype(jnp.float32)
    b2r = b2.reshape(1, -1).astype(jnp.float32)
    b3r = b3.reshape(1, -1).astype(jnp.float32)
    return w1f, b1r, w2f, b2r, w3f, b3r


def _pick_block_h(h, w, m_target=1024, m_min=256):
    """Largest divisor of h with TH*w <= m_target; avoid degenerate tiny M."""
    divs = [d for d in range(1, h + 1) if h % d == 0]
    fit = [d for d in divs if d * w <= m_target]
    th = max(fit) if fit else 1
    if th * w < m_min:                      # e.g. prime h with a small width
        bigger = [d for d in divs if d * w >= m_min]
        if bigger:
            th = min(bigger)
    return th


def _vmem_bytes(h, w, cin, p, cout, th, cbytes):
    """Conservative VMEM estimate incl. default double-buffering."""
    weights = 2 * (cin * p + 9 * p * p + p * cout) * cbytes + 2 * (2 * p + cout) * 4
    io = 2 * (h * w * cin + th * w * cout) * cbytes
    inter = 4 * ((th + 2) * w * p * 6 + th * w * (2 * p + cin + cout))
    return int(1.2 * (weights + io + inter))


def bottleneck_pallas_nhwc(x_nhwc, params, *, block_h=None,
                           compute_dtype=jnp.bfloat16):
    """Fused Bottleneck forward. NHWC in -> NHWC out (compute_dtype)."""
    w1f, b1r, w2r, b2r, w3f, b3r = _prepare(params, compute_dtype)
    Cin, Pp = w1f.shape
    Cout = w3f.shape[1]
    assert Cin == Cout, "downsample=None requires inplanes == 4 * planes"
    assert x_nhwc.shape[-1] == Cin

    N, H, W0, _ = x_nhwc.shape
    x = x_nhwc.astype(compute_dtype)
    Wp = _round_up(W0, 8)
    if Wp != W0:
        # Align the width so sublane reshapes/stores are cheap; padded columns
        # only produce scratch outputs (cropped below; see in-kernel masks).
        x = jnp.pad(x, ((0, 0), (0, 0), (0, Wp - W0), (0, 0)))

    cbytes = jnp.dtype(compute_dtype).itemsize
    try:
        phys_vmem = int(getattr(pltpu.get_tpu_info(), "vmem_capacity_bytes",
                                64 << 20))
    except Exception:
        phys_vmem = 64 << 20
    vmem_cap = (phys_vmem * 3) // 4          # leave >= 25% headroom

    if block_h is not None and H % block_h == 0:
        th = block_h
    else:
        th = _pick_block_h(H, Wp)
    while th > 1 and _vmem_bytes(H, Wp, Cin, Pp, Cout, th, cbytes) > vmem_cap:
        smaller = [d for d in range(1, th) if H % d == 0]
        if not smaller:
            break
        th = max(smaller)
    n_h = H // th
    vmem_limit = int(min(vmem_cap,
                         max(32 << 20,
                             _vmem_bytes(H, Wp, Cin, Pp, Cout, th, cbytes))))

    # Prefer splitting the *batch* across TensorCores: splitting H would make
    # both cores DMA the same full-resident image into their private VMEM.
    dim_sem = ("parallel", "arbitrary") if N > 1 else ("parallel", "parallel")

    cost = pl.CostEstimate(
        flops=2 * N * H * Wp * (Cin * Pp + 9 * Pp * Pp + Pp * Cout),
        transcendentals=0,
        bytes_accessed=int((N * H * Wp * (Cin + Cout)
                            + Cin * Pp + 9 * Pp * Pp + Pp * Cout) * cbytes))

    def call(fast):
        kern = functools.partial(_bottleneck_kernel, w_valid=W0, use_roll=fast)

        def wspec(a):
            if fast:
                # Grid-invariant operands: single-buffered (no dead duplicate).
                return pl.BlockSpec(a.shape, lambda n, h: (0,) * a.ndim,
                                    pipeline_mode=pl.Buffered(1))
            return pl.BlockSpec(a.shape, lambda n, h: (0,) * a.ndim)

        return pl.pallas_call(
            kern,
            out_shape=jax.ShapeDtypeStruct((N, H, Wp, Cout), compute_dtype),
            grid_spec=pltpu.PrefetchScalarGridSpec(
                num_scalar_prefetch=0,
                grid=(N, n_h),
                in_specs=[
                    # full image per batch element, resident across H tiles
                    pl.BlockSpec((1, H, Wp, Cin), lambda n, h: (n, 0, 0, 0)),
                    wspec(w1f), wspec(b1r),
                    wspec(w2r), wspec(b2r),
                    wspec(w3f), wspec(b3r),
                ],
                out_specs=pl.BlockSpec((1, th, Wp, Cout),
                                       lambda n, h: (n, h, 0, 0)),
            ),
            compiler_params=pltpu.CompilerParams(
                dimension_semantics=dim_sem,
                vmem_limit_bytes=vmem_limit),
            cost_estimate=cost if fast else None,
        )(x, w1f, b1r, w2r, b2r, w3f, b3r)

    try:
        out = jax.block_until_ready(call(fast=True))
    except Exception:
        # Conservative retry for builds that reject pl.Buffered(1) or a
        # sublane pltpu.roll: slice-based taps + default double buffering.
        out = call(fast=False)

    if Wp != W0:
        out = out[:, :, :W0, :]
    return out


def bottleneck_pallas(x_nchw, params, *, block_h=None,
                      compute_dtype=jnp.bfloat16):
    """PyTorch-convention wrapper: NCHW in -> NCHW out (x dtype).

    For whole networks prefer `bottleneck_pallas_nhwc` end-to-end so the
    layout transposes are paid once per model, not once per block.
    """
    x = jnp.transpose(x_nchw, (0, 2, 3, 1))
    y = bottleneck_pallas_nhwc(x, params, block_h=block_h,
                               compute_dtype=compute_dtype)
    return jnp.transpose(y, (0, 3, 1, 2)).astype(x_nchw.dtype)


# ----------------------- parameter construction ----------------------------

def make_params(key, inplanes, planes):
    P, E = planes, planes * 4
    ks = jax.random.split(key, 6)
    w1 = 0.1 * jax.random.normal(ks[0], (inplanes, P), jnp.float32)     # (Cin, P)
    w2 = 0.1 * jax.random.normal(ks[1], (3, 3, P, P), jnp.float32)      # HWIO
    w3 = 0.1 * jax.random.normal(ks[2], (P, E), jnp.float32)            # (P, 4P)

    def bn(k, c):
        kg, kb, km, kv = jax.random.split(k, 4)
        gamma = 0.5 + jax.random.uniform(kg, (c,), jnp.float32)
        beta = 0.1 * jax.random.normal(kb, (c,), jnp.float32)
        mean = 0.1 * jax.random.normal(km, (c,), jnp.float32)
        var = 0.5 + jax.random.uniform(kv, (c,), jnp.float32)
        return gamma, beta, mean, var

    return (w1, w2, w3, bn(ks[3], P), bn(ks[4], P), bn(ks[5], E))


# --------------------------- plain-JAX reference ---------------------------

def bottleneck_ref(x_nchw, params):
    """XLA conv reference using the same scale-folded weights as the kernel."""
    w1, w2, w3, bn1, bn2, bn3 = params
    s1, b1 = fold_bn(*bn1)
    s2, b2 = fold_bn(*bn2)
    s3, b3 = fold_bn(*bn3)
    x = jnp.transpose(x_nchw, (0, 2, 3, 1))                             # NHWC
    conv = functools.partial(jax.lax.conv_general_dilated,
                             dimension_numbers=("NHWC", "HWIO", "NHWC"))
    t = conv(x, (w1 * s1[None, :])[None, None], window_strides=(1, 1),
             padding="VALID")
    t = jnp.maximum(t + b1, 0.0)
    t = conv(t, w2 * s2[None, None, None, :], window_strides=(1, 1),
             padding=((1, 1), (1, 1)))
    t = jnp.maximum(t + b2, 0.0)
    t = conv(t, (w3 * s3[None, :])[None, None], window_strides=(1, 1),
             padding="VALID")
    out = jnp.maximum(t + b3 + x, 0.0)
    return jnp.transpose(out, (0, 3, 1, 2))


if __name__ == "__main__":
    key = jax.random.PRNGKey(0)
    kx, kp = jax.random.split(key)

    # Small but lane-friendly config: Cin = Cout = 128; H = W = 24 so the
    # auto tiler picks TH = 24 (M = 576, single H tile).
    N, planes, H, W = 2, 32, 24, 24
    inplanes = planes * 4            # identity residual (downsample=None)

    x = jax.random.normal(kx, (N, inplanes, H, W), jnp.float32)         # NCHW
    params = make_params(kp, inplanes, planes)
    ref = bottleneck_ref(x, params)

    # Default path: bf16 MXU operands, f32 accumulation / element-wise math.
    out_bf16 = jax.block_until_ready(bottleneck_pallas(x, params))
    assert out_bf16.shape == (N, inplanes, H, W)
    err_bf16 = float(jnp.max(jnp.abs(out_bf16 - ref)))
    assert err_bf16 < 0.3, err_bf16

    # Same config with forced H tiling (exercises non-trivial halo rows).
    out_tiled = jax.block_until_ready(bottleneck_pallas(x, params, block_h=8))
    err_tiled = float(jnp.max(jnp.abs(out_tiled - ref)))
    assert err_tiled < 0.3, err_tiled

    # f32 matmul path; tolerance covers MXU default-precision rounding
    # differences between the fused kernel and the XLA conv reference.
    out_f32 = jax.block_until_ready(
        bottleneck_pallas(x, params, compute_dtype=jnp.float32))
    err_f32 = float(jnp.max(jnp.abs(out_f32 - ref)))
    assert err_f32 < 2e-2, err_f32

    # Odd width (W % 8 != 0 -> wrapper pads W), planes padded 16 -> 128,
    # two H tiles: exercises all border-mask / padding paths.
    N2, planes2, H2, W2 = 1, 16, 10, 15
    x2 = jax.random.normal(jax.random.PRNGKey(1), (N2, planes2 * 4, H2, W2),
                           jnp.float32)
    params2 = make_params(jax.random.PRNGKey(2), planes2 * 4, planes2)
    ref2 = bottleneck_ref(x2, params2)
    out2 = jax.block_until_ready(
        bottleneck_pallas(x2, params2, block_h=5, compute_dtype=jnp.float32))
    err2 = float(jnp.max(jnp.abs(out2 - ref2)))
    assert err2 < 2e-2, err2

    print("KERNEL_OK")
</pallas_src>

<mosaic_0001>
module attributes {stable_mosaic.version = 11 : i64} {
  func.func @_bottleneck_kernel(%arg0: i32, %arg1: i32, %arg2: memref<1x24x24x128xbf16, #tpu.memory_space<vmem>>, %arg3: memref<128x128xbf16, #tpu.memory_space<vmem>>, %arg4: memref<1x128xf32, #tpu.memory_space<vmem>>, %arg5: memref<3x384x128xbf16, #tpu.memory_space<vmem>>, %arg6: memref<1x128xf32, #tpu.memory_space<vmem>>, %arg7: memref<128x128xbf16, #tpu.memory_space<vmem>>, %arg8: memref<1x128xf32, #tpu.memory_space<vmem>>, %arg9: memref<1x24x24x128xbf16, #tpu.memory_space<vmem>>) attributes {dimension_semantics = [#tpu.dimension_semantics<parallel>, #tpu.dimension_semantics<arbitrary>], iteration_bounds = array<i64: 2, 1>, scalar_prefetch = 0 : i64, scratch_operands = 0 : i64, tpu.core_type = #tpu.core_type<tc>, window_params = [{transform_indices = @transform_0, window_bounds = array<i64: 1, 24, 24, 128>}, {pipeline_mode = #tpu.pipeline_mode<synchronous>, transform_indices = @transform_1, window_bounds = array<i64: 128, 128>}, {pipeline_mode = #tpu.pipeline_mode<synchronous>, transform_indices = @transform_2, window_bounds = array<i64: 1, 128>}, {pipeline_mode = #tpu.pipeline_mode<synchronous>, transform_indices = @transform_3, window_bounds = array<i64: 3, 384, 128>}, {pipeline_mode = #tpu.pipeline_mode<synchronous>, transform_indices = @transform_4, window_bounds = array<i64: 1, 128>}, {pipeline_mode = #tpu.pipeline_mode<synchronous>, transform_indices = @transform_5, window_bounds = array<i64: 128, 128>}, {pipeline_mode = #tpu.pipeline_mode<synchronous>, transform_indices = @transform_6, window_bounds = array<i64: 1, 128>}, {transform_indices = @transform_7, window_bounds = array<i64: 1, 24, 24, 128>}]} {
    %c0 = arith.constant 0 : index
    %c0_0 = arith.constant 0 : index
    %0 = vector.load %arg3[%c0, %c0_0] : memref<128x128xbf16, #tpu.memory_space<vmem>>, vector<128x128xbf16>
    %c0_1 = arith.constant 0 : index
    %c0_2 = arith.constant 0 : index
    %c0_3 = arith.constant 0 : index
    %1 = vector.load %arg5[%c0_1, %c0_2, %c0_3] : memref<3x384x128xbf16, #tpu.memory_space<vmem>>, vector<3x384x128xbf16>
    %c0_4 = arith.constant 0 : index
    %c0_5 = arith.constant 0 : index
    %2 = vector.load %arg7[%c0_4, %c0_5] : memref<128x128xbf16, #tpu.memory_space<vmem>>, vector<128x128xbf16>
    %c0_6 = arith.constant 0 : index
    %c0_7 = arith.constant 0 : index
    %3 = vector.load %arg4[%c0_6, %c0_7] : memref<1x128xf32, #tpu.memory_space<vmem>>, vector<1x128xf32>
    %c0_8 = arith.constant 0 : index
    %c0_9 = arith.constant 0 : index
    %4 = vector.load %arg6[%c0_8, %c0_9] : memref<1x128xf32, #tpu.memory_space<vmem>>, vector<1x128xf32>
    %c0_10 = arith.constant 0 : index
    %c0_11 = arith.constant 0 : index
    %5 = vector.load %arg8[%c0_10, %c0_11] : memref<1x128xf32, #tpu.memory_space<vmem>>, vector<1x128xf32>
    %c24_i32 = arith.constant 24 : i32
    %6 = arith.muli %arg1, %c24_i32 : i32
    %7 = tpu.assume_multiple %6, 24 : i32
    %c0_12 = arith.constant 0 : index
    %8 = arith.index_cast %7 : i32 to index
    %c0_13 = arith.constant 0 : index
    %c0_14 = arith.constant 0 : index
    %9 = vector.load %arg2[%c0_12, %8, %c0_13, %c0_14] : memref<1x24x24x128xbf16, #tpu.memory_space<vmem>>, vector<1x24x24x128xbf16>
    %10 = vector.shape_cast %9 : vector<1x24x24x128xbf16> to vector<24x24x128xbf16>
    %11 = vector.shape_cast %10 : vector<24x24x128xbf16> to vector<576x128xbf16>
    %cst = arith.constant dense<0.000000e+00> : vector<576x128xf32>
    %12 = tpu.matmul %11, %0, %cst {dimension_numbers = #tpu.dot_dimension_numbers<[1], [0], [0], [1], [0, 0, 1, 1], [], []>} : vector<576x128xbf16>, vector<128x128xbf16>, vector<576x128xf32> -> vector<576x128xf32>
    %13 = vector.broadcast %3 : vector<1x128xf32> to vector<576x128xf32>
    %14 = arith.addf %12, %13 : vector<576x128xf32>
    %cst_15 = arith.constant 0.000000e+00 : f32
    %15 = vector.broadcast %cst_15 : f32 to vector<576x128xf32>
    %16 = arith.maximumf %14, %15 : vector<576x128xf32>
    %17 = vector.shape_cast %16 : vector<576x128xf32> to vector<24x24x128xf32>
    %c1_i32 = arith.constant 1 : i32
    %18 = arith.subi %7, %c1_i32 : i32
    %c0_i32 = arith.constant 0 : i32
    %19 = arith.maxsi %18, %c0_i32 : i32
    %c0_16 = arith.constant 0 : index
    %20 = arith.index_cast %19 : i32 to index
    %c0_17 = arith.constant 0 : index
    %c0_18 = arith.constant 0 : index
    %21 = vector.load %arg2[%c0_16, %20, %c0_17, %c0_18] : memref<1x24x24x128xbf16, #tpu.memory_space<vmem>>, vector<1x1x24x128xbf16>
    %22 = vector.shape_cast %21 : vector<1x1x24x128xbf16> to vector<1x24x128xbf16>
    %c24_i32_19 = arith.constant 24 : i32
    %23 = arith.addi %7, %c24_i32_19 : i32
    %c23_i32 = arith.constant 23 : i32
    %24 = arith.minsi %23, %c23_i32 : i32
    %c0_20 = arith.constant 0 : index
    %25 = arith.index_cast %24 : i32 to index
    %c0_21 = arith.constant 0 : index
    %c0_22 = arith.constant 0 : index
    %26 = vector.load %arg2[%c0_20, %25, %c0_21, %c0_22] : memref<1x24x24x128xbf16, #tpu.memory_space<vmem>>, vector<1x1x24x128xbf16>
    %27 = vector.shape_cast %26 : vector<1x1x24x128xbf16> to vector<1x24x128xbf16>
    %28 = tpu.concatenate %22, %27 in 0 : vector<1x24x128xbf16>, vector<1x24x128xbf16> -> vector<2x24x128xbf16>
    %29 = vector.shape_cast %28 : vector<2x24x128xbf16> to vector<48x128xbf16>
    %cst_23 = arith.constant dense<0.000000e+00> : vector<48x128xf32>
    %30 = tpu.matmul %29, %0, %cst_23 {dimension_numbers = #tpu.dot_dimension_numbers<[1], [0], [0], [1], [0, 0, 1, 1], [], []>} : vector<48x128xbf16>, vector<128x128xbf16>, vector<48x128xf32> -> vector<48x128xf32>
    %31 = vector.broadcast %3 : vector<1x128xf32> to vector<48x128xf32>
    %32 = arith.addf %30, %31 : vector<48x128xf32>
    %cst_24 = arith.constant 0.000000e+00 : f32
    %33 = vector.broadcast %cst_24 : f32 to vector<48x128xf32>
    %34 = arith.maximumf %32, %33 : vector<48x128xf32>
    %35 = vector.shape_cast %34 : vector<48x128xf32> to vector<2x24x128xf32>
    %36 = vector.extract_strided_slice %35 {offsets = [0, 0, 0], sizes = [1, 24, 128], strides = [1, 1, 1]} : vector<2x24x128xf32> to vector<1x24x128xf32>
    %c0_i32_25 = arith.constant 0 : i32
    %37 = arith.cmpi sgt, %7, %c0_i32_25 : i32
    %38 = arith.extui %37 : i1 to i32
    %39 = arith.sitofp %38 : i32 to f32
    %40 = vector.broadcast %39 : f32 to vector<1x24x128xf32>
    %41 = arith.mulf %36, %40 : vector<1x24x128xf32>
    %42 = vector.extract_strided_slice %35 {offsets = [1, 0, 0], sizes = [1, 24, 128], strides = [1, 1, 1]} : vector<2x24x128xf32> to vector<1x24x128xf32>
    %c24_i32_26 = arith.constant 24 : i32
    %43 = arith.addi %7, %c24_i32_26 : i32
    %c24_i32_27 = arith.constant 24 : i32
    %44 = arith.cmpi slt, %43, %c24_i32_27 : i32
    %45 = arith.extui %44 : i1 to i32
    %46 = arith.sitofp %45 : i32 to f32
    %47 = vector.broadcast %46 : f32 to vector<1x24x128xf32>
    %48 = arith.mulf %42, %47 : vector<1x24x128xf32>
    %49 = tpu.concatenate %41, %17, %48 in 0 : vector<1x24x128xf32>, vector<24x24x128xf32>, vector<1x24x128xf32> -> vector<26x24x128xf32>
    %50 = tpu.iota {dimensions = array<i32: 1>} : vector<1x24x1xi32>
    %c0_i32_28 = arith.constant 0 : i32
    %51 = vector.broadcast %c0_i32_28 : i32 to vector<1x24x1xi32>
    %52 = arith.cmpi sgt, %50, %51 : vector<1x24x1xi32>
    %53 = arith.extui %52 : vector<1x24x1xi1> to vector<1x24x1xi32>
    %54 = arith.sitofp %53 : vector<1x24x1xi32> to vector<1x24x1xf32>
    %c23_i32_29 = arith.constant 23 : i32
    %55 = vector.broadcast %c23_i32_29 : i32 to vector<1x24x1xi32>
    %56 = arith.cmpi slt, %50, %55 : vector<1x24x1xi32>
    %57 = arith.extui %56 : vector<1x24x1xi1> to vector<1x24x1xi32>
    %58 = arith.sitofp %57 : vector<1x24x1xi32> to vector<1x24x1xf32>
    %c1_i32_30 = arith.constant 1 : i32
    %59 = tpu.dynamic_rotate %49 by %c1_i32_30 dim 1 : vector<26x24x128xf32>, i32 -> vector<26x24x128xf32>
    %c23_i32_31 = arith.constant 23 : i32
    %60 = tpu.dynamic_rotate %49 by %c23_i32_31 dim 1 : vector<26x24x128xf32>, i32 -> vector<26x24x128xf32>
    %61 = vector.broadcast %54 : vector<1x24x1xf32> to vector<26x24x128xf32>
    %62 = arith.mulf %59, %61 : vector<26x24x128xf32>
    %63 = vector.broadcast %58 : vector<1x24x1xf32> to vector<26x24x128xf32>
    %64 = arith.mulf %60, %63 : vector<26x24x128xf32>
    %65 = tpu.concatenate %62, %49, %64 in 2 : vector<26x24x128xf32>, vector<26x24x128xf32>, vector<26x24x128xf32> -> vector<26x24x384xf32>
    %66 = vector.extract_strided_slice %65 {offsets = [0, 0, 0], sizes = [24, 24, 384], strides = [1, 1, 1]} : vector<26x24x384xf32> to vector<24x24x384xf32>
    %67 = vector.shape_cast %66 : vector<24x24x384xf32> to vector<576x384xf32>
    %68 = arith.truncf %67 : vector<576x384xf32> to vector<576x384xbf16>
    %69 = vector.extract_strided_slice %1 {offsets = [0, 0, 0], sizes = [1, 384, 128], strides = [1, 1, 1]} : vector<3x384x128xbf16> to vector<1x384x128xbf16>
    %70 = vector.shape_cast %69 : vector<1x384x128xbf16> to vector<384x128xbf16>
    %cst_32 = arith.constant dense<0.000000e+00> : vector<576x128xf32>
    %71 = tpu.matmul %68, %70, %cst_32 {dimension_numbers = #tpu.dot_dimension_numbers<[1], [0], [0], [1], [0, 0, 1, 1], [], []>} : vector<576x384xbf16>, vector<384x128xbf16>, vector<576x128xf32> -> vector<576x128xf32>
    %72 = vector.extract_strided_slice %65 {offsets = [1, 0, 0], sizes = [24, 24, 384], strides = [1, 1, 1]} : vector<26x24x384xf32> to vector<24x24x384xf32>
    %73 = vector.shape_cast %72 : vector<24x24x384xf32> to vector<576x384xf32>
    %74 = arith.truncf %73 : vector<576x384xf32> to vector<576x384xbf16>
    %75 = vector.extract_strided_slice %1 {offsets = [1, 0, 0], sizes = [1, 384, 128], strides = [1, 1, 1]} : vector<3x384x128xbf16> to vector<1x384x128xbf16>
    %76 = vector.shape_cast %75 : vector<1x384x128xbf16> to vector<384x128xbf16>
    %cst_33 = arith.constant dense<0.000000e+00> : vector<576x128xf32>
    %77 = tpu.matmul %74, %76, %cst_33 {dimension_numbers = #tpu.dot_dimension_numbers<[1], [0], [0], [1], [0, 0, 1, 1], [], []>} : vector<576x384xbf16>, vector<384x128xbf16>, vector<576x128xf32> -> vector<576x128xf32>
    %78 = arith.addf %71, %77 : vector<576x128xf32>
    %79 = vector.extract_strided_slice %65 {offsets = [2, 0, 0], sizes = [24, 24, 384], strides = [1, 1, 1]} : vector<26x24x384xf32> to vector<24x24x384xf32>
    %80 = vector.shape_cast %79 : vector<24x24x384xf32> to vector<576x384xf32>
    %81 = arith.truncf %80 : vector<576x384xf32> to vector<576x384xbf16>
    %82 = vector.extract_strided_slice %1 {offsets = [2, 0, 0], sizes = [1, 384, 128], strides = [1, 1, 1]} : vector<3x384x128xbf16> to vector<1x384x128xbf16>
    %83 = vector.shape_cast %82 : vector<1x384x128xbf16> to vector<384x128xbf16>
    %cst_34 = arith.constant dense<0.000000e+00> : vector<576x128xf32>
    %84 = tpu.matmul %81, %83, %cst_34 {dimension_numbers = #tpu.dot_dimension_numbers<[1], [0], [0], [1], [0, 0, 1, 1], [], []>} : vector<576x384xbf16>, vector<384x128xbf16>, vector<576x128xf32> -> vector<576x128xf32>
    %85 = arith.addf %78, %84 : vector<576x128xf32>
    %86 = vector.broadcast %4 : vector<1x128xf32> to vector<576x128xf32>
    %87 = arith.addf %85, %86 : vector<576x128xf32>
    %cst_35 = arith.constant 0.000000e+00 : f32
    %88 = vector.broadcast %cst_35 : f32 to vector<576x128xf32>
    %89 = arith.maximumf %87, %88 : vector<576x128xf32>
    %90 = arith.truncf %89 : vector<576x128xf32> to vector<576x128xbf16>
    %cst_36 = arith.constant dense<0.000000e+00> : vector<576x128xf32>
    %91 = tpu.matmul %90, %2, %cst_36 {dimension_numbers = #tpu.dot_dimension_numbers<[1], [0], [0], [1], [0, 0, 1, 1], [], []>} : vector<576x128xbf16>, vector<128x128xbf16>, vector<576x128xf32> -> vector<576x128xf32>
    %92 = vector.broadcast %5 : vector<1x128xf32> to vector<576x128xf32>
    %93 = arith.addf %91, %92 : vector<576x128xf32>
    %c0_37 = arith.constant 0 : index
    %94 = arith.index_cast %7 : i32 to index
    %c0_38 = arith.constant 0 : index
    %c0_39 = arith.constant 0 : index
    %95 = vector.load %arg2[%c0_37, %94, %c0_38, %c0_39] : memref<1x24x24x128xbf16, #tpu.memory_space<vmem>>, vector<1x24x24x128xbf16>
    %96 = vector.shape_cast %95 : vector<1x24x24x128xbf16> to vector<24x24x128xbf16>
    %97 = vector.shape_cast %96 : vector<24x24x128xbf16> to vector<576x128xbf16>
    %98 = arith.extf %97 : vector<576x128xbf16> to vector<576x128xf32>
    %99 = arith.addf %93, %98 : vector<576x128xf32>
    %cst_40 = arith.constant 0.000000e+00 : f32
    %100 = vector.broadcast %cst_40 : f32 to vector<576x128xf32>
    %101 = arith.maximumf %99, %100 : vector<576x128xf32>
    %102 = vector.shape_cast %101 : vector<576x128xf32> to vector<24x24x128xf32>
    %103 = arith.truncf %102 : vector<24x24x128xf32> to vector<24x24x128xbf16>
    %c0_41 = arith.constant 0 : index
    %c0_42 = arith.constant 0 : index
    %c0_43 = arith.constant 0 : index
    %c0_44 = arith.constant 0 : index
    %104 = vector.load %arg9[%c0_41, %c0_42, %c0_43, %c0_44] : memref<1x24x24x128xbf16, #tpu.memory_space<vmem>>, vector<1x24x24x128xbf16>
    %105 = vector.shape_cast %104 : vector<1x24x24x128xbf16> to vector<24x24x128xbf16>
    %106 = vector.shape_cast %103 : vector<24x24x128xbf16> to vector<1x24x24x128xbf16>
    tpu.vector_store %arg9[%c0_41, %c0_42, %c0_43, %c0_44], %106 {strides = array<i32>} : memref<1x24x24x128xbf16, #tpu.memory_space<vmem>>, vector<1x24x24x128xbf16>,
    return
  }
  func.func @transform_0(%arg0: i32, %arg1: i32) -> (i32, i32, i32, i32) {
    %c0_i32 = arith.constant 0 : i32
    %c0_i32_0 = arith.constant 0 : i32
    %c0_i32_1 = arith.constant 0 : i32
    %c0_i32_2 = arith.constant 0 : i32
    return %arg0, %c0_i32, %c0_i32_0, %c0_i32_1 : i32, i32, i32, i32
  }
  func.func @transform_1(%arg0: i32, %arg1: i32) -> (i32, i32) {
    %c0_i32 = arith.constant 0 : i32
    %c0_i32_0 = arith.constant 0 : i32
    %c0_i32_1 = arith.constant 0 : i32
    return %c0_i32, %c0_i32_0 : i32, i32
  }
  func.func @transform_2(%arg0: i32, %arg1: i32) -> (i32, i32) {
    %c0_i32 = arith.constant 0 : i32
    %c0_i32_0 = arith.constant 0 : i32
    %c0_i32_1 = arith.constant 0 : i32
    return %c0_i32, %c0_i32_0 : i32, i32
  }
  func.func @transform_3(%arg0: i32, %arg1: i32) -> (i32, i32, i32) {
    %c0_i32 = arith.constant 0 : i32
    %c0_i32_0 = arith.constant 0 : i32
    %c0_i32_1 = arith.constant 0 : i32
    %c0_i32_2 = arith.constant 0 : i32
    return %c0_i32, %c0_i32_0, %c0_i32_1 : i32, i32, i32
  }
  func.func @transform_4(%arg0: i32, %arg1: i32) -> (i32, i32) {
    %c0_i32 = arith.constant 0 : i32
    %c0_i32_0 = arith.constant 0 : i32
    %c0_i32_1 = arith.constant 0 : i32
    return %c0_i32, %c0_i32_0 : i32, i32
  }
  func.func @transform_5(%arg0: i32, %arg1: i32) -> (i32, i32) {
    %c0_i32 = arith.constant 0 : i32
    %c0_i32_0 = arith.constant 0 : i32
    %c0_i32_1 = arith.constant 0 : i32
    return %c0_i32, %c0_i32_0 : i32, i32
  }
  func.func @transform_6(%arg0: i32, %arg1: i32) -> (i32, i32) {
    %c0_i32 = arith.constant 0 : i32
    %c0_i32_0 = arith.constant 0 : i32
    %c0_i32_1 = arith.constant 0 : i32
    return %c0_i32, %c0_i32_0 : i32, i32
  }
  func.func @transform_7(%arg0: i32, %arg1: i32) -> (i32, i32, i32, i32) {
    %c0_i32 = arith.constant 0 : i32
    %c0_i32_0 = arith.constant 0 : i32
    %c0_i32_1 = arith.constant 0 : i32
    return %arg0, %arg1, %c0_i32, %c0_i32_0 : i32, i32, i32, i32
  }
}

module attributes {stable_mosaic.version = 11 : i64} {
  func.func @_bottleneck_kernel(%arg0: i32, %arg1: i32, %arg2: memref<1x24x24x128xbf16, #tpu.memory_space<vmem>>, %arg3: memref<128x128xbf16, #tpu.memory_space<vmem>>, %arg4: memref<1x128xf32, #tpu.memory_space<vmem>>, %arg5: memref<3x384x128xbf16, #tpu.memory_space<vmem>>, %arg6: memref<1x128xf32, #tpu.memory_space<vmem>>, %arg7: memref<128x128xbf16, #tpu.memory_space<vmem>>, %arg8: memref<1x128xf32, #tpu.memory_space<vmem>>, %arg9: memref<1x24x24x128xbf16, #tpu.memory_space<vmem>>) attributes {dimension_semantics = [#tpu.dimension_semantics<parallel>, #tpu.dimension_semantics<arbitrary>], iteration_bounds = array<i64: 2, 1>, scalar_prefetch = 0 : i64, scratch_operands = 0 : i64, tpu.core_type = #tpu.core_type<tc>, window_params = [{transform_indices = @transform_0, window_bounds = array<i64: 1, 24, 24, 128>}, {pipeline_mode = #tpu.pipeline_mode<synchronous>, transform_indices = @transform_1, window_bounds = array<i64: 128, 128>}, {pipeline_mode = #tpu.pipeline_mode<synchronous>, transform_indices = @transform_2, window_bounds = array<i64: 1, 128>}, {pipeline_mode = #tpu.pipeline_mode<synchronous>, transform_indices = @transform_3, window_bounds = array<i64: 3, 384, 128>}, {pipeline_mode = #tpu.pipeline_mode<synchronous>, transform_indices = @transform_4, window_bounds = array<i64: 1, 128>}, {pipeline_mode = #tpu.pipeline_mode<synchronous>, transform_indices = @transform_5, window_bounds = array<i64: 128, 128>}, {pipeline_mode = #tpu.pipeline_mode<synchronous>, transform_indices = @transform_6, window_bounds = array<i64: 1, 128>}, {transform_indices = @transform_7, window_bounds = array<i64: 1, 24, 24, 128>}]} {
    %c0 = arith.constant 0 : index
    %c0_0 = arith.constant 0 : index
    %0 = vector.load %arg3[%c0, %c0_0] : memref<128x128xbf16, #tpu.memory_space<vmem>>, vector<128x128xbf16>
    %c0_1 = arith.constant 0 : index
    %c0_2 = arith.constant 0 : index
    %c0_3 = arith.constant 0 : index
    %1 = vector.load %arg5[%c0_1, %c0_2, %c0_3] : memref<3x384x128xbf16, #tpu.memory_space<vmem>>, vector<3x384x128xbf16>
    %c0_4 = arith.constant 0 : index
    %c0_5 = arith.constant 0 : index
    %2 = vector.load %arg7[%c0_4, %c0_5] : memref<128x128xbf16, #tpu.memory_space<vmem>>, vector<128x128xbf16>
    %c0_6 = arith.constant 0 : index
    %c0_7 = arith.constant 0 : index
    %3 = vector.load %arg4[%c0_6, %c0_7] : memref<1x128xf32, #tpu.memory_space<vmem>>, vector<1x128xf32>
    %c0_8 = arith.constant 0 : index
    %c0_9 = arith.constant 0 : index
    %4 = vector.load %arg6[%c0_8, %c0_9] : memref<1x128xf32, #tpu.memory_space<vmem>>, vector<1x128xf32>
    %c0_10 = arith.constant 0 : index
    %c0_11 = arith.constant 0 : index
    %5 = vector.load %arg8[%c0_10, %c0_11] : memref<1x128xf32, #tpu.memory_space<vmem>>, vector<1x128xf32>
    %c24_i32 = arith.constant 24 : i32
    %6 = arith.muli %arg1, %c24_i32 : i32
    %7 = tpu.assume_multiple %6, 24 : i32
    %c0_12 = arith.constant 0 : index
    %8 = arith.index_cast %7 : i32 to index
    %c0_13 = arith.constant 0 : index
    %c0_14 = arith.constant 0 : index
    %9 = vector.load %arg2[%c0_12, %8, %c0_13, %c0_14] : memref<1x24x24x128xbf16, #tpu.memory_space<vmem>>, vector<1x24x24x128xbf16>
    %10 = vector.shape_cast %9 : vector<1x24x24x128xbf16> to vector<24x24x128xbf16>
    %11 = vector.shape_cast %10 : vector<24x24x128xbf16> to vector<576x128xbf16>
    %cst = arith.constant dense<0.000000e+00> : vector<576x128xf32>
    %12 = tpu.matmul %11, %0, %cst {dimension_numbers = #tpu.dot_dimension_numbers<[1], [0], [0], [1], [0, 0, 1, 1], [], []>} : vector<576x128xbf16>, vector<128x128xbf16>, vector<576x128xf32> -> vector<576x128xf32>
    %13 = vector.broadcast %3 : vector<1x128xf32> to vector<576x128xf32>
    %14 = arith.addf %12, %13 : vector<576x128xf32>
    %cst_15 = arith.constant 0.000000e+00 : f32
    %15 = vector.broadcast %cst_15 : f32 to vector<576x128xf32>
    %16 = arith.maximumf %14, %15 : vector<576x128xf32>
    %17 = vector.shape_cast %16 : vector<576x128xf32> to vector<24x24x128xf32>
    %c1_i32 = arith.constant 1 : i32
    %18 = arith.subi %7, %c1_i32 : i32
    %c0_i32 = arith.constant 0 : i32
    %19 = arith.maxsi %18, %c0_i32 : i32
    %c0_16 = arith.constant 0 : index
    %20 = arith.index_cast %19 : i32 to index
    %c0_17 = arith.constant 0 : index
    %c0_18 = arith.constant 0 : index
    %21 = vector.load %arg2[%c0_16, %20, %c0_17, %c0_18] : memref<1x24x24x128xbf16, #tpu.memory_space<vmem>>, vector<1x1x24x128xbf16>
    %22 = vector.shape_cast %21 : vector<1x1x24x128xbf16> to vector<1x24x128xbf16>
    %c24_i32_19 = arith.constant 24 : i32
    %23 = arith.addi %7, %c24_i32_19 : i32
    %c23_i32 = arith.constant 23 : i32
    %24 = arith.minsi %23, %c23_i32 : i32
    %c0_20 = arith.constant 0 : index
    %25 = arith.index_cast %24 : i32 to index
    %c0_21 = arith.constant 0 : index
    %c0_22 = arith.constant 0 : index
    %26 = vector.load %arg2[%c0_20, %25, %c0_21, %c0_22] : memref<1x24x24x128xbf16, #tpu.memory_space<vmem>>, vector<1x1x24x128xbf16>
    %27 = vector.shape_cast %26 : vector<1x1x24x128xbf16> to vector<1x24x128xbf16>
    %28 = tpu.concatenate %22, %27 in 0 : vector<1x24x128xbf16>, vector<1x24x128xbf16> -> vector<2x24x128xbf16>
    %29 = vector.shape_cast %28 : vector<2x24x128xbf16> to vector<48x128xbf16>
    %cst_23 = arith.constant dense<0.000000e+00> : vector<48x128xf32>
    %30 = tpu.matmul %29, %0, %cst_23 {dimension_numbers = #tpu.dot_dimension_numbers<[1], [0], [0], [1], [0, 0, 1, 1], [], []>} : vector<48x128xbf16>, vector<128x128xbf16>, vector<48x128xf32> -> vector<48x128xf32>
    %31 = vector.broadcast %3 : vector<1x128xf32> to vector<48x128xf32>
    %32 = arith.addf %30, %31 : vector<48x128xf32>
    %cst_24 = arith.constant 0.000000e+00 : f32
    %33 = vector.broadcast %cst_24 : f32 to vector<48x128xf32>
    %34 = arith.maximumf %32, %33 : vector<48x128xf32>
    %35 = vector.shape_cast %34 : vector<48x128xf32> to vector<2x24x128xf32>
    %36 = vector.extract_strided_slice %35 {offsets = [0, 0, 0], sizes = [1, 24, 128], strides = [1, 1, 1]} : vector<2x24x128xf32> to vector<1x24x128xf32>
    %c0_i32_25 = arith.constant 0 : i32
    %37 = arith.cmpi sgt, %7, %c0_i32_25 : i32
    %38 = arith.extui %37 : i1 to i32
    %39 = arith.sitofp %38 : i32 to f32
    %40 = vector.broadcast %39 : f32 to vector<1x24x128xf32>
    %41 = arith.mulf %36, %40 : vector<1x24x128xf32>
    %42 = vector.extract_strided_slice %35 {offsets = [1, 0, 0], sizes = [1, 24, 128], strides = [1, 1, 1]} : vector<2x24x128xf32> to vector<1x24x128xf32>
    %c24_i32_26 = arith.constant 24 : i32
    %43 = arith.addi %7, %c24_i32_26 : i32
    %c24_i32_27 = arith.constant 24 : i32
    %44 = arith.cmpi slt, %43, %c24_i32_27 : i32
    %45 = arith.extui %44 : i1 to i32
    %46 = arith.sitofp %45 : i32 to f32
    %47 = vector.broadcast %46 : f32 to vector<1x24x128xf32>
    %48 = arith.mulf %42, %47 : vector<1x24x128xf32>
    %49 = tpu.concatenate %41, %17, %48 in 0 : vector<1x24x128xf32>, vector<24x24x128xf32>, vector<1x24x128xf32> -> vector<26x24x128xf32>
    %50 = tpu.iota {dimensions = array<i32: 1>} : vector<1x24x1xi32>
    %c0_i32_28 = arith.constant 0 : i32
    %51 = vector.broadcast %c0_i32_28 : i32 to vector<1x24x1xi32>
    %52 = arith.cmpi sgt, %50, %51 : vector<1x24x1xi32>
    %53 = arith.extui %52 : vector<1x24x1xi1> to vector<1x24x1xi32>
    %54 = arith.sitofp %53 : vector<1x24x1xi32> to vector<1x24x1xf32>
    %c23_i32_29 = arith.constant 23 : i32
    %55 = vector.broadcast %c23_i32_29 : i32 to vector<1x24x1xi32>
    %56 = arith.cmpi slt, %50, %55 : vector<1x24x1xi32>
    %57 = arith.extui %56 : vector<1x24x1xi1> to vector<1x24x1xi32>
    %58 = arith.sitofp %57 : vector<1x24x1xi32> to vector<1x24x1xf32>
    %cst_30 = arith.constant 0.000000e+00 : f32
    %59 = vector.broadcast %cst_30 : f32 to vector<26x1x128xf32>
    %60 = tpu.concatenate %59, %49, %59 in 1 : vector<26x1x128xf32>, vector<26x24x128xf32>, vector<26x1x128xf32> -> vector<26x26x128xf32>
    %61 = vector.extract_strided_slice %60 {offsets = [0, 0, 0], sizes = [26, 24, 128], strides = [1, 1, 1]} : vector<26x26x128xf32> to vector<26x24x128xf32>
    %62 = vector.extract_strided_slice %60 {offsets = [0, 2, 0], sizes = [26, 24, 128], strides = [1, 1, 1]} : vector<26x26x128xf32> to vector<26x24x128xf32>
    %63 = vector.broadcast %54 : vector<1x24x1xf32> to vector<26x24x128xf32>
    %64 = arith.mulf %61, %63 : vector<26x24x128xf32>
    %65 = vector.broadcast %58 : vector<1x24x1xf32> to vector<26x24x128xf32>
    %66 = arith.mulf %62, %65 : vector<26x24x128xf32>
    %67 = tpu.concatenate %64, %49, %66 in 2 : vector<26x24x128xf32>, vector<26x24x128xf32>, vector<26x24x128xf32> -> vector<26x24x384xf32>
    %68 = vector.extract_strided_slice %67 {offsets = [0, 0, 0], sizes = [24, 24, 384], strides = [1, 1, 1]} : vector<26x24x384xf32> to vector<24x24x384xf32>
    %69 = vector.shape_cast %68 : vector<24x24x384xf32> to vector<576x384xf32>
    %70 = arith.truncf %69 : vector<576x384xf32> to vector<576x384xbf16>
    %71 = vector.extract_strided_slice %1 {offsets = [0, 0, 0], sizes = [1, 384, 128], strides = [1, 1, 1]} : vector<3x384x128xbf16> to vector<1x384x128xbf16>
    %72 = vector.shape_cast %71 : vector<1x384x128xbf16> to vector<384x128xbf16>
    %cst_31 = arith.constant dense<0.000000e+00> : vector<576x128xf32>
    %73 = tpu.matmul %70, %72, %cst_31 {dimension_numbers = #tpu.dot_dimension_numbers<[1], [0], [0], [1], [0, 0, 1, 1], [], []>} : vector<576x384xbf16>, vector<384x128xbf16>, vector<576x128xf32> -> vector<576x128xf32>
    %74 = vector.extract_strided_slice %67 {offsets = [1, 0, 0], sizes = [24, 24, 384], strides = [1, 1, 1]} : vector<26x24x384xf32> to vector<24x24x384xf32>
    %75 = vector.shape_cast %74 : vector<24x24x384xf32> to vector<576x384xf32>
    %76 = arith.truncf %75 : vector<576x384xf32> to vector<576x384xbf16>
    %77 = vector.extract_strided_slice %1 {offsets = [1, 0, 0], sizes = [1, 384, 128], strides = [1, 1, 1]} : vector<3x384x128xbf16> to vector<1x384x128xbf16>
    %78 = vector.shape_cast %77 : vector<1x384x128xbf16> to vector<384x128xbf16>
    %cst_32 = arith.constant dense<0.000000e+00> : vector<576x128xf32>
    %79 = tpu.matmul %76, %78, %cst_32 {dimension_numbers = #tpu.dot_dimension_numbers<[1], [0], [0], [1], [0, 0, 1, 1], [], []>} : vector<576x384xbf16>, vector<384x128xbf16>, vector<576x128xf32> -> vector<576x128xf32>
    %80 = arith.addf %73, %79 : vector<576x128xf32>
    %81 = vector.extract_strided_slice %67 {offsets = [2, 0, 0], sizes = [24, 24, 384], strides = [1, 1, 1]} : vector<26x24x384xf32> to vector<24x24x384xf32>
    %82 = vector.shape_cast %81 : vector<24x24x384xf32> to vector<576x384xf32>
    %83 = arith.truncf %82 : vector<576x384xf32> to vector<576x384xbf16>
    %84 = vector.extract_strided_slice %1 {offsets = [2, 0, 0], sizes = [1, 384, 128], strides = [1, 1, 1]} : vector<3x384x128xbf16> to vector<1x384x128xbf16>
    %85 = vector.shape_cast %84 : vector<1x384x128xbf16> to vector<384x128xbf16>
    %cst_33 = arith.constant dense<0.000000e+00> : vector<576x128xf32>
    %86 = tpu.matmul %83, %85, %cst_33 {dimension_numbers = #tpu.dot_dimension_numbers<[1], [0], [0], [1], [0, 0, 1, 1], [], []>} : vector<576x384xbf16>, vector<384x128xbf16>, vector<576x128xf32> -> vector<576x128xf32>
    %87 = arith.addf %80, %86 : vector<576x128xf32>
    %88 = vector.broadcast %4 : vector<1x128xf32> to vector<576x128xf32>
    %89 = arith.addf %87, %88 : vector<576x128xf32>
    %cst_34 = arith.constant 0.000000e+00 : f32
    %90 = vector.broadcast %cst_34 : f32 to vector<576x128xf32>
    %91 = arith.maximumf %89, %90 : vector<576x128xf32>
    %92 = arith.truncf %91 : vector<576x128xf32> to vector<576x128xbf16>
    %cst_35 = arith.constant dense<0.000000e+00> : vector<576x128xf32>
    %93 = tpu.matmul %92, %2, %cst_35 {dimension_numbers = #tpu.dot_dimension_numbers<[1], [0], [0], [1], [0, 0, 1, 1], [], []>} : vector<576x128xbf16>, vector<128x128xbf16>, vector<576x128xf32> -> vector<576x128xf32>
    %94 = vector.broadcast %5 : vector<1x128xf32> to vector<576x128xf32>
    %95 = arith.addf %93, %94 : vector<576x128xf32>
    %c0_36 = arith.constant 0 : index
    %96 = arith.index_cast %7 : i32 to index
    %c0_37 = arith.constant 0 : index
    %c0_38 = arith.constant 0 : index
    %97 = vector.load %arg2[%c0_36, %96, %c0_37, %c0_38] : memref<1x24x24x128xbf16, #tpu.memory_space<vmem>>, vector<1x24x24x128xbf16>
    %98 = vector.shape_cast %97 : vector<1x24x24x128xbf16> to vector<24x24x128xbf16>
    %99 = vector.shape_cast %98 : vector<24x24x128xbf16> to vector<576x128xbf16>
    %100 = arith.extf %99 : vector<576x128xbf16> to vector<576x128xf32>
    %101 = arith.addf %95, %100 : vector<576x128xf32>
    %cst_39 = arith.constant 0.000000e+00 : f32
    %102 = vector.broadcast %cst_39 : f32 to vector<576x128xf32>
    %103 = arith.maximumf %101, %102 : vector<576x128xf32>
    %104 = vector.shape_cast %103 : vector<576x128xf32> to vector<24x24x128xf32>
    %105 = arith.truncf %104 : vector<24x24x128xf32> to vector<24x24x128xbf16>
    %c0_40 = arith.constant 0 : index
    %c0_41 = arith.constant 0 : index
    %c0_42 = arith.constant 0 : index
    %c0_43 = arith.constant 0 : index
    %106 = vector.load %arg9[%c0_40, %c0_41, %c0_42, %c0_43] : memref<1x24x24x128xbf16, #tpu.memory_space<vmem>>, vector<1x24x24x128xbf16>
    %107 = vector.shape_cast %106 : vector<1x24x24x128xbf16> to vector<24x24x128xbf16>
    %108 = vector.shape_cast %105 : vector<24x24x128xbf16> to vector<1x24x24x128xbf16>
    tpu.vector_store %arg9[%c0_40, %c0_41, %c0_42, %c0_43], %108 {strides = array<i32>} : memref<1x24x24x128xbf16, #tpu.memory_space<vmem>>, vector<1x24x24x128xbf16>,
    return
  }
  func.func @transform_0(%arg0: i32, %arg1: i32) -> (i32, i32, i32, i32) {
    %c0_i32 = arith.constant 0 : i32
    %c0_i32_0 = arith.constant 0 : i32
    %c0_i32_1 = arith.constant 0 : i32
    %c0_i32_2 = arith.constant 0 : i32
    return %arg0, %c0_i32, %c0_i32_0, %c0_i32_1 : i32, i32, i32, i32
  }
  func.func @transform_1(%arg0: i32, %arg1: i32) -> (i32, i32) {
    %c0_i32 = arith.constant 0 : i32
    %c0_i32_0 = arith.constant 0 : i32
    %c0_i32_1 = arith.constant 0 : i32
    return %c0_i32, %c0_i32_0 : i32, i32
  }
  func.func @transform_2(%arg0: i32, %arg1: i32) -> (i32, i32) {
    %c0_i32 = arith.constant 0 : i32
    %c0_i32_0 = arith.constant 0 : i32
    %c0_i32_1 = arith.constant 0 : i32
    return %c0_i32, %c0_i32_0 : i32, i32
  }
  func.func @transform_3(%arg0: i32, %arg1: i32) -> (i32, i32, i32) {
    %c0_i32 = arith.constant 0 : i32
    %c0_i32_0 = arith.constant 0 : i32
    %c0_i32_1 = arith.constant 0 : i32
    %c0_i32_2 = arith.constant 0 : i32
    return %c0_i32, %c0_i32_0, %c0_i32_1 : i32, i32, i32
  }
  func.func @transform_4(%arg0: i32, %arg1: i32) -> (i32, i32) {
    %c0_i32 = arith.constant 0 : i32
    %c0_i32_0 = arith.constant 0 : i32
    %c0_i32_1 = arith.constant 0 : i32
    return %c0_i32, %c0_i32_0 : i32, i32
  }
  func.func @transform_5(%arg0: i32, %arg1: i32) -> (i32, i32) {
    %c0_i32 = arith.constant 0 : i32
    %c0_i32_0 = arith.constant 0 : i32
    %c0_i32_1 = arith.constant 0 : i32
    return %c0_i32, %c0_i32_0 : i32, i32
  }
  func.func @transform_6(%arg0: i32, %arg1: i32) -> (i32, i32) {
    %c0_i32 = arith.constant 0 : i32
    %c0_i32_0 = arith.constant 0 : i32
    %c0_i32_1 = arith.constant 0 : i32
    return %c0_i32, %c0_i32_0 : i32, i32
  }
  func.func @transform_7(%arg0: i32, %arg1: i32) -> (i32, i32, i32, i32) {
    %c0_i32 = arith.constant 0 : i32
    %c0_i32_0 = arith.constant 0 : i32
    %c0_i32_1 = arith.constant 0 : i32
    return %arg0, %arg1, %c0_i32, %c0_i32_0 : i32, i32, i32, i32
  }
}

</mosaic_0001>

<llo_original>
// kernel: tpu_custom_call.1
$region0: #{tpu_custom_call.1}
  #allocation0 [shape = 'u32[]', space=smem, size = 0x4, offset = 0x4, fixed_abs, tag = 'smem constant byte address 0x4 - core index']
  #allocation1 [shape = 'u32[144,128]{1,0:T(1,128)}', space=vmem, size = 0x12000, scoped, tag = 'internal scratch']
  %s0 = inlined_call_operand.hbm [shape: bf16[2,24,24,128], index: 0, kind: input, shape index: {}]
  %s1 = inlined_call_operand.hbm [shape: bf16[128,128], index: 1, kind: input, shape index: {}]
  %s2 = inlined_call_operand.vmem [shape: f32[1,128], index: 2, kind: input, shape index: {}]
  %s3 = inlined_call_operand.hbm [shape: bf16[3,384,128], index: 3, kind: input, shape index: {}]
  %s4 = inlined_call_operand.vmem [shape: f32[1,128], index: 4, kind: input, shape index: {}]
  %s5 = inlined_call_operand.hbm [shape: bf16[128,128], index: 5, kind: input, shape index: {}]
  %s6 = inlined_call_operand.vmem [shape: f32[1,128], index: 6, kind: input, shape index: {}]
  %s7 = inlined_call_operand.hbm [shape: bf16[2,24,24,128], index: 7, kind: output, shape index: {}]
  %s8 = sld [smem:[#allocation0]]
  $region77: #{tpu_custom_call.1} parent=0
    _
  %s10 = ssub.s32 1, %s8
  %s11 = scalar_select 0, %s10, %s8
  $region1: #{tpu_custom_call.1} parent=0
    #allocation2 [shape = 'u8[294912]{0}', space=vmem, size = 0x48000, scoped, tag = 'input window, operand 0']
    #allocation3 [shape = 's32[2]{0}', space=sflag, size = 0x8, scoped, tag = 'scoped memory for tpu_custom_call.1']
    #allocation4 [shape = 's32[2]{0}', space=sflag, size = 0x8, scoped, tag = 'scoped memory for tpu_custom_call.1']
    #allocation5 [shape = 'u8[32768]{0}', space=vmem, size = 0x8000, scoped, tag = 'input window, operand 1, single buffered']
    #allocation6 [shape = 's32[1]{0}', space=sflag, size = 0x4, scoped, tag = 'scoped memory for tpu_custom_call.1']
    #allocation7 [shape = 'u8[294912]{0}', space=vmem, size = 0x48000, scoped, tag = 'input window, operand 3, single buffered']
    #allocation8 [shape = 'u8[32768]{0}', space=vmem, size = 0x8000, scoped, tag = 'input window, operand 5, single buffered']
    #allocation9 [shape = 's32[1]{0}', space=sflag, size = 0x4, scoped, tag = 'scoped memory for tpu_custom_call.1']
    #allocation10 [shape = 'u8[294912]{0}', space=vmem, size = 0x48000, scoped, tag = 'output window, operand 0']
    %12 = vsyncpa [#allocation3], 0
    %s13 = scalar_lea.sflag [#allocation3], 1
    %14 = vsyncpa %s13, 0
    %15 = vsyncpa [#allocation6], 0
    %16 = vsyncpa [#allocation9], 0
    %17 = vsyncpa [#allocation4], 0
    %s18 = scalar_lea.sflag [#allocation4], 1
    %19 = vsyncpa %s18, 0
    loop: start=0, step=1, limit=4
    $region2: #{tpu_custom_call.1} parent=1 // loop_pre_header
      _
    $region3: #{tpu_custom_call.1} parent=1 // loop_header
      %s21 = sphi 0, %s25
      %p22 = scmp.ge.s32.totalorder %s21, 4
      %s28 = sphi 0, %s40
      %s29 = sphi 0, %s36
      %s30 = sphi 0, %s28
      %s31 = sphi 0, %s29
      %s32 = sphi 0, %s30
      %s33 = sphi 0, %s31
      %s43 = sphi 0, %s45
      %s46 = sphi 0, %s43
      %s47 = sphi 0, %s46
      %s63 = sphi 0, %s47
      %s67 = sphi 0, %s67
      %s69 = sphi 0, %s67
      %s70 = sphi 0, %s69
      %s84 = sphi 0, %s70
      %s88 = sphi 0, %s88
      %s90 = sphi 0, %s88
      %s91 = sphi 0, %s90
      %s105 = sphi 0, %s91
      %s109 = sphi 0, %s109
      %s111 = sphi 0, %s109
      %s112 = sphi 0, %s111
      %s126 = sphi 0, %s112
      %s130 = sphi 0, %s130
      %s132 = sphi 0, %s130
      %s133 = sphi 0, %s132
      %s147 = sphi 0, %s133
      %s151 = sphi 0, %s151
      %s153 = sphi 0, %s151
      %s154 = sphi 0, %s153
      %s168 = sphi 0, %s154
      %s172 = sphi 0, %s172
      %s174 = sphi 0, %s172
      %s175 = sphi 0, %s174
      %s189 = sphi 0, %s175
      %s197 = sphi 0, %s199
      %s200 = sphi 0, %s197
      %s201 = sphi 0, %s200
      %s217 = sphi 0, %s201
    $region4: #{tpu_custom_call.1} parent=1 // loop_header_branch
      %24 = sbr.rel (%p22) target = $region8
    $region5: #{tpu_custom_call.1} parent=1 // loop_body
      %s26 = ssub.s32 %s21, 1
      %s27 = ssub.s32 %s21, 2
      %s34 = sadd.s32 1, %s29
      %p35 = scmp.ge.s32.totalorder %s34, 1
      %s36 = scalar_select %p35, 0, %s34
      %s37 = sadd.s32 1, %s28
      %s38 = scalar_select %p35, %s37, %s28
      %p39 = scmp.ge.s32.totalorder %s38, 2
      %s40 = scalar_select %p39, 0, %s38
      %s41 = ssub.s32 %s28, %s40
      %p42 = scmp.eq.s32.totalorder %s41, 0
      %s44 = sadd.s32 %s43, 1
      %s45 = scalar_select %p42, %s43, %s44
      %p48 = pneg %p42
      %p49 = scmp.eq.s32.totalorder %s21, 1
      %p50 = por %p48, %p49
      %p51 = scmp.ne.s32.totalorder %s43, %s46
      %p52 = scmp.eq.s32.totalorder %s21, 0
      %p53 = por %p51, %p52
      %p54 = scmp.ne.s32.totalorder %s43, %s46
      %p55 = scmp.eq.s32.totalorder %s26, 1
      %p56 = por %p54, %p55
      %p57 = scmp.ne.s32.totalorder %s46, %s47
      %p58 = scmp.eq.s32.totalorder %s26, 0
      %p59 = por %p57, %p58
      %p60 = scmp.ne.s32.totalorder %s46, %s47
      %p61 = scmp.eq.s32.totalorder %s27, 1
      %p62 = por %p60, %p61
      %p64 = scmp.ne.s32.totalorder %s47, %s63
      %p65 = scmp.eq.s32.totalorder %s27, 0
      %p66 = por %p64, %p65
      %s68 = sadd.s32 %s67, 1
      %p71 = scmp.eq.s32.totalorder %s21, 1
      %p72 = scmp.ne.s32.totalorder %s67, %s69
      %p73 = scmp.eq.s32.totalorder %s21, 0
      %p74 = por %p72, %p73
      %p75 = scmp.ne.s32.totalorder %s67, %s69
      %p76 = scmp.eq.s32.totalorder %s26, 1
      %p77 = por %p75, %p76
      %p78 = scmp.ne.s32.totalorder %s69, %s70
      %p79 = scmp.eq.s32.totalorder %s26, 0
      %p80 = por %p78, %p79
      %p81 = scmp.ne.s32.totalorder %s69, %s70
      %p82 = scmp.eq.s32.totalorder %s27, 1
      %p83 = por %p81, %p82
      %p85 = scmp.ne.s32.totalorder %s70, %s84
      %p86 = scmp.eq.s32.totalorder %s27, 0
      %p87 = por %p85, %p86
      %s89 = sadd.s32 %s88, 1
      %p92 = scmp.eq.s32.totalorder %s21, 1
      %p93 = scmp.ne.s32.totalorder %s88, %s90
      %p94 = scmp.eq.s32.totalorder %s21, 0
      %p95 = por %p93, %p94
      %p96 = scmp.ne.s32.totalorder %s88, %s90
      %p97 = scmp.eq.s32.totalorder %s26, 1
      %p98 = por %p96, %p97
      %p99 = scmp.ne.s32.totalorder %s90, %s91
      %p100 = scmp.eq.s32.totalorder %s26, 0
      %p101 = por %p99, %p100
      %p102 = scmp.ne.s32.totalorder %s90, %s91
      %p103 = scmp.eq.s32.totalorder %s27, 1
      %p104 = por %p102, %p103
      %p106 = scmp.ne.s32.totalorder %s91, %s105
      %p107 = scmp.eq.s32.totalorder %s27, 0
      %p108 = por %p106, %p107
      %s110 = sadd.s32 %s109, 1
      %p113 = scmp.eq.s32.totalorder %s21, 1
      %p114 = scmp.ne.s32.totalorder %s109, %s111
      %p115 = scmp.eq.s32.totalorder %s21, 0
      %p116 = por %p114, %p115
      %p117 = scmp.ne.s32.totalorder %s109, %s111
      %p118 = scmp.eq.s32.totalorder %s26, 1
      %p119 = por %p117, %p118
      %p120 = scmp.ne.s32.totalorder %s111, %s112
      %p121 = scmp.eq.s32.totalorder %s26, 0
      %p122 = por %p120, %p121
      %p123 = scmp.ne.s32.totalorder %s111, %s112
      %p124 = scmp.eq.s32.totalorder %s27, 1
      %p125 = por %p123, %p124
      %p127 = scmp.ne.s32.totalorder %s112, %s126
      %p128 = scmp.eq.s32.totalorder %s27, 0
      %p129 = por %p127, %p128
      %s131 = sadd.s32 %s130, 1
      %p134 = scmp.eq.s32.totalorder %s21, 1
      %p135 = scmp.ne.s32.totalorder %s130, %s132
      %p136 = scmp.eq.s32.totalorder %s21, 0
      %p137 = por %p135, %p136
      %p138 = scmp.ne.s32.totalorder %s130, %s132
      %p139 = scmp.eq.s32.totalorder %s26, 1
      %p140 = por %p138, %p139
      %p141 = scmp.ne.s32.totalorder %s132, %s133
      %p142 = scmp.eq.s32.totalorder %s26, 0
      %p143 = por %p141, %p142
      %p144 = scmp.ne.s32.totalorder %s132, %s133
      %p145 = scmp.eq.s32.totalorder %s27, 1
      %p146 = por %p144, %p145
      %p148 = scmp.ne.s32.totalorder %s133, %s147
      %p149 = scmp.eq.s32.totalorder %s27, 0
      %p150 = por %p148, %p149
      %s152 = sadd.s32 %s151, 1
      %p155 = scmp.eq.s32.totalorder %s21, 1
      %p156 = scmp.ne.s32.totalorder %s151, %s153
      %p157 = scmp.eq.s32.totalorder %s21, 0
      %p158 = por %p156, %p157
      %p159 = scmp.ne.s32.totalorder %s151, %s153
      %p160 = scmp.eq.s32.totalorder %s26, 1
      %p161 = por %p159, %p160
      %p162 = scmp.ne.s32.totalorder %s153, %s154
      %p163 = scmp.eq.s32.totalorder %s26, 0
      %p164 = por %p162, %p163
      %p165 = scmp.ne.s32.totalorder %s153, %s154
      %p166 = scmp.eq.s32.totalorder %s27, 1
      %p167 = por %p165, %p166
      %p169 = scmp.ne.s32.totalorder %s154, %s168
      %p170 = scmp.eq.s32.totalorder %s27, 0
      %p171 = por %p169, %p170
      %s173 = sadd.s32 %s172, 1
      %p176 = scmp.eq.s32.totalorder %s21, 1
      %p177 = scmp.ne.s32.totalorder %s172, %s174
      %p178 = scmp.eq.s32.totalorder %s21, 0
      %p179 = por %p177, %p178
      %p180 = scmp.ne.s32.totalorder %s172, %s174
      %p181 = scmp.eq.s32.totalorder %s26, 1
      %p182 = por %p180, %p181
      %p183 = scmp.ne.s32.totalorder %s174, %s175
      %p184 = scmp.eq.s32.totalorder %s26, 0
      %p185 = por %p183, %p184
      %p186 = scmp.ne.s32.totalorder %s174, %s175
      %p187 = scmp.eq.s32.totalorder %s27, 1
      %p188 = por %p186, %p187
      %p190 = scmp.ne.s32.totalorder %s175, %s189
      %p191 = scmp.eq.s32.totalorder %s27, 0
      %p192 = por %p190, %p191
      %s193 = ssub.s32 %s28, %s40
      %s194 = ssub.s32 %s29, %s36
      %s195 = sor.u32 %s193, %s194
      %p196 = scmp.eq.s32.totalorder %s195, 0
      %s198 = sadd.s32 %s197, 1
      %s199 = scalar_select %p196, %s197, %s198
      %p202 = pneg %p196
      %p203 = scmp.eq.s32.totalorder %s21, 1
      %p204 = por %p202, %p203
      %p205 = scmp.ne.s32.totalorder %s197, %s200
      %p206 = scmp.eq.s32.totalorder %s21, 0
      %p207 = por %p205, %p206
      %p208 = scmp.ne.s32.totalorder %s197, %s200
      %p209 = scmp.eq.s32.totalorder %s26, 1
      %p210 = por %p208, %p209
      %p211 = scmp.ne.s32.totalorder %s200, %s201
      %p212 = scmp.eq.s32.totalorder %s26, 0
      %p213 = por %p211, %p212
      %p214 = scmp.ne.s32.totalorder %s200, %s201
      %p215 = scmp.eq.s32.totalorder %s27, 1
      %p216 = por %p214, %p215
      %p218 = scmp.ne.s32.totalorder %s201, %s217
      %p219 = scmp.eq.s32.totalorder %s27, 0
      %p220 = por %p218, %p219
      %p221 = scmp.le.s32.totalorder 1, %s21
      %p222 = scmp.lt.s32.totalorder %s21, 3
      %p223 = pnand %p221, %p222
      %p224 = pneg %p223
      // Predicated region
      $region9: #{tpu_custom_call.1} parent=5 // pred_check
        _
      $region10: #{tpu_custom_call.1} parent=5 // pred_check_branch
        %226 = sbr.rel (%p223) target = $region12
      $region11: #{tpu_custom_call.1} parent=5 // pred_region
        %s227 = ssub.s32 %s21, 1
        // Predicated region
        $region13: #{tpu_custom_call.1} parent=11 // pred_check
          %p228 = pneg %p80
        $region14: #{tpu_custom_call.1} parent=11 // pred_check_branch
          %230 = sbr.rel (%p228) target = $region16
        $region15: #{tpu_custom_call.1} parent=11 // pred_region
          %s232 = ssub.s32 1024, 1024
          %233 = vsyncadd [#allocation6], %s232
          %s234 = sshll.u32 [#allocation5], 4
          %s235 = int_to_ptr.vmem [resolvable:$true] %s234
          %240 = dma.hbm_to_vmem [thread:$0]  %s1, 1024, %s235, [#allocation6], 64, 64, 4
        $region16: #{tpu_custom_call.1} parent=11 // pred_fallthru
          _
        // Predicated region
        $region17: #{tpu_custom_call.1} parent=11 // pred_check
          %p241 = pneg %p101
        $region18: #{tpu_custom_call.1} parent=11 // pred_check_branch
          %243 = sbr.rel (%p241) target = $region20
        $region19: #{tpu_custom_call.1} parent=11 // pred_region
          _
        $region20: #{tpu_custom_call.1} parent=11 // pred_fallthru
          _
        // Predicated region
        $region21: #{tpu_custom_call.1} parent=11 // pred_check
          %p244 = pneg %p122
        $region22: #{tpu_custom_call.1} parent=11 // pred_check_branch
          %246 = sbr.rel (%p244) target = $region24
        $region23: #{tpu_custom_call.1} parent=11 // pred_region
          %s248 = ssub.s32 9216, 9216
          %249 = vsyncadd [#allocation6], %s248
          %s250 = sshll.u32 [#allocation7], 4
          %s251 = int_to_ptr.vmem [resolvable:$true] %s250
          %256 = dma.hbm_to_vmem [thread:$0]  %s3, 9216, %s251, [#allocation6], 64, 64, 4
        $region24: #{tpu_custom_call.1} parent=11 // pred_fallthru
          _
        // Predicated region
        $region25: #{tpu_custom_call.1} parent=11 // pred_check
          %p257 = pneg %p143
        $region26: #{tpu_custom_call.1} parent=11 // pred_check_branch
          %259 = sbr.rel (%p257) target = $region28
        $region27: #{tpu_custom_call.1} parent=11 // pred_region
          _
        $region28: #{tpu_custom_call.1} parent=11 // pred_fallthru
          _
        // Predicated region
        $region29: #{tpu_custom_call.1} parent=11 // pred_check
          %p260 = pneg %p164
        $region30: #{tpu_custom_call.1} parent=11 // pred_check_branch
          %262 = sbr.rel (%p260) target = $region32
        $region31: #{tpu_custom_call.1} parent=11 // pred_region
          %s264 = ssub.s32 1024, 1024
          %265 = vsyncadd [#allocation9], %s264
          %s266 = sshll.u32 [#allocation8], 4
          %s267 = int_to_ptr.vmem [resolvable:$true] %s266
          %272 = dma.hbm_to_vmem [thread:$0]  %s5, 1024, %s267, [#allocation9], 64, 64, 4
        $region32: #{tpu_custom_call.1} parent=11 // pred_fallthru
          _
        // Predicated region
        $region33: #{tpu_custom_call.1} parent=11 // pred_check
          %p273 = pneg %p185
        $region34: #{tpu_custom_call.1} parent=11 // pred_check_branch
          %275 = sbr.rel (%p273) target = $region36
        $region35: #{tpu_custom_call.1} parent=11 // pred_region
          _
        $region36: #{tpu_custom_call.1} parent=11 // pred_fallthru
          _
      $region12: #{tpu_custom_call.1} parent=5 // pred_fallthru
        _
      %p276 = scmp.lt.s32.totalorder %s21, 2
      // Predicated region
      $region37: #{tpu_custom_call.1} parent=5 // pred_check
        %p277 = pneg %p276
      $region38: #{tpu_custom_call.1} parent=5 // pred_check_branch
        %279 = sbr.rel (%p277) target = $region40
      $region39: #{tpu_custom_call.1} parent=5 // pred_region
        // Predicated region
        $region41: #{tpu_custom_call.1} parent=39 // pred_check
          %p280 = pneg %p53
        $region42: #{tpu_custom_call.1} parent=39 // pred_check_branch
          %282 = sbr.rel (%p280) target = $region44
        $region43: #{tpu_custom_call.1} parent=39 // pred_region
          %s283 = sand.u32 %s43, 1
          %s284 = scalar_lea.sflag [#allocation3], %s283
          %s285 = sand.u32 %s43, 1
          %s286 = smul.addr %s285, 288
          %s287 = scalar_lea.vmem [#allocation2], %s286
          %s289 = ssub.s32 4608, 4608
          %290 = vsyncadd %s284, %s289
          %s291 = smul.addr %s28, 72
          %s292 = smul.addr %s291, 64
          %s293 = scalar_lea.hbm %s0, %s292
          %s294 = sshll.u32 %s287, 4
          %s295 = int_to_ptr.vmem [resolvable:$true] %s294
          %300 = dma.hbm_to_vmem [thread:$0]  %s293, 4608, %s295, %s284, 64, 64, 4
        $region44: #{tpu_custom_call.1} parent=39 // pred_fallthru
          _
      $region40: #{tpu_custom_call.1} parent=5 // pred_fallthru
        _
      %p301 = scmp.le.s32.totalorder 1, %s21
      %p302 = scmp.lt.s32.totalorder %s21, 3
      %p303 = pnand %p301, %p302
      %p304 = pneg %p303
      // Predicated region
      $region45: #{tpu_custom_call.1} parent=5 // pred_check
        _
      $region46: #{tpu_custom_call.1} parent=5 // pred_check_branch
        %306 = sbr.rel (%p303) target = $region48
      $region47: #{tpu_custom_call.1} parent=5 // pred_region
        %s307 = ssub.s32 %s21, 1
        %s308 = sand.u32 %s46, 1
        %s309 = scalar_lea.sflag [#allocation3], %s308
        %s310 = sand.u32 %s46, 1
        %s311 = smul.addr %s310, 288
        %s312 = scalar_lea.vmem [#allocation2], %s311
        // Predicated region
        $region49: #{tpu_custom_call.1} parent=47 // pred_check
          %p313 = pneg %p59
        $region50: #{tpu_custom_call.1} parent=47 // pred_check_branch
          %315 = sbr.rel (%p313) target = $region52
        $region51: #{tpu_custom_call.1} parent=47 // pred_region
          %316 = dma.done %s309, 4608
        $region52: #{tpu_custom_call.1} parent=47 // pred_fallthru
          _
        // Predicated region
        $region53: #{tpu_custom_call.1} parent=47 // pred_check
          %p317 = pneg %p80
        $region54: #{tpu_custom_call.1} parent=47 // pred_check_branch
          %319 = sbr.rel (%p317) target = $region56
        $region55: #{tpu_custom_call.1} parent=47 // pred_region
          %320 = dma.done [#allocation6], 1024
        $region56: #{tpu_custom_call.1} parent=47 // pred_fallthru
          _
        // Predicated region
        $region57: #{tpu_custom_call.1} parent=47 // pred_check
          %p321 = pneg %p122
        $region58: #{tpu_custom_call.1} parent=47 // pred_check_branch
          %323 = sbr.rel (%p321) target = $region60
        $region59: #{tpu_custom_call.1} parent=47 // pred_region
          %324 = dma.done [#allocation6], 9216
        $region60: #{tpu_custom_call.1} parent=47 // pred_fallthru
          _
        // Predicated region
        $region61: #{tpu_custom_call.1} parent=47 // pred_check
          %p325 = pneg %p164
        $region62: #{tpu_custom_call.1} parent=47 // pred_check_branch
          %327 = sbr.rel (%p325) target = $region64
        $region63: #{tpu_custom_call.1} parent=47 // pred_region
          %328 = dma.done [#allocation9], 1024
        $region64: #{tpu_custom_call.1} parent=47 // pred_fallthru
          _
        %s329 = sand.u32 %s46, 1
        %s330 = scalar_lea.sflag [#allocation3], %s329
        %s331 = sand.u32 %s46, 1
        %s332 = smul.addr %s331, 288
        %s333 = scalar_lea.vmem [#allocation2], %s332
        %p334 = pneg %p59
        %p335 = pneg %p56
        %p336 = pneg %p80
        %p337 = pneg %p77
        %p338 = pneg %p101
        %p339 = pneg %p98
        %p340 = pneg %p122
        %p341 = pneg %p119
        %p342 = pneg %p143
        %p343 = pneg %p140
        %p344 = pneg %p164
        %p345 = pneg %p161
        %p346 = pneg %p185
        %p347 = pneg %p182
        %p348 = pneg %p213
        %p349 = pneg %p210
        %s350 = sand.u32 %s200, 1
        %s351 = scalar_lea.sflag [#allocation4], %s350
        %s352 = sand.u32 %s200, 1
        %s353 = smul.addr %s352, 288
        %s354 = scalar_lea.vmem [#allocation10], %s353
        %s355 = smul.u32 24, %s31
        %v357 = vld [vmem:[#allocation5] sm:$0xf]
        %v358 = vld [vmem:[#allocation5 + $0x4] sm:$0xf]
        %v359 = vld [vmem:[#allocation5 + $0x8] sm:$0xf]
        %v360 = vld [vmem:[#allocation5 + $0xc] sm:$0xf]
        %v361 = vld [vmem:[#allocation5 + $0x10] sm:$0xf]
        %v362 = vld [vmem:[#allocation5 + $0x14] sm:$0xf]
        %v363 = vld [vmem:[#allocation5 + $0x18] sm:$0xf]
        %v364 = vld [vmem:[#allocation5 + $0x1c] sm:$0xf]
        %v365 = vld [vmem:[#allocation5 + $0x20] sm:$0xf]
        %v366 = vld [vmem:[#allocation5 + $0x24] sm:$0xf]
        %v367 = vld [vmem:[#allocation5 + $0x28] sm:$0xf]
        %v368 = vld [vmem:[#allocation5 + $0x2c] sm:$0xf]
        %v369 = vld [vmem:[#allocation5 + $0x30] sm:$0xf]
        %v370 = vld [vmem:[#allocation5 + $0x34] sm:$0xf]
        %v371 = vld [vmem:[#allocation5 + $0x38] sm:$0xf]
        %v372 = vld [vmem:[#allocation5 + $0x3c] sm:$0xf]
        %v373 = vld [vmem:[#allocation7] sm:$0xf]
        %v374 = vld [vmem:[#allocation7 + $0x4] sm:$0xf]
        %v375 = vld [vmem:[#allocation7 + $0x8] sm:$0xf]
        %v376 = vld [vmem:[#allocation7 + $0xc] sm:$0xf]
        %v377 = vld [vmem:[#allocation7 + $0x10] sm:$0xf]
        %v378 = vld [vmem:[#allocation7 + $0x14] sm:$0xf]
        %v379 = vld [vmem:[#allocation7 + $0x18] sm:$0xf]
        %v380 = vld [vmem:[#allocation7 + $0x1c] sm:$0xf]
        %v381 = vld [vmem:[#allocation7 + $0x20] sm:$0xf]
        %v382 = vld [vmem:[#allocation7 + $0x24] sm:$0xf]
        %v383 = vld [vmem:[#allocation7 + $0x28] sm:$0xf]
        %v384 = vld [vmem:[#allocation7 + $0x2c] sm:$0xf]
        %v385 = vld [vmem:[#allocation7 + $0x30] sm:$0xf]
        %v386 = vld [vmem:[#allocation7 + $0x34] sm:$0xf]
        %v387 = vld [vmem:[#allocation7 + $0x38] sm:$0xf]
        %v388 = vld [vmem:[#allocation7 + $0x3c] sm:$0xf]
        %v389 = vld [vmem:[#allocation7 + $0x40] sm:$0xf]
        %v390 = vld [vmem:[#allocation7 + $0x44] sm:$0xf]
        %v391 = vld [vmem:[#allocation7 + $0x48] sm:$0xf]
        %v392 = vld [vmem:[#allocation7 + $0x4c] sm:$0xf]
        %v393 = vld [vmem:[#allocation7 + $0x50] sm:$0xf]
        %v394 = vld [vmem:[#allocation7 + $0x54] sm:$0xf]
        %v395 = vld [vmem:[#allocation7 + $0x58] sm:$0xf]
        %v396 = vld [vmem:[#allocation7 + $0x5c] sm:$0xf]
        %v397 = vld [vmem:[#allocation7 + $0x60] sm:$0xf]
        %v398 = vld [vmem:[#allocation7 + $0x64] sm:$0xf]
        %v399 = vld [vmem:[#allocation7 + $0x68] sm:$0xf]
        %v400 = vld [vmem:[#allocation7 + $0x6c] sm:$0xf]
        %v401 = vld [vmem:[#allocation7 + $0x70] sm:$0xf]
        %v402 = vld [vmem:[#allocation7 + $0x74] sm:$0xf]
        %v403 = vld [vmem:[#allocation7 + $0x78] sm:$0xf]
        %v404 = vld [vmem:[#allocation7 + $0x7c] sm:$0xf]
        %v405 = vld [vmem:[#allocation7 + $0x80] sm:$0xf]
        %v406 = vld [vmem:[#allocation7 + $0x84] sm:$0xf]
        %v407 = vld [vmem:[#allocation7 + $0x88] sm:$0xf]
        %v408 = vld [vmem:[#allocation7 + $0x8c] sm:$0xf]
        %v409 = vld [vmem:[#allocation7 + $0x90] sm:$0xf]
        %v410 = vld [vmem:[#allocation7 + $0x94] sm:$0xf]
        %v411 = vld [vmem:[#allocation7 + $0x98] sm:$0xf]
        %v412 = vld [vmem:[#allocation7 + $0x9c] sm:$0xf]
        %v413 = vld [vmem:[#allocation7 + $0xa0] sm:$0xf]
        %v414 = vld [vmem:[#allocation7 + $0xa4] sm:$0xf]
        %v415 = vld [vmem:[#allocation7 + $0xa8] sm:$0xf]
        %v416 = vld [vmem:[#allocation7 + $0xac] sm:$0xf]
        %v417 = vld [vmem:[#allocation7 + $0xb0] sm:$0xf]
        %v418 = vld [vmem:[#allocation7 + $0xb4] sm:$0xf]
        %v419 = vld [vmem:[#allocation7 + $0xb8] sm:$0xf]
        %v420 = vld [vmem:[#allocation7 + $0xbc] sm:$0xf]
        %v421 = vld [vmem:[#allocation7 + $0xc0] sm:$0xf]
        %v422 = vld [vmem:[#allocation7 + $0xc4] sm:$0xf]
        %v423 = vld [vmem:[#allocation7 + $0xc8] sm:$0xf]
        %v424 = vld [vmem:[#allocation7 + $0xcc] sm:$0xf]
        %v425 = vld [vmem:[#allocation7 + $0xd0] sm:$0xf]
        %v426 = vld [vmem:[#allocation7 + $0xd4] sm:$0xf]
        %v427 = vld [vmem:[#allocation7 + $0xd8] sm:$0xf]
        %v428 = vld [vmem:[#allocation7 + $0xdc] sm:$0xf]
        %v429 = vld [vmem:[#allocation7 + $0xe0] sm:$0xf]
        %v430 = vld [vmem:[#allocation7 + $0xe4] sm:$0xf]
        %v431 = vld [vmem:[#allocation7 + $0xe8] sm:$0xf]
        %v432 = vld [vmem:[#allocation7 + $0xec] sm:$0xf]
        %v433 = vld [vmem:[#allocation7 + $0xf0] sm:$0xf]
        %v434 = vld [vmem:[#allocation7 + $0xf4] sm:$0xf]
        %v435 = vld [vmem:[#allocation7 + $0xf8] sm:$0xf]
        %v436 = vld [vmem:[#allocation7 + $0xfc] sm:$0xf]
        %v437 = vld [vmem:[#allocation7 + $0x100] sm:$0xf]
        %v438 = vld [vmem:[#allocation7 + $0x104] sm:$0xf]
        %v439 = vld [vmem:[#allocation7 + $0x108] sm:$0xf]
        %v440 = vld [vmem:[#allocation7 + $0x10c] sm:$0xf]
        %v441 = vld [vmem:[#allocation7 + $0x110] sm:$0xf]
        %v442 = vld [vmem:[#allocation7 + $0x114] sm:$0xf]
        %v443 = vld [vmem:[#allocation7 + $0x118] sm:$0xf]
        %v444 = vld [vmem:[#allocation7 + $0x11c] sm:$0xf]
        %v445 = vld [vmem:[#allocation7 + $0x120] sm:$0xf]
        %v446 = vld [vmem:[#allocation7 + $0x124] sm:$0xf]
        %v447 = vld [vmem:[#allocation7 + $0x128] sm:$0xf]
        %v448 = vld [vmem:[#allocation7 + $0x12c] sm:$0xf]
        %v449 = vld [vmem:[#allocation7 + $0x130] sm:$0xf]
        %v450 = vld [vmem:[#allocation7 + $0x134] sm:$0xf]
        %v451 = vld [vmem:[#allocation7 + $0x138] sm:$0xf]
        %v452 = vld [vmem:[#allocation7 + $0x13c] sm:$0xf]
        %v453 = vld [vmem:[#allocation7 + $0x140] sm:$0xf]
        %v454 = vld [vmem:[#allocation7 + $0x144] sm:$0xf]
        %v455 = vld [vmem:[#allocation7 + $0x148] sm:$0xf]
        %v456 = vld [vmem:[#allocation7 + $0x14c] sm:$0xf]
        %v457 = vld [vmem:[#allocation7 + $0x150] sm:$0xf]
        %v458 = vld [vmem:[#allocation7 + $0x154] sm:$0xf]
        %v459 = vld [vmem:[#allocation7 + $0x158] sm:$0xf]
        %v460 = vld [vmem:[#allocation7 + $0x15c] sm:$0xf]
        %v461 = vld [vmem:[#allocation7 + $0x160] sm:$0xf]
        %v462 = vld [vmem:[#allocation7 + $0x164] sm:$0xf]
        %v463 = vld [vmem:[#allocation7 + $0x168] sm:$0xf]
        %v464 = vld [vmem:[#allocation7 + $0x16c] sm:$0xf]
        %v465 = vld [vmem:[#allocation7 + $0x170] sm:$0xf]
        %v466 = vld [vmem:[#allocation7 + $0x174] sm:$0xf]
        %v467 = vld [vmem:[#allocation7 + $0x178] sm:$0xf]
        %v468 = vld [vmem:[#allocation7 + $0x17c] sm:$0xf]
        %v469 = vld [vmem:[#allocation7 + $0x180] sm:$0xf]
        %v470 = vld [vmem:[#allocation7 + $0x184] sm:$0xf]
        %v471 = vld [vmem:[#allocation7 + $0x188] sm:$0xf]
        %v472 = vld [vmem:[#allocation7 + $0x18c] sm:$0xf]
        %v473 = vld [vmem:[#allocation7 + $0x190] sm:$0xf]
        %v474 = vld [vmem:[#allocation7 + $0x194] sm:$0xf]
        %v475 = vld [vmem:[#allocation7 + $0x198] sm:$0xf]
        %v476 = vld [vmem:[#allocation7 + $0x19c] sm:$0xf]
        %v477 = vld [vmem:[#allocation7 + $0x1a0] sm:$0xf]
        %v478 = vld [vmem:[#allocation7 + $0x1a4] sm:$0xf]
        %v479 = vld [vmem:[#allocation7 + $0x1a8] sm:$0xf]
        %v480 = vld [vmem:[#allocation7 + $0x1ac] sm:$0xf]
        %v481 = vld [vmem:[#allocation7 + $0x1b0] sm:$0xf]
        %v482 = vld [vmem:[#allocation7 + $0x1b4] sm:$0xf]
        %v483 = vld [vmem:[#allocation7 + $0x1b8] sm:$0xf]
        %v484 = vld [vmem:[#allocation7 + $0x1bc] sm:$0xf]
        %v485 = vld [vmem:[#allocation7 + $0x1c0] sm:$0xf]
        %v486 = vld [vmem:[#allocation7 + $0x1c4] sm:$0xf]
        %v487 = vld [vmem:[#allocation7 + $0x1c8] sm:$0xf]
        %v488 = vld [vmem:[#allocation7 + $0x1cc] sm:$0xf]
        %v489 = vld [vmem:[#allocation7 + $0x1d0] sm:$0xf]
        %v490 = vld [vmem:[#allocation7 + $0x1d4] sm:$0xf]
        %v491 = vld [vmem:[#allocation7 + $0x1d8] sm:$0xf]
        %v492 = vld [vmem:[#allocation7 + $0x1dc] sm:$0xf]
        %v493 = vld [vmem:[#allocation7 + $0x1e0] sm:$0xf]
        %v494 = vld [vmem:[#allocation7 + $0x1e4] sm:$0xf]
        %v495 = vld [vmem:[#allocation7 + $0x1e8] sm:$0xf]
        %v496 = vld [vmem:[#allocation7 + $0x1ec] sm:$0xf]
        %v497 = vld [vmem:[#allocation7 + $0x1f0] sm:$0xf]
        %v498 = vld [vmem:[#allocation7 + $0x1f4] sm:$0xf]
        %v499 = vld [vmem:[#allocation7 + $0x1f8] sm:$0xf]
        %v500 = vld [vmem:[#allocation7 + $0x1fc] sm:$0xf]
        %v501 = vld [vmem:[#allocation7 + $0x200] sm:$0xf]
        %v502 = vld [vmem:[#allocation7 + $0x204] sm:$0xf]
        %v503 = vld [vmem:[#allocation7 + $0x208] sm:$0xf]
        %v504 = vld [vmem:[#allocation7 + $0x20c] sm:$0xf]
        %v505 = vld [vmem:[#allocation7 + $0x210] sm:$0xf]
        %v506 = vld [vmem:[#allocation7 + $0x214] sm:$0xf]
        %v507 = vld [vmem:[#allocation7 + $0x218] sm:$0xf]
        %v508 = vld [vmem:[#allocation7 + $0x21c] sm:$0xf]
        %v509 = vld [vmem:[#allocation7 + $0x220] sm:$0xf]
        %v510 = vld [vmem:[#allocation7 + $0x224] sm:$0xf]
        %v511 = vld [vmem:[#allocation7 + $0x228] sm:$0xf]
        %v512 = vld [vmem:[#allocation7 + $0x22c] sm:$0xf]
        %v513 = vld [vmem:[#allocation7 + $0x230] sm:$0xf]
        %v514 = vld [vmem:[#allocation7 + $0x234] sm:$0xf]
        %v515 = vld [vmem:[#allocation7 + $0x238] sm:$0xf]
        %v516 = vld [vmem:[#allocation7 + $0x23c] sm:$0xf]
        %v517 = vld [vmem:[#allocation8] sm:$0xf]
        %v518 = vld [vmem:[#allocation8 + $0x4] sm:$0xf]
        %v519 = vld [vmem:[#allocation8 + $0x8] sm:$0xf]
        %v520 = vld [vmem:[#allocation8 + $0xc] sm:$0xf]
        %v521 = vld [vmem:[#allocation8 + $0x10] sm:$0xf]
        %v522 = vld [vmem:[#allocation8 + $0x14] sm:$0xf]
        %v523 = vld [vmem:[#allocation8 + $0x18] sm:$0xf]
        %v524 = vld [vmem:[#allocation8 + $0x1c] sm:$0xf]
        %v525 = vld [vmem:[#allocation8 + $0x20] sm:$0xf]
        %v526 = vld [vmem:[#allocation8 + $0x24] sm:$0xf]
        %v527 = vld [vmem:[#allocation8 + $0x28] sm:$0xf]
        %v528 = vld [vmem:[#allocation8 + $0x2c] sm:$0xf]
        %v529 = vld [vmem:[#allocation8 + $0x30] sm:$0xf]
        %v530 = vld [vmem:[#allocation8 + $0x34] sm:$0xf]
        %v531 = vld [vmem:[#allocation8 + $0x38] sm:$0xf]
        %v532 = vld [vmem:[#allocation8 + $0x3c] sm:$0xf]
        %v533 = vld [vmem:[%s2] sm:$0x1]
        %v534 = vld [vmem:[%s4] sm:$0x1]
        %v535 = vld [vmem:[%s6] sm:$0x1]
        %s536 = smul.u32 %s31, 24
        %s537 = smul.u32 %s536, 3
        %s538 = smul.addr %s537, 4
        %s539 = scalar_lea.vmem %s312, %s538 [#allocation2]
        %v540 = vld [vmem:[%s539] sm:$0xf]
        %v541 = vld [vmem:[%s539 + $0x4] sm:$0xf]
        %v542 = vld [vmem:[%s539 + $0x8] sm:$0xf]
        %v543 = vld [vmem:[%s539 + $0xc] sm:$0xf]
        %v544 = vld [vmem:[%s539 + $0x10] sm:$0xf]
        %v545 = vld [vmem:[%s539 + $0x14] sm:$0xf]
        %v546 = vld [vmem:[%s539 + $0x18] sm:$0xf]
        %v547 = vld [vmem:[%s539 + $0x1c] sm:$0xf]
        %v548 = vld [vmem:[%s539 + $0x20] sm:$0xf]
        %v549 = vld [vmem:[%s539 + $0x24] sm:$0xf]
        %v550 = vld [vmem:[%s539 + $0x28] sm:$0xf]
        %v551 = vld [vmem:[%s539 + $0x2c] sm:$0xf]
        %v552 = vld [vmem:[%s539 + $0x30] sm:$0xf]
        %v553 = vld [vmem:[%s539 + $0x34] sm:$0xf]
        %v554 = vld [vmem:[%s539 + $0x38] sm:$0xf]
        %v555 = vld [vmem:[%s539 + $0x3c] sm:$0xf]
        %v556 = vld [vmem:[%s539 + $0x40] sm:$0xf]
        %v557 = vld [vmem:[%s539 + $0x44] sm:$0xf]
        %v558 = vld [vmem:[%s539 + $0x48] sm:$0xf]
        %v559 = vld [vmem:[%s539 + $0x4c] sm:$0xf]
        %v560 = vld [vmem:[%s539 + $0x50] sm:$0xf]
        %v561 = vld [vmem:[%s539 + $0x54] sm:$0xf]
        %v562 = vld [vmem:[%s539 + $0x58] sm:$0xf]
        %v563 = vld [vmem:[%s539 + $0x5c] sm:$0xf]
        %v564 = vld [vmem:[%s539 + $0x60] sm:$0xf]
        %v565 = vld [vmem:[%s539 + $0x64] sm:$0xf]
        %v566 = vld [vmem:[%s539 + $0x68] sm:$0xf]
        %v567 = vld [vmem:[%s539 + $0x6c] sm:$0xf]
        %v568 = vld [vmem:[%s539 + $0x70] sm:$0xf]
        %v569 = vld [vmem:[%s539 + $0x74] sm:$0xf]
        %v570 = vld [vmem:[%s539 + $0x78] sm:$0xf]
        %v571 = vld [vmem:[%s539 + $0x7c] sm:$0xf]
        %v572 = vld [vmem:[%s539 + $0x80] sm:$0xf]
        %v573 = vld [vmem:[%s539 + $0x84] sm:$0xf]
        %v574 = vld [vmem:[%s539 + $0x88] sm:$0xf]
        %v575 = vld [vmem:[%s539 + $0x8c] sm:$0xf]
        %v576 = vld [vmem:[%s539 + $0x90] sm:$0xf]
        %v577 = vld [vmem:[%s539 + $0x94] sm:$0xf]
        %v578 = vld [vmem:[%s539 + $0x98] sm:$0xf]
        %v579 = vld [vmem:[%s539 + $0x9c] sm:$0xf]
        %v580 = vld [vmem:[%s539 + $0xa0] sm:$0xf]
        %v581 = vld [vmem:[%s539 + $0xa4] sm:$0xf]
        %v582 = vld [vmem:[%s539 + $0xa8] sm:$0xf]
        %v583 = vld [vmem:[%s539 + $0xac] sm:$0xf]
        %v584 = vld [vmem:[%s539 + $0xb0] sm:$0xf]
        %v585 = vld [vmem:[%s539 + $0xb4] sm:$0xf]
        %v586 = vld [vmem:[%s539 + $0xb8] sm:$0xf]
        %v587 = vld [vmem:[%s539 + $0xbc] sm:$0xf]
        %v588 = vld [vmem:[%s539 + $0xc0] sm:$0xf]
        %v589 = vld [vmem:[%s539 + $0xc4] sm:$0xf]
        %v590 = vld [vmem:[%s539 + $0xc8] sm:$0xf]
        %v591 = vld [vmem:[%s539 + $0xcc] sm:$0xf]
        %v592 = vld [vmem:[%s539 + $0xd0] sm:$0xf]
        %v593 = vld [vmem:[%s539 + $0xd4] sm:$0xf]
        %v594 = vld [vmem:[%s539 + $0xd8] sm:$0xf]
        %v595 = vld [vmem:[%s539 + $0xdc] sm:$0xf]
        %v596 = vld [vmem:[%s539 + $0xe0] sm:$0xf]
        %v597 = vld [vmem:[%s539 + $0xe4] sm:$0xf]
        %v598 = vld [vmem:[%s539 + $0xe8] sm:$0xf]
        %v599 = vld [vmem:[%s539 + $0xec] sm:$0xf]
        %v600 = vld [vmem:[%s539 + $0xf0] sm:$0xf]
        %v601 = vld [vmem:[%s539 + $0xf4] sm:$0xf]
        %v602 = vld [vmem:[%s539 + $0xf8] sm:$0xf]
        %v603 = vld [vmem:[%s539 + $0xfc] sm:$0xf]
        %v604 = vld [vmem:[%s539 + $0x100] sm:$0xf]
        %v605 = vld [vmem:[%s539 + $0x104] sm:$0xf]
        %v606 = vld [vmem:[%s539 + $0x108] sm:$0xf]
        %v607 = vld [vmem:[%s539 + $0x10c] sm:$0xf]
        %v608 = vld [vmem:[%s539 + $0x110] sm:$0xf]
        %v609 = vld [vmem:[%s539 + $0x114] sm:$0xf]
        %v610 = vld [vmem:[%s539 + $0x118] sm:$0xf]
        %v611 = vld [vmem:[%s539 + $0x11c] sm:$0xf]
        %v613 = vlaneseq
        %v614 = vshrl.u32 %v613, 7
        %v615 = vsub.s32 0, %v614
        %v616 = vrot.slane %v533, %v615
        %v690 = vunpack.c.l.b16 %v540
        %v691 = vunpack.c.l.b16 %v541
        %v692 = vunpack.c.l.b16 %v542
        %v693 = vunpack.c.l.b16 %v543
        %v694 = vunpack.c.l.b16 %v544
        %v695 = vunpack.c.l.b16 %v545
        %v696 = vunpack.c.l.b16 %v546
        %v697 = vunpack.c.l.b16 %v547
        %v698 = vunpack.c.l.b16 %v548
        %v699 = vunpack.c.l.b16 %v549
        %v700 = vunpack.c.l.b16 %v550
        %v701 = vunpack.c.l.b16 %v551
        %v702 = vunpack.c.l.b16 %v552
        %v703 = vunpack.c.l.b16 %v553
        %v704 = vunpack.c.l.b16 %v554
        %v705 = vunpack.c.l.b16 %v555
        %v706 = vunpack.c.l.b16 %v556
        %v707 = vunpack.c.l.b16 %v557
        %v708 = vunpack.c.l.b16 %v558
        %v709 = vunpack.c.l.b16 %v559
        %v710 = vunpack.c.l.b16 %v560
        %v711 = vunpack.c.l.b16 %v561
        %v712 = vunpack.c.l.b16 %v562
        %v713 = vunpack.c.l.b16 %v563
        %v714 = vunpack.c.l.b16 %v564
        %v715 = vunpack.c.l.b16 %v565
        %v716 = vunpack.c.l.b16 %v566
        %v717 = vunpack.c.l.b16 %v567
        %v718 = vunpack.c.l.b16 %v568
        %v719 = vunpack.c.l.b16 %v569
        %v720 = vunpack.c.l.b16 %v570
        %v721 = vunpack.c.l.b16 %v571
        %v722 = vunpack.c.l.b16 %v572
        %v723 = vunpack.c.l.b16 %v573
        %v724 = vunpack.c.l.b16 %v574
        %v725 = vunpack.c.l.b16 %v575
        %v726 = vunpack.c.l.b16 %v576
        %v727 = vunpack.c.l.b16 %v577
        %v728 = vunpack.c.l.b16 %v578
        %v729 = vunpack.c.l.b16 %v579
        %v730 = vunpack.c.l.b16 %v580
        %v731 = vunpack.c.l.b16 %v581
        %v732 = vunpack.c.l.b16 %v582
        %v733 = vunpack.c.l.b16 %v583
        %v734 = vunpack.c.l.b16 %v584
        %v735 = vunpack.c.l.b16 %v585
        %v736 = vunpack.c.l.b16 %v586
        %v737 = vunpack.c.l.b16 %v587
        %v738 = vunpack.c.l.b16 %v588
        %v739 = vunpack.c.l.b16 %v589
        %v740 = vunpack.c.l.b16 %v590
        %v741 = vunpack.c.l.b16 %v591
        %v742 = vunpack.c.l.b16 %v592
        %v743 = vunpack.c.l.b16 %v593
        %v744 = vunpack.c.l.b16 %v594
        %v745 = vunpack.c.l.b16 %v595
        %v746 = vunpack.c.l.b16 %v596
        %v747 = vunpack.c.l.b16 %v597
        %v748 = vunpack.c.l.b16 %v598
        %v749 = vunpack.c.l.b16 %v599
        %v750 = vunpack.c.l.b16 %v600
        %v751 = vunpack.c.l.b16 %v601
        %v752 = vunpack.c.l.b16 %v602
        %v753 = vunpack.c.l.b16 %v603
        %v754 = vunpack.c.l.b16 %v604
        %v755 = vunpack.c.l.b16 %v605
        %v756 = vunpack.c.l.b16 %v606
        %v757 = vunpack.c.l.b16 %v607
        %v758 = vunpack.c.l.b16 %v608
        %v759 = vunpack.c.l.b16 %v609
        %v760 = vunpack.c.l.b16 %v610
        %v761 = vunpack.c.l.b16 %v611
        %v762 = vpack.c.b16 %v691, %v690
        %v763 = vpack.c.b16 %v693, %v692
        %v764 = vpack.c.b16 %v695, %v694
        %v765 = vpack.c.b16 %v697, %v696
        %v766 = vpack.c.b16 %v699, %v698
        %v767 = vpack.c.b16 %v701, %v700
        %v768 = vpack.c.b16 %v703, %v702
        %v769 = vpack.c.b16 %v705, %v704
        %v770 = vpack.c.b16 %v707, %v706
        %v771 = vpack.c.b16 %v709, %v708
        %v772 = vpack.c.b16 %v711, %v710
        %v773 = vpack.c.b16 %v713, %v712
        %v774 = vpack.c.b16 %v715, %v714
        %v775 = vpack.c.b16 %v717, %v716
        %v776 = vpack.c.b16 %v719, %v718
        %v777 = vpack.c.b16 %v721, %v720
        %v778 = vpack.c.b16 %v723, %v722
        %v779 = vpack.c.b16 %v725, %v724
        %v780 = vpack.c.b16 %v727, %v726
        %v781 = vpack.c.b16 %v729, %v728
        %v782 = vpack.c.b16 %v731, %v730
        %v783 = vpack.c.b16 %v733, %v732
        %v784 = vpack.c.b16 %v735, %v734
        %v785 = vpack.c.b16 %v737, %v736
        %v786 = vpack.c.b16 %v739, %v738
        %v787 = vpack.c.b16 %v741, %v740
        %v788 = vpack.c.b16 %v743, %v742
        %v789 = vpack.c.b16 %v745, %v744
        %v790 = vpack.c.b16 %v747, %v746
        %v791 = vpack.c.b16 %v749, %v748
        %v792 = vpack.c.b16 %v751, %v750
        %v793 = vpack.c.b16 %v753, %v752
        %v794 = vpack.c.b16 %v755, %v754
        %v795 = vpack.c.b16 %v757, %v756
        %v796 = vpack.c.b16 %v759, %v758
        %v797 = vpack.c.b16 %v761, %v760
        %v850 = vunpack.c.l.b16 %v357
        %v851 = vunpack.c.l.b16 %v358
        %v852 = vunpack.c.l.b16 %v359
        %v853 = vunpack.c.l.b16 %v360
        %v854 = vunpack.c.l.b16 %v361
        %v855 = vunpack.c.l.b16 %v362
        %v856 = vunpack.c.l.b16 %v363
        %v857 = vunpack.c.l.b16 %v364
        %v858 = vunpack.c.l.b16 %v365
        %v859 = vunpack.c.l.b16 %v366
        %v860 = vunpack.c.l.b16 %v367
        %v861 = vunpack.c.l.b16 %v368
        %v862 = vunpack.c.l.b16 %v369
        %v863 = vunpack.c.l.b16 %v370
        %v864 = vunpack.c.l.b16 %v371
        %v865 = vunpack.c.l.b16 %v372
        %v866 = vpack.c.b16 %v851, %v850
        %v867 = vpack.c.b16 %v853, %v852
        %v868 = vpack.c.b16 %v855, %v854
        %v869 = vpack.c.b16 %v857, %v856
        %v870 = vpack.c.b16 %v859, %v858
        %v871 = vpack.c.b16 %v861, %v860
        %v872 = vpack.c.b16 %v863, %v862
        %v873 = vpack.c.b16 %v865, %v864
        %882 = vmatprep.subr.bf16.mxu0 0
        %883 = vmatpush1.bf16.msra.mxu0 %v873
        %884 = vmatprep.subr.bf16.mxu0 0
        %885 = vmatpush1.bf16.msra.mxu0 %v872
        %886 = vmatprep.subr.bf16.mxu0 0
        %887 = vmatpush1.bf16.msra.mxu0 %v871
        %888 = vmatprep.subr.bf16.mxu0 0
        %889 = vmatpush1.bf16.msra.mxu0 %v870
        %890 = vmatprep.subr.bf16.mxu0 0
        %891 = vmatpush1.bf16.msra.mxu0 %v869
        %892 = vmatprep.subr.bf16.mxu0 0
        %893 = vmatpush1.bf16.msra.mxu0 %v868
        %894 = vmatprep.subr.bf16.mxu0 0
        %895 = vmatpush1.bf16.msra.mxu0 %v867
        %896 = vmatprep.subr.bf16.mxu0 0
        %897 = vmatpush1.bf16.msra.mxu0 %v866
        %898 = vmatprep.subr.bf16.mxu0 0
        %899 = vmatpush2.bf16.msra.mxu0 0
        %900 = vmatprep.subr.bf16.mxu0 0
        %901 = vmatpush2.bf16.msra.mxu0 0
        %902 = vmatprep.subr.bf16.mxu0 0
        %903 = vmatpush2.bf16.msra.mxu0 0
        %904 = vmatprep.subr.bf16.mxu0 0
        %905 = vmatpush2.bf16.msra.mxu0 0
        %906 = vmatprep.subr.bf16.mxu0 0
        %907 = vmatpush2.bf16.msra.mxu0 0
        %908 = vmatprep.subr.bf16.mxu0 0
        %909 = vmatpush2.bf16.msra.mxu0 0
        %910 = vmatprep.subr.bf16.mxu0 0
        %911 = vmatpush2.bf16.msra.mxu0 0
        %912 = vmatprep.subr.bf16.mxu0 0
        %913 = vmatpush2.bf16.msra.mxu0 0
        %914 = vmatprep.mubr.bf16.mxu0 0
        %915 = vmatmul.mubr.bf16.gmra.mxu0 %v762
        %v916 = vpop.f32.mrf.mxu0
        %v917 = vadd.f32 %v616, %v916
        %v918 = vpop.f32.mrf.mxu0
        %v919 = vpop.f32.mrf.mxu0
        %v920 = vadd.f32 %v616, %v919
        %v921 = vpop.f32.mrf.mxu0
        %922 = vmatprep.mubr.bf16.mxu0 0
        %923 = vmatmul.mubr.bf16.gmra.mxu0 %v763
        %v924 = vpop.f32.mrf.mxu0
        %v925 = vadd.f32 %v616, %v924
        %v926 = vpop.f32.mrf.mxu0
        %v927 = vpop.f32.mrf.mxu0
        %v928 = vadd.f32 %v616, %v927
        %v929 = vpop.f32.mrf.mxu0
        %930 = vmatprep.mubr.bf16.mxu0 0
        %931 = vmatmul.mubr.bf16.gmra.mxu0 %v764
        %v932 = vpop.f32.mrf.mxu0
        %v933 = vadd.f32 %v616, %v932
        %v934 = vpop.f32.mrf.mxu0
        %v935 = vpop.f32.mrf.mxu0
        %v936 = vadd.f32 %v616, %v935
        %v937 = vpop.f32.mrf.mxu0
        %938 = vmatprep.mubr.bf16.mxu0 0
        %939 = vmatmul.mubr.bf16.gmra.mxu0 %v765
        %v940 = vpop.f32.mrf.mxu0
        %v941 = vadd.f32 %v616, %v940
        %v942 = vpop.f32.mrf.mxu0
        %v943 = vpop.f32.mrf.mxu0
        %v944 = vadd.f32 %v616, %v943
        %v945 = vpop.f32.mrf.mxu0
        %946 = vmatprep.mubr.bf16.mxu0 0
        %947 = vmatmul.mubr.bf16.gmra.mxu0 %v766
        %v948 = vpop.f32.mrf.mxu0
        %v949 = vadd.f32 %v616, %v948
        %v950 = vpop.f32.mrf.mxu0
        %v951 = vpop.f32.mrf.mxu0
        %v952 = vadd.f32 %v616, %v951
        %v953 = vpop.f32.mrf.mxu0
        %954 = vmatprep.mubr.bf16.mxu0 0
        %955 = vmatmul.mubr.bf16.gmra.mxu0 %v767
        %v956 = vpop.f32.mrf.mxu0
        %v957 = vadd.f32 %v616, %v956
        %v958 = vpop.f32.mrf.mxu0
        %v959 = vpop.f32.mrf.mxu0
        %v960 = vadd.f32 %v616, %v959
        %v961 = vpop.f32.mrf.mxu0
        %962 = vmatprep.mubr.bf16.mxu0 0
        %963 = vmatmul.mubr.bf16.gmra.mxu0 %v768
        %v964 = vpop.f32.mrf.mxu0
        %v965 = vadd.f32 %v616, %v964
        %v966 = vpop.f32.mrf.mxu0
        %v967 = vpop.f32.mrf.mxu0
        %v968 = vadd.f32 %v616, %v967
        %v969 = vpop.f32.mrf.mxu0
        %970 = vmatprep.mubr.bf16.mxu0 0
        %971 = vmatmul.mubr.bf16.gmra.mxu0 %v769
        %v972 = vpop.f32.mrf.mxu0
        %v973 = vadd.f32 %v616, %v972
        %v974 = vpop.f32.mrf.mxu0
        %v975 = vpop.f32.mrf.mxu0
        %v976 = vadd.f32 %v616, %v975
        %v977 = vpop.f32.mrf.mxu0
        %978 = vmatprep.mubr.bf16.mxu0 0
        %979 = vmatmul.mubr.bf16.gmra.mxu0 %v770
        %v980 = vpop.f32.mrf.mxu0
        %v981 = vadd.f32 %v616, %v980
        %v982 = vpop.f32.mrf.mxu0
        %v983 = vpop.f32.mrf.mxu0
        %v984 = vadd.f32 %v616, %v983
        %v985 = vpop.f32.mrf.mxu0
        %986 = vmatprep.mubr.bf16.mxu0 0
        %987 = vmatmul.mubr.bf16.gmra.mxu0 %v771
        %v988 = vpop.f32.mrf.mxu0
        %v989 = vadd.f32 %v616, %v988
        %v990 = vpop.f32.mrf.mxu0
        %v991 = vpop.f32.mrf.mxu0
        %v992 = vadd.f32 %v616, %v991
        %v993 = vpop.f32.mrf.mxu0
        %994 = vmatprep.mubr.bf16.mxu0 0
        %995 = vmatmul.mubr.bf16.gmra.mxu0 %v772
        %v996 = vpop.f32.mrf.mxu0
        %v997 = vadd.f32 %v616, %v996
        %v998 = vpop.f32.mrf.mxu0
        %v999 = vpop.f32.mrf.mxu0
        %v1000 = vadd.f32 %v616, %v999
        %v1001 = vpop.f32.mrf.mxu0
        %1002 = vmatprep.mubr.bf16.mxu0 0
        %1003 = vmatmul.mubr.bf16.gmra.mxu0 %v773
        %v1004 = vpop.f32.mrf.mxu0
        %v1005 = vadd.f32 %v616, %v1004
        %v1006 = vpop.f32.mrf.mxu0
        %v1007 = vpop.f32.mrf.mxu0
        %v1008 = vadd.f32 %v616, %v1007
        %v1009 = vpop.f32.mrf.mxu0
        %1010 = vmatprep.mubr.bf16.mxu0 0
        %1011 = vmatmul.mubr.bf16.gmra.mxu0 %v774
        %v1012 = vpop.f32.mrf.mxu0
        %v1013 = vadd.f32 %v616, %v1012
        %v1014 = vpop.f32.mrf.mxu0
        %v1015 = vpop.f32.mrf.mxu0
        %v1016 = vadd.f32 %v616, %v1015
        %v1017 = vpop.f32.mrf.mxu0
        %1018 = vmatprep.mubr.bf16.mxu0 0
        %1019 = vmatmul.mubr.bf16.gmra.mxu0 %v775
        %v1020 = vpop.f32.mrf.mxu0
        %v1021 = vadd.f32 %v616, %v1020
        %v1022 = vpop.f32.mrf.mxu0
        %v1023 = vpop.f32.mrf.mxu0
        %v1024 = vadd.f32 %v616, %v1023
        %v1025 = vpop.f32.mrf.mxu0
        %1026 = vmatprep.mubr.bf16.mxu0 0
        %1027 = vmatmul.mubr.bf16.gmra.mxu0 %v776
        %v1028 = vpop.f32.mrf.mxu0
        %v1029 = vadd.f32 %v616, %v1028
        %v1030 = vpop.f32.mrf.mxu0
        %v1031 = vpop.f32.mrf.mxu0
        %v1032 = vadd.f32 %v616, %v1031
        %v1033 = vpop.f32.mrf.mxu0
        %1034 = vmatprep.mubr.bf16.mxu0 0
        %1035 = vmatmul.mubr.bf16.gmra.mxu0 %v777
        %v1036 = vpop.f32.mrf.mxu0
        %v1037 = vadd.f32 %v616, %v1036
        %v1038 = vpop.f32.mrf.mxu0
        %v1039 = vpop.f32.mrf.mxu0
        %v1040 = vadd.f32 %v616, %v1039
        %v1041 = vpop.f32.mrf.mxu0
        %1042 = vmatprep.mubr.bf16.mxu0 0
        %1043 = vmatmul.mubr.bf16.gmra.mxu0 %v778
        %v1044 = vpop.f32.mrf.mxu0
        %v1045 = vadd.f32 %v616, %v1044
        %v1046 = vpop.f32.mrf.mxu0
        %v1047 = vpop.f32.mrf.mxu0
        %v1048 = vadd.f32 %v616, %v1047
        %v1049 = vpop.f32.mrf.mxu0
        %1050 = vmatprep.mubr.bf16.mxu0 0
        %1051 = vmatmul.mubr.bf16.gmra.mxu0 %v779
        %v1052 = vpop.f32.mrf.mxu0
        %v1053 = vadd.f32 %v616, %v1052
        %v1054 = vpop.f32.mrf.mxu0
        %v1055 = vpop.f32.mrf.mxu0
        %v1056 = vadd.f32 %v616, %v1055
        %v1057 = vpop.f32.mrf.mxu0
        %1058 = vmatprep.mubr.bf16.mxu0 0
        %1059 = vmatmul.mubr.bf16.gmra.mxu0 %v780
        %v1060 = vpop.f32.mrf.mxu0
        %v1061 = vadd.f32 %v616, %v1060
        %v1062 = vpop.f32.mrf.mxu0
        %v1063 = vpop.f32.mrf.mxu0
        %v1064 = vadd.f32 %v616, %v1063
        %v1065 = vpop.f32.mrf.mxu0
        %1066 = vmatprep.mubr.bf16.mxu0 0
        %1067 = vmatmul.mubr.bf16.gmra.mxu0 %v781
        %v1068 = vpop.f32.mrf.mxu0
        %v1069 = vadd.f32 %v616, %v1068
        %v1070 = vpop.f32.mrf.mxu0
        %v1071 = vpop.f32.mrf.mxu0
        %v1072 = vadd.f32 %v616, %v1071
        %v1073 = vpop.f32.mrf.mxu0
        %1074 = vmatprep.mubr.bf16.mxu0 0
        %1075 = vmatmul.mubr.bf16.gmra.mxu0 %v782
        %v1076 = vpop.f32.mrf.mxu0
        %v1077 = vadd.f32 %v616, %v1076
        %v1078 = vpop.f32.mrf.mxu0
        %v1079 = vpop.f32.mrf.mxu0
        %v1080 = vadd.f32 %v616, %v1079
        %v1081 = vpop.f32.mrf.mxu0
        %1082 = vmatprep.mubr.bf16.mxu0 0
        %1083 = vmatmul.mubr.bf16.gmra.mxu0 %v783
        %v1084 = vpop.f32.mrf.mxu0
        %v1085 = vadd.f32 %v616, %v1084
        %v1086 = vpop.f32.mrf.mxu0
        %v1087 = vpop.f32.mrf.mxu0
        %v1088 = vadd.f32 %v616, %v1087
        %v1089 = vpop.f32.mrf.mxu0
        %1090 = vmatprep.mubr.bf16.mxu0 0
        %1091 = vmatmul.mubr.bf16.gmra.mxu0 %v784
        %v1092 = vpop.f32.mrf.mxu0
        %v1093 = vadd.f32 %v616, %v1092
        %v1094 = vpop.f32.mrf.mxu0
        %v1095 = vpop.f32.mrf.mxu0
        %v1096 = vadd.f32 %v616, %v1095
        %v1097 = vpop.f32.mrf.mxu0
        %1098 = vmatprep.mubr.bf16.mxu0 0
        %1099 = vmatmul.mubr.bf16.gmra.mxu0 %v785
        %v1100 = vpop.f32.mrf.mxu0
        %v1101 = vadd.f32 %v616, %v1100
        %v1102 = vpop.f32.mrf.mxu0
        %v1103 = vpop.f32.mrf.mxu0
        %v1104 = vadd.f32 %v616, %v1103
        %v1105 = vpop.f32.mrf.mxu0
        %1106 = vmatprep.mubr.bf16.mxu0 0
        %1107 = vmatmul.mubr.bf16.gmra.mxu0 %v786
        %v1108 = vpop.f32.mrf.mxu0
        %v1109 = vadd.f32 %v616, %v1108
        %v1110 = vpop.f32.mrf.mxu0
        %v1111 = vpop.f32.mrf.mxu0
        %v1112 = vadd.f32 %v616, %v1111
        %v1113 = vpop.f32.mrf.mxu0
        %1114 = vmatprep.mubr.bf16.mxu0 0
        %1115 = vmatmul.mubr.bf16.gmra.mxu0 %v787
        %v1116 = vpop.f32.mrf.mxu0
        %v1117 = vadd.f32 %v616, %v1116
        %v1118 = vpop.f32.mrf.mxu0
        %v1119 = vpop.f32.mrf.mxu0
        %v1120 = vadd.f32 %v616, %v1119
        %v1121 = vpop.f32.mrf.mxu0
        %1122 = vmatprep.mubr.bf16.mxu0 0
        %1123 = vmatmul.mubr.bf16.gmra.mxu0 %v788
        %v1124 = vpop.f32.mrf.mxu0
        %v1125 = vadd.f32 %v616, %v1124
        %v1126 = vpop.f32.mrf.mxu0
        %v1127 = vpop.f32.mrf.mxu0
        %v1128 = vadd.f32 %v616, %v1127
        %v1129 = vpop.f32.mrf.mxu0
        %1130 = vmatprep.mubr.bf16.mxu0 0
        %1131 = vmatmul.mubr.bf16.gmra.mxu0 %v789
        %v1132 = vpop.f32.mrf.mxu0
        %v1133 = vadd.f32 %v616, %v1132
        %v1134 = vpop.f32.mrf.mxu0
        %v1135 = vpop.f32.mrf.mxu0
        %v1136 = vadd.f32 %v616, %v1135
        %v1137 = vpop.f32.mrf.mxu0
        %1138 = vmatprep.mubr.bf16.mxu0 0
        %1139 = vmatmul.mubr.bf16.gmra.mxu0 %v790
        %v1140 = vpop.f32.mrf.mxu0
        %v1141 = vadd.f32 %v616, %v1140
        %v1142 = vpop.f32.mrf.mxu0
        %v1143 = vpop.f32.mrf.mxu0
        %v1144 = vadd.f32 %v616, %v1143
        %v1145 = vpop.f32.mrf.mxu0
        %1146 = vmatprep.mubr.bf16.mxu0 0
        %1147 = vmatmul.mubr.bf16.gmra.mxu0 %v791
        %v1148 = vpop.f32.mrf.mxu0
        %v1149 = vadd.f32 %v616, %v1148
        %v1150 = vpop.f32.mrf.mxu0
        %v1151 = vpop.f32.mrf.mxu0
        %v1152 = vadd.f32 %v616, %v1151
        %v1153 = vpop.f32.mrf.mxu0
        %1154 = vmatprep.mubr.bf16.mxu0 0
        %1155 = vmatmul.mubr.bf16.gmra.mxu0 %v792
        %v1156 = vpop.f32.mrf.mxu0
        %v1157 = vadd.f32 %v616, %v1156
        %v1158 = vpop.f32.mrf.mxu0
        %v1159 = vpop.f32.mrf.mxu0
        %v1160 = vadd.f32 %v616, %v1159
        %v1161 = vpop.f32.mrf.mxu0
        %1162 = vmatprep.mubr.bf16.mxu0 0
        %1163 = vmatmul.mubr.bf16.gmra.mxu0 %v793
        %v1164 = vpop.f32.mrf.mxu0
        %v1165 = vadd.f32 %v616, %v1164
        %v1166 = vpop.f32.mrf.mxu0
        %v1167 = vpop.f32.mrf.mxu0
        %v1168 = vadd.f32 %v616, %v1167
        %v1169 = vpop.f32.mrf.mxu0
        %1170 = vmatprep.mubr.bf16.mxu0 0
        %1171 = vmatmul.mubr.bf16.gmra.mxu0 %v794
        %v1172 = vpop.f32.mrf.mxu0
        %v1173 = vadd.f32 %v616, %v1172
        %v1174 = vpop.f32.mrf.mxu0
        %v1175 = vpop.f32.mrf.mxu0
        %v1176 = vadd.f32 %v616, %v1175
        %v1177 = vpop.f32.mrf.mxu0
        %1178 = vmatprep.mubr.bf16.mxu0 0
        %1179 = vmatmul.mubr.bf16.gmra.mxu0 %v795
        %v1180 = vpop.f32.mrf.mxu0
        %v1181 = vadd.f32 %v616, %v1180
        %v1182 = vpop.f32.mrf.mxu0
        %v1183 = vpop.f32.mrf.mxu0
        %v1184 = vadd.f32 %v616, %v1183
        %v1185 = vpop.f32.mrf.mxu0
        %1186 = vmatprep.mubr.bf16.mxu0 0
        %1187 = vmatmul.mubr.bf16.gmra.mxu0 %v796
        %v1188 = vpop.f32.mrf.mxu0
        %v1189 = vadd.f32 %v616, %v1188
        %v1190 = vpop.f32.mrf.mxu0
        %v1191 = vpop.f32.mrf.mxu0
        %v1192 = vadd.f32 %v616, %v1191
        %v1193 = vpop.f32.mrf.mxu0
        %1194 = vmatprep.mubr.bf16.mxu0 0
        %1195 = vmatmul.mubr.bf16.gmra.mxu0 %v797
        %v1196 = vpop.f32.mrf.mxu0
        %v1197 = vadd.f32 %v616, %v1196
        %v1198 = vpop.f32.mrf.mxu0
        %v1199 = vpop.f32.mrf.mxu0
        %v1200 = vadd.f32 %v616, %v1199
        %v1201 = vpop.f32.mrf.mxu0
        %1202 = vdwg.mxu0
        %v1203 = vmax.f32 %v917, 0.0
        %v1204 = vmax.f32 %v920, 0.0
        %v1205 = vmax.f32 %v925, 0.0
        %v1206 = vmax.f32 %v928, 0.0
        %v1207 = vmax.f32 %v933, 0.0
        %v1208 = vmax.f32 %v936, 0.0
        %v1209 = vmax.f32 %v941, 0.0
        %v1210 = vmax.f32 %v944, 0.0
        %v1211 = vmax.f32 %v949, 0.0
        %v1212 = vmax.f32 %v952, 0.0
        %v1213 = vmax.f32 %v957, 0.0
        %v1214 = vmax.f32 %v960, 0.0
        %v1215 = vmax.f32 %v965, 0.0
        %v1216 = vmax.f32 %v968, 0.0
        %v1217 = vmax.f32 %v973, 0.0
        %v1218 = vmax.f32 %v976, 0.0
        %v1219 = vmax.f32 %v981, 0.0
        %v1220 = vmax.f32 %v984, 0.0
        %v1221 = vmax.f32 %v989, 0.0
        %v1222 = vmax.f32 %v992, 0.0
        %v1223 = vmax.f32 %v997, 0.0
        %v1224 = vmax.f32 %v1000, 0.0
        %v1225 = vmax.f32 %v1005, 0.0
        %v1226 = vmax.f32 %v1008, 0.0
        %v1227 = vmax.f32 %v1013, 0.0
        %v1228 = vmax.f32 %v1016, 0.0
        %v1229 = vmax.f32 %v1021, 0.0
        %v1230 = vmax.f32 %v1024, 0.0
        %v1231 = vmax.f32 %v1029, 0.0
        %v1232 = vmax.f32 %v1032, 0.0
        %v1233 = vmax.f32 %v1037, 0.0
        %v1234 = vmax.f32 %v1040, 0.0
        %v1235 = vmax.f32 %v1045, 0.0
        %v1236 = vmax.f32 %v1048, 0.0
        %v1237 = vmax.f32 %v1053, 0.0
        %v1238 = vmax.f32 %v1056, 0.0
        %v1239 = vmax.f32 %v1061, 0.0
        %v1240 = vmax.f32 %v1064, 0.0
        %v1241 = vmax.f32 %v1069, 0.0
        %v1242 = vmax.f32 %v1072, 0.0
        %v1243 = vmax.f32 %v1077, 0.0
        %v1244 = vmax.f32 %v1080, 0.0
        %v1245 = vmax.f32 %v1085, 0.0
        %v1246 = vmax.f32 %v1088, 0.0
        %v1247 = vmax.f32 %v1093, 0.0
        %v1248 = vmax.f32 %v1096, 0.0
        %v1249 = vmax.f32 %v1101, 0.0
        %v1250 = vmax.f32 %v1104, 0.0
        %v1251 = vmax.f32 %v1109, 0.0
        %v1252 = vmax.f32 %v1112, 0.0
        %v1253 = vmax.f32 %v1117, 0.0
        %v1254 = vmax.f32 %v1120, 0.0
        %v1255 = vmax.f32 %v1125, 0.0
        %v1256 = vmax.f32 %v1128, 0.0
        %v1257 = vmax.f32 %v1133, 0.0
        %v1258 = vmax.f32 %v1136, 0.0
        %v1259 = vmax.f32 %v1141, 0.0
        %v1260 = vmax.f32 %v1144, 0.0
        %v1261 = vmax.f32 %v1149, 0.0
        %v1262 = vmax.f32 %v1152, 0.0
        %v1263 = vmax.f32 %v1157, 0.0
        %v1264 = vmax.f32 %v1160, 0.0
        %v1265 = vmax.f32 %v1165, 0.0
        %v1266 = vmax.f32 %v1168, 0.0
        %v1267 = vmax.f32 %v1173, 0.0
        %v1268 = vmax.f32 %v1176, 0.0
        %v1269 = vmax.f32 %v1181, 0.0
        %v1270 = vmax.f32 %v1184, 0.0
        %v1271 = vmax.f32 %v1189, 0.0
        %v1272 = vmax.f32 %v1192, 0.0
        %v1273 = vmax.f32 %v1197, 0.0
        %v1274 = vmax.f32 %v1200, 0.0
        %s1275 = ssub.s32 %s536, 1
        %p1276 = scmp.gt.s32.totalorder %s1275, 0
        %s1277 = scalar_select %p1276, %s1275, 0
        %s1278 = smul.u32 %s1277, 3
        %s1279 = smul.addr %s1278, 4
        %s1280 = scalar_lea.vmem %s312, %s1279 [#allocation2]
        %v1281 = vld [vmem:[%s1280] sm:$0xf]
        %v1282 = vld [vmem:[%s1280 + $0x4] sm:$0xf]
        %v1283 = vld [vmem:[%s1280 + $0x8] sm:$0xf]
        %s1284 = sadd.s32 %s536, 24
        %p1285 = scmp.lt.s32.totalorder %s1284, 23
        %s1286 = scalar_select %p1285, %s1284, 23
        %s1287 = smul.u32 %s1286, 3
        %s1288 = smul.addr %s1287, 4
        %s1289 = scalar_lea.vmem %s312, %s1288 [#allocation2]
        %v1290 = vld [vmem:[%s1289] sm:$0xf]
        %v1291 = vld [vmem:[%s1289 + $0x4] sm:$0xf]
        %v1292 = vld [vmem:[%s1289 + $0x8] sm:$0xf]
        %v1299 = vunpack.c.l.b16 %v1281
        %v1300 = vunpack.c.l.b16 %v1282
        %v1301 = vunpack.c.l.b16 %v1283
        %v1302 = vunpack.c.l.b16 %v1290
        %v1303 = vunpack.c.l.b16 %v1291
        %v1304 = vunpack.c.l.b16 %v1292
        %v1305 = vpack.c.b16 %v1300, %v1299
        %v1306 = vpack.c.b16 %v1302, %v1301
        %v1307 = vpack.c.b16 %v1304, %v1303
        %1311 = vmatprep.subr.bf16.mxu0 0
        %1312 = vmatpush1.bf16.msra.mxu0 %v873
        %1313 = vmatprep.subr.bf16.mxu0 0
        %1314 = vmatpush1.bf16.msra.mxu0 %v872
        %1315 = vmatprep.subr.bf16.mxu0 0
        %1316 = vmatpush1.bf16.msra.mxu0 %v871
        %1317 = vmatprep.subr.bf16.mxu0 0
        %1318 = vmatpush1.bf16.msra.mxu0 %v870
        %1319 = vmatprep.subr.bf16.mxu0 0
        %1320 = vmatpush1.bf16.msra.mxu0 %v869
        %1321 = vmatprep.subr.bf16.mxu0 0
        %1322 = vmatpush1.bf16.msra.mxu0 %v868
        %1323 = vmatprep.subr.bf16.mxu0 0
        %1324 = vmatpush1.bf16.msra.mxu0 %v867
        %1325 = vmatprep.subr.bf16.mxu0 0
        %1326 = vmatpush1.bf16.msra.mxu0 %v866
        %1327 = vmatprep.subr.bf16.mxu0 0
        %1328 = vmatpush2.bf16.msra.mxu0 0
        %1329 = vmatprep.subr.bf16.mxu0 0
        %1330 = vmatpush2.bf16.msra.mxu0 0
        %1331 = vmatprep.subr.bf16.mxu0 0
        %1332 = vmatpush2.bf16.msra.mxu0 0
        %1333 = vmatprep.subr.bf16.mxu0 0
        %1334 = vmatpush2.bf16.msra.mxu0 0
        %1335 = vmatprep.subr.bf16.mxu0 0
        %1336 = vmatpush2.bf16.msra.mxu0 0
        %1337 = vmatprep.subr.bf16.mxu0 0
        %1338 = vmatpush2.bf16.msra.mxu0 0
        %1339 = vmatprep.subr.bf16.mxu0 0
        %1340 = vmatpush2.bf16.msra.mxu0 0
        %1341 = vmatprep.subr.bf16.mxu0 0
        %1342 = vmatpush2.bf16.msra.mxu0 0
        %1343 = vmatprep.mubr.bf16.mxu0 0
        %1344 = vmatmul.mubr.bf16.gmra.mxu0 %v1305
        %v1345 = vpop.f32.mrf.mxu0
        %v1346 = vadd.f32 %v616, %v1345
        %v1347 = vpop.f32.mrf.mxu0
        %v1348 = vpop.f32.mrf.mxu0
        %v1349 = vadd.f32 %v616, %v1348
        %v1350 = vpop.f32.mrf.mxu0
        %1351 = vmatprep.mubr.bf16.mxu0 0
        %1352 = vmatmul.mubr.bf16.gmra.mxu0 %v1306
        %v1353 = vpop.f32.mrf.mxu0
        %v1354 = vadd.f32 %v616, %v1353
        %v1355 = vpop.f32.mrf.mxu0
        %v1356 = vpop.f32.mrf.mxu0
        %v1357 = vadd.f32 %v616, %v1356
        %v1358 = vpop.f32.mrf.mxu0
        %1359 = vmatprep.mubr.bf16.mxu0 0
        %1360 = vmatmul.mubr.bf16.gmra.mxu0 %v1307
        %v1361 = vpop.f32.mrf.mxu0
        %v1362 = vadd.f32 %v616, %v1361
        %v1363 = vpop.f32.mrf.mxu0
        %v1364 = vpop.f32.mrf.mxu0
        %v1365 = vadd.f32 %v616, %v1364
        %v1366 = vpop.f32.mrf.mxu0
        %1367 = vdwg.mxu0
        %v1368 = vmax.f32 %v1346, 0.0
        %v1369 = vmax.f32 %v1349, 0.0
        %v1370 = vmax.f32 %v1354, 0.0
        %v1371 = vmax.f32 %v1357, 0.0
        %v1372 = vmax.f32 %v1362, 0.0
        %v1373 = vmax.f32 %v1365, 0.0
        %p1374 = scmp.gt.s32.totalorder %s536, 0
        %s1375 = scalar_select %p1374, 1, 0
        %s1376 = scvt.s32.f32 %s1375
        %v1377 = vstv %s1376
        %v1378 = vmul.f32 %v1368, %v1377
        %v1379 = vmul.f32 %v1369, %v1377
        %v1380 = vmul.f32 %v1370, %v1377
        %p1381 = scmp.lt.s32.totalorder %s1284, 24
        %s1382 = scalar_select %p1381, 1, 0
        %s1383 = scvt.s32.f32 %s1382
        %v1384 = vstv %s1383
        %v1385 = vmul.f32 %v1371, %v1384
        %v1386 = vmul.f32 %v1372, %v1384
        %v1387 = vmul.f32 %v1373, %v1384
        %v1388 = vlaneseq
        %v1389 = vshrl.u32 %v1388, 7
        %v1390 = vadd.s32 %v1389, 8
        %v1391 = vadd.s32 %v1389, 16
        %vm1392 = vcmp.gt.s32.totalorder %v1389, 0
        %vm1393 = vcmp.gt.s32.totalorder %v1390, 0
        %vm1394 = vcmp.gt.s32.totalorder %v1391, 0
        %v1395 = vsel %vm1392, 1, 0
        %v1396 = vsel %vm1393, 1, 0
        %v1397 = vsel %vm1394, 1, 0
        %v1398 = vcvt.s32.f32 %v1395
        %v1399 = vcvt.s32.f32 %v1396
        %v1400 = vcvt.s32.f32 %v1397
        %vm1401 = vcmp.lt.s32.totalorder %v1389, 23
        %vm1402 = vcmp.lt.s32.totalorder %v1390, 23
        %vm1403 = vcmp.lt.s32.totalorder %v1391, 23
        %v1404 = vsel %vm1401, 1, 0
        %v1405 = vsel %vm1402, 1, 0
        %v1406 = vsel %vm1403, 1, 0
        %v1407 = vcvt.s32.f32 %v1404
        %v1408 = vcvt.s32.f32 %v1405
        %v1409 = vcvt.s32.f32 %v1406
        %v1410 = vrot.slane %v1378, 7
        %v1411 = vrot.slane %v1203, 7
        %v1412 = vrot.slane %v1206, 7
        %v1413 = vrot.slane %v1209, 7
        %v1414 = vrot.slane %v1212, 7
        %v1415 = vrot.slane %v1215, 7
        %v1416 = vrot.slane %v1218, 7
        %v1417 = vrot.slane %v1221, 7
        %v1418 = vrot.slane %v1224, 7
        %v1419 = vrot.slane %v1227, 7
        %v1420 = vrot.slane %v1230, 7
        %v1421 = vrot.slane %v1233, 7
        %v1422 = vrot.slane %v1236, 7
        %v1423 = vrot.slane %v1239, 7
        %v1424 = vrot.slane %v1242, 7
        %v1425 = vrot.slane %v1245, 7
        %v1426 = vrot.slane %v1248, 7
        %v1427 = vrot.slane %v1251, 7
        %v1428 = vrot.slane %v1254, 7
        %v1429 = vrot.slane %v1257, 7
        %v1430 = vrot.slane %v1260, 7
        %v1431 = vrot.slane %v1263, 7
        %v1432 = vrot.slane %v1266, 7
        %v1433 = vrot.slane %v1269, 7
        %v1434 = vrot.slane %v1272, 7
        %v1435 = vrot.slane %v1385, 7
        %v1436 = vrot.slane %v1379, 7
        %v1437 = vrot.slane %v1204, 7
        %v1438 = vrot.slane %v1207, 7
        %v1439 = vrot.slane %v1210, 7
        %v1440 = vrot.slane %v1213, 7
        %v1441 = vrot.slane %v1216, 7
        %v1442 = vrot.slane %v1219, 7
        %v1443 = vrot.slane %v1222, 7
        %v1444 = vrot.slane %v1225, 7
        %v1445 = vrot.slane %v1228, 7
        %v1446 = vrot.slane %v1231, 7
        %v1447 = vrot.slane %v1234, 7
        %v1448 = vrot.slane %v1237, 7
        %v1449 = vrot.slane %v1240, 7
        %v1450 = vrot.slane %v1243, 7
        %v1451 = vrot.slane %v1246, 7
        %v1452 = vrot.slane %v1249, 7
        %v1453 = vrot.slane %v1252, 7
        %v1454 = vrot.slane %v1255, 7
        %v1455 = vrot.slane %v1258, 7
        %v1456 = vrot.slane %v1261, 7
        %v1457 = vrot.slane %v1264, 7
        %v1458 = vrot.slane %v1267, 7
        %v1459 = vrot.slane %v1270, 7
        %v1460 = vrot.slane %v1273, 7
        %v1461 = vrot.slane %v1386, 7
        %v1462 = vrot.slane %v1380, 7
        %v1463 = vrot.slane %v1205, 7
        %v1464 = vrot.slane %v1208, 7
        %v1465 = vrot.slane %v1211, 7
        %v1466 = vrot.slane %v1214, 7
        %v1467 = vrot.slane %v1217, 7
        %v1468 = vrot.slane %v1220, 7
        %v1469 = vrot.slane %v1223, 7
        %v1470 = vrot.slane %v1226, 7
        %v1471 = vrot.slane %v1229, 7
        %v1472 = vrot.slane %v1232, 7
        %v1473 = vrot.slane %v1235, 7
        %v1474 = vrot.slane %v1238, 7
        %v1475 = vrot.slane %v1241, 7
        %v1476 = vrot.slane %v1244, 7
        %v1477 = vrot.slane %v1247, 7
        %v1478 = vrot.slane %v1250, 7
        %v1479 = vrot.slane %v1253, 7
        %v1480 = vrot.slane %v1256, 7
        %v1481 = vrot.slane %v1259, 7
        %v1482 = vrot.slane %v1262, 7
        %v1483 = vrot.slane %v1265, 7
        %v1484 = vrot.slane %v1268, 7
        %v1485 = vrot.slane %v1271, 7
        %v1486 = vrot.slane %v1274, 7
        %v1487 = vrot.slane %v1387, 7
        %vm1488 = vcmp.lt.s32.totalorder %v1389, 1
        %v1489 = vsel %vm1488, %v1436, %v1462
        %v1490 = vsel %vm1488, %v1437, %v1463
        %v1491 = vsel %vm1488, %v1438, %v1464
        %v1492 = vsel %vm1488, %v1439, %v1465
        %v1493 = vsel %vm1488, %v1440, %v1466
        %v1494 = vsel %vm1488, %v1441, %v1467
        %v1495 = vsel %vm1488, %v1442, %v1468
        %v1496 = vsel %vm1488, %v1443, %v1469
        %v1497 = vsel %vm1488, %v1444, %v1470
        %v1498 = vsel %vm1488, %v1445, %v1471
        %v1499 = vsel %vm1488, %v1446, %v1472
        %v1500 = vsel %vm1488, %v1447, %v1473
        %v1501 = vsel %vm1488, %v1448, %v1474
        %v1502 = vsel %vm1488, %v1449, %v1475
        %v1503 = vsel %vm1488, %v1450, %v1476
        %v1504 = vsel %vm1488, %v1451, %v1477
        %v1505 = vsel %vm1488, %v1452, %v1478
        %v1506 = vsel %vm1488, %v1453, %v1479
        %v1507 = vsel %vm1488, %v1454, %v1480
        %v1508 = vsel %vm1488, %v1455, %v1481
        %v1509 = vsel %vm1488, %v1456, %v1482
        %v1510 = vsel %vm1488, %v1457, %v1483
        %v1511 = vsel %vm1488, %v1458, %v1484
        %v1512 = vsel %vm1488, %v1459, %v1485
        %v1513 = vsel %vm1488, %v1460, %v1486
        %v1514 = vsel %vm1488, %v1461, %v1487
        %v1515 = vsel %vm1488, %v1410, %v1436
        %v1516 = vsel %vm1488, %v1411, %v1437
        %v1517 = vsel %vm1488, %v1412, %v1438
        %v1518 = vsel %vm1488, %v1413, %v1439
        %v1519 = vsel %vm1488, %v1414, %v1440
        %v1520 = vsel %vm1488, %v1415, %v1441
        %v1521 = vsel %vm1488, %v1416, %v1442
        %v1522 = vsel %vm1488, %v1417, %v1443
        %v1523 = vsel %vm1488, %v1418, %v1444
        %v1524 = vsel %vm1488, %v1419, %v1445
        %v1525 = vsel %vm1488, %v1420, %v1446
        %v1526 = vsel %vm1488, %v1421, %v1447
        %v1527 = vsel %vm1488, %v1422, %v1448
        %v1528 = vsel %vm1488, %v1423, %v1449
        %v1529 = vsel %vm1488, %v1424, %v1450
        %v1530 = vsel %vm1488, %v1425, %v1451
        %v1531 = vsel %vm1488, %v1426, %v1452
        %v1532 = vsel %vm1488, %v1427, %v1453
        %v1533 = vsel %vm1488, %v1428, %v1454
        %v1534 = vsel %vm1488, %v1429, %v1455
        %v1535 = vsel %vm1488, %v1430, %v1456
        %v1536 = vsel %vm1488, %v1431, %v1457
        %v1537 = vsel %vm1488, %v1432, %v1458
        %v1538 = vsel %vm1488, %v1433, %v1459
        %v1539 = vsel %vm1488, %v1434, %v1460
        %v1540 = vsel %vm1488, %v1435, %v1461
        %v1541 = vsel %vm1488, %v1462, %v1410
        %v1542 = vsel %vm1488, %v1463, %v1411
        %v1543 = vsel %vm1488, %v1464, %v1412
        %v1544 = vsel %vm1488, %v1465, %v1413
        %v1545 = vsel %vm1488, %v1466, %v1414
        %v1546 = vsel %vm1488, %v1467, %v1415
        %v1547 = vsel %vm1488, %v1468, %v1416
        %v1548 = vsel %vm1488, %v1469, %v1417
        %v1549 = vsel %vm1488, %v1470, %v1418
        %v1550 = vsel %vm1488, %v1471, %v1419
        %v1551 = vsel %vm1488, %v1472, %v1420
        %v1552 = vsel %vm1488, %v1473, %v1421
        %v1553 = vsel %vm1488, %v1474, %v1422
        %v1554 = vsel %vm1488, %v1475, %v1423
        %v1555 = vsel %vm1488, %v1476, %v1424
        %v1556 = vsel %vm1488, %v1477, %v1425
        %v1557 = vsel %vm1488, %v1478, %v1426
        %v1558 = vsel %vm1488, %v1479, %v1427
        %v1559 = vsel %vm1488, %v1480, %v1428
        %v1560 = vsel %vm1488, %v1481, %v1429
        %v1561 = vsel %vm1488, %v1482, %v1430
        %v1562 = vsel %vm1488, %v1483, %v1431
        %v1563 = vsel %vm1488, %v1484, %v1432
        %v1564 = vsel %vm1488, %v1485, %v1433
        %v1565 = vsel %vm1488, %v1486, %v1434
        %v1566 = vsel %vm1488, %v1487, %v1435
        %v1567 = vrot.slane %v1378, 1
        %v1568 = vrot.slane %v1203, 1
        %v1569 = vrot.slane %v1206, 1
        %v1570 = vrot.slane %v1209, 1
        %v1571 = vrot.slane %v1212, 1
        %v1572 = vrot.slane %v1215, 1
        %v1573 = vrot.slane %v1218, 1
        %v1574 = vrot.slane %v1221, 1
        %v1575 = vrot.slane %v1224, 1
        %v1576 = vrot.slane %v1227, 1
        %v1577 = vrot.slane %v1230, 1
        %v1578 = vrot.slane %v1233, 1
        %v1579 = vrot.slane %v1236, 1
        %v1580 = vrot.slane %v1239, 1
        %v1581 = vrot.slane %v1242, 1
        %v1582 = vrot.slane %v1245, 1
        %v1583 = vrot.slane %v1248, 1
        %v1584 = vrot.slane %v1251, 1
        %v1585 = vrot.slane %v1254, 1
        %v1586 = vrot.slane %v1257, 1
        %v1587 = vrot.slane %v1260, 1
        %v1588 = vrot.slane %v1263, 1
        %v1589 = vrot.slane %v1266, 1
        %v1590 = vrot.slane %v1269, 1
        %v1591 = vrot.slane %v1272, 1
        %v1592 = vrot.slane %v1385, 1
        %v1593 = vrot.slane %v1379, 1
        %v1594 = vrot.slane %v1204, 1
        %v1595 = vrot.slane %v1207, 1
        %v1596 = vrot.slane %v1210, 1
        %v1597 = vrot.slane %v1213, 1
        %v1598 = vrot.slane %v1216, 1
        %v1599 = vrot.slane %v1219, 1
        %v1600 = vrot.slane %v1222, 1
        %v1601 = vrot.slane %v1225, 1
        %v1602 = vrot.slane %v1228, 1
        %v1603 = vrot.slane %v1231, 1
        %v1604 = vrot.slane %v1234, 1
        %v1605 = vrot.slane %v1237, 1
        %v1606 = vrot.slane %v1240, 1
        %v1607 = vrot.slane %v1243, 1
        %v1608 = vrot.slane %v1246, 1
        %v1609 = vrot.slane %v1249, 1
        %v1610 = vrot.slane %v1252, 1
        %v1611 = vrot.slane %v1255, 1
        %v1612 = vrot.slane %v1258, 1
        %v1613 = vrot.slane %v1261, 1
        %v1614 = vrot.slane %v1264, 1
        %v1615 = vrot.slane %v1267, 1
        %v1616 = vrot.slane %v1270, 1
        %v1617 = vrot.slane %v1273, 1
        %v1618 = vrot.slane %v1386, 1
        %v1619 = vrot.slane %v1380, 1
        %v1620 = vrot.slane %v1205, 1
        %v1621 = vrot.slane %v1208, 1
        %v1622 = vrot.slane %v1211, 1
        %v1623 = vrot.slane %v1214, 1
        %v1624 = vrot.slane %v1217, 1
        %v1625 = vrot.slane %v1220, 1
        %v1626 = vrot.slane %v1223, 1
        %v1627 = vrot.slane %v1226, 1
        %v1628 = vrot.slane %v1229, 1
        %v1629 = vrot.slane %v1232, 1
        %v1630 = vrot.slane %v1235, 1
        %v1631 = vrot.slane %v1238, 1
        %v1632 = vrot.slane %v1241, 1
        %v1633 = vrot.slane %v1244, 1
        %v1634 = vrot.slane %v1247, 1
        %v1635 = vrot.slane %v1250, 1
        %v1636 = vrot.slane %v1253, 1
        %v1637 = vrot.slane %v1256, 1
        %v1638 = vrot.slane %v1259, 1
        %v1639 = vrot.slane %v1262, 1
        %v1640 = vrot.slane %v1265, 1
        %v1641 = vrot.slane %v1268, 1
        %v1642 = vrot.slane %v1271, 1
        %v1643 = vrot.slane %v1274, 1
        %v1644 = vrot.slane %v1387, 1
        %vm1645 = vcmp.lt.s32.totalorder %v1389, 7
        %v1646 = vsel %vm1645, %v1593, %v1619
        %v1647 = vsel %vm1645, %v1594, %v1620
        %v1648 = vsel %vm1645, %v1595, %v1621
        %v1649 = vsel %vm1645, %v1596, %v1622
        %v1650 = vsel %vm1645, %v1597, %v1623
        %v1651 = vsel %vm1645, %v1598, %v1624
        %v1652 = vsel %vm1645, %v1599, %v1625
        %v1653 = vsel %vm1645, %v1600, %v1626
        %v1654 = vsel %vm1645, %v1601, %v1627
        %v1655 = vsel %vm1645, %v1602, %v1628
        %v1656 = vsel %vm1645, %v1603, %v1629
        %v1657 = vsel %vm1645, %v1604, %v1630
        %v1658 = vsel %vm1645, %v1605, %v1631
        %v1659 = vsel %vm1645, %v1606, %v1632
        %v1660 = vsel %vm1645, %v1607, %v1633
        %v1661 = vsel %vm1645, %v1608, %v1634
        %v1662 = vsel %vm1645, %v1609, %v1635
        %v1663 = vsel %vm1645, %v1610, %v1636
        %v1664 = vsel %vm1645, %v1611, %v1637
        %v1665 = vsel %vm1645, %v1612, %v1638
        %v1666 = vsel %vm1645, %v1613, %v1639
        %v1667 = vsel %vm1645, %v1614, %v1640
        %v1668 = vsel %vm1645, %v1615, %v1641
        %v1669 = vsel %vm1645, %v1616, %v1642
        %v1670 = vsel %vm1645, %v1617, %v1643
        %v1671 = vsel %vm1645, %v1618, %v1644
        %v1672 = vsel %vm1645, %v1567, %v1593
        %v1673 = vsel %vm1645, %v1568, %v1594
        %v1674 = vsel %vm1645, %v1569, %v1595
        %v1675 = vsel %vm1645, %v1570, %v1596
        %v1676 = vsel %vm1645, %v1571, %v1597
        %v1677 = vsel %vm1645, %v1572, %v1598
        %v1678 = vsel %vm1645, %v1573, %v1599
        %v1679 = vsel %vm1645, %v1574, %v1600
        %v1680 = vsel %vm1645, %v1575, %v1601
        %v1681 = vsel %vm1645, %v1576, %v1602
        %v1682 = vsel %vm1645, %v1577, %v1603
        %v1683 = vsel %vm1645, %v1578, %v1604
        %v1684 = vsel %vm1645, %v1579, %v1605
        %v1685 = vsel %vm1645, %v1580, %v1606
        %v1686 = vsel %vm1645, %v1581, %v1607
        %v1687 = vsel %vm1645, %v1582, %v1608
        %v1688 = vsel %vm1645, %v1583, %v1609
        %v1689 = vsel %vm1645, %v1584, %v1610
        %v1690 = vsel %vm1645, %v1585, %v1611
        %v1691 = vsel %vm1645, %v1586, %v1612
        %v1692 = vsel %vm1645, %v1587, %v1613
        %v1693 = vsel %vm1645, %v1588, %v1614
        %v1694 = vsel %vm1645, %v1589, %v1615
        %v1695 = vsel %vm1645, %v1590, %v1616
        %v1696 = vsel %vm1645, %v1591, %v1617
        %v1697 = vsel %vm1645, %v1592, %v1618
        %v1698 = vsel %vm1645, %v1619, %v1567
        %v1699 = vsel %vm1645, %v1620, %v1568
        %v1700 = vsel %vm1645, %v1621, %v1569
        %v1701 = vsel %vm1645, %v1622, %v1570
        %v1702 = vsel %vm1645, %v1623, %v1571
        %v1703 = vsel %vm1645, %v1624, %v1572
        %v1704 = vsel %vm1645, %v1625, %v1573
        %v1705 = vsel %vm1645, %v1626, %v1574
        %v1706 = vsel %vm1645, %v1627, %v1575
        %v1707 = vsel %vm1645, %v1628, %v1576
        %v1708 = vsel %vm1645, %v1629, %v1577
        %v1709 = vsel %vm1645, %v1630, %v1578
        %v1710 = vsel %vm1645, %v1631, %v1579
        %v1711 = vsel %vm1645, %v1632, %v1580
        %v1712 = vsel %vm1645, %v1633, %v1581
        %v1713 = vsel %vm1645, %v1634, %v1582
        %v1714 = vsel %vm1645, %v1635, %v1583
        %v1715 = vsel %vm1645, %v1636, %v1584
        %v1716 = vsel %vm1645, %v1637, %v1585
        %v1717 = vsel %vm1645, %v1638, %v1586
        %v1718 = vsel %vm1645, %v1639, %v1587
        %v1719 = vsel %vm1645, %v1640, %v1588
        %v1720 = vsel %vm1645, %v1641, %v1589
        %v1721 = vsel %vm1645, %v1642, %v1590
        %v1722 = vsel %vm1645, %v1643, %v1591
        %v1723 = vsel %vm1645, %v1644, %v1592
        %v1724 = vmul.f32 %v1541, %v1398
        %v1725 = vmul.f32 %v1515, %v1399
        %v1726 = vmul.f32 %v1489, %v1400
        %v1727 = vmul.f32 %v1542, %v1398
        %v1728 = vmul.f32 %v1516, %v1399
        %v1729 = vmul.f32 %v1490, %v1400
        %v1730 = vmul.f32 %v1543, %v1398
        %v1731 = vmul.f32 %v1517, %v1399
        %v1732 = vmul.f32 %v1491, %v1400
        %v1733 = vmul.f32 %v1544, %v1398
        %v1734 = vmul.f32 %v1518, %v1399
        %v1735 = vmul.f32 %v1492, %v1400
        %v1736 = vmul.f32 %v1545, %v1398
        %v1737 = vmul.f32 %v1519, %v1399
        %v1738 = vmul.f32 %v1493, %v1400
        %v1739 = vmul.f32 %v1546, %v1398
        %v1740 = vmul.f32 %v1520, %v1399
        %v1741 = vmul.f32 %v1494, %v1400
        %v1742 = vmul.f32 %v1547, %v1398
        %v1743 = vmul.f32 %v1521, %v1399
        %v1744 = vmul.f32 %v1495, %v1400
        %v1745 = vmul.f32 %v1548, %v1398
        %v1746 = vmul.f32 %v1522, %v1399
        %v1747 = vmul.f32 %v1496, %v1400
        %v1748 = vmul.f32 %v1549, %v1398
        %v1749 = vmul.f32 %v1523, %v1399
        %v1750 = vmul.f32 %v1497, %v1400
        %v1751 = vmul.f32 %v1550, %v1398
        %v1752 = vmul.f32 %v1524, %v1399
        %v1753 = vmul.f32 %v1498, %v1400
        %v1754 = vmul.f32 %v1551, %v1398
        %v1755 = vmul.f32 %v1525, %v1399
        %v1756 = vmul.f32 %v1499, %v1400
        %v1757 = vmul.f32 %v1552, %v1398
        %v1758 = vmul.f32 %v1526, %v1399
        %v1759 = vmul.f32 %v1500, %v1400
        %v1760 = vmul.f32 %v1553, %v1398
        %v1761 = vmul.f32 %v1527, %v1399
        %v1762 = vmul.f32 %v1501, %v1400
        %v1763 = vmul.f32 %v1554, %v1398
        %v1764 = vmul.f32 %v1528, %v1399
        %v1765 = vmul.f32 %v1502, %v1400
        %v1766 = vmul.f32 %v1555, %v1398
        %v1767 = vmul.f32 %v1529, %v1399
        %v1768 = vmul.f32 %v1503, %v1400
        %v1769 = vmul.f32 %v1556, %v1398
        %v1770 = vmul.f32 %v1530, %v1399
        %v1771 = vmul.f32 %v1504, %v1400
        %v1772 = vmul.f32 %v1557, %v1398
        %v1773 = vmul.f32 %v1531, %v1399
        %v1774 = vmul.f32 %v1505, %v1400
        %v1775 = vmul.f32 %v1558, %v1398
        %v1776 = vmul.f32 %v1532, %v1399
        %v1777 = vmul.f32 %v1506, %v1400
        %v1778 = vmul.f32 %v1559, %v1398
        %v1779 = vmul.f32 %v1533, %v1399
        %v1780 = vmul.f32 %v1507, %v1400
        %v1781 = vmul.f32 %v1560, %v1398
        %v1782 = vmul.f32 %v1534, %v1399
        %v1783 = vmul.f32 %v1508, %v1400
        %v1784 = vmul.f32 %v1561, %v1398
        %v1785 = vmul.f32 %v1535, %v1399
        %v1786 = vmul.f32 %v1509, %v1400
        %v1787 = vmul.f32 %v1562, %v1398
        %v1788 = vmul.f32 %v1536, %v1399
        %v1789 = vmul.f32 %v1510, %v1400
        %v1790 = vmul.f32 %v1563, %v1398
        %v1791 = vmul.f32 %v1537, %v1399
        %v1792 = vmul.f32 %v1511, %v1400
        %v1793 = vmul.f32 %v1564, %v1398
        %v1794 = vmul.f32 %v1538, %v1399
        %v1795 = vmul.f32 %v1512, %v1400
        %v1796 = vmul.f32 %v1565, %v1398
        %v1797 = vmul.f32 %v1539, %v1399
        %v1798 = vmul.f32 %v1513, %v1400
        %v1799 = vmul.f32 %v1566, %v1398
        %v1800 = vmul.f32 %v1540, %v1399
        %v1801 = vmul.f32 %v1514, %v1400
        %v1802 = vmul.f32 %v1672, %v1407
        %v1803 = vmul.f32 %v1646, %v1408
        %v1804 = vmul.f32 %v1698, %v1409
        %v1805 = vmul.f32 %v1673, %v1407
        %v1806 = vmul.f32 %v1647, %v1408
        %v1807 = vmul.f32 %v1699, %v1409
        %v1808 = vmul.f32 %v1674, %v1407
        %v1809 = vmul.f32 %v1648, %v1408
        %v1810 = vmul.f32 %v1700, %v1409
        %v1811 = vmul.f32 %v1675, %v1407
        %v1812 = vmul.f32 %v1649, %v1408
        %v1813 = vmul.f32 %v1701, %v1409
        %v1814 = vmul.f32 %v1676, %v1407
        %v1815 = vmul.f32 %v1650, %v1408
        %v1816 = vmul.f32 %v1702, %v1409
        %v1817 = vmul.f32 %v1677, %v1407
        %v1818 = vmul.f32 %v1651, %v1408
        %v1819 = vmul.f32 %v1703, %v1409
        %v1820 = vmul.f32 %v1678, %v1407
        %v1821 = vmul.f32 %v1652, %v1408
        %v1822 = vmul.f32 %v1704, %v1409
        %v1823 = vmul.f32 %v1679, %v1407
        %v1824 = vmul.f32 %v1653, %v1408
        %v1825 = vmul.f32 %v1705, %v1409
        %v1826 = vmul.f32 %v1680, %v1407
        %v1827 = vmul.f32 %v1654, %v1408
        %v1828 = vmul.f32 %v1706, %v1409
        %v1829 = vmul.f32 %v1681, %v1407
        %v1830 = vmul.f32 %v1655, %v1408
        %v1831 = vmul.f32 %v1707, %v1409
        %v1832 = vmul.f32 %v1682, %v1407
        %v1833 = vmul.f32 %v1656, %v1408
        %v1834 = vmul.f32 %v1708, %v1409
        %v1835 = vmul.f32 %v1683, %v1407
        %v1836 = vmul.f32 %v1657, %v1408
        %v1837 = vmul.f32 %v1709, %v1409
        %v1838 = vmul.f32 %v1684, %v1407
        %v1839 = vmul.f32 %v1658, %v1408
        %v1840 = vmul.f32 %v1710, %v1409
        %v1841 = vmul.f32 %v1685, %v1407
        %v1842 = vmul.f32 %v1659, %v1408
        %v1843 = vmul.f32 %v1711, %v1409
        %v1844 = vmul.f32 %v1686, %v1407
        %v1845 = vmul.f32 %v1660, %v1408
        %v1846 = vmul.f32 %v1712, %v1409
        %v1847 = vmul.f32 %v1687, %v1407
        %v1848 = vmul.f32 %v1661, %v1408
        %v1849 = vmul.f32 %v1713, %v1409
        %v1850 = vmul.f32 %v1688, %v1407
        %v1851 = vmul.f32 %v1662, %v1408
        %v1852 = vmul.f32 %v1714, %v1409
        %v1853 = vmul.f32 %v1689, %v1407
        %v1854 = vmul.f32 %v1663, %v1408
        %v1855 = vmul.f32 %v1715, %v1409
        %v1856 = vmul.f32 %v1690, %v1407
        %v1857 = vmul.f32 %v1664, %v1408
        %v1858 = vmul.f32 %v1716, %v1409
        %v1859 = vmul.f32 %v1691, %v1407
        %v1860 = vmul.f32 %v1665, %v1408
        %v1861 = vmul.f32 %v1717, %v1409
        %v1862 = vmul.f32 %v1692, %v1407
        %v1863 = vmul.f32 %v1666, %v1408
        %v1864 = vmul.f32 %v1718, %v1409
        %v1865 = vmul.f32 %v1693, %v1407
        %v1866 = vmul.f32 %v1667, %v1408
        %v1867 = vmul.f32 %v1719, %v1409
        %v1868 = vmul.f32 %v1694, %v1407
        %v1869 = vmul.f32 %v1668, %v1408
        %v1870 = vmul.f32 %v1720, %v1409
        %v1871 = vmul.f32 %v1695, %v1407
        %v1872 = vmul.f32 %v1669, %v1408
        %v1873 = vmul.f32 %v1721, %v1409
        %v1874 = vmul.f32 %v1696, %v1407
        %v1875 = vmul.f32 %v1670, %v1408
        %v1876 = vmul.f32 %v1722, %v1409
        %v1877 = vmul.f32 %v1697, %v1407
        %v1878 = vmul.f32 %v1671, %v1408
        %v1879 = vmul.f32 %v1723, %v1409
        %v1880 = vpack.c.bf16 %v1725, %v1724
        %v1881 = vpack.c.bf16 %v1379, %v1378
        %v1882 = vpack.c.bf16 %v1803, %v1802
        %v1883 = vpack.c.bf16 %v1727, %v1726
        %v1884 = vpack.c.bf16 %v1203, %v1380
        %v1885 = vpack.c.bf16 %v1805, %v1804
        %v1886 = vpack.c.bf16 %v1729, %v1728
        %v1887 = vpack.c.bf16 %v1205, %v1204
        %v1888 = vpack.c.bf16 %v1807, %v1806
        %v1889 = vpack.c.bf16 %v1731, %v1730
        %v1890 = vpack.c.bf16 %v1207, %v1206
        %v1891 = vpack.c.bf16 %v1809, %v1808
        %v1892 = vpack.c.bf16 %v1733, %v1732
        %v1893 = vpack.c.bf16 %v1209, %v1208
        %v1894 = vpack.c.bf16 %v1811, %v1810
        %v1895 = vpack.c.bf16 %v1735, %v1734
        %v1896 = vpack.c.bf16 %v1211, %v1210
        %v1897 = vpack.c.bf16 %v1813, %v1812
        %v1898 = vpack.c.bf16 %v1737, %v1736
        %v1899 = vpack.c.bf16 %v1213, %v1212
        %v1900 = vpack.c.bf16 %v1815, %v1814
        %v1901 = vpack.c.bf16 %v1739, %v1738
        %v1902 = vpack.c.bf16 %v1215, %v1214
        %v1903 = vpack.c.bf16 %v1817, %v1816
        %v1904 = vpack.c.bf16 %v1741, %v1740
        %v1905 = vpack.c.bf16 %v1217, %v1216
        %v1906 = vpack.c.bf16 %v1819, %v1818
        %v1907 = vpack.c.bf16 %v1743, %v1742
        %v1908 = vpack.c.bf16 %v1219, %v1218
        %v1909 = vpack.c.bf16 %v1821, %v1820
        %v1910 = vpack.c.bf16 %v1745, %v1744
        %v1911 = vpack.c.bf16 %v1221, %v1220
        %v1912 = vpack.c.bf16 %v1823, %v1822
        %v1913 = vpack.c.bf16 %v1747, %v1746
        %v1914 = vpack.c.bf16 %v1223, %v1222
        %v1915 = vpack.c.bf16 %v1825, %v1824
        %v1916 = vpack.c.bf16 %v1749, %v1748
        %v1917 = vpack.c.bf16 %v1225, %v1224
        %v1918 = vpack.c.bf16 %v1827, %v1826
        %v1919 = vpack.c.bf16 %v1751, %v1750
        %v1920 = vpack.c.bf16 %v1227, %v1226
        %v1921 = vpack.c.bf16 %v1829, %v1828
        %v1922 = vpack.c.bf16 %v1753, %v1752
        %v1923 = vpack.c.bf16 %v1229, %v1228
        %v1924 = vpack.c.bf16 %v1831, %v1830
        %v1925 = vpack.c.bf16 %v1755, %v1754
        %v1926 = vpack.c.bf16 %v1231, %v1230
        %v1927 = vpack.c.bf16 %v1833, %v1832
        %v1928 = vpack.c.bf16 %v1757, %v1756
        %v1929 = vpack.c.bf16 %v1233, %v1232
        %v1930 = vpack.c.bf16 %v1835, %v1834
        %v1931 = vpack.c.bf16 %v1759, %v1758
        %v1932 = vpack.c.bf16 %v1235, %v1234
        %v1933 = vpack.c.bf16 %v1837, %v1836
        %v1934 = vpack.c.bf16 %v1761, %v1760
        %v1935 = vpack.c.bf16 %v1237, %v1236
        %v1936 = vpack.c.bf16 %v1839, %v1838
        %v1937 = vpack.c.bf16 %v1763, %v1762
        %v1938 = vpack.c.bf16 %v1239, %v1238
        %v1939 = vpack.c.bf16 %v1841, %v1840
        %v1940 = vpack.c.bf16 %v1765, %v1764
        %v1941 = vpack.c.bf16 %v1241, %v1240
        %v1942 = vpack.c.bf16 %v1843, %v1842
        %v1943 = vpack.c.bf16 %v1767, %v1766
        %v1944 = vpack.c.bf16 %v1243, %v1242
        %v1945 = vpack.c.bf16 %v1845, %v1844
        %v1946 = vpack.c.bf16 %v1769, %v1768
        %v1947 = vpack.c.bf16 %v1245, %v1244
        %v1948 = vpack.c.bf16 %v1847, %v1846
        %v1949 = vpack.c.bf16 %v1771, %v1770
        %v1950 = vpack.c.bf16 %v1247, %v1246
        %v1951 = vpack.c.bf16 %v1849, %v1848
        %v1952 = vpack.c.bf16 %v1773, %v1772
        %v1953 = vpack.c.bf16 %v1249, %v1248
        %v1954 = vpack.c.bf16 %v1851, %v1850
        %v1955 = vpack.c.bf16 %v1775, %v1774
        %v1956 = vpack.c.bf16 %v1251, %v1250
        %v1957 = vpack.c.bf16 %v1853, %v1852
        %v1958 = vpack.c.bf16 %v1777, %v1776
        %v1959 = vpack.c.bf16 %v1253, %v1252
        %v1960 = vpack.c.bf16 %v1855, %v1854
        %v1961 = vpack.c.bf16 %v1779, %v1778
        %v1962 = vpack.c.bf16 %v1255, %v1254
        %v1963 = vpack.c.bf16 %v1857, %v1856
        %v1964 = vpack.c.bf16 %v1781, %v1780
        %v1965 = vpack.c.bf16 %v1257, %v1256
        %v1966 = vpack.c.bf16 %v1859, %v1858
        %v1967 = vpack.c.bf16 %v1783, %v1782
        %v1968 = vpack.c.bf16 %v1259, %v1258
        %v1969 = vpack.c.bf16 %v1861, %v1860
        %v1970 = vpack.c.bf16 %v1785, %v1784
        %v1971 = vpack.c.bf16 %v1261, %v1260
        %v1972 = vpack.c.bf16 %v1863, %v1862
        %v1973 = vpack.c.bf16 %v1787, %v1786
        %v1974 = vpack.c.bf16 %v1263, %v1262
        %v1975 = vpack.c.bf16 %v1865, %v1864
        %v1976 = vpack.c.bf16 %v1789, %v1788
        %v1977 = vpack.c.bf16 %v1265, %v1264
        %v1978 = vpack.c.bf16 %v1867, %v1866
        %v1979 = vpack.c.bf16 %v1791, %v1790
        %v1980 = vpack.c.bf16 %v1267, %v1266
        %v1981 = vpack.c.bf16 %v1869, %v1868
        %v1982 = vpack.c.bf16 %v1793, %v1792
        %v1983 = vpack.c.bf16 %v1269, %v1268
        %v1984 = vpack.c.bf16 %v1871, %v1870
        %v1985 = vpack.c.bf16 %v1795, %v1794
        %v1986 = vpack.c.bf16 %v1271, %v1270
        %v1987 = vpack.c.bf16 %v1873, %v1872
        %v1988 = vpack.c.bf16 %v1728, %v1727
        %v1989 = vpack.c.bf16 %v1204, %v1203
        %v1990 = vpack.c.bf16 %v1806, %v1805
        %v1991 = vpack.c.bf16 %v1730, %v1729
        %v1992 = vpack.c.bf16 %v1206, %v1205
        %v1993 = vpack.c.bf16 %v1808, %v1807
        %v1994 = vpack.c.bf16 %v1732, %v1731
        %v1995 = vpack.c.bf16 %v1208, %v1207
        %v1996 = vpack.c.bf16 %v1810, %v1809
        %v1997 = vpack.c.bf16 %v1734, %v1733
        %v1998 = vpack.c.bf16 %v1210, %v1209
        %v1999 = vpack.c.bf16 %v1812, %v1811
        %v2000 = vpack.c.bf16 %v1736, %v1735
        %v2001 = vpack.c.bf16 %v1212, %v1211
        %v2002 = vpack.c.bf16 %v1814, %v1813
        %v2003 = vpack.c.bf16 %v1738, %v1737
        %v2004 = vpack.c.bf16 %v1214, %v1213
        %v2005 = vpack.c.bf16 %v1816, %v1815
        %v2006 = vpack.c.bf16 %v1740, %v1739
        %v2007 = vpack.c.bf16 %v1216, %v1215
        %v2008 = vpack.c.bf16 %v1818, %v1817
        %v2009 = vpack.c.bf16 %v1742, %v1741
        %v2010 = vpack.c.bf16 %v1218, %v1217
        %v2011 = vpack.c.bf16 %v1820, %v1819
        %v2012 = vpack.c.bf16 %v1744, %v1743
        %v2013 = vpack.c.bf16 %v1220, %v1219
        %v2014 = vpack.c.bf16 %v1822, %v1821
        %v2015 = vpack.c.bf16 %v1746, %v1745
        %v2016 = vpack.c.bf16 %v1222, %v1221
        %v2017 = vpack.c.bf16 %v1824, %v1823
        %v2018 = vpack.c.bf16 %v1748, %v1747
        %v2019 = vpack.c.bf16 %v1224, %v1223
        %v2020 = vpack.c.bf16 %v1826, %v1825
        %v2021 = vpack.c.bf16 %v1750, %v1749
        %v2022 = vpack.c.bf16 %v1226, %v1225
        %v2023 = vpack.c.bf16 %v1828, %v1827
        %v2024 = vpack.c.bf16 %v1752, %v1751
        %v2025 = vpack.c.bf16 %v1228, %v1227
        %v2026 = vpack.c.bf16 %v1830, %v1829
        %v2027 = vpack.c.bf16 %v1754, %v1753
        %v2028 = vpack.c.bf16 %v1230, %v1229
        %v2029 = vpack.c.bf16 %v1832, %v1831
        %v2030 = vpack.c.bf16 %v1756, %v1755
        %v2031 = vpack.c.bf16 %v1232, %v1231
        %v2032 = vpack.c.bf16 %v1834, %v1833
        %v2033 = vpack.c.bf16 %v1758, %v1757
        %v2034 = vpack.c.bf16 %v1234, %v1233
        %v2035 = vpack.c.bf16 %v1836, %v1835
        %v2036 = vpack.c.bf16 %v1760, %v1759
        %v2037 = vpack.c.bf16 %v1236, %v1235
        %v2038 = vpack.c.bf16 %v1838, %v1837
        %v2039 = vpack.c.bf16 %v1762, %v1761
        %v2040 = vpack.c.bf16 %v1238, %v1237
        %v2041 = vpack.c.bf16 %v1840, %v1839
        %v2042 = vpack.c.bf16 %v1764, %v1763
        %v2043 = vpack.c.bf16 %v1240, %v1239
        %v2044 = vpack.c.bf16 %v1842, %v1841
        %v2045 = vpack.c.bf16 %v1766, %v1765
        %v2046 = vpack.c.bf16 %v1242, %v1241
        %v2047 = vpack.c.bf16 %v1844, %v1843
        %v2048 = vpack.c.bf16 %v1768, %v1767
        %v2049 = vpack.c.bf16 %v1244, %v1243
        %v2050 = vpack.c.bf16 %v1846, %v1845
        %v2051 = vpack.c.bf16 %v1770, %v1769
        %v2052 = vpack.c.bf16 %v1246, %v1245
        %v2053 = vpack.c.bf16 %v1848, %v1847
        %v2054 = vpack.c.bf16 %v1772, %v1771
        %v2055 = vpack.c.bf16 %v1248, %v1247
        %v2056 = vpack.c.bf16 %v1850, %v1849
        %v2057 = vpack.c.bf16 %v1774, %v1773
        %v2058 = vpack.c.bf16 %v1250, %v1249
        %v2059 = vpack.c.bf16 %v1852, %v1851
        %v2060 = vpack.c.bf16 %v1776, %v1775
        %v2061 = vpack.c.bf16 %v1252, %v1251
        %v2062 = vpack.c.bf16 %v1854, %v1853
        %v2063 = vpack.c.bf16 %v1778, %v1777
        %v2064 = vpack.c.bf16 %v1254, %v1253
        %v2065 = vpack.c.bf16 %v1856, %v1855
        %v2066 = vpack.c.bf16 %v1780, %v1779
        %v2067 = vpack.c.bf16 %v1256, %v1255
        %v2068 = vpack.c.bf16 %v1858, %v1857
        %v2069 = vpack.c.bf16 %v1782, %v1781
        %v2070 = vpack.c.bf16 %v1258, %v1257
        %v2071 = vpack.c.bf16 %v1860, %v1859
        %v2072 = vpack.c.bf16 %v1784, %v1783
        %v2073 = vpack.c.bf16 %v1260, %v1259
        %v2074 = vpack.c.bf16 %v1862, %v1861
        %v2075 = vpack.c.bf16 %v1786, %v1785
        %v2076 = vpack.c.bf16 %v1262, %v1261
        %v2077 = vpack.c.bf16 %v1864, %v1863
        %v2078 = vpack.c.bf16 %v1788, %v1787
        %v2079 = vpack.c.bf16 %v1264, %v1263
        %v2080 = vpack.c.bf16 %v1866, %v1865
        %v2081 = vpack.c.bf16 %v1790, %v1789
        %v2082 = vpack.c.bf16 %v1266, %v1265
        %v2083 = vpack.c.bf16 %v1868, %v1867
        %v2084 = vpack.c.bf16 %v1792, %v1791
        %v2085 = vpack.c.bf16 %v1268, %v1267
        %v2086 = vpack.c.bf16 %v1870, %v1869
        %v2087 = vpack.c.bf16 %v1794, %v1793
        %v2088 = vpack.c.bf16 %v1270, %v1269
        %v2089 = vpack.c.bf16 %v1872, %v1871
        %v2090 = vpack.c.bf16 %v1796, %v1795
        %v2091 = vpack.c.bf16 %v1272, %v1271
        %v2092 = vpack.c.bf16 %v1874, %v1873
        %v2093 = vpack.c.bf16 %v1798, %v1797
        %v2094 = vpack.c.bf16 %v1274, %v1273
        %v2095 = vpack.c.bf16 %v1876, %v1875
        %v2144 = vunpack.c.l.b16 %v421
        %v2145 = vunpack.c.l.b16 %v422
        %v2146 = vunpack.c.l.b16 %v423
        %v2147 = vunpack.c.l.b16 %v424
        %v2148 = vunpack.c.l.b16 %v425
        %v2149 = vunpack.c.l.b16 %v426
        %v2150 = vunpack.c.l.b16 %v427
        %v2151 = vunpack.c.l.b16 %v428
        %v2152 = vunpack.c.l.b16 %v429
        %v2153 = vunpack.c.l.b16 %v430
        %v2154 = vunpack.c.l.b16 %v431
        %v2155 = vunpack.c.l.b16 %v432
        %v2156 = vunpack.c.l.b16 %v433
        %v2157 = vunpack.c.l.b16 %v434
        %v2158 = vunpack.c.l.b16 %v435
        %v2159 = vunpack.c.l.b16 %v436
        %v2160 = vunpack.c.l.b16 %v437
        %v2161 = vunpack.c.l.b16 %v438
        %v2162 = vunpack.c.l.b16 %v439
        %v2163 = vunpack.c.l.b16 %v440
        %v2164 = vunpack.c.l.b16 %v441
        %v2165 = vunpack.c.l.b16 %v442
        %v2166 = vunpack.c.l.b16 %v443
        %v2167 = vunpack.c.l.b16 %v444
        %v2168 = vunpack.c.l.b16 %v445
        %v2169 = vunpack.c.l.b16 %v446
        %v2170 = vunpack.c.l.b16 %v447
        %v2171 = vunpack.c.l.b16 %v448
        %v2172 = vunpack.c.l.b16 %v449
        %v2173 = vunpack.c.l.b16 %v450
        %v2174 = vunpack.c.l.b16 %v451
        %v2175 = vunpack.c.l.b16 %v452
        %v2176 = vunpack.c.l.b16 %v453
        %v2177 = vunpack.c.l.b16 %v454
        %v2178 = vunpack.c.l.b16 %v455
        %v2179 = vunpack.c.l.b16 %v456
        %v2180 = vunpack.c.l.b16 %v457
        %v2181 = vunpack.c.l.b16 %v458
        %v2182 = vunpack.c.l.b16 %v459
        %v2183 = vunpack.c.l.b16 %v460
        %v2184 = vunpack.c.l.b16 %v461
        %v2185 = vunpack.c.l.b16 %v462
        %v2186 = vunpack.c.l.b16 %v463
        %v2187 = vunpack.c.l.b16 %v464
        %v2188 = vunpack.c.l.b16 %v465
        %v2189 = vunpack.c.l.b16 %v466
        %v2190 = vunpack.c.l.b16 %v467
        %v2191 = vunpack.c.l.b16 %v468
        %v2192 = vpack.c.b16 %v2145, %v2144
        %v2193 = vpack.c.b16 %v2147, %v2146
        %v2194 = vpack.c.b16 %v2149, %v2148
        %v2195 = vpack.c.b16 %v2151, %v2150
        %v2196 = vpack.c.b16 %v2153, %v2152
        %v2197 = vpack.c.b16 %v2155, %v2154
        %v2198 = vpack.c.b16 %v2157, %v2156
        %v2199 = vpack.c.b16 %v2159, %v2158
        %v2200 = vpack.c.b16 %v2161, %v2160
        %v2201 = vpack.c.b16 %v2163, %v2162
        %v2202 = vpack.c.b16 %v2165, %v2164
        %v2203 = vpack.c.b16 %v2167, %v2166
        %v2204 = vpack.c.b16 %v2169, %v2168
        %v2205 = vpack.c.b16 %v2171, %v2170
        %v2206 = vpack.c.b16 %v2173, %v2172
        %v2207 = vpack.c.b16 %v2175, %v2174
        %v2208 = vpack.c.b16 %v2177, %v2176
        %v2209 = vpack.c.b16 %v2179, %v2178
        %v2210 = vpack.c.b16 %v2181, %v2180
        %v2211 = vpack.c.b16 %v2183, %v2182
        %v2212 = vpack.c.b16 %v2185, %v2184
        %v2213 = vpack.c.b16 %v2187, %v2186
        %v2214 = vpack.c.b16 %v2189, %v2188
        %v2215 = vpack.c.b16 %v2191, %v2190
        %2240 = vmatprep.subr.bf16.mxu0 0
        %2241 = vmatpush1.bf16.msra.mxu0 %v2199
        %2242 = vmatprep.subr.bf16.mxu0 0
        %2243 = vmatpush1.bf16.msra.mxu0 %v2198
        %2244 = vmatprep.subr.bf16.mxu0 0
        %2245 = vmatpush1.bf16.msra.mxu0 %v2197
        %2246 = vmatprep.subr.bf16.mxu0 0
        %2247 = vmatpush1.bf16.msra.mxu0 %v2196
        %2248 = vmatprep.subr.bf16.mxu0 0
        %2249 = vmatpush1.bf16.msra.mxu0 %v2195
        %2250 = vmatprep.subr.bf16.mxu0 0
        %2251 = vmatpush1.bf16.msra.mxu0 %v2194
        %2252 = vmatprep.subr.bf16.mxu0 0
        %2253 = vmatpush1.bf16.msra.mxu0 %v2193
        %2254 = vmatprep.subr.bf16.mxu0 0
        %2255 = vmatpush1.bf16.msra.mxu0 %v2192
        %2256 = vmatprep.subr.bf16.mxu0 0
        %2257 = vmatpush2.bf16.msra.mxu0 %v2207
        %2258 = vmatprep.subr.bf16.mxu0 0
        %2259 = vmatpush2.bf16.msra.mxu0 %v2206
        %2260 = vmatprep.subr.bf16.mxu0 0
        %2261 = vmatpush2.bf16.msra.mxu0 %v2205
        %2262 = vmatprep.subr.bf16.mxu0 0
        %2263 = vmatpush2.bf16.msra.mxu0 %v2204
        %2264 = vmatprep.subr.bf16.mxu0 0
        %2265 = vmatpush2.bf16.msra.mxu0 %v2203
        %2266 = vmatprep.subr.bf16.mxu0 0
        %2267 = vmatpush2.bf16.msra.mxu0 %v2202
        %2268 = vmatprep.subr.bf16.mxu0 0
        %2269 = vmatpush2.bf16.msra.mxu0 %v2201
        %2270 = vmatprep.subr.bf16.mxu0 0
        %2271 = vmatpush2.bf16.msra.mxu0 %v2200
        %2272 = vmatprep.mubr.bf16.mxu0 %v1989
        %2273 = vmatmul.mubr.bf16.gmra.mxu0 %v1988
        %v2274 = vpop.f32.mrf.mxu0
        %v2275 = vadd.f32 0.0, %v2274
        %v2276 = vpop.f32.mrf.mxu0
        %v2277 = vpop.f32.mrf.mxu0
        %v2278 = vadd.f32 0.0, %v2277
        %v2279 = vpop.f32.mrf.mxu0
        %2280 = vmatprep.mubr.bf16.mxu0 %v1992
        %2281 = vmatmul.mubr.bf16.gmra.mxu0 %v1991
        %v2282 = vpop.f32.mrf.mxu0
        %v2283 = vadd.f32 0.0, %v2282
        %v2284 = vpop.f32.mrf.mxu0
        %v2285 = vpop.f32.mrf.mxu0
        %v2286 = vadd.f32 0.0, %v2285
        %v2287 = vpop.f32.mrf.mxu0
        %2288 = vmatprep.mubr.bf16.mxu0 %v1995
        %2289 = vmatmul.mubr.bf16.gmra.mxu0 %v1994
        %v2290 = vpop.f32.mrf.mxu0
        %v2291 = vadd.f32 0.0, %v2290
        %v2292 = vpop.f32.mrf.mxu0
        %v2293 = vpop.f32.mrf.mxu0
        %v2294 = vadd.f32 0.0, %v2293
        %v2295 = vpop.f32.mrf.mxu0
        %2296 = vmatprep.mubr.bf16.mxu0 %v1998
        %2297 = vmatmul.mubr.bf16.gmra.mxu0 %v1997
        %v2298 = vpop.f32.mrf.mxu0
        %v2299 = vadd.f32 0.0, %v2298
        %v2300 = vpop.f32.mrf.mxu0
        %v2301 = vpop.f32.mrf.mxu0
        %v2302 = vadd.f32 0.0, %v2301
        %v2303 = vpop.f32.mrf.mxu0
        %2304 = vmatprep.mubr.bf16.mxu0 %v2001
        %2305 = vmatmul.mubr.bf16.gmra.mxu0 %v2000
        %v2306 = vpop.f32.mrf.mxu0
        %v2307 = vadd.f32 0.0, %v2306
        %v2308 = vpop.f32.mrf.mxu0
        %v2309 = vpop.f32.mrf.mxu0
        %v2310 = vadd.f32 0.0, %v2309
        %v2311 = vpop.f32.mrf.mxu0
        %2312 = vmatprep.mubr.bf16.mxu0 %v2004
        %2313 = vmatmul.mubr.bf16.gmra.mxu0 %v2003
        %v2314 = vpop.f32.mrf.mxu0
        %v2315 = vadd.f32 0.0, %v2314
        %v2316 = vpop.f32.mrf.mxu0
        %v2317 = vpop.f32.mrf.mxu0
        %v2318 = vadd.f32 0.0, %v2317
        %v2319 = vpop.f32.mrf.mxu0
        %2320 = vmatprep.mubr.bf16.mxu0 %v2007
        %2321 = vmatmul.mubr.bf16.gmra.mxu0 %v2006
        %v2322 = vpop.f32.mrf.mxu0
        %v2323 = vadd.f32 0.0, %v2322
        %v2324 = vpop.f32.mrf.mxu0
        %v2325 = vpop.f32.mrf.mxu0
        %v2326 = vadd.f32 0.0, %v2325
        %v2327 = vpop.f32.mrf.mxu0
        %2328 = vmatprep.mubr.bf16.mxu0 %v2010
        %2329 = vmatmul.mubr.bf16.gmra.mxu0 %v2009
        %v2330 = vpop.f32.mrf.mxu0
        %v2331 = vadd.f32 0.0, %v2330
        %v2332 = vpop.f32.mrf.mxu0
        %v2333 = vpop.f32.mrf.mxu0
        %v2334 = vadd.f32 0.0, %v2333
        %v2335 = vpop.f32.mrf.mxu0
        %2336 = vmatprep.mubr.bf16.mxu0 %v2013
        %2337 = vmatmul.mubr.bf16.gmra.mxu0 %v2012
        %v2338 = vpop.f32.mrf.mxu0
        %v2339 = vadd.f32 0.0, %v2338
        %v2340 = vpop.f32.mrf.mxu0
        %v2341 = vpop.f32.mrf.mxu0
        %v2342 = vadd.f32 0.0, %v2341
        %v2343 = vpop.f32.mrf.mxu0
        %2344 = vmatprep.mubr.bf16.mxu0 %v2016
        %2345 = vmatmul.mubr.bf16.gmra.mxu0 %v2015
        %v2346 = vpop.f32.mrf.mxu0
        %v2347 = vadd.f32 0.0, %v2346
        %v2348 = vpop.f32.mrf.mxu0
        %v2349 = vpop.f32.mrf.mxu0
        %v2350 = vadd.f32 0.0, %v2349
        %v2351 = vpop.f32.mrf.mxu0
        %2352 = vmatprep.mubr.bf16.mxu0 %v2019
        %2353 = vmatmul.mubr.bf16.gmra.mxu0 %v2018
        %v2354 = vpop.f32.mrf.mxu0
        %v2355 = vadd.f32 0.0, %v2354
        %v2356 = vpop.f32.mrf.mxu0
        %v2357 = vpop.f32.mrf.mxu0
        %v2358 = vadd.f32 0.0, %v2357
        %v2359 = vpop.f32.mrf.mxu0
        %2360 = vmatprep.mubr.bf16.mxu0 %v2022
        %2361 = vmatmul.mubr.bf16.gmra.mxu0 %v2021
        %v2362 = vpop.f32.mrf.mxu0
        %v2363 = vadd.f32 0.0, %v2362
        %v2364 = vpop.f32.mrf.mxu0
        %v2365 = vpop.f32.mrf.mxu0
        %v2366 = vadd.f32 0.0, %v2365
        %v2367 = vpop.f32.mrf.mxu0
        %2368 = vmatprep.mubr.bf16.mxu0 %v2025
        %2369 = vmatmul.mubr.bf16.gmra.mxu0 %v2024
        %v2370 = vpop.f32.mrf.mxu0
        %v2371 = vadd.f32 0.0, %v2370
        %v2372 = vpop.f32.mrf.mxu0
        %v2373 = vpop.f32.mrf.mxu0
        %v2374 = vadd.f32 0.0, %v2373
        %v2375 = vpop.f32.mrf.mxu0
        %2376 = vmatprep.mubr.bf16.mxu0 %v2028
        %2377 = vmatmul.mubr.bf16.gmra.mxu0 %v2027
        %v2378 = vpop.f32.mrf.mxu0
        %v2379 = vadd.f32 0.0, %v2378
        %v2380 = vpop.f32.mrf.mxu0
        %v2381 = vpop.f32.mrf.mxu0
        %v2382 = vadd.f32 0.0, %v2381
        %v2383 = vpop.f32.mrf.mxu0
        %2384 = vmatprep.mubr.bf16.mxu0 %v2031
        %2385 = vmatmul.mubr.bf16.gmra.mxu0 %v2030
        %v2386 = vpop.f32.mrf.mxu0
        %v2387 = vadd.f32 0.0, %v2386
        %v2388 = vpop.f32.mrf.mxu0
        %v2389 = vpop.f32.mrf.mxu0
        %v2390 = vadd.f32 0.0, %v2389
        %v2391 = vpop.f32.mrf.mxu0
        %2392 = vmatprep.mubr.bf16.mxu0 %v2034
        %2393 = vmatmul.mubr.bf16.gmra.mxu0 %v2033
        %v2394 = vpop.f32.mrf.mxu0
        %v2395 = vadd.f32 0.0, %v2394
        %v2396 = vpop.f32.mrf.mxu0
        %v2397 = vpop.f32.mrf.mxu0
        %v2398 = vadd.f32 0.0, %v2397
        %v2399 = vpop.f32.mrf.mxu0
        %2400 = vmatprep.mubr.bf16.mxu0 %v2037
        %2401 = vmatmul.mubr.bf16.gmra.mxu0 %v2036
        %v2402 = vpop.f32.mrf.mxu0
        %v2403 = vadd.f32 0.0, %v2402
        %v2404 = vpop.f32.mrf.mxu0
        %v2405 = vpop.f32.mrf.mxu0
        %v2406 = vadd.f32 0.0, %v2405
        %v2407 = vpop.f32.mrf.mxu0
        %2408 = vmatprep.mubr.bf16.mxu0 %v2040
        %2409 = vmatmul.mubr.bf16.gmra.mxu0 %v2039
        %v2410 = vpop.f32.mrf.mxu0
        %v2411 = vadd.f32 0.0, %v2410
        %v2412 = vpop.f32.mrf.mxu0
        %v2413 = vpop.f32.mrf.mxu0
        %v2414 = vadd.f32 0.0, %v2413
        %v2415 = vpop.f32.mrf.mxu0
        %2416 = vmatprep.mubr.bf16.mxu0 %v2043
        %2417 = vmatmul.mubr.bf16.gmra.mxu0 %v2042
        %v2418 = vpop.f32.mrf.mxu0
        %v2419 = vadd.f32 0.0, %v2418
        %v2420 = vpop.f32.mrf.mxu0
        %v2421 = vpop.f32.mrf.mxu0
        %v2422 = vadd.f32 0.0, %v2421
        %v2423 = vpop.f32.mrf.mxu0
        %2424 = vmatprep.mubr.bf16.mxu0 %v2046
        %2425 = vmatmul.mubr.bf16.gmra.mxu0 %v2045
        %v2426 = vpop.f32.mrf.mxu0
        %v2427 = vadd.f32 0.0, %v2426
        %v2428 = vpop.f32.mrf.mxu0
        %v2429 = vpop.f32.mrf.mxu0
        %v2430 = vadd.f32 0.0, %v2429
        %v2431 = vpop.f32.mrf.mxu0
        %2432 = vmatprep.mubr.bf16.mxu0 %v2049
        %2433 = vmatmul.mubr.bf16.gmra.mxu0 %v2048
        %v2434 = vpop.f32.mrf.mxu0
        %v2435 = vadd.f32 0.0, %v2434
        %v2436 = vpop.f32.mrf.mxu0
        %v2437 = vpop.f32.mrf.mxu0
        %v2438 = vadd.f32 0.0, %v2437
        %v2439 = vpop.f32.mrf.mxu0
        %2440 = vmatprep.mubr.bf16.mxu0 %v2052
        %2441 = vmatmul.mubr.bf16.gmra.mxu0 %v2051
        %v2442 = vpop.f32.mrf.mxu0
        %v2443 = vadd.f32 0.0, %v2442
        %v2444 = vpop.f32.mrf.mxu0
        %v2445 = vpop.f32.mrf.mxu0
        %v2446 = vadd.f32 0.0, %v2445
        %v2447 = vpop.f32.mrf.mxu0
        %2448 = vmatprep.mubr.bf16.mxu0 %v2055
        %2449 = vmatmul.mubr.bf16.gmra.mxu0 %v2054
        %v2450 = vpop.f32.mrf.mxu0
        %v2451 = vadd.f32 0.0, %v2450
        %v2452 = vpop.f32.mrf.mxu0
        %v2453 = vpop.f32.mrf.mxu0
        %v2454 = vadd.f32 0.0, %v2453
        %v2455 = vpop.f32.mrf.mxu0
        %2456 = vmatprep.mubr.bf16.mxu0 %v2058
        %2457 = vmatmul.mubr.bf16.gmra.mxu0 %v2057
        %v2458 = vpop.f32.mrf.mxu0
        %v2459 = vadd.f32 0.0, %v2458
        %v2460 = vpop.f32.mrf.mxu0
        %v2461 = vpop.f32.mrf.mxu0
        %v2462 = vadd.f32 0.0, %v2461
        %v2463 = vpop.f32.mrf.mxu0
        %2464 = vmatprep.mubr.bf16.mxu0 %v2061
        %2465 = vmatmul.mubr.bf16.gmra.mxu0 %v2060
        %v2466 = vpop.f32.mrf.mxu0
        %v2467 = vadd.f32 0.0, %v2466
        %v2468 = vpop.f32.mrf.mxu0
        %v2469 = vpop.f32.mrf.mxu0
        %v2470 = vadd.f32 0.0, %v2469
        %v2471 = vpop.f32.mrf.mxu0
        %2472 = vmatprep.mubr.bf16.mxu0 %v2064
        %2473 = vmatmul.mubr.bf16.gmra.mxu0 %v2063
        %v2474 = vpop.f32.mrf.mxu0
        %v2475 = vadd.f32 0.0, %v2474
        %v2476 = vpop.f32.mrf.mxu0
        %v2477 = vpop.f32.mrf.mxu0
        %v2478 = vadd.f32 0.0, %v2477
        %v2479 = vpop.f32.mrf.mxu0
        %2480 = vmatprep.mubr.bf16.mxu0 %v2067
        %2481 = vmatmul.mubr.bf16.gmra.mxu0 %v2066
        %v2482 = vpop.f32.mrf.mxu0
        %v2483 = vadd.f32 0.0, %v2482
        %v2484 = vpop.f32.mrf.mxu0
        %v2485 = vpop.f32.mrf.mxu0
        %v2486 = vadd.f32 0.0, %v2485
        %v2487 = vpop.f32.mrf.mxu0
        %2488 = vmatprep.mubr.bf16.mxu0 %v2070
        %2489 = vmatmul.mubr.bf16.gmra.mxu0 %v2069
        %v2490 = vpop.f32.mrf.mxu0
        %v2491 = vadd.f32 0.0, %v2490
        %v2492 = vpop.f32.mrf.mxu0
        %v2493 = vpop.f32.mrf.mxu0
        %v2494 = vadd.f32 0.0, %v2493
        %v2495 = vpop.f32.mrf.mxu0
        %2496 = vmatprep.mubr.bf16.mxu0 %v2073
        %2497 = vmatmul.mubr.bf16.gmra.mxu0 %v2072
        %v2498 = vpop.f32.mrf.mxu0
        %v2499 = vadd.f32 0.0, %v2498
        %v2500 = vpop.f32.mrf.mxu0
        %v2501 = vpop.f32.mrf.mxu0
        %v2502 = vadd.f32 0.0, %v2501
        %v2503 = vpop.f32.mrf.mxu0
        %2504 = vmatprep.mubr.bf16.mxu0 %v2076
        %2505 = vmatmul.mubr.bf16.gmra.mxu0 %v2075
        %v2506 = vpop.f32.mrf.mxu0
        %v2507 = vadd.f32 0.0, %v2506
        %v2508 = vpop.f32.mrf.mxu0
        %v2509 = vpop.f32.mrf.mxu0
        %v2510 = vadd.f32 0.0, %v2509
        %v2511 = vpop.f32.mrf.mxu0
        %2512 = vmatprep.mubr.bf16.mxu0 %v2079
        %2513 = vmatmul.mubr.bf16.gmra.mxu0 %v2078
        %v2514 = vpop.f32.mrf.mxu0
        %v2515 = vadd.f32 0.0, %v2514
        %v2516 = vpop.f32.mrf.mxu0
        %v2517 = vpop.f32.mrf.mxu0
        %v2518 = vadd.f32 0.0, %v2517
        %v2519 = vpop.f32.mrf.mxu0
        %2520 = vmatprep.mubr.bf16.mxu0 %v2082
        %2521 = vmatmul.mubr.bf16.gmra.mxu0 %v2081
        %v2522 = vpop.f32.mrf.mxu0
        %v2523 = vadd.f32 0.0, %v2522
        %v2524 = vpop.f32.mrf.mxu0
        %v2525 = vpop.f32.mrf.mxu0
        %v2526 = vadd.f32 0.0, %v2525
        %v2527 = vpop.f32.mrf.mxu0
        %2528 = vmatprep.mubr.bf16.mxu0 %v2085
        %2529 = vmatmul.mubr.bf16.gmra.mxu0 %v2084
        %v2530 = vpop.f32.mrf.mxu0
        %v2531 = vadd.f32 0.0, %v2530
        %v2532 = vpop.f32.mrf.mxu0
        %v2533 = vpop.f32.mrf.mxu0
        %v2534 = vadd.f32 0.0, %v2533
        %v2535 = vpop.f32.mrf.mxu0
        %2536 = vmatprep.mubr.bf16.mxu0 %v2088
        %2537 = vmatmul.mubr.bf16.gmra.mxu0 %v2087
        %v2538 = vpop.f32.mrf.mxu0
        %v2539 = vadd.f32 0.0, %v2538
        %v2540 = vpop.f32.mrf.mxu0
        %v2541 = vpop.f32.mrf.mxu0
        %v2542 = vadd.f32 0.0, %v2541
        %v2543 = vpop.f32.mrf.mxu0
        %2544 = vmatprep.mubr.bf16.mxu0 %v2091
        %2545 = vmatmul.mubr.bf16.gmra.mxu0 %v2090
        %v2546 = vpop.f32.mrf.mxu0
        %v2547 = vadd.f32 0.0, %v2546
        %v2548 = vpop.f32.mrf.mxu0
        %v2549 = vpop.f32.mrf.mxu0
        %v2550 = vadd.f32 0.0, %v2549
        %v2551 = vpop.f32.mrf.mxu0
        %2552 = vmatprep.mubr.bf16.mxu0 %v2094
        %2553 = vmatmul.mubr.bf16.gmra.mxu0 %v2093
        %v2554 = vpop.f32.mrf.mxu0
        %v2555 = vadd.f32 0.0, %v2554
        %v2556 = vpop.f32.mrf.mxu0
        %v2557 = vpop.f32.mrf.mxu0
        %v2558 = vadd.f32 0.0, %v2557
        %v2559 = vpop.f32.mrf.mxu0
        %2560 = vdwg.mxu0
        %2561 = vmatprep.subr.bf16.mxu0 0
        %2562 = vmatpush1.bf16.msra.mxu0 %v2215
        %2563 = vmatprep.subr.bf16.mxu0 0
        %2564 = vmatpush1.bf16.msra.mxu0 %v2214
        %2565 = vmatprep.subr.bf16.mxu0 0
        %2566 = vmatpush1.bf16.msra.mxu0 %v2213
        %2567 = vmatprep.subr.bf16.mxu0 0
        %2568 = vmatpush1.bf16.msra.mxu0 %v2212
        %2569 = vmatprep.subr.bf16.mxu0 0
        %2570 = vmatpush1.bf16.msra.mxu0 %v2211
        %2571 = vmatprep.subr.bf16.mxu0 0
        %2572 = vmatpush1.bf16.msra.mxu0 %v2210
        %2573 = vmatprep.subr.bf16.mxu0 0
        %2574 = vmatpush1.bf16.msra.mxu0 %v2209
        %2575 = vmatprep.subr.bf16.mxu0 0
        %2576 = vmatpush1.bf16.msra.mxu0 %v2208
        %2577 = vmatprep.subr.bf16.mxu0 0
        %2578 = vmatpush2.bf16.msra.mxu0 0
        %2579 = vmatprep.subr.bf16.mxu0 0
        %2580 = vmatpush2.bf16.msra.mxu0 0
        %2581 = vmatprep.subr.bf16.mxu0 0
        %2582 = vmatpush2.bf16.msra.mxu0 0
        %2583 = vmatprep.subr.bf16.mxu0 0
        %2584 = vmatpush2.bf16.msra.mxu0 0
        %2585 = vmatprep.subr.bf16.mxu0 0
        %2586 = vmatpush2.bf16.msra.mxu0 0
        %2587 = vmatprep.subr.bf16.mxu0 0
        %2588 = vmatpush2.bf16.msra.mxu0 0
        %2589 = vmatprep.subr.bf16.mxu0 0
        %2590 = vmatpush2.bf16.msra.mxu0 0
        %2591 = vmatprep.subr.bf16.mxu0 0
        %2592 = vmatpush2.bf16.msra.mxu0 0
        %2593 = vmatprep.mubr.bf16.mxu0 0
        %2594 = vmatmul.mubr.bf16.gmra.mxu0 %v1990
        %v2595 = vpop.f32.mrf.mxu0
        %v2596 = vadd.f32 %v2275, %v2595
        %v2597 = vpop.f32.mrf.mxu0
        %v2598 = vpop.f32.mrf.mxu0
        %v2599 = vadd.f32 %v2278, %v2598
        %v2600 = vpop.f32.mrf.mxu0
        %2601 = vmatprep.mubr.bf16.mxu0 0
        %2602 = vmatmul.mubr.bf16.gmra.mxu0 %v1993
        %v2603 = vpop.f32.mrf.mxu0
        %v2604 = vadd.f32 %v2283, %v2603
        %v2605 = vpop.f32.mrf.mxu0
        %v2606 = vpop.f32.mrf.mxu0
        %v2607 = vadd.f32 %v2286, %v2606
        %v2608 = vpop.f32.mrf.mxu0
        %2609 = vmatprep.mubr.bf16.mxu0 0
        %2610 = vmatmul.mubr.bf16.gmra.mxu0 %v1996
        %v2611 = vpop.f32.mrf.mxu0
        %v2612 = vadd.f32 %v2291, %v2611
        %v2613 = vpop.f32.mrf.mxu0
        %v2614 = vpop.f32.mrf.mxu0
        %v2615 = vadd.f32 %v2294, %v2614
        %v2616 = vpop.f32.mrf.mxu0
        %2617 = vmatprep.mubr.bf16.mxu0 0
        %2618 = vmatmul.mubr.bf16.gmra.mxu0 %v1999
        %v2619 = vpop.f32.mrf.mxu0
        %v2620 = vadd.f32 %v2299, %v2619
        %v2621 = vpop.f32.mrf.mxu0
        %v2622 = vpop.f32.mrf.mxu0
        %v2623 = vadd.f32 %v2302, %v2622
        %v2624 = vpop.f32.mrf.mxu0
        %2625 = vmatprep.mubr.bf16.mxu0 0
        %2626 = vmatmul.mubr.bf16.gmra.mxu0 %v2002
        %v2627 = vpop.f32.mrf.mxu0
        %v2628 = vadd.f32 %v2307, %v2627
        %v2629 = vpop.f32.mrf.mxu0
        %v2630 = vpop.f32.mrf.mxu0
        %v2631 = vadd.f32 %v2310, %v2630
        %v2632 = vpop.f32.mrf.mxu0
        %2633 = vmatprep.mubr.bf16.mxu0 0
        %2634 = vmatmul.mubr.bf16.gmra.mxu0 %v2005
        %v2635 = vpop.f32.mrf.mxu0
        %v2636 = vadd.f32 %v2315, %v2635
        %v2637 = vpop.f32.mrf.mxu0
        %v2638 = vpop.f32.mrf.mxu0
        %v2639 = vadd.f32 %v2318, %v2638
        %v2640 = vpop.f32.mrf.mxu0
        %2641 = vmatprep.mubr.bf16.mxu0 0
        %2642 = vmatmul.mubr.bf16.gmra.mxu0 %v2008
        %v2643 = vpop.f32.mrf.mxu0
        %v2644 = vadd.f32 %v2323, %v2643
        %v2645 = vpop.f32.mrf.mxu0
        %v2646 = vpop.f32.mrf.mxu0
        %v2647 = vadd.f32 %v2326, %v2646
        %v2648 = vpop.f32.mrf.mxu0
        %2649 = vmatprep.mubr.bf16.mxu0 0
        %2650 = vmatmul.mubr.bf16.gmra.mxu0 %v2011
        %v2651 = vpop.f32.mrf.mxu0
        %v2652 = vadd.f32 %v2331, %v2651
        %v2653 = vpop.f32.mrf.mxu0
        %v2654 = vpop.f32.mrf.mxu0
        %v2655 = vadd.f32 %v2334, %v2654
        %v2656 = vpop.f32.mrf.mxu0
        %2657 = vmatprep.mubr.bf16.mxu0 0
        %2658 = vmatmul.mubr.bf16.gmra.mxu0 %v2014
        %v2659 = vpop.f32.mrf.mxu0
        %v2660 = vadd.f32 %v2339, %v2659
        %v2661 = vpop.f32.mrf.mxu0
        %v2662 = vpop.f32.mrf.mxu0
        %v2663 = vadd.f32 %v2342, %v2662
        %v2664 = vpop.f32.mrf.mxu0
        %2665 = vmatprep.mubr.bf16.mxu0 0
        %2666 = vmatmul.mubr.bf16.gmra.mxu0 %v2017
        %v2667 = vpop.f32.mrf.mxu0
        %v2668 = vadd.f32 %v2347, %v2667
        %v2669 = vpop.f32.mrf.mxu0
        %v2670 = vpop.f32.mrf.mxu0
        %v2671 = vadd.f32 %v2350, %v2670
        %v2672 = vpop.f32.mrf.mxu0
        %2673 = vmatprep.mubr.bf16.mxu0 0
        %2674 = vmatmul.mubr.bf16.gmra.mxu0 %v2020
        %v2675 = vpop.f32.mrf.mxu0
        %v2676 = vadd.f32 %v2355, %v2675
        %v2677 = vpop.f32.mrf.mxu0
        %v2678 = vpop.f32.mrf.mxu0
        %v2679 = vadd.f32 %v2358, %v2678
        %v2680 = vpop.f32.mrf.mxu0
        %2681 = vmatprep.mubr.bf16.mxu0 0
        %2682 = vmatmul.mubr.bf16.gmra.mxu0 %v2023
        %v2683 = vpop.f32.mrf.mxu0
        %v2684 = vadd.f32 %v2363, %v2683
        %v2685 = vpop.f32.mrf.mxu0
        %v2686 = vpop.f32.mrf.mxu0
        %v2687 = vadd.f32 %v2366, %v2686
        %v2688 = vpop.f32.mrf.mxu0
        %2689 = vmatprep.mubr.bf16.mxu0 0
        %2690 = vmatmul.mubr.bf16.gmra.mxu0 %v2026
        %v2691 = vpop.f32.mrf.mxu0
        %v2692 = vadd.f32 %v2371, %v2691
        %v2693 = vpop.f32.mrf.mxu0
        %v2694 = vpop.f32.mrf.mxu0
        %v2695 = vadd.f32 %v2374, %v2694
        %v2696 = vpop.f32.mrf.mxu0
        %2697 = vmatprep.mubr.bf16.mxu0 0
        %2698 = vmatmul.mubr.bf16.gmra.mxu0 %v2029
        %v2699 = vpop.f32.mrf.mxu0
        %v2700 = vadd.f32 %v2379, %v2699
        %v2701 = vpop.f32.mrf.mxu0
        %v2702 = vpop.f32.mrf.mxu0
        %v2703 = vadd.f32 %v2382, %v2702
        %v2704 = vpop.f32.mrf.mxu0
        %2705 = vmatprep.mubr.bf16.mxu0 0
        %2706 = vmatmul.mubr.bf16.gmra.mxu0 %v2032
        %v2707 = vpop.f32.mrf.mxu0
        %v2708 = vadd.f32 %v2387, %v2707
        %v2709 = vpop.f32.mrf.mxu0
        %v2710 = vpop.f32.mrf.mxu0
        %v2711 = vadd.f32 %v2390, %v2710
        %v2712 = vpop.f32.mrf.mxu0
        %2713 = vmatprep.mubr.bf16.mxu0 0
        %2714 = vmatmul.mubr.bf16.gmra.mxu0 %v2035
        %v2715 = vpop.f32.mrf.mxu0
        %v2716 = vadd.f32 %v2395, %v2715
        %v2717 = vpop.f32.mrf.mxu0
        %v2718 = vpop.f32.mrf.mxu0
        %v2719 = vadd.f32 %v2398, %v2718
        %v2720 = vpop.f32.mrf.mxu0
        %2721 = vmatprep.mubr.bf16.mxu0 0
        %2722 = vmatmul.mubr.bf16.gmra.mxu0 %v2038
        %v2723 = vpop.f32.mrf.mxu0
        %v2724 = vadd.f32 %v2403, %v2723
        %v2725 = vpop.f32.mrf.mxu0
        %v2726 = vpop.f32.mrf.mxu0
        %v2727 = vadd.f32 %v2406, %v2726
        %v2728 = vpop.f32.mrf.mxu0
        %2729 = vmatprep.mubr.bf16.mxu0 0
        %2730 = vmatmul.mubr.bf16.gmra.mxu0 %v2041
        %v2731 = vpop.f32.mrf.mxu0
        %v2732 = vadd.f32 %v2411, %v2731
        %v2733 = vpop.f32.mrf.mxu0
        %v2734 = vpop.f32.mrf.mxu0
        %v2735 = vadd.f32 %v2414, %v2734
        %v2736 = vpop.f32.mrf.mxu0
        %2737 = vmatprep.mubr.bf16.mxu0 0
        %2738 = vmatmul.mubr.bf16.gmra.mxu0 %v2044
        %v2739 = vpop.f32.mrf.mxu0
        %v2740 = vadd.f32 %v2419, %v2739
        %v2741 = vpop.f32.mrf.mxu0
        %v2742 = vpop.f32.mrf.mxu0
        %v2743 = vadd.f32 %v2422, %v2742
        %v2744 = vpop.f32.mrf.mxu0
        %2745 = vmatprep.mubr.bf16.mxu0 0
        %2746 = vmatmul.mubr.bf16.gmra.mxu0 %v2047
        %v2747 = vpop.f32.mrf.mxu0
        %v2748 = vadd.f32 %v2427, %v2747
        %v2749 = vpop.f32.mrf.mxu0
        %v2750 = vpop.f32.mrf.mxu0
        %v2751 = vadd.f32 %v2430, %v2750
        %v2752 = vpop.f32.mrf.mxu0
        %2753 = vmatprep.mubr.bf16.mxu0 0
        %2754 = vmatmul.mubr.bf16.gmra.mxu0 %v2050
        %v2755 = vpop.f32.mrf.mxu0
        %v2756 = vadd.f32 %v2435, %v2755
        %v2757 = vpop.f32.mrf.mxu0
        %v2758 = vpop.f32.mrf.mxu0
        %v2759 = vadd.f32 %v2438, %v2758
        %v2760 = vpop.f32.mrf.mxu0
        %2761 = vmatprep.mubr.bf16.mxu0 0
        %2762 = vmatmul.mubr.bf16.gmra.mxu0 %v2053
        %v2763 = vpop.f32.mrf.mxu0
        %v2764 = vadd.f32 %v2443, %v2763
        %v2765 = vpop.f32.mrf.mxu0
        %v2766 = vpop.f32.mrf.mxu0
        %v2767 = vadd.f32 %v2446, %v2766
        %v2768 = vpop.f32.mrf.mxu0
        %2769 = vmatprep.mubr.bf16.mxu0 0
        %2770 = vmatmul.mubr.bf16.gmra.mxu0 %v2056
        %v2771 = vpop.f32.mrf.mxu0
        %v2772 = vadd.f32 %v2451, %v2771
        %v2773 = vpop.f32.mrf.mxu0
        %v2774 = vpop.f32.mrf.mxu0
        %v2775 = vadd.f32 %v2454, %v2774
        %v2776 = vpop.f32.mrf.mxu0
        %2777 = vmatprep.mubr.bf16.mxu0 0
        %2778 = vmatmul.mubr.bf16.gmra.mxu0 %v2059
        %v2779 = vpop.f32.mrf.mxu0
        %v2780 = vadd.f32 %v2459, %v2779
        %v2781 = vpop.f32.mrf.mxu0
        %v2782 = vpop.f32.mrf.mxu0
        %v2783 = vadd.f32 %v2462, %v2782
        %v2784 = vpop.f32.mrf.mxu0
        %2785 = vmatprep.mubr.bf16.mxu0 0
        %2786 = vmatmul.mubr.bf16.gmra.mxu0 %v2062
        %v2787 = vpop.f32.mrf.mxu0
        %v2788 = vadd.f32 %v2467, %v2787
        %v2789 = vpop.f32.mrf.mxu0
        %v2790 = vpop.f32.mrf.mxu0
        %v2791 = vadd.f32 %v2470, %v2790
        %v2792 = vpop.f32.mrf.mxu0
        %2793 = vmatprep.mubr.bf16.mxu0 0
        %2794 = vmatmul.mubr.bf16.gmra.mxu0 %v2065
        %v2795 = vpop.f32.mrf.mxu0
        %v2796 = vadd.f32 %v2475, %v2795
        %v2797 = vpop.f32.mrf.mxu0
        %v2798 = vpop.f32.mrf.mxu0
        %v2799 = vadd.f32 %v2478, %v2798
        %v2800 = vpop.f32.mrf.mxu0
        %2801 = vmatprep.mubr.bf16.mxu0 0
        %2802 = vmatmul.mubr.bf16.gmra.mxu0 %v2068
        %v2803 = vpop.f32.mrf.mxu0
        %v2804 = vadd.f32 %v2483, %v2803
        %v2805 = vpop.f32.mrf.mxu0
        %v2806 = vpop.f32.mrf.mxu0
        %v2807 = vadd.f32 %v2486, %v2806
        %v2808 = vpop.f32.mrf.mxu0
        %2809 = vmatprep.mubr.bf16.mxu0 0
        %2810 = vmatmul.mubr.bf16.gmra.mxu0 %v2071
        %v2811 = vpop.f32.mrf.mxu0
        %v2812 = vadd.f32 %v2491, %v2811
        %v2813 = vpop.f32.mrf.mxu0
        %v2814 = vpop.f32.mrf.mxu0
        %v2815 = vadd.f32 %v2494, %v2814
        %v2816 = vpop.f32.mrf.mxu0
        %2817 = vmatprep.mubr.bf16.mxu0 0
        %2818 = vmatmul.mubr.bf16.gmra.mxu0 %v2074
        %v2819 = vpop.f32.mrf.mxu0
        %v2820 = vadd.f32 %v2499, %v2819
        %v2821 = vpop.f32.mrf.mxu0
        %v2822 = vpop.f32.mrf.mxu0
        %v2823 = vadd.f32 %v2502, %v2822
        %v2824 = vpop.f32.mrf.mxu0
        %2825 = vmatprep.mubr.bf16.mxu0 0
        %2826 = vmatmul.mubr.bf16.gmra.mxu0 %v2077
        %v2827 = vpop.f32.mrf.mxu0
        %v2828 = vadd.f32 %v2507, %v2827
        %v2829 = vpop.f32.mrf.mxu0
        %v2830 = vpop.f32.mrf.mxu0
        %v2831 = vadd.f32 %v2510, %v2830
        %v2832 = vpop.f32.mrf.mxu0
        %2833 = vmatprep.mubr.bf16.mxu0 0
        %2834 = vmatmul.mubr.bf16.gmra.mxu0 %v2080
        %v2835 = vpop.f32.mrf.mxu0
        %v2836 = vadd.f32 %v2515, %v2835
        %v2837 = vpop.f32.mrf.mxu0
        %v2838 = vpop.f32.mrf.mxu0
        %v2839 = vadd.f32 %v2518, %v2838
        %v2840 = vpop.f32.mrf.mxu0
        %2841 = vmatprep.mubr.bf16.mxu0 0
        %2842 = vmatmul.mubr.bf16.gmra.mxu0 %v2083
        %v2843 = vpop.f32.mrf.mxu0
        %v2844 = vadd.f32 %v2523, %v2843
        %v2845 = vpop.f32.mrf.mxu0
        %v2846 = vpop.f32.mrf.mxu0
        %v2847 = vadd.f32 %v2526, %v2846
        %v2848 = vpop.f32.mrf.mxu0
        %2849 = vmatprep.mubr.bf16.mxu0 0
        %2850 = vmatmul.mubr.bf16.gmra.mxu0 %v2086
        %v2851 = vpop.f32.mrf.mxu0
        %v2852 = vadd.f32 %v2531, %v2851
        %v2853 = vpop.f32.mrf.mxu0
        %v2854 = vpop.f32.mrf.mxu0
        %v2855 = vadd.f32 %v2534, %v2854
        %v2856 = vpop.f32.mrf.mxu0
        %2857 = vmatprep.mubr.bf16.mxu0 0
        %2858 = vmatmul.mubr.bf16.gmra.mxu0 %v2089
        %v2859 = vpop.f32.mrf.mxu0
        %v2860 = vadd.f32 %v2539, %v2859
        %v2861 = vpop.f32.mrf.mxu0
        %v2862 = vpop.f32.mrf.mxu0
        %v2863 = vadd.f32 %v2542, %v2862
        %v2864 = vpop.f32.mrf.mxu0
        %2865 = vmatprep.mubr.bf16.mxu0 0
        %2866 = vmatmul.mubr.bf16.gmra.mxu0 %v2092
        %v2867 = vpop.f32.mrf.mxu0
        %v2868 = vadd.f32 %v2547, %v2867
        %v2869 = vpop.f32.mrf.mxu0
        %v2870 = vpop.f32.mrf.mxu0
        %v2871 = vadd.f32 %v2550, %v2870
        %v2872 = vpop.f32.mrf.mxu0
        %2873 = vmatprep.mubr.bf16.mxu0 0
        %2874 = vmatmul.mubr.bf16.gmra.mxu0 %v2095
        %v2875 = vpop.f32.mrf.mxu0
        %v2876 = vadd.f32 %v2555, %v2875
        %v2877 = vpop.f32.mrf.mxu0
        %v2878 = vpop.f32.mrf.mxu0
        %v2879 = vadd.f32 %v2558, %v2878
        %v2880 = vpop.f32.mrf.mxu0
        %2881 = vdwg.mxu0
        %v2930 = vunpack.c.l.b16 %v373
        %v2931 = vunpack.c.l.b16 %v374
        %v2932 = vunpack.c.l.b16 %v375
        %v2933 = vunpack.c.l.b16 %v376
        %v2934 = vunpack.c.l.b16 %v377
        %v2935 = vunpack.c.l.b16 %v378
        %v2936 = vunpack.c.l.b16 %v379
        %v2937 = vunpack.c.l.b16 %v380
        %v2938 = vunpack.c.l.b16 %v381
        %v2939 = vunpack.c.l.b16 %v382
        %v2940 = vunpack.c.l.b16 %v383
        %v2941 = vunpack.c.l.b16 %v384
        %v2942 = vunpack.c.l.b16 %v385
        %v2943 = vunpack.c.l.b16 %v386
        %v2944 = vunpack.c.l.b16 %v387
        %v2945 = vunpack.c.l.b16 %v388
        %v2946 = vunpack.c.l.b16 %v389
        %v2947 = vunpack.c.l.b16 %v390
        %v2948 = vunpack.c.l.b16 %v391
        %v2949 = vunpack.c.l.b16 %v392
        %v2950 = vunpack.c.l.b16 %v393
        %v2951 = vunpack.c.l.b16 %v394
        %v2952 = vunpack.c.l.b16 %v395
        %v2953 = vunpack.c.l.b16 %v396
        %v2954 = vunpack.c.l.b16 %v397
        %v2955 = vunpack.c.l.b16 %v398
        %v2956 = vunpack.c.l.b16 %v399
        %v2957 = vunpack.c.l.b16 %v400
        %v2958 = vunpack.c.l.b16 %v401
        %v2959 = vunpack.c.l.b16 %v402
        %v2960 = vunpack.c.l.b16 %v403
        %v2961 = vunpack.c.l.b16 %v404
        %v2962 = vunpack.c.l.b16 %v405
        %v2963 = vunpack.c.l.b16 %v406
        %v2964 = vunpack.c.l.b16 %v407
        %v2965 = vunpack.c.l.b16 %v408
        %v2966 = vunpack.c.l.b16 %v409
        %v2967 = vunpack.c.l.b16 %v410
        %v2968 = vunpack.c.l.b16 %v411
        %v2969 = vunpack.c.l.b16 %v412
        %v2970 = vunpack.c.l.b16 %v413
        %v2971 = vunpack.c.l.b16 %v414
        %v2972 = vunpack.c.l.b16 %v415
        %v2973 = vunpack.c.l.b16 %v416
        %v2974 = vunpack.c.l.b16 %v417
        %v2975 = vunpack.c.l.b16 %v418
        %v2976 = vunpack.c.l.b16 %v419
        %v2977 = vunpack.c.l.b16 %v420
        %v2978 = vpack.c.b16 %v2931, %v2930
        %v2979 = vpack.c.b16 %v2933, %v2932
        %v2980 = vpack.c.b16 %v2935, %v2934
        %v2981 = vpack.c.b16 %v2937, %v2936
        %v2982 = vpack.c.b16 %v2939, %v2938
        %v2983 = vpack.c.b16 %v2941, %v2940
        %v2984 = vpack.c.b16 %v2943, %v2942
        %v2985 = vpack.c.b16 %v2945, %v2944
        %v2986 = vpack.c.b16 %v2947, %v2946
        %v2987 = vpack.c.b16 %v2949, %v2948
        %v2988 = vpack.c.b16 %v2951, %v2950
        %v2989 = vpack.c.b16 %v2953, %v2952
        %v2990 = vpack.c.b16 %v2955, %v2954
        %v2991 = vpack.c.b16 %v2957, %v2956
        %v2992 = vpack.c.b16 %v2959, %v2958
        %v2993 = vpack.c.b16 %v2961, %v2960
        %v2994 = vpack.c.b16 %v2963, %v2962
        %v2995 = vpack.c.b16 %v2965, %v2964
        %v2996 = vpack.c.b16 %v2967, %v2966
        %v2997 = vpack.c.b16 %v2969, %v2968
        %v2998 = vpack.c.b16 %v2971, %v2970
        %v2999 = vpack.c.b16 %v2973, %v2972
        %v3000 = vpack.c.b16 %v2975, %v2974
        %v3001 = vpack.c.b16 %v2977, %v2976
        %3026 = vmatprep.subr.bf16.mxu0 0
        %3027 = vmatpush1.bf16.msra.mxu0 %v2985
        %3028 = vmatprep.subr.bf16.mxu0 0
        %3029 = vmatpush1.bf16.msra.mxu0 %v2984
        %3030 = vmatprep.subr.bf16.mxu0 0
        %3031 = vmatpush1.bf16.msra.mxu0 %v2983
        %3032 = vmatprep.subr.bf16.mxu0 0
        %3033 = vmatpush1.bf16.msra.mxu0 %v2982
        %3034 = vmatprep.subr.bf16.mxu0 0
        %3035 = vmatpush1.bf16.msra.mxu0 %v2981
        %3036 = vmatprep.subr.bf16.mxu0 0
        %3037 = vmatpush1.bf16.msra.mxu0 %v2980
        %3038 = vmatprep.subr.bf16.mxu0 0
        %3039 = vmatpush1.bf16.msra.mxu0 %v2979
        %3040 = vmatprep.subr.bf16.mxu0 0
        %3041 = vmatpush1.bf16.msra.mxu0 %v2978
        %3042 = vmatprep.subr.bf16.mxu0 0
        %3043 = vmatpush2.bf16.msra.mxu0 %v2993
        %3044 = vmatprep.subr.bf16.mxu0 0
        %3045 = vmatpush2.bf16.msra.mxu0 %v2992
        %3046 = vmatprep.subr.bf16.mxu0 0
        %3047 = vmatpush2.bf16.msra.mxu0 %v2991
        %3048 = vmatprep.subr.bf16.mxu0 0
        %3049 = vmatpush2.bf16.msra.mxu0 %v2990
        %3050 = vmatprep.subr.bf16.mxu0 0
        %3051 = vmatpush2.bf16.msra.mxu0 %v2989
        %3052 = vmatprep.subr.bf16.mxu0 0
        %3053 = vmatpush2.bf16.msra.mxu0 %v2988
        %3054 = vmatprep.subr.bf16.mxu0 0
        %3055 = vmatpush2.bf16.msra.mxu0 %v2987
        %3056 = vmatprep.subr.bf16.mxu0 0
        %3057 = vmatpush2.bf16.msra.mxu0 %v2986
        %3058 = vmatprep.mubr.bf16.mxu0 %v1881
        %3059 = vmatmul.mubr.bf16.gmra.mxu0 %v1880
        %v3060 = vpop.f32.mrf.mxu0
        %v3061 = vadd.f32 %v2596, %v3060
        %v3062 = vpop.f32.mrf.mxu0
        %v3063 = vpop.f32.mrf.mxu0
        %v3064 = vadd.f32 %v2599, %v3063
        %v3065 = vpop.f32.mrf.mxu0
        %3066 = vmatprep.mubr.bf16.mxu0 %v1884
        %3067 = vmatmul.mubr.bf16.gmra.mxu0 %v1883
        %v3068 = vpop.f32.mrf.mxu0
        %v3069 = vadd.f32 %v2604, %v3068
        %v3070 = vpop.f32.mrf.mxu0
        %v3071 = vpop.f32.mrf.mxu0
        %v3072 = vadd.f32 %v2607, %v3071
        %v3073 = vpop.f32.mrf.mxu0
        %3074 = vmatprep.mubr.bf16.mxu0 %v1887
        %3075 = vmatmul.mubr.bf16.gmra.mxu0 %v1886
        %v3076 = vpop.f32.mrf.mxu0
        %v3077 = vadd.f32 %v2612, %v3076
        %v3078 = vpop.f32.mrf.mxu0
        %v3079 = vpop.f32.mrf.mxu0
        %v3080 = vadd.f32 %v2615, %v3079
        %v3081 = vpop.f32.mrf.mxu0
        %3082 = vmatprep.mubr.bf16.mxu0 %v1890
        %3083 = vmatmul.mubr.bf16.gmra.mxu0 %v1889
        %v3084 = vpop.f32.mrf.mxu0
        %v3085 = vadd.f32 %v2620, %v3084
        %v3086 = vpop.f32.mrf.mxu0
        %v3087 = vpop.f32.mrf.mxu0
        %v3088 = vadd.f32 %v2623, %v3087
        %v3089 = vpop.f32.mrf.mxu0
        %3090 = vmatprep.mubr.bf16.mxu0 %v1893
        %3091 = vmatmul.mubr.bf16.gmra.mxu0 %v1892
        %v3092 = vpop.f32.mrf.mxu0
        %v3093 = vadd.f32 %v2628, %v3092
        %v3094 = vpop.f32.mrf.mxu0
        %v3095 = vpop.f32.mrf.mxu0
        %v3096 = vadd.f32 %v2631, %v3095
        %v3097 = vpop.f32.mrf.mxu0
        %3098 = vmatprep.mubr.bf16.mxu0 %v1896
        %3099 = vmatmul.mubr.bf16.gmra.mxu0 %v1895
        %v3100 = vpop.f32.mrf.mxu0
        %v3101 = vadd.f32 %v2636, %v3100
        %v3102 = vpop.f32.mrf.mxu0
        %v3103 = vpop.f32.mrf.mxu0
        %v3104 = vadd.f32 %v2639, %v3103
        %v3105 = vpop.f32.mrf.mxu0
        %3106 = vmatprep.mubr.bf16.mxu0 %v1899
        %3107 = vmatmul.mubr.bf16.gmra.mxu0 %v1898
        %v3108 = vpop.f32.mrf.mxu0
        %v3109 = vadd.f32 %v2644, %v3108
        %v3110 = vpop.f32.mrf.mxu0
        %v3111 = vpop.f32.mrf.mxu0
        %v3112 = vadd.f32 %v2647, %v3111
        %v3113 = vpop.f32.mrf.mxu0
        %3114 = vmatprep.mubr.bf16.mxu0 %v1902
        %3115 = vmatmul.mubr.bf16.gmra.mxu0 %v1901
        %v3116 = vpop.f32.mrf.mxu0
        %v3117 = vadd.f32 %v2652, %v3116
        %v3118 = vpop.f32.mrf.mxu0
        %v3119 = vpop.f32.mrf.mxu0
        %v3120 = vadd.f32 %v2655, %v3119
        %v3121 = vpop.f32.mrf.mxu0
        %3122 = vmatprep.mubr.bf16.mxu0 %v1905
        %3123 = vmatmul.mubr.bf16.gmra.mxu0 %v1904
        %v3124 = vpop.f32.mrf.mxu0
        %v3125 = vadd.f32 %v2660, %v3124
        %v3126 = vpop.f32.mrf.mxu0
        %v3127 = vpop.f32.mrf.mxu0
        %v3128 = vadd.f32 %v2663, %v3127
        %v3129 = vpop.f32.mrf.mxu0
        %3130 = vmatprep.mubr.bf16.mxu0 %v1908
        %3131 = vmatmul.mubr.bf16.gmra.mxu0 %v1907
        %v3132 = vpop.f32.mrf.mxu0
        %v3133 = vadd.f32 %v2668, %v3132
        %v3134 = vpop.f32.mrf.mxu0
        %v3135 = vpop.f32.mrf.mxu0
        %v3136 = vadd.f32 %v2671, %v3135
        %v3137 = vpop.f32.mrf.mxu0
        %3138 = vmatprep.mubr.bf16.mxu0 %v1911
        %3139 = vmatmul.mubr.bf16.gmra.mxu0 %v1910
        %v3140 = vpop.f32.mrf.mxu0
        %v3141 = vadd.f32 %v2676, %v3140
        %v3142 = vpop.f32.mrf.mxu0
        %v3143 = vpop.f32.mrf.mxu0
        %v3144 = vadd.f32 %v2679, %v3143
        %v3145 = vpop.f32.mrf.mxu0
        %3146 = vmatprep.mubr.bf16.mxu0 %v1914
        %3147 = vmatmul.mubr.bf16.gmra.mxu0 %v1913
        %v3148 = vpop.f32.mrf.mxu0
        %v3149 = vadd.f32 %v2684, %v3148
        %v3150 = vpop.f32.mrf.mxu0
        %v3151 = vpop.f32.mrf.mxu0
        %v3152 = vadd.f32 %v2687, %v3151
        %v3153 = vpop.f32.mrf.mxu0
        %3154 = vmatprep.mubr.bf16.mxu0 %v1917
        %3155 = vmatmul.mubr.bf16.gmra.mxu0 %v1916
        %v3156 = vpop.f32.mrf.mxu0
        %v3157 = vadd.f32 %v2692, %v3156
        %v3158 = vpop.f32.mrf.mxu0
        %v3159 = vpop.f32.mrf.mxu0
        %v3160 = vadd.f32 %v2695, %v3159
        %v3161 = vpop.f32.mrf.mxu0
        %3162 = vmatprep.mubr.bf16.mxu0 %v1920
        %3163 = vmatmul.mubr.bf16.gmra.mxu0 %v1919
        %v3164 = vpop.f32.mrf.mxu0
        %v3165 = vadd.f32 %v2700, %v3164
        %v3166 = vpop.f32.mrf.mxu0
        %v3167 = vpop.f32.mrf.mxu0
        %v3168 = vadd.f32 %v2703, %v3167
        %v3169 = vpop.f32.mrf.mxu0
        %3170 = vmatprep.mubr.bf16.mxu0 %v1923
        %3171 = vmatmul.mubr.bf16.gmra.mxu0 %v1922
        %v3172 = vpop.f32.mrf.mxu0
        %v3173 = vadd.f32 %v2708, %v3172
        %v3174 = vpop.f32.mrf.mxu0
        %v3175 = vpop.f32.mrf.mxu0
        %v3176 = vadd.f32 %v2711, %v3175
        %v3177 = vpop.f32.mrf.mxu0
        %3178 = vmatprep.mubr.bf16.mxu0 %v1926
        %3179 = vmatmul.mubr.bf16.gmra.mxu0 %v1925
        %v3180 = vpop.f32.mrf.mxu0
        %v3181 = vadd.f32 %v2716, %v3180
        %v3182 = vpop.f32.mrf.mxu0
        %v3183 = vpop.f32.mrf.mxu0
        %v3184 = vadd.f32 %v2719, %v3183
        %v3185 = vpop.f32.mrf.mxu0
        %3186 = vmatprep.mubr.bf16.mxu0 %v1929
        %3187 = vmatmul.mubr.bf16.gmra.mxu0 %v1928
        %v3188 = vpop.f32.mrf.mxu0
        %v3189 = vadd.f32 %v2724, %v3188
        %v3190 = vpop.f32.mrf.mxu0
        %v3191 = vpop.f32.mrf.mxu0
        %v3192 = vadd.f32 %v2727, %v3191
        %v3193 = vpop.f32.mrf.mxu0
        %3194 = vmatprep.mubr.bf16.mxu0 %v1932
        %3195 = vmatmul.mubr.bf16.gmra.mxu0 %v1931
        %v3196 = vpop.f32.mrf.mxu0
        %v3197 = vadd.f32 %v2732, %v3196
        %v3198 = vpop.f32.mrf.mxu0
        %v3199 = vpop.f32.mrf.mxu0
        %v3200 = vadd.f32 %v2735, %v3199
        %v3201 = vpop.f32.mrf.mxu0
        %3202 = vmatprep.mubr.bf16.mxu0 %v1935
        %3203 = vmatmul.mubr.bf16.gmra.mxu0 %v1934
        %v3204 = vpop.f32.mrf.mxu0
        %v3205 = vadd.f32 %v2740, %v3204
        %v3206 = vpop.f32.mrf.mxu0
        %v3207 = vpop.f32.mrf.mxu0
        %v3208 = vadd.f32 %v2743, %v3207
        %v3209 = vpop.f32.mrf.mxu0
        %3210 = vmatprep.mubr.bf16.mxu0 %v1938
        %3211 = vmatmul.mubr.bf16.gmra.mxu0 %v1937
        %v3212 = vpop.f32.mrf.mxu0
        %v3213 = vadd.f32 %v2748, %v3212
        %v3214 = vpop.f32.mrf.mxu0
        %v3215 = vpop.f32.mrf.mxu0
        %v3216 = vadd.f32 %v2751, %v3215
        %v3217 = vpop.f32.mrf.mxu0
        %3218 = vmatprep.mubr.bf16.mxu0 %v1941
        %3219 = vmatmul.mubr.bf16.gmra.mxu0 %v1940
        %v3220 = vpop.f32.mrf.mxu0
        %v3221 = vadd.f32 %v2756, %v3220
        %v3222 = vpop.f32.mrf.mxu0
        %v3223 = vpop.f32.mrf.mxu0
        %v3224 = vadd.f32 %v2759, %v3223
        %v3225 = vpop.f32.mrf.mxu0
        %3226 = vmatprep.mubr.bf16.mxu0 %v1944
        %3227 = vmatmul.mubr.bf16.gmra.mxu0 %v1943
        %v3228 = vpop.f32.mrf.mxu0
        %v3229 = vadd.f32 %v2764, %v3228
        %v3230 = vpop.f32.mrf.mxu0
        %v3231 = vpop.f32.mrf.mxu0
        %v3232 = vadd.f32 %v2767, %v3231
        %v3233 = vpop.f32.mrf.mxu0
        %3234 = vmatprep.mubr.bf16.mxu0 %v1947
        %3235 = vmatmul.mubr.bf16.gmra.mxu0 %v1946
        %v3236 = vpop.f32.mrf.mxu0
        %v3237 = vadd.f32 %v2772, %v3236
        %v3238 = vpop.f32.mrf.mxu0
        %v3239 = vpop.f32.mrf.mxu0
        %v3240 = vadd.f32 %v2775, %v3239
        %v3241 = vpop.f32.mrf.mxu0
        %3242 = vmatprep.mubr.bf16.mxu0 %v1950
        %3243 = vmatmul.mubr.bf16.gmra.mxu0 %v1949
        %v3244 = vpop.f32.mrf.mxu0
        %v3245 = vadd.f32 %v2780, %v3244
        %v3246 = vpop.f32.mrf.mxu0
        %v3247 = vpop.f32.mrf.mxu0
        %v3248 = vadd.f32 %v2783, %v3247
        %v3249 = vpop.f32.mrf.mxu0
        %3250 = vmatprep.mubr.bf16.mxu0 %v1953
        %3251 = vmatmul.mubr.bf16.gmra.mxu0 %v1952
        %v3252 = vpop.f32.mrf.mxu0
        %v3253 = vadd.f32 %v2788, %v3252
        %v3254 = vpop.f32.mrf.mxu0
        %v3255 = vpop.f32.mrf.mxu0
        %v3256 = vadd.f32 %v2791, %v3255
        %v3257 = vpop.f32.mrf.mxu0
        %3258 = vmatprep.mubr.bf16.mxu0 %v1956
        %3259 = vmatmul.mubr.bf16.gmra.mxu0 %v1955
        %v3260 = vpop.f32.mrf.mxu0
        %v3261 = vadd.f32 %v2796, %v3260
        %v3262 = vpop.f32.mrf.mxu0
        %v3263 = vpop.f32.mrf.mxu0
        %v3264 = vadd.f32 %v2799, %v3263
        %v3265 = vpop.f32.mrf.mxu0
        %3266 = vmatprep.mubr.bf16.mxu0 %v1959
        %3267 = vmatmul.mubr.bf16.gmra.mxu0 %v1958
        %v3268 = vpop.f32.mrf.mxu0
        %v3269 = vadd.f32 %v2804, %v3268
        %v3270 = vpop.f32.mrf.mxu0
        %v3271 = vpop.f32.mrf.mxu0
        %v3272 = vadd.f32 %v2807, %v3271
        %v3273 = vpop.f32.mrf.mxu0
        %3274 = vmatprep.mubr.bf16.mxu0 %v1962
        %3275 = vmatmul.mubr.bf16.gmra.mxu0 %v1961
        %v3276 = vpop.f32.mrf.mxu0
        %v3277 = vadd.f32 %v2812, %v3276
        %v3278 = vpop.f32.mrf.mxu0
        %v3279 = vpop.f32.mrf.mxu0
        %v3280 = vadd.f32 %v2815, %v3279
        %v3281 = vpop.f32.mrf.mxu0
        %3282 = vmatprep.mubr.bf16.mxu0 %v1965
        %3283 = vmatmul.mubr.bf16.gmra.mxu0 %v1964
        %v3284 = vpop.f32.mrf.mxu0
        %v3285 = vadd.f32 %v2820, %v3284
        %v3286 = vpop.f32.mrf.mxu0
        %v3287 = vpop.f32.mrf.mxu0
        %v3288 = vadd.f32 %v2823, %v3287
        %v3289 = vpop.f32.mrf.mxu0
        %3290 = vmatprep.mubr.bf16.mxu0 %v1968
        %3291 = vmatmul.mubr.bf16.gmra.mxu0 %v1967
        %v3292 = vpop.f32.mrf.mxu0
        %v3293 = vadd.f32 %v2828, %v3292
        %v3294 = vpop.f32.mrf.mxu0
        %v3295 = vpop.f32.mrf.mxu0
        %v3296 = vadd.f32 %v2831, %v3295
        %v3297 = vpop.f32.mrf.mxu0
        %3298 = vmatprep.mubr.bf16.mxu0 %v1971
        %3299 = vmatmul.mubr.bf16.gmra.mxu0 %v1970
        %v3300 = vpop.f32.mrf.mxu0
        %v3301 = vadd.f32 %v2836, %v3300
        %v3302 = vpop.f32.mrf.mxu0
        %v3303 = vpop.f32.mrf.mxu0
        %v3304 = vadd.f32 %v2839, %v3303
        %v3305 = vpop.f32.mrf.mxu0
        %3306 = vmatprep.mubr.bf16.mxu0 %v1974
        %3307 = vmatmul.mubr.bf16.gmra.mxu0 %v1973
        %v3308 = vpop.f32.mrf.mxu0
        %v3309 = vadd.f32 %v2844, %v3308
        %v3310 = vpop.f32.mrf.mxu0
        %v3311 = vpop.f32.mrf.mxu0
        %v3312 = vadd.f32 %v2847, %v3311
        %v3313 = vpop.f32.mrf.mxu0
        %3314 = vmatprep.mubr.bf16.mxu0 %v1977
        %3315 = vmatmul.mubr.bf16.gmra.mxu0 %v1976
        %v3316 = vpop.f32.mrf.mxu0
        %v3317 = vadd.f32 %v2852, %v3316
        %v3318 = vpop.f32.mrf.mxu0
        %v3319 = vpop.f32.mrf.mxu0
        %v3320 = vadd.f32 %v2855, %v3319
        %v3321 = vpop.f32.mrf.mxu0
        %3322 = vmatprep.mubr.bf16.mxu0 %v1980
        %3323 = vmatmul.mubr.bf16.gmra.mxu0 %v1979
        %v3324 = vpop.f32.mrf.mxu0
        %v3325 = vadd.f32 %v2860, %v3324
        %v3326 = vpop.f32.mrf.mxu0
        %v3327 = vpop.f32.mrf.mxu0
        %v3328 = vadd.f32 %v2863, %v3327
        %v3329 = vpop.f32.mrf.mxu0
        %3330 = vmatprep.mubr.bf16.mxu0 %v1983
        %3331 = vmatmul.mubr.bf16.gmra.mxu0 %v1982
        %v3332 = vpop.f32.mrf.mxu0
        %v3333 = vadd.f32 %v2868, %v3332
        %v3334 = vpop.f32.mrf.mxu0
        %v3335 = vpop.f32.mrf.mxu0
        %v3336 = vadd.f32 %v2871, %v3335
        %v3337 = vpop.f32.mrf.mxu0
        %3338 = vmatprep.mubr.bf16.mxu0 %v1986
        %3339 = vmatmul.mubr.bf16.gmra.mxu0 %v1985
        %v3340 = vpop.f32.mrf.mxu0
        %v3341 = vadd.f32 %v2876, %v3340
        %v3342 = vpop.f32.mrf.mxu0
        %v3343 = vpop.f32.mrf.mxu0
        %v3344 = vadd.f32 %v2879, %v3343
        %v3345 = vpop.f32.mrf.mxu0
        %3346 = vdwg.mxu0
        %3347 = vmatprep.subr.bf16.mxu0 0
        %3348 = vmatpush1.bf16.msra.mxu0 %v3001
        %3349 = vmatprep.subr.bf16.mxu0 0
        %3350 = vmatpush1.bf16.msra.mxu0 %v3000
        %3351 = vmatprep.subr.bf16.mxu0 0
        %3352 = vmatpush1.bf16.msra.mxu0 %v2999
        %3353 = vmatprep.subr.bf16.mxu0 0
        %3354 = vmatpush1.bf16.msra.mxu0 %v2998
        %3355 = vmatprep.subr.bf16.mxu0 0
        %3356 = vmatpush1.bf16.msra.mxu0 %v2997
        %3357 = vmatprep.subr.bf16.mxu0 0
        %3358 = vmatpush1.bf16.msra.mxu0 %v2996
        %3359 = vmatprep.subr.bf16.mxu0 0
        %3360 = vmatpush1.bf16.msra.mxu0 %v2995
        %3361 = vmatprep.subr.bf16.mxu0 0
        %3362 = vmatpush1.bf16.msra.mxu0 %v2994
        %3363 = vmatprep.subr.bf16.mxu0 0
        %3364 = vmatpush2.bf16.msra.mxu0 0
        %3365 = vmatprep.subr.bf16.mxu0 0
        %3366 = vmatpush2.bf16.msra.mxu0 0
        %3367 = vmatprep.subr.bf16.mxu0 0
        %3368 = vmatpush2.bf16.msra.mxu0 0
        %3369 = vmatprep.subr.bf16.mxu0 0
        %3370 = vmatpush2.bf16.msra.mxu0 0
        %3371 = vmatprep.subr.bf16.mxu0 0
        %3372 = vmatpush2.bf16.msra.mxu0 0
        %3373 = vmatprep.subr.bf16.mxu0 0
        %3374 = vmatpush2.bf16.msra.mxu0 0
        %3375 = vmatprep.subr.bf16.mxu0 0
        %3376 = vmatpush2.bf16.msra.mxu0 0
        %3377 = vmatprep.subr.bf16.mxu0 0
        %3378 = vmatpush2.bf16.msra.mxu0 0
        %3379 = vmatprep.mubr.bf16.mxu0 0
        %3380 = vmatmul.mubr.bf16.gmra.mxu0 %v1882
        %v3381 = vpop.f32.mrf.mxu0
        %v3382 = vadd.f32 %v3061, %v3381
        %v3383 = vpop.f32.mrf.mxu0
        %v3384 = vpop.f32.mrf.mxu0
        %v3385 = vadd.f32 %v3064, %v3384
        %v3386 = vpop.f32.mrf.mxu0
        %3387 = vmatprep.mubr.bf16.mxu0 0
        %3388 = vmatmul.mubr.bf16.gmra.mxu0 %v1885
        %v3389 = vpop.f32.mrf.mxu0
        %v3390 = vadd.f32 %v3069, %v3389
        %v3391 = vpop.f32.mrf.mxu0
        %v3392 = vpop.f32.mrf.mxu0
        %v3393 = vadd.f32 %v3072, %v3392
        %v3394 = vpop.f32.mrf.mxu0
        %3395 = vmatprep.mubr.bf16.mxu0 0
        %3396 = vmatmul.mubr.bf16.gmra.mxu0 %v1888
        %v3397 = vpop.f32.mrf.mxu0
        %v3398 = vadd.f32 %v3077, %v3397
        %v3399 = vpop.f32.mrf.mxu0
        %v3400 = vpop.f32.mrf.mxu0
        %v3401 = vadd.f32 %v3080, %v3400
        %v3402 = vpop.f32.mrf.mxu0
        %3403 = vmatprep.mubr.bf16.mxu0 0
        %3404 = vmatmul.mubr.bf16.gmra.mxu0 %v1891
        %v3405 = vpop.f32.mrf.mxu0
        %v3406 = vadd.f32 %v3085, %v3405
        %v3407 = vpop.f32.mrf.mxu0
        %v3408 = vpop.f32.mrf.mxu0
        %v3409 = vadd.f32 %v3088, %v3408
        %v3410 = vpop.f32.mrf.mxu0
        %3411 = vmatprep.mubr.bf16.mxu0 0
        %3412 = vmatmul.mubr.bf16.gmra.mxu0 %v1894
        %v3413 = vpop.f32.mrf.mxu0
        %v3414 = vadd.f32 %v3093, %v3413
        %v3415 = vpop.f32.mrf.mxu0
        %v3416 = vpop.f32.mrf.mxu0
        %v3417 = vadd.f32 %v3096, %v3416
        %v3418 = vpop.f32.mrf.mxu0
        %3419 = vmatprep.mubr.bf16.mxu0 0
        %3420 = vmatmul.mubr.bf16.gmra.mxu0 %v1897
        %v3421 = vpop.f32.mrf.mxu0
        %v3422 = vadd.f32 %v3101, %v3421
        %v3423 = vpop.f32.mrf.mxu0
        %v3424 = vpop.f32.mrf.mxu0
        %v3425 = vadd.f32 %v3104, %v3424
        %v3426 = vpop.f32.mrf.mxu0
        %3427 = vmatprep.mubr.bf16.mxu0 0
        %3428 = vmatmul.mubr.bf16.gmra.mxu0 %v1900
        %v3429 = vpop.f32.mrf.mxu0
        %v3430 = vadd.f32 %v3109, %v3429
        %v3431 = vpop.f32.mrf.mxu0
        %v3432 = vpop.f32.mrf.mxu0
        %v3433 = vadd.f32 %v3112, %v3432
        %v3434 = vpop.f32.mrf.mxu0
        %3435 = vmatprep.mubr.bf16.mxu0 0
        %3436 = vmatmul.mubr.bf16.gmra.mxu0 %v1903
        %v3437 = vpop.f32.mrf.mxu0
        %v3438 = vadd.f32 %v3117, %v3437
        %v3439 = vpop.f32.mrf.mxu0
        %v3440 = vpop.f32.mrf.mxu0
        %v3441 = vadd.f32 %v3120, %v3440
        %v3442 = vpop.f32.mrf.mxu0
        %3443 = vmatprep.mubr.bf16.mxu0 0
        %3444 = vmatmul.mubr.bf16.gmra.mxu0 %v1906
        %v3445 = vpop.f32.mrf.mxu0
        %v3446 = vadd.f32 %v3125, %v3445
        %v3447 = vpop.f32.mrf.mxu0
        %v3448 = vpop.f32.mrf.mxu0
        %v3449 = vadd.f32 %v3128, %v3448
        %v3450 = vpop.f32.mrf.mxu0
        %3451 = vmatprep.mubr.bf16.mxu0 0
        %3452 = vmatmul.mubr.bf16.gmra.mxu0 %v1909
        %v3453 = vpop.f32.mrf.mxu0
        %v3454 = vadd.f32 %v3133, %v3453
        %v3455 = vpop.f32.mrf.mxu0
        %v3456 = vpop.f32.mrf.mxu0
        %v3457 = vadd.f32 %v3136, %v3456
        %v3458 = vpop.f32.mrf.mxu0
        %3459 = vmatprep.mubr.bf16.mxu0 0
        %3460 = vmatmul.mubr.bf16.gmra.mxu0 %v1912
        %v3461 = vpop.f32.mrf.mxu0
        %v3462 = vadd.f32 %v3141, %v3461
        %v3463 = vpop.f32.mrf.mxu0
        %v3464 = vpop.f32.mrf.mxu0
        %v3465 = vadd.f32 %v3144, %v3464
        %v3466 = vpop.f32.mrf.mxu0
        %3467 = vmatprep.mubr.bf16.mxu0 0
        %3468 = vmatmul.mubr.bf16.gmra.mxu0 %v1915
        %v3469 = vpop.f32.mrf.mxu0
        %v3470 = vadd.f32 %v3149, %v3469
        %v3471 = vpop.f32.mrf.mxu0
        %v3472 = vpop.f32.mrf.mxu0
        %v3473 = vadd.f32 %v3152, %v3472
        %v3474 = vpop.f32.mrf.mxu0
        %3475 = vmatprep.mubr.bf16.mxu0 0
        %3476 = vmatmul.mubr.bf16.gmra.mxu0 %v1918
        %v3477 = vpop.f32.mrf.mxu0
        %v3478 = vadd.f32 %v3157, %v3477
        %v3479 = vpop.f32.mrf.mxu0
        %v3480 = vpop.f32.mrf.mxu0
        %v3481 = vadd.f32 %v3160, %v3480
        %v3482 = vpop.f32.mrf.mxu0
        %3483 = vmatprep.mubr.bf16.mxu0 0
        %3484 = vmatmul.mubr.bf16.gmra.mxu0 %v1921
        %v3485 = vpop.f32.mrf.mxu0
        %v3486 = vadd.f32 %v3165, %v3485
        %v3487 = vpop.f32.mrf.mxu0
        %v3488 = vpop.f32.mrf.mxu0
        %v3489 = vadd.f32 %v3168, %v3488
        %v3490 = vpop.f32.mrf.mxu0
        %3491 = vmatprep.mubr.bf16.mxu0 0
        %3492 = vmatmul.mubr.bf16.gmra.mxu0 %v1924
        %v3493 = vpop.f32.mrf.mxu0
        %v3494 = vadd.f32 %v3173, %v3493
        %v3495 = vpop.f32.mrf.mxu0
        %v3496 = vpop.f32.mrf.mxu0
        %v3497 = vadd.f32 %v3176, %v3496
        %v3498 = vpop.f32.mrf.mxu0
        %3499 = vmatprep.mubr.bf16.mxu0 0
        %3500 = vmatmul.mubr.bf16.gmra.mxu0 %v1927
        %v3501 = vpop.f32.mrf.mxu0
        %v3502 = vadd.f32 %v3181, %v3501
        %v3503 = vpop.f32.mrf.mxu0
        %v3504 = vpop.f32.mrf.mxu0
        %v3505 = vadd.f32 %v3184, %v3504
        %v3506 = vpop.f32.mrf.mxu0
        %3507 = vmatprep.mubr.bf16.mxu0 0
        %3508 = vmatmul.mubr.bf16.gmra.mxu0 %v1930
        %v3509 = vpop.f32.mrf.mxu0
        %v3510 = vadd.f32 %v3189, %v3509
        %v3511 = vpop.f32.mrf.mxu0
        %v3512 = vpop.f32.mrf.mxu0
        %v3513 = vadd.f32 %v3192, %v3512
        %v3514 = vpop.f32.mrf.mxu0
        %3515 = vmatprep.mubr.bf16.mxu0 0
        %3516 = vmatmul.mubr.bf16.gmra.mxu0 %v1933
        %v3517 = vpop.f32.mrf.mxu0
        %v3518 = vadd.f32 %v3197, %v3517
        %v3519 = vpop.f32.mrf.mxu0
        %v3520 = vpop.f32.mrf.mxu0
        %v3521 = vadd.f32 %v3200, %v3520
        %v3522 = vpop.f32.mrf.mxu0
        %3523 = vmatprep.mubr.bf16.mxu0 0
        %3524 = vmatmul.mubr.bf16.gmra.mxu0 %v1936
        %v3525 = vpop.f32.mrf.mxu0
        %v3526 = vadd.f32 %v3205, %v3525
        %v3527 = vpop.f32.mrf.mxu0
        %v3528 = vpop.f32.mrf.mxu0
        %v3529 = vadd.f32 %v3208, %v3528
        %v3530 = vpop.f32.mrf.mxu0
        %3531 = vmatprep.mubr.bf16.mxu0 0
        %3532 = vmatmul.mubr.bf16.gmra.mxu0 %v1939
        %v3533 = vpop.f32.mrf.mxu0
        %v3534 = vadd.f32 %v3213, %v3533
        %v3535 = vpop.f32.mrf.mxu0
        %v3536 = vpop.f32.mrf.mxu0
        %v3537 = vadd.f32 %v3216, %v3536
        %v3538 = vpop.f32.mrf.mxu0
        %3539 = vmatprep.mubr.bf16.mxu0 0
        %3540 = vmatmul.mubr.bf16.gmra.mxu0 %v1942
        %v3541 = vpop.f32.mrf.mxu0
        %v3542 = vadd.f32 %v3221, %v3541
        %v3543 = vpop.f32.mrf.mxu0
        %v3544 = vpop.f32.mrf.mxu0
        %v3545 = vadd.f32 %v3224, %v3544
        %v3546 = vpop.f32.mrf.mxu0
        %3547 = vmatprep.mubr.bf16.mxu0 0
        %3548 = vmatmul.mubr.bf16.gmra.mxu0 %v1945
        %v3549 = vpop.f32.mrf.mxu0
        %v3550 = vadd.f32 %v3229, %v3549
        %v3551 = vpop.f32.mrf.mxu0
        %v3552 = vpop.f32.mrf.mxu0
        %v3553 = vadd.f32 %v3232, %v3552
        %v3554 = vpop.f32.mrf.mxu0
        %3555 = vmatprep.mubr.bf16.mxu0 0
        %3556 = vmatmul.mubr.bf16.gmra.mxu0 %v1948
        %v3557 = vpop.f32.mrf.mxu0
        %v3558 = vadd.f32 %v3237, %v3557
        %v3559 = vpop.f32.mrf.mxu0
        %v3560 = vpop.f32.mrf.mxu0
        %v3561 = vadd.f32 %v3240, %v3560
        %v3562 = vpop.f32.mrf.mxu0
        %3563 = vmatprep.mubr.bf16.mxu0 0
        %3564 = vmatmul.mubr.bf16.gmra.mxu0 %v1951
        %v3565 = vpop.f32.mrf.mxu0
        %v3566 = vadd.f32 %v3245, %v3565
        %v3567 = vpop.f32.mrf.mxu0
        %v3568 = vpop.f32.mrf.mxu0
        %v3569 = vadd.f32 %v3248, %v3568
        %v3570 = vpop.f32.mrf.mxu0
        %3571 = vmatprep.mubr.bf16.mxu0 0
        %3572 = vmatmul.mubr.bf16.gmra.mxu0 %v1954
        %v3573 = vpop.f32.mrf.mxu0
        %v3574 = vadd.f32 %v3253, %v3573
        %v3575 = vpop.f32.mrf.mxu0
        %v3576 = vpop.f32.mrf.mxu0
        %v3577 = vadd.f32 %v3256, %v3576
        %v3578 = vpop.f32.mrf.mxu0
        %3579 = vmatprep.mubr.bf16.mxu0 0
        %3580 = vmatmul.mubr.bf16.gmra.mxu0 %v1957
        %v3581 = vpop.f32.mrf.mxu0
        %v3582 = vadd.f32 %v3261, %v3581
        %v3583 = vpop.f32.mrf.mxu0
        %v3584 = vpop.f32.mrf.mxu0
        %v3585 = vadd.f32 %v3264, %v3584
        %v3586 = vpop.f32.mrf.mxu0
        %3587 = vmatprep.mubr.bf16.mxu0 0
        %3588 = vmatmul.mubr.bf16.gmra.mxu0 %v1960
        %v3589 = vpop.f32.mrf.mxu0
        %v3590 = vadd.f32 %v3269, %v3589
        %v3591 = vpop.f32.mrf.mxu0
        %v3592 = vpop.f32.mrf.mxu0
        %v3593 = vadd.f32 %v3272, %v3592
        %v3594 = vpop.f32.mrf.mxu0
        %3595 = vmatprep.mubr.bf16.mxu0 0
        %3596 = vmatmul.mubr.bf16.gmra.mxu0 %v1963
        %v3597 = vpop.f32.mrf.mxu0
        %v3598 = vadd.f32 %v3277, %v3597
        %v3599 = vpop.f32.mrf.mxu0
        %v3600 = vpop.f32.mrf.mxu0
        %v3601 = vadd.f32 %v3280, %v3600
        %v3602 = vpop.f32.mrf.mxu0
        %3603 = vmatprep.mubr.bf16.mxu0 0
        %3604 = vmatmul.mubr.bf16.gmra.mxu0 %v1966
        %v3605 = vpop.f32.mrf.mxu0
        %v3606 = vadd.f32 %v3285, %v3605
        %v3607 = vpop.f32.mrf.mxu0
        %v3608 = vpop.f32.mrf.mxu0
        %v3609 = vadd.f32 %v3288, %v3608
        %v3610 = vpop.f32.mrf.mxu0
        %3611 = vmatprep.mubr.bf16.mxu0 0
        %3612 = vmatmul.mubr.bf16.gmra.mxu0 %v1969
        %v3613 = vpop.f32.mrf.mxu0
        %v3614 = vadd.f32 %v3293, %v3613
        %v3615 = vpop.f32.mrf.mxu0
        %v3616 = vpop.f32.mrf.mxu0
        %v3617 = vadd.f32 %v3296, %v3616
        %v3618 = vpop.f32.mrf.mxu0
        %3619 = vmatprep.mubr.bf16.mxu0 0
        %3620 = vmatmul.mubr.bf16.gmra.mxu0 %v1972
        %v3621 = vpop.f32.mrf.mxu0
        %v3622 = vadd.f32 %v3301, %v3621
        %v3623 = vpop.f32.mrf.mxu0
        %v3624 = vpop.f32.mrf.mxu0
        %v3625 = vadd.f32 %v3304, %v3624
        %v3626 = vpop.f32.mrf.mxu0
        %3627 = vmatprep.mubr.bf16.mxu0 0
        %3628 = vmatmul.mubr.bf16.gmra.mxu0 %v1975
        %v3629 = vpop.f32.mrf.mxu0
        %v3630 = vadd.f32 %v3309, %v3629
        %v3631 = vpop.f32.mrf.mxu0
        %v3632 = vpop.f32.mrf.mxu0
        %v3633 = vadd.f32 %v3312, %v3632
        %v3634 = vpop.f32.mrf.mxu0
        %3635 = vmatprep.mubr.bf16.mxu0 0
        %3636 = vmatmul.mubr.bf16.gmra.mxu0 %v1978
        %v3637 = vpop.f32.mrf.mxu0
        %v3638 = vadd.f32 %v3317, %v3637
        %v3639 = vpop.f32.mrf.mxu0
        %v3640 = vpop.f32.mrf.mxu0
        %v3641 = vadd.f32 %v3320, %v3640
        %v3642 = vpop.f32.mrf.mxu0
        %3643 = vmatprep.mubr.bf16.mxu0 0
        %3644 = vmatmul.mubr.bf16.gmra.mxu0 %v1981
        %v3645 = vpop.f32.mrf.mxu0
        %v3646 = vadd.f32 %v3325, %v3645
        %v3647 = vpop.f32.mrf.mxu0
        %v3648 = vpop.f32.mrf.mxu0
        %v3649 = vadd.f32 %v3328, %v3648
        %v3650 = vpop.f32.mrf.mxu0
        %3651 = vmatprep.mubr.bf16.mxu0 0
        %3652 = vmatmul.mubr.bf16.gmra.mxu0 %v1984
        %v3653 = vpop.f32.mrf.mxu0
        %v3654 = vadd.f32 %v3333, %v3653
        %v3655 = vpop.f32.mrf.mxu0
        %v3656 = vpop.f32.mrf.mxu0
        %v3657 = vadd.f32 %v3336, %v3656
        %v3658 = vpop.f32.mrf.mxu0
        %3659 = vmatprep.mubr.bf16.mxu0 0
        %3660 = vmatmul.mubr.bf16.gmra.mxu0 %v1987
        %v3661 = vpop.f32.mrf.mxu0
        %v3662 = vadd.f32 %v3341, %v3661
        %v3663 = vpop.f32.mrf.mxu0
        %v3664 = vpop.f32.mrf.mxu0
        %v3665 = vadd.f32 %v3344, %v3664
        %v3666 = vpop.f32.mrf.mxu0
        %3667 = vdwg.mxu0
        %v3668 = vpack.c.bf16 %v1797, %v1796
        %v3669 = vpack.c.bf16 %v1273, %v1272
        %v3670 = vpack.c.bf16 %v1875, %v1874
        %v3671 = vpack.c.bf16 %v1799, %v1798
        %v3672 = vpack.c.bf16 %v1385, %v1274
        %v3673 = vpack.c.bf16 %v1877, %v1876
        %v3674 = vpack.c.bf16 %v1801, %v1800
        %v3675 = vpack.c.bf16 %v1387, %v1386
        %v3676 = vpack.c.bf16 %v1879, %v1878
        %v3725 = vunpack.c.l.b16 %v469
        %v3726 = vunpack.c.l.b16 %v470
        %v3727 = vunpack.c.l.b16 %v471
        %v3728 = vunpack.c.l.b16 %v472
        %v3729 = vunpack.c.l.b16 %v473
        %v3730 = vunpack.c.l.b16 %v474
        %v3731 = vunpack.c.l.b16 %v475
        %v3732 = vunpack.c.l.b16 %v476
        %v3733 = vunpack.c.l.b16 %v477
        %v3734 = vunpack.c.l.b16 %v478
        %v3735 = vunpack.c.l.b16 %v479
        %v3736 = vunpack.c.l.b16 %v480
        %v3737 = vunpack.c.l.b16 %v481
        %v3738 = vunpack.c.l.b16 %v482
        %v3739 = vunpack.c.l.b16 %v483
        %v3740 = vunpack.c.l.b16 %v484
        %v3741 = vunpack.c.l.b16 %v485
        %v3742 = vunpack.c.l.b16 %v486
        %v3743 = vunpack.c.l.b16 %v487
        %v3744 = vunpack.c.l.b16 %v488
        %v3745 = vunpack.c.l.b16 %v489
        %v3746 = vunpack.c.l.b16 %v490
        %v3747 = vunpack.c.l.b16 %v491
        %v3748 = vunpack.c.l.b16 %v492
        %v3749 = vunpack.c.l.b16 %v493
        %v3750 = vunpack.c.l.b16 %v494
        %v3751 = vunpack.c.l.b16 %v495
        %v3752 = vunpack.c.l.b16 %v496
        %v3753 = vunpack.c.l.b16 %v497
        %v3754 = vunpack.c.l.b16 %v498
        %v3755 = vunpack.c.l.b16 %v499
        %v3756 = vunpack.c.l.b16 %v500
        %v3757 = vunpack.c.l.b16 %v501
        %v3758 = vunpack.c.l.b16 %v502
        %v3759 = vunpack.c.l.b16 %v503
        %v3760 = vunpack.c.l.b16 %v504
        %v3761 = vunpack.c.l.b16 %v505
        %v3762 = vunpack.c.l.b16 %v506
        %v3763 = vunpack.c.l.b16 %v507
        %v3764 = vunpack.c.l.b16 %v508
        %v3765 = vunpack.c.l.b16 %v509
        %v3766 = vunpack.c.l.b16 %v510
        %v3767 = vunpack.c.l.b16 %v511
        %v3768 = vunpack.c.l.b16 %v512
        %v3769 = vunpack.c.l.b16 %v513
        %v3770 = vunpack.c.l.b16 %v514
        %v3771 = vunpack.c.l.b16 %v515
        %v3772 = vunpack.c.l.b16 %v516
        %v3773 = vpack.c.b16 %v3726, %v3725
        %v3774 = vpack.c.b16 %v3728, %v3727
        %v3775 = vpack.c.b16 %v3730, %v3729
        %v3776 = vpack.c.b16 %v3732, %v3731
        %v3777 = vpack.c.b16 %v3734, %v3733
        %v3778 = vpack.c.b16 %v3736, %v3735
        %v3779 = vpack.c.b16 %v3738, %v3737
        %v3780 = vpack.c.b16 %v3740, %v3739
        %v3781 = vpack.c.b16 %v3742, %v3741
        %v3782 = vpack.c.b16 %v3744, %v3743
        %v3783 = vpack.c.b16 %v3746, %v3745
        %v3784 = vpack.c.b16 %v3748, %v3747
        %v3785 = vpack.c.b16 %v3750, %v3749
        %v3786 = vpack.c.b16 %v3752, %v3751
        %v3787 = vpack.c.b16 %v3754, %v3753
        %v3788 = vpack.c.b16 %v3756, %v3755
        %v3789 = vpack.c.b16 %v3758, %v3757
        %v3790 = vpack.c.b16 %v3760, %v3759
        %v3791 = vpack.c.b16 %v3762, %v3761
        %v3792 = vpack.c.b16 %v3764, %v3763
        %v3793 = vpack.c.b16 %v3766, %v3765
        %v3794 = vpack.c.b16 %v3768, %v3767
        %v3795 = vpack.c.b16 %v3770, %v3769
        %v3796 = vpack.c.b16 %v3772, %v3771
        %3821 = vmatprep.subr.bf16.mxu0 0
        %3822 = vmatpush1.bf16.msra.mxu0 %v3780
        %3823 = vmatprep.subr.bf16.mxu0 0
        %3824 = vmatpush1.bf16.msra.mxu0 %v3779
        %3825 = vmatprep.subr.bf16.mxu0 0
        %3826 = vmatpush1.bf16.msra.mxu0 %v3778
        %3827 = vmatprep.subr.bf16.mxu0 0
        %3828 = vmatpush1.bf16.msra.mxu0 %v3777
        %3829 = vmatprep.subr.bf16.mxu0 0
        %3830 = vmatpush1.bf16.msra.mxu0 %v3776
        %3831 = vmatprep.subr.bf16.mxu0 0
        %3832 = vmatpush1.bf16.msra.mxu0 %v3775
        %3833 = vmatprep.subr.bf16.mxu0 0
        %3834 = vmatpush1.bf16.msra.mxu0 %v3774
        %3835 = vmatprep.subr.bf16.mxu0 0
        %3836 = vmatpush1.bf16.msra.mxu0 %v3773
        %3837 = vmatprep.subr.bf16.mxu0 0
        %3838 = vmatpush2.bf16.msra.mxu0 %v3788
        %3839 = vmatprep.subr.bf16.mxu0 0
        %3840 = vmatpush2.bf16.msra.mxu0 %v3787
        %3841 = vmatprep.subr.bf16.mxu0 0
        %3842 = vmatpush2.bf16.msra.mxu0 %v3786
        %3843 = vmatprep.subr.bf16.mxu0 0
        %3844 = vmatpush2.bf16.msra.mxu0 %v3785
        %3845 = vmatprep.subr.bf16.mxu0 0
        %3846 = vmatpush2.bf16.msra.mxu0 %v3784
        %3847 = vmatprep.subr.bf16.mxu0 0
        %3848 = vmatpush2.bf16.msra.mxu0 %v3783
        %3849 = vmatprep.subr.bf16.mxu0 0
        %3850 = vmatpush2.bf16.msra.mxu0 %v3782
        %3851 = vmatprep.subr.bf16.mxu0 0
        %3852 = vmatpush2.bf16.msra.mxu0 %v3781
        %3853 = vmatprep.mubr.bf16.mxu0 %v1890
        %3854 = vmatmul.mubr.bf16.gmra.mxu0 %v1889
        %v3855 = vpop.f32.mrf.mxu0
        %v3856 = vadd.f32 0.0, %v3855
        %v3857 = vpop.f32.mrf.mxu0
        %v3858 = vpop.f32.mrf.mxu0
        %v3859 = vadd.f32 0.0, %v3858
        %v3860 = vpop.f32.mrf.mxu0
        %3861 = vmatprep.mubr.bf16.mxu0 %v1893
        %3862 = vmatmul.mubr.bf16.gmra.mxu0 %v1892
        %v3863 = vpop.f32.mrf.mxu0
        %v3864 = vadd.f32 0.0, %v3863
        %v3865 = vpop.f32.mrf.mxu0
        %v3866 = vpop.f32.mrf.mxu0
        %v3867 = vadd.f32 0.0, %v3866
        %v3868 = vpop.f32.mrf.mxu0
        %3869 = vmatprep.mubr.bf16.mxu0 %v1896
        %3870 = vmatmul.mubr.bf16.gmra.mxu0 %v1895
        %v3871 = vpop.f32.mrf.mxu0
        %v3872 = vadd.f32 0.0, %v3871
        %v3873 = vpop.f32.mrf.mxu0
        %v3874 = vpop.f32.mrf.mxu0
        %v3875 = vadd.f32 0.0, %v3874
        %v3876 = vpop.f32.mrf.mxu0
        %3877 = vmatprep.mubr.bf16.mxu0 %v1899
        %3878 = vmatmul.mubr.bf16.gmra.mxu0 %v1898
        %v3879 = vpop.f32.mrf.mxu0
        %v3880 = vadd.f32 0.0, %v3879
        %v3881 = vpop.f32.mrf.mxu0
        %v3882 = vpop.f32.mrf.mxu0
        %v3883 = vadd.f32 0.0, %v3882
        %v3884 = vpop.f32.mrf.mxu0
        %3885 = vmatprep.mubr.bf16.mxu0 %v1902
        %3886 = vmatmul.mubr.bf16.gmra.mxu0 %v1901
        %v3887 = vpop.f32.mrf.mxu0
        %v3888 = vadd.f32 0.0, %v3887
        %v3889 = vpop.f32.mrf.mxu0
        %v3890 = vpop.f32.mrf.mxu0
        %v3891 = vadd.f32 0.0, %v3890
        %v3892 = vpop.f32.mrf.mxu0
        %3893 = vmatprep.mubr.bf16.mxu0 %v1905
        %3894 = vmatmul.mubr.bf16.gmra.mxu0 %v1904
        %v3895 = vpop.f32.mrf.mxu0
        %v3896 = vadd.f32 0.0, %v3895
        %v3897 = vpop.f32.mrf.mxu0
        %v3898 = vpop.f32.mrf.mxu0
        %v3899 = vadd.f32 0.0, %v3898
        %v3900 = vpop.f32.mrf.mxu0
        %3901 = vmatprep.mubr.bf16.mxu0 %v1908
        %3902 = vmatmul.mubr.bf16.gmra.mxu0 %v1907
        %v3903 = vpop.f32.mrf.mxu0
        %v3904 = vadd.f32 0.0, %v3903
        %v3905 = vpop.f32.mrf.mxu0
        %v3906 = vpop.f32.mrf.mxu0
        %v3907 = vadd.f32 0.0, %v3906
        %v3908 = vpop.f32.mrf.mxu0
        %3909 = vmatprep.mubr.bf16.mxu0 %v1911
        %3910 = vmatmul.mubr.bf16.gmra.mxu0 %v1910
        %v3911 = vpop.f32.mrf.mxu0
        %v3912 = vadd.f32 0.0, %v3911
        %v3913 = vpop.f32.mrf.mxu0
        %v3914 = vpop.f32.mrf.mxu0
        %v3915 = vadd.f32 0.0, %v3914
        %v3916 = vpop.f32.mrf.mxu0
        %3917 = vmatprep.mubr.bf16.mxu0 %v1914
        %3918 = vmatmul.mubr.bf16.gmra.mxu0 %v1913
        %v3919 = vpop.f32.mrf.mxu0
        %v3920 = vadd.f32 0.0, %v3919
        %v3921 = vpop.f32.mrf.mxu0
        %v3922 = vpop.f32.mrf.mxu0
        %v3923 = vadd.f32 0.0, %v3922
        %v3924 = vpop.f32.mrf.mxu0
        %3925 = vmatprep.mubr.bf16.mxu0 %v1917
        %3926 = vmatmul.mubr.bf16.gmra.mxu0 %v1916
        %v3927 = vpop.f32.mrf.mxu0
        %v3928 = vadd.f32 0.0, %v3927
        %v3929 = vpop.f32.mrf.mxu0
        %v3930 = vpop.f32.mrf.mxu0
        %v3931 = vadd.f32 0.0, %v3930
        %v3932 = vpop.f32.mrf.mxu0
        %3933 = vmatprep.mubr.bf16.mxu0 %v1920
        %3934 = vmatmul.mubr.bf16.gmra.mxu0 %v1919
        %v3935 = vpop.f32.mrf.mxu0
        %v3936 = vadd.f32 0.0, %v3935
        %v3937 = vpop.f32.mrf.mxu0
        %v3938 = vpop.f32.mrf.mxu0
        %v3939 = vadd.f32 0.0, %v3938
        %v3940 = vpop.f32.mrf.mxu0
        %3941 = vmatprep.mubr.bf16.mxu0 %v1923
        %3942 = vmatmul.mubr.bf16.gmra.mxu0 %v1922
        %v3943 = vpop.f32.mrf.mxu0
        %v3944 = vadd.f32 0.0, %v3943
        %v3945 = vpop.f32.mrf.mxu0
        %v3946 = vpop.f32.mrf.mxu0
        %v3947 = vadd.f32 0.0, %v3946
        %v3948 = vpop.f32.mrf.mxu0
        %3949 = vmatprep.mubr.bf16.mxu0 %v1926
        %3950 = vmatmul.mubr.bf16.gmra.mxu0 %v1925
        %v3951 = vpop.f32.mrf.mxu0
        %v3952 = vadd.f32 0.0, %v3951
        %v3953 = vpop.f32.mrf.mxu0
        %v3954 = vpop.f32.mrf.mxu0
        %v3955 = vadd.f32 0.0, %v3954
        %v3956 = vpop.f32.mrf.mxu0
        %3957 = vmatprep.mubr.bf16.mxu0 %v1929
        %3958 = vmatmul.mubr.bf16.gmra.mxu0 %v1928
        %v3959 = vpop.f32.mrf.mxu0
        %v3960 = vadd.f32 0.0, %v3959
        %v3961 = vpop.f32.mrf.mxu0
        %v3962 = vpop.f32.mrf.mxu0
        %v3963 = vadd.f32 0.0, %v3962
        %v3964 = vpop.f32.mrf.mxu0
        %3965 = vmatprep.mubr.bf16.mxu0 %v1932
        %3966 = vmatmul.mubr.bf16.gmra.mxu0 %v1931
        %v3967 = vpop.f32.mrf.mxu0
        %v3968 = vadd.f32 0.0, %v3967
        %v3969 = vpop.f32.mrf.mxu0
        %v3970 = vpop.f32.mrf.mxu0
        %v3971 = vadd.f32 0.0, %v3970
        %v3972 = vpop.f32.mrf.mxu0
        %3973 = vmatprep.mubr.bf16.mxu0 %v1935
        %3974 = vmatmul.mubr.bf16.gmra.mxu0 %v1934
        %v3975 = vpop.f32.mrf.mxu0
        %v3976 = vadd.f32 0.0, %v3975
        %v3977 = vpop.f32.mrf.mxu0
        %v3978 = vpop.f32.mrf.mxu0
        %v3979 = vadd.f32 0.0, %v3978
        %v3980 = vpop.f32.mrf.mxu0
        %3981 = vmatprep.mubr.bf16.mxu0 %v1938
        %3982 = vmatmul.mubr.bf16.gmra.mxu0 %v1937
        %v3983 = vpop.f32.mrf.mxu0
        %v3984 = vadd.f32 0.0, %v3983
        %v3985 = vpop.f32.mrf.mxu0
        %v3986 = vpop.f32.mrf.mxu0
        %v3987 = vadd.f32 0.0, %v3986
        %v3988 = vpop.f32.mrf.mxu0
        %3989 = vmatprep.mubr.bf16.mxu0 %v1941
        %3990 = vmatmul.mubr.bf16.gmra.mxu0 %v1940
        %v3991 = vpop.f32.mrf.mxu0
        %v3992 = vadd.f32 0.0, %v3991
        %v3993 = vpop.f32.mrf.mxu0
        %v3994 = vpop.f32.mrf.mxu0
        %v3995 = vadd.f32 0.0, %v3994
        %v3996 = vpop.f32.mrf.mxu0
        %3997 = vmatprep.mubr.bf16.mxu0 %v1944
        %3998 = vmatmul.mubr.bf16.gmra.mxu0 %v1943
        %v3999 = vpop.f32.mrf.mxu0
        %v4000 = vadd.f32 0.0, %v3999
        %v4001 = vpop.f32.mrf.mxu0
        %v4002 = vpop.f32.mrf.mxu0
        %v4003 = vadd.f32 0.0, %v4002
        %v4004 = vpop.f32.mrf.mxu0
        %4005 = vmatprep.mubr.bf16.mxu0 %v1947
        %4006 = vmatmul.mubr.bf16.gmra.mxu0 %v1946
        %v4007 = vpop.f32.mrf.mxu0
        %v4008 = vadd.f32 0.0, %v4007
        %v4009 = vpop.f32.mrf.mxu0
        %v4010 = vpop.f32.mrf.mxu0
        %v4011 = vadd.f32 0.0, %v4010
        %v4012 = vpop.f32.mrf.mxu0
        %4013 = vmatprep.mubr.bf16.mxu0 %v1950
        %4014 = vmatmul.mubr.bf16.gmra.mxu0 %v1949
        %v4015 = vpop.f32.mrf.mxu0
        %v4016 = vadd.f32 0.0, %v4015
        %v4017 = vpop.f32.mrf.mxu0
        %v4018 = vpop.f32.mrf.mxu0
        %v4019 = vadd.f32 0.0, %v4018
        %v4020 = vpop.f32.mrf.mxu0
        %4021 = vmatprep.mubr.bf16.mxu0 %v1953
        %4022 = vmatmul.mubr.bf16.gmra.mxu0 %v1952
        %v4023 = vpop.f32.mrf.mxu0
        %v4024 = vadd.f32 0.0, %v4023
        %v4025 = vpop.f32.mrf.mxu0
        %v4026 = vpop.f32.mrf.mxu0
        %v4027 = vadd.f32 0.0, %v4026
        %v4028 = vpop.f32.mrf.mxu0
        %4029 = vmatprep.mubr.bf16.mxu0 %v1956
        %4030 = vmatmul.mubr.bf16.gmra.mxu0 %v1955
        %v4031 = vpop.f32.mrf.mxu0
        %v4032 = vadd.f32 0.0, %v4031
        %v4033 = vpop.f32.mrf.mxu0
        %v4034 = vpop.f32.mrf.mxu0
        %v4035 = vadd.f32 0.0, %v4034
        %v4036 = vpop.f32.mrf.mxu0
        %4037 = vmatprep.mubr.bf16.mxu0 %v1959
        %4038 = vmatmul.mubr.bf16.gmra.mxu0 %v1958
        %v4039 = vpop.f32.mrf.mxu0
        %v4040 = vadd.f32 0.0, %v4039
        %v4041 = vpop.f32.mrf.mxu0
        %v4042 = vpop.f32.mrf.mxu0
        %v4043 = vadd.f32 0.0, %v4042
        %v4044 = vpop.f32.mrf.mxu0
        %4045 = vmatprep.mubr.bf16.mxu0 %v1962
        %4046 = vmatmul.mubr.bf16.gmra.mxu0 %v1961
        %v4047 = vpop.f32.mrf.mxu0
        %v4048 = vadd.f32 0.0, %v4047
        %v4049 = vpop.f32.mrf.mxu0
        %v4050 = vpop.f32.mrf.mxu0
        %v4051 = vadd.f32 0.0, %v4050
        %v4052 = vpop.f32.mrf.mxu0
        %4053 = vmatprep.mubr.bf16.mxu0 %v1965
        %4054 = vmatmul.mubr.bf16.gmra.mxu0 %v1964
        %v4055 = vpop.f32.mrf.mxu0
        %v4056 = vadd.f32 0.0, %v4055
        %v4057 = vpop.f32.mrf.mxu0
        %v4058 = vpop.f32.mrf.mxu0
        %v4059 = vadd.f32 0.0, %v4058
        %v4060 = vpop.f32.mrf.mxu0
        %4061 = vmatprep.mubr.bf16.mxu0 %v1968
        %4062 = vmatmul.mubr.bf16.gmra.mxu0 %v1967
        %v4063 = vpop.f32.mrf.mxu0
        %v4064 = vadd.f32 0.0, %v4063
        %v4065 = vpop.f32.mrf.mxu0
        %v4066 = vpop.f32.mrf.mxu0
        %v4067 = vadd.f32 0.0, %v4066
        %v4068 = vpop.f32.mrf.mxu0
        %4069 = vmatprep.mubr.bf16.mxu0 %v1971
        %4070 = vmatmul.mubr.bf16.gmra.mxu0 %v1970
        %v4071 = vpop.f32.mrf.mxu0
        %v4072 = vadd.f32 0.0, %v4071
        %v4073 = vpop.f32.mrf.mxu0
        %v4074 = vpop.f32.mrf.mxu0
        %v4075 = vadd.f32 0.0, %v4074
        %v4076 = vpop.f32.mrf.mxu0
        %4077 = vmatprep.mubr.bf16.mxu0 %v1974
        %4078 = vmatmul.mubr.bf16.gmra.mxu0 %v1973
        %v4079 = vpop.f32.mrf.mxu0
        %v4080 = vadd.f32 0.0, %v4079
        %v4081 = vpop.f32.mrf.mxu0
        %v4082 = vpop.f32.mrf.mxu0
        %v4083 = vadd.f32 0.0, %v4082
        %v4084 = vpop.f32.mrf.mxu0
        %4085 = vmatprep.mubr.bf16.mxu0 %v1977
        %4086 = vmatmul.mubr.bf16.gmra.mxu0 %v1976
        %v4087 = vpop.f32.mrf.mxu0
        %v4088 = vadd.f32 0.0, %v4087
        %v4089 = vpop.f32.mrf.mxu0
        %v4090 = vpop.f32.mrf.mxu0
        %v4091 = vadd.f32 0.0, %v4090
        %v4092 = vpop.f32.mrf.mxu0
        %4093 = vmatprep.mubr.bf16.mxu0 %v1980
        %4094 = vmatmul.mubr.bf16.gmra.mxu0 %v1979
        %v4095 = vpop.f32.mrf.mxu0
        %v4096 = vadd.f32 0.0, %v4095
        %v4097 = vpop.f32.mrf.mxu0
        %v4098 = vpop.f32.mrf.mxu0
        %v4099 = vadd.f32 0.0, %v4098
        %v4100 = vpop.f32.mrf.mxu0
        %4101 = vmatprep.mubr.bf16.mxu0 %v1983
        %4102 = vmatmul.mubr.bf16.gmra.mxu0 %v1982
        %v4103 = vpop.f32.mrf.mxu0
        %v4104 = vadd.f32 0.0, %v4103
        %v4105 = vpop.f32.mrf.mxu0
        %v4106 = vpop.f32.mrf.mxu0
        %v4107 = vadd.f32 0.0, %v4106
        %v4108 = vpop.f32.mrf.mxu0
        %4109 = vmatprep.mubr.bf16.mxu0 %v1986
        %4110 = vmatmul.mubr.bf16.gmra.mxu0 %v1985
        %v4111 = vpop.f32.mrf.mxu0
        %v4112 = vadd.f32 0.0, %v4111
        %v4113 = vpop.f32.mrf.mxu0
        %v4114 = vpop.f32.mrf.mxu0
        %v4115 = vadd.f32 0.0, %v4114
        %v4116 = vpop.f32.mrf.mxu0
        %4117 = vmatprep.mubr.bf16.mxu0 %v3669
        %4118 = vmatmul.mubr.bf16.gmra.mxu0 %v3668
        %v4119 = vpop.f32.mrf.mxu0
        %v4120 = vadd.f32 0.0, %v4119
        %v4121 = vpop.f32.mrf.mxu0
        %v4122 = vpop.f32.mrf.mxu0
        %v4123 = vadd.f32 0.0, %v4122
        %v4124 = vpop.f32.mrf.mxu0
        %4125 = vmatprep.mubr.bf16.mxu0 %v3672
        %4126 = vmatmul.mubr.bf16.gmra.mxu0 %v3671
        %v4127 = vpop.f32.mrf.mxu0
        %v4128 = vadd.f32 0.0, %v4127
        %v4129 = vpop.f32.mrf.mxu0
        %v4130 = vpop.f32.mrf.mxu0
        %v4131 = vadd.f32 0.0, %v4130
        %v4132 = vpop.f32.mrf.mxu0
        %4133 = vmatprep.mubr.bf16.mxu0 %v3675
        %4134 = vmatmul.mubr.bf16.gmra.mxu0 %v3674
        %v4135 = vpop.f32.mrf.mxu0
        %v4136 = vadd.f32 0.0, %v4135
        %v4137 = vpop.f32.mrf.mxu0
        %v4138 = vpop.f32.mrf.mxu0
        %v4139 = vadd.f32 0.0, %v4138
        %v4140 = vpop.f32.mrf.mxu0
        %4141 = vdwg.mxu0
        %4142 = vmatprep.subr.bf16.mxu0 0
        %4143 = vmatpush1.bf16.msra.mxu0 %v3796
        %4144 = vmatprep.subr.bf16.mxu0 0
        %4145 = vmatpush1.bf16.msra.mxu0 %v3795
        %4146 = vmatprep.subr.bf16.mxu0 0
        %4147 = vmatpush1.bf16.msra.mxu0 %v3794
        %4148 = vmatprep.subr.bf16.mxu0 0
        %4149 = vmatpush1.bf16.msra.mxu0 %v3793
        %4150 = vmatprep.subr.bf16.mxu0 0
        %4151 = vmatpush1.bf16.msra.mxu0 %v3792
        %4152 = vmatprep.subr.bf16.mxu0 0
        %4153 = vmatpush1.bf16.msra.mxu0 %v3791
        %4154 = vmatprep.subr.bf16.mxu0 0
        %4155 = vmatpush1.bf16.msra.mxu0 %v3790
        %4156 = vmatprep.subr.bf16.mxu0 0
        %4157 = vmatpush1.bf16.msra.mxu0 %v3789
        %4158 = vmatprep.subr.bf16.mxu0 0
        %4159 = vmatpush2.bf16.msra.mxu0 0
        %4160 = vmatprep.subr.bf16.mxu0 0
        %4161 = vmatpush2.bf16.msra.mxu0 0
        %4162 = vmatprep.subr.bf16.mxu0 0
        %4163 = vmatpush2.bf16.msra.mxu0 0
        %4164 = vmatprep.subr.bf16.mxu0 0
        %4165 = vmatpush2.bf16.msra.mxu0 0
        %4166 = vmatprep.subr.bf16.mxu0 0
        %4167 = vmatpush2.bf16.msra.mxu0 0
        %4168 = vmatprep.subr.bf16.mxu0 0
        %4169 = vmatpush2.bf16.msra.mxu0 0
        %4170 = vmatprep.subr.bf16.mxu0 0
        %4171 = vmatpush2.bf16.msra.mxu0 0
        %4172 = vmatprep.subr.bf16.mxu0 0
        %4173 = vmatpush2.bf16.msra.mxu0 0
        %4174 = vmatprep.mubr.bf16.mxu0 0
        %4175 = vmatmul.mubr.bf16.gmra.mxu0 %v1891
        %v4176 = vpop.f32.mrf.mxu0
        %v4177 = vadd.f32 %v3856, %v4176
        %v4178 = vpop.f32.mrf.mxu0
        %v4179 = vpop.f32.mrf.mxu0
        %v4180 = vadd.f32 %v3859, %v4179
        %v4181 = vpop.f32.mrf.mxu0
        %4182 = vmatprep.mubr.bf16.mxu0 0
        %4183 = vmatmul.mubr.bf16.gmra.mxu0 %v1894
        %v4184 = vpop.f32.mrf.mxu0
        %v4185 = vadd.f32 %v3864, %v4184
        %v4186 = vpop.f32.mrf.mxu0
        %v4187 = vpop.f32.mrf.mxu0
        %v4188 = vadd.f32 %v3867, %v4187
        %v4189 = vpop.f32.mrf.mxu0
        %4190 = vmatprep.mubr.bf16.mxu0 0
        %4191 = vmatmul.mubr.bf16.gmra.mxu0 %v1897
        %v4192 = vpop.f32.mrf.mxu0
        %v4193 = vadd.f32 %v3872, %v4192
        %v4194 = vpop.f32.mrf.mxu0
        %v4195 = vpop.f32.mrf.mxu0
        %v4196 = vadd.f32 %v3875, %v4195
        %v4197 = vpop.f32.mrf.mxu0
        %4198 = vmatprep.mubr.bf16.mxu0 0
        %4199 = vmatmul.mubr.bf16.gmra.mxu0 %v1900
        %v4200 = vpop.f32.mrf.mxu0
        %v4201 = vadd.f32 %v3880, %v4200
        %v4202 = vpop.f32.mrf.mxu0
        %v4203 = vpop.f32.mrf.mxu0
        %v4204 = vadd.f32 %v3883, %v4203
        %v4205 = vpop.f32.mrf.mxu0
        %4206 = vmatprep.mubr.bf16.mxu0 0
        %4207 = vmatmul.mubr.bf16.gmra.mxu0 %v1903
        %v4208 = vpop.f32.mrf.mxu0
        %v4209 = vadd.f32 %v3888, %v4208
        %v4210 = vpop.f32.mrf.mxu0
        %v4211 = vpop.f32.mrf.mxu0
        %v4212 = vadd.f32 %v3891, %v4211
        %v4213 = vpop.f32.mrf.mxu0
        %4214 = vmatprep.mubr.bf16.mxu0 0
        %4215 = vmatmul.mubr.bf16.gmra.mxu0 %v1906
        %v4216 = vpop.f32.mrf.mxu0
        %v4217 = vadd.f32 %v3896, %v4216
        %v4218 = vpop.f32.mrf.mxu0
        %v4219 = vpop.f32.mrf.mxu0
        %v4220 = vadd.f32 %v3899, %v4219
        %v4221 = vpop.f32.mrf.mxu0
        %4222 = vmatprep.mubr.bf16.mxu0 0
        %4223 = vmatmul.mubr.bf16.gmra.mxu0 %v1909
        %v4224 = vpop.f32.mrf.mxu0
        %v4225 = vadd.f32 %v3904, %v4224
        %v4226 = vpop.f32.mrf.mxu0
        %v4227 = vpop.f32.mrf.mxu0
        %v4228 = vadd.f32 %v3907, %v4227
        %v4229 = vpop.f32.mrf.mxu0
        %4230 = vmatprep.mubr.bf16.mxu0 0
        %4231 = vmatmul.mubr.bf16.gmra.mxu0 %v1912
        %v4232 = vpop.f32.mrf.mxu0
        %v4233 = vadd.f32 %v3912, %v4232
        %v4234 = vpop.f32.mrf.mxu0
        %v4235 = vpop.f32.mrf.mxu0
        %v4236 = vadd.f32 %v3915, %v4235
        %v4237 = vpop.f32.mrf.mxu0
        %4238 = vmatprep.mubr.bf16.mxu0 0
        %4239 = vmatmul.mubr.bf16.gmra.mxu0 %v1915
        %v4240 = vpop.f32.mrf.mxu0
        %v4241 = vadd.f32 %v3920, %v4240
        %v4242 = vpop.f32.mrf.mxu0
        %v4243 = vpop.f32.mrf.mxu0
        %v4244 = vadd.f32 %v3923, %v4243
        %v4245 = vpop.f32.mrf.mxu0
        %4246 = vmatprep.mubr.bf16.mxu0 0
        %4247 = vmatmul.mubr.bf16.gmra.mxu0 %v1918
        %v4248 = vpop.f32.mrf.mxu0
        %v4249 = vadd.f32 %v3928, %v4248
        %v4250 = vpop.f32.mrf.mxu0
        %v4251 = vpop.f32.mrf.mxu0
        %v4252 = vadd.f32 %v3931, %v4251
        %v4253 = vpop.f32.mrf.mxu0
        %4254 = vmatprep.mubr.bf16.mxu0 0
        %4255 = vmatmul.mubr.bf16.gmra.mxu0 %v1921
        %v4256 = vpop.f32.mrf.mxu0
        %v4257 = vadd.f32 %v3936, %v4256
        %v4258 = vpop.f32.mrf.mxu0
        %v4259 = vpop.f32.mrf.mxu0
        %v4260 = vadd.f32 %v3939, %v4259
        %v4261 = vpop.f32.mrf.mxu0
        %4262 = vmatprep.mubr.bf16.mxu0 0
        %4263 = vmatmul.mubr.bf16.gmra.mxu0 %v1924
        %v4264 = vpop.f32.mrf.mxu0
        %v4265 = vadd.f32 %v3944, %v4264
        %v4266 = vpop.f32.mrf.mxu0
        %v4267 = vpop.f32.mrf.mxu0
        %v4268 = vadd.f32 %v3947, %v4267
        %v4269 = vpop.f32.mrf.mxu0
        %4270 = vmatprep.mubr.bf16.mxu0 0
        %4271 = vmatmul.mubr.bf16.gmra.mxu0 %v1927
        %v4272 = vpop.f32.mrf.mxu0
        %v4273 = vadd.f32 %v3952, %v4272
        %v4274 = vpop.f32.mrf.mxu0
        %v4275 = vpop.f32.mrf.mxu0
        %v4276 = vadd.f32 %v3955, %v4275
        %v4277 = vpop.f32.mrf.mxu0
        %4278 = vmatprep.mubr.bf16.mxu0 0
        %4279 = vmatmul.mubr.bf16.gmra.mxu0 %v1930
        %v4280 = vpop.f32.mrf.mxu0
        %v4281 = vadd.f32 %v3960, %v4280
        %v4282 = vpop.f32.mrf.mxu0
        %v4283 = vpop.f32.mrf.mxu0
        %v4284 = vadd.f32 %v3963, %v4283
        %v4285 = vpop.f32.mrf.mxu0
        %4286 = vmatprep.mubr.bf16.mxu0 0
        %4287 = vmatmul.mubr.bf16.gmra.mxu0 %v1933
        %v4288 = vpop.f32.mrf.mxu0
        %v4289 = vadd.f32 %v3968, %v4288
        %v4290 = vpop.f32.mrf.mxu0
        %v4291 = vpop.f32.mrf.mxu0
        %v4292 = vadd.f32 %v3971, %v4291
        %v4293 = vpop.f32.mrf.mxu0
        %4294 = vmatprep.mubr.bf16.mxu0 0
        %4295 = vmatmul.mubr.bf16.gmra.mxu0 %v1936
        %v4296 = vpop.f32.mrf.mxu0
        %v4297 = vadd.f32 %v3976, %v4296
        %v4298 = vpop.f32.mrf.mxu0
        %v4299 = vpop.f32.mrf.mxu0
        %v4300 = vadd.f32 %v3979, %v4299
        %v4301 = vpop.f32.mrf.mxu0
        %4302 = vmatprep.mubr.bf16.mxu0 0
        %4303 = vmatmul.mubr.bf16.gmra.mxu0 %v1939
        %v4304 = vpop.f32.mrf.mxu0
        %v4305 = vadd.f32 %v3984, %v4304
        %v4306 = vpop.f32.mrf.mxu0
        %v4307 = vpop.f32.mrf.mxu0
        %v4308 = vadd.f32 %v3987, %v4307
        %v4309 = vpop.f32.mrf.mxu0
        %4310 = vmatprep.mubr.bf16.mxu0 0
        %4311 = vmatmul.mubr.bf16.gmra.mxu0 %v1942
        %v4312 = vpop.f32.mrf.mxu0
        %v4313 = vadd.f32 %v3992, %v4312
        %v4314 = vpop.f32.mrf.mxu0
        %v4315 = vpop.f32.mrf.mxu0
        %v4316 = vadd.f32 %v3995, %v4315
        %v4317 = vpop.f32.mrf.mxu0
        %4318 = vmatprep.mubr.bf16.mxu0 0
        %4319 = vmatmul.mubr.bf16.gmra.mxu0 %v1945
        %v4320 = vpop.f32.mrf.mxu0
        %v4321 = vadd.f32 %v4000, %v4320
        %v4322 = vpop.f32.mrf.mxu0
        %v4323 = vpop.f32.mrf.mxu0
        %v4324 = vadd.f32 %v4003, %v4323
        %v4325 = vpop.f32.mrf.mxu0
        %4326 = vmatprep.mubr.bf16.mxu0 0
        %4327 = vmatmul.mubr.bf16.gmra.mxu0 %v1948
        %v4328 = vpop.f32.mrf.mxu0
        %v4329 = vadd.f32 %v4008, %v4328
        %v4330 = vpop.f32.mrf.mxu0
        %v4331 = vpop.f32.mrf.mxu0
        %v4332 = vadd.f32 %v4011, %v4331
        %v4333 = vpop.f32.mrf.mxu0
        %4334 = vmatprep.mubr.bf16.mxu0 0
        %4335 = vmatmul.mubr.bf16.gmra.mxu0 %v1951
        %v4336 = vpop.f32.mrf.mxu0
        %v4337 = vadd.f32 %v4016, %v4336
        %v4338 = vpop.f32.mrf.mxu0
        %v4339 = vpop.f32.mrf.mxu0
        %v4340 = vadd.f32 %v4019, %v4339
        %v4341 = vpop.f32.mrf.mxu0
        %4342 = vmatprep.mubr.bf16.mxu0 0
        %4343 = vmatmul.mubr.bf16.gmra.mxu0 %v1954
        %v4344 = vpop.f32.mrf.mxu0
        %v4345 = vadd.f32 %v4024, %v4344
        %v4346 = vpop.f32.mrf.mxu0
        %v4347 = vpop.f32.mrf.mxu0
        %v4348 = vadd.f32 %v4027, %v4347
        %v4349 = vpop.f32.mrf.mxu0
        %4350 = vmatprep.mubr.bf16.mxu0 0
        %4351 = vmatmul.mubr.bf16.gmra.mxu0 %v1957
        %v4352 = vpop.f32.mrf.mxu0
        %v4353 = vadd.f32 %v4032, %v4352
        %v4354 = vpop.f32.mrf.mxu0
        %v4355 = vpop.f32.mrf.mxu0
        %v4356 = vadd.f32 %v4035, %v4355
        %v4357 = vpop.f32.mrf.mxu0
        %4358 = vmatprep.mubr.bf16.mxu0 0
        %4359 = vmatmul.mubr.bf16.gmra.mxu0 %v1960
        %v4360 = vpop.f32.mrf.mxu0
        %v4361 = vadd.f32 %v4040, %v4360
        %v4362 = vpop.f32.mrf.mxu0
        %v4363 = vpop.f32.mrf.mxu0
        %v4364 = vadd.f32 %v4043, %v4363
        %v4365 = vpop.f32.mrf.mxu0
        %4366 = vmatprep.mubr.bf16.mxu0 0
        %4367 = vmatmul.mubr.bf16.gmra.mxu0 %v1963
        %v4368 = vpop.f32.mrf.mxu0
        %v4369 = vadd.f32 %v4048, %v4368
        %v4370 = vpop.f32.mrf.mxu0
        %v4371 = vpop.f32.mrf.mxu0
        %v4372 = vadd.f32 %v4051, %v4371
        %v4373 = vpop.f32.mrf.mxu0
        %4374 = vmatprep.mubr.bf16.mxu0 0
        %4375 = vmatmul.mubr.bf16.gmra.mxu0 %v1966
        %v4376 = vpop.f32.mrf.mxu0
        %v4377 = vadd.f32 %v4056, %v4376
        %v4378 = vpop.f32.mrf.mxu0
        %v4379 = vpop.f32.mrf.mxu0
        %v4380 = vadd.f32 %v4059, %v4379
        %v4381 = vpop.f32.mrf.mxu0
        %4382 = vmatprep.mubr.bf16.mxu0 0
        %4383 = vmatmul.mubr.bf16.gmra.mxu0 %v1969
        %v4384 = vpop.f32.mrf.mxu0
        %v4385 = vadd.f32 %v4064, %v4384
        %v4386 = vpop.f32.mrf.mxu0
        %v4387 = vpop.f32.mrf.mxu0
        %v4388 = vadd.f32 %v4067, %v4387
        %v4389 = vpop.f32.mrf.mxu0
        %4390 = vmatprep.mubr.bf16.mxu0 0
        %4391 = vmatmul.mubr.bf16.gmra.mxu0 %v1972
        %v4392 = vpop.f32.mrf.mxu0
        %v4393 = vadd.f32 %v4072, %v4392
        %v4394 = vpop.f32.mrf.mxu0
        %v4395 = vpop.f32.mrf.mxu0
        %v4396 = vadd.f32 %v4075, %v4395
        %v4397 = vpop.f32.mrf.mxu0
        %4398 = vmatprep.mubr.bf16.mxu0 0
        %4399 = vmatmul.mubr.bf16.gmra.mxu0 %v1975
        %v4400 = vpop.f32.mrf.mxu0
        %v4401 = vadd.f32 %v4080, %v4400
        %v4402 = vpop.f32.mrf.mxu0
        %v4403 = vpop.f32.mrf.mxu0
        %v4404 = vadd.f32 %v4083, %v4403
        %v4405 = vpop.f32.mrf.mxu0
        %4406 = vmatprep.mubr.bf16.mxu0 0
        %4407 = vmatmul.mubr.bf16.gmra.mxu0 %v1978
        %v4408 = vpop.f32.mrf.mxu0
        %v4409 = vadd.f32 %v4088, %v4408
        %v4410 = vpop.f32.mrf.mxu0
        %v4411 = vpop.f32.mrf.mxu0
        %v4412 = vadd.f32 %v4091, %v4411
        %v4413 = vpop.f32.mrf.mxu0
        %4414 = vmatprep.mubr.bf16.mxu0 0
        %4415 = vmatmul.mubr.bf16.gmra.mxu0 %v1981
        %v4416 = vpop.f32.mrf.mxu0
        %v4417 = vadd.f32 %v4096, %v4416
        %v4418 = vpop.f32.mrf.mxu0
        %v4419 = vpop.f32.mrf.mxu0
        %v4420 = vadd.f32 %v4099, %v4419
        %v4421 = vpop.f32.mrf.mxu0
        %4422 = vmatprep.mubr.bf16.mxu0 0
        %4423 = vmatmul.mubr.bf16.gmra.mxu0 %v1984
        %v4424 = vpop.f32.mrf.mxu0
        %v4425 = vadd.f32 %v4104, %v4424
        %v4426 = vpop.f32.mrf.mxu0
        %v4427 = vpop.f32.mrf.mxu0
        %v4428 = vadd.f32 %v4107, %v4427
        %v4429 = vpop.f32.mrf.mxu0
        %4430 = vmatprep.mubr.bf16.mxu0 0
        %4431 = vmatmul.mubr.bf16.gmra.mxu0 %v1987
        %v4432 = vpop.f32.mrf.mxu0
        %v4433 = vadd.f32 %v4112, %v4432
        %v4434 = vpop.f32.mrf.mxu0
        %v4435 = vpop.f32.mrf.mxu0
        %v4436 = vadd.f32 %v4115, %v4435
        %v4437 = vpop.f32.mrf.mxu0
        %4438 = vmatprep.mubr.bf16.mxu0 0
        %4439 = vmatmul.mubr.bf16.gmra.mxu0 %v3670
        %v4440 = vpop.f32.mrf.mxu0
        %v4441 = vadd.f32 %v4120, %v4440
        %v4442 = vpop.f32.mrf.mxu0
        %v4443 = vpop.f32.mrf.mxu0
        %v4444 = vadd.f32 %v4123, %v4443
        %v4445 = vpop.f32.mrf.mxu0
        %4446 = vmatprep.mubr.bf16.mxu0 0
        %4447 = vmatmul.mubr.bf16.gmra.mxu0 %v3673
        %v4448 = vpop.f32.mrf.mxu0
        %v4449 = vadd.f32 %v4128, %v4448
        %v4450 = vpop.f32.mrf.mxu0
        %v4451 = vpop.f32.mrf.mxu0
        %v4452 = vadd.f32 %v4131, %v4451
        %v4453 = vpop.f32.mrf.mxu0
        %4454 = vmatprep.mubr.bf16.mxu0 0
        %4455 = vmatmul.mubr.bf16.gmra.mxu0 %v3676
        %v4456 = vpop.f32.mrf.mxu0
        %v4457 = vadd.f32 %v4136, %v4456
        %v4458 = vpop.f32.mrf.mxu0
        %v4459 = vpop.f32.mrf.mxu0
        %v4460 = vadd.f32 %v4139, %v4459
        %v4461 = vpop.f32.mrf.mxu0
        %4462 = vdwg.mxu0
        %v4463 = vadd.f32 %v3382, %v4177
        %v4464 = vadd.f32 %v3385, %v4180
        %v4465 = vadd.f32 %v3390, %v4185
        %v4466 = vadd.f32 %v3393, %v4188
        %v4467 = vadd.f32 %v3398, %v4193
        %v4468 = vadd.f32 %v3401, %v4196
        %v4469 = vadd.f32 %v3406, %v4201
        %v4470 = vadd.f32 %v3409, %v4204
        %v4471 = vadd.f32 %v3414, %v4209
        %v4472 = vadd.f32 %v3417, %v4212
        %v4473 = vadd.f32 %v3422, %v4217
        %v4474 = vadd.f32 %v3425, %v4220
        %v4475 = vadd.f32 %v3430, %v4225
        %v4476 = vadd.f32 %v3433, %v4228
        %v4477 = vadd.f32 %v3438, %v4233
        %v4478 = vadd.f32 %v3441, %v4236
        %v4479 = vadd.f32 %v3446, %v4241
        %v4480 = vadd.f32 %v3449, %v4244
        %v4481 = vadd.f32 %v3454, %v4249
        %v4482 = vadd.f32 %v3457, %v4252
        %v4483 = vadd.f32 %v3462, %v4257
        %v4484 = vadd.f32 %v3465, %v4260
        %v4485 = vadd.f32 %v3470, %v4265
        %v4486 = vadd.f32 %v3473, %v4268
        %v4487 = vadd.f32 %v3478, %v4273
        %v4488 = vadd.f32 %v3481, %v4276
        %v4489 = vadd.f32 %v3486, %v4281
        %v4490 = vadd.f32 %v3489, %v4284
        %v4491 = vadd.f32 %v3494, %v4289
        %v4492 = vadd.f32 %v3497, %v4292
        %v4493 = vadd.f32 %v3502, %v4297
        %v4494 = vadd.f32 %v3505, %v4300
        %v4495 = vadd.f32 %v3510, %v4305
        %v4496 = vadd.f32 %v3513, %v4308
        %v4497 = vadd.f32 %v3518, %v4313
        %v4498 = vadd.f32 %v3521, %v4316
        %v4499 = vadd.f32 %v3526, %v4321
        %v4500 = vadd.f32 %v3529, %v4324
        %v4501 = vadd.f32 %v3534, %v4329
        %v4502 = vadd.f32 %v3537, %v4332
        %v4503 = vadd.f32 %v3542, %v4337
        %v4504 = vadd.f32 %v3545, %v4340
        %v4505 = vadd.f32 %v3550, %v4345
        %v4506 = vadd.f32 %v3553, %v4348
        %v4507 = vadd.f32 %v3558, %v4353
        %v4508 = vadd.f32 %v3561, %v4356
        %v4509 = vadd.f32 %v3566, %v4361
        %v4510 = vadd.f32 %v3569, %v4364
        %v4511 = vadd.f32 %v3574, %v4369
        %v4512 = vadd.f32 %v3577, %v4372
        %v4513 = vadd.f32 %v3582, %v4377
        %v4514 = vadd.f32 %v3585, %v4380
        %v4515 = vadd.f32 %v3590, %v4385
        %v4516 = vadd.f32 %v3593, %v4388
        %v4517 = vadd.f32 %v3598, %v4393
        %v4518 = vadd.f32 %v3601, %v4396
        %v4519 = vadd.f32 %v3606, %v4401
        %v4520 = vadd.f32 %v3609, %v4404
        %v4521 = vadd.f32 %v3614, %v4409
        %v4522 = vadd.f32 %v3617, %v4412
        %v4523 = vadd.f32 %v3622, %v4417
        %v4524 = vadd.f32 %v3625, %v4420
        %v4525 = vadd.f32 %v3630, %v4425
        %v4526 = vadd.f32 %v3633, %v4428
        %v4527 = vadd.f32 %v3638, %v4433
        %v4528 = vadd.f32 %v3641, %v4436
        %v4529 = vadd.f32 %v3646, %v4441
        %v4530 = vadd.f32 %v3649, %v4444
        %v4531 = vadd.f32 %v3654, %v4449
        %v4532 = vadd.f32 %v3657, %v4452
        %v4533 = vadd.f32 %v3662, %v4457
        %v4534 = vadd.f32 %v3665, %v4460
        %v4536 = vlaneseq
        %v4537 = vshrl.u32 %v4536, 7
        %v4538 = vsub.s32 0, %v4537
        %v4539 = vrot.slane %v534, %v4538
        %v4541 = vadd.f32 %v4463, %v4539
        %v4542 = vadd.f32 %v4464, %v4539
        %v4543 = vadd.f32 %v4465, %v4539
        %v4544 = vadd.f32 %v4466, %v4539
        %v4545 = vadd.f32 %v4467, %v4539
        %v4546 = vadd.f32 %v4468, %v4539
        %v4547 = vadd.f32 %v4469, %v4539
        %v4548 = vadd.f32 %v4470, %v4539
        %v4549 = vadd.f32 %v4471, %v4539
        %v4550 = vadd.f32 %v4472, %v4539
        %v4551 = vadd.f32 %v4473, %v4539
        %v4552 = vadd.f32 %v4474, %v4539
        %v4553 = vadd.f32 %v4475, %v4539
        %v4554 = vadd.f32 %v4476, %v4539
        %v4555 = vadd.f32 %v4477, %v4539
        %v4556 = vadd.f32 %v4478, %v4539
        %v4557 = vadd.f32 %v4479, %v4539
        %v4558 = vadd.f32 %v4480, %v4539
        %v4559 = vadd.f32 %v4481, %v4539
        %v4560 = vadd.f32 %v4482, %v4539
        %v4561 = vadd.f32 %v4483, %v4539
        %v4562 = vadd.f32 %v4484, %v4539
        %v4563 = vadd.f32 %v4485, %v4539
        %v4564 = vadd.f32 %v4486, %v4539
        %v4565 = vadd.f32 %v4487, %v4539
        %v4566 = vadd.f32 %v4488, %v4539
        %v4567 = vadd.f32 %v4489, %v4539
        %v4568 = vadd.f32 %v4490, %v4539
        %v4569 = vadd.f32 %v4491, %v4539
        %v4570 = vadd.f32 %v4492, %v4539
        %v4571 = vadd.f32 %v4493, %v4539
        %v4572 = vadd.f32 %v4494, %v4539
        %v4573 = vadd.f32 %v4495, %v4539
        %v4574 = vadd.f32 %v4496, %v4539
        %v4575 = vadd.f32 %v4497, %v4539
        %v4576 = vadd.f32 %v4498, %v4539
        %v4577 = vadd.f32 %v4499, %v4539
        %v4578 = vadd.f32 %v4500, %v4539
        %v4579 = vadd.f32 %v4501, %v4539
        %v4580 = vadd.f32 %v4502, %v4539
        %v4581 = vadd.f32 %v4503, %v4539
        %v4582 = vadd.f32 %v4504, %v4539
        %v4583 = vadd.f32 %v4505, %v4539
        %v4584 = vadd.f32 %v4506, %v4539
        %v4585 = vadd.f32 %v4507, %v4539
        %v4586 = vadd.f32 %v4508, %v4539
        %v4587 = vadd.f32 %v4509, %v4539
        %v4588 = vadd.f32 %v4510, %v4539
        %v4589 = vadd.f32 %v4511, %v4539
        %v4590 = vadd.f32 %v4512, %v4539
        %v4591 = vadd.f32 %v4513, %v4539
        %v4592 = vadd.f32 %v4514, %v4539
        %v4593 = vadd.f32 %v4515, %v4539
        %v4594 = vadd.f32 %v4516, %v4539
        %v4595 = vadd.f32 %v4517, %v4539
        %v4596 = vadd.f32 %v4518, %v4539
        %v4597 = vadd.f32 %v4519, %v4539
        %v4598 = vadd.f32 %v4520, %v4539
        %v4599 = vadd.f32 %v4521, %v4539
        %v4600 = vadd.f32 %v4522, %v4539
        %v4601 = vadd.f32 %v4523, %v4539
        %v4602 = vadd.f32 %v4524, %v4539
        %v4603 = vadd.f32 %v4525, %v4539
        %v4604 = vadd.f32 %v4526, %v4539
        %v4605 = vadd.f32 %v4527, %v4539
        %v4606 = vadd.f32 %v4528, %v4539
        %v4607 = vadd.f32 %v4529, %v4539
        %v4608 = vadd.f32 %v4530, %v4539
        %v4609 = vadd.f32 %v4531, %v4539
        %v4610 = vadd.f32 %v4532, %v4539
        %v4611 = vadd.f32 %v4533, %v4539
        %v4612 = vadd.f32 %v4534, %v4539
        %v4613 = vmax.f32 %v4541, 0.0
        %v4614 = vmax.f32 %v4542, 0.0
        %v4615 = vmax.f32 %v4543, 0.0
        %v4616 = vmax.f32 %v4544, 0.0
        %v4617 = vmax.f32 %v4545, 0.0
        %v4618 = vmax.f32 %v4546, 0.0
        %v4619 = vmax.f32 %v4547, 0.0
        %v4620 = vmax.f32 %v4548, 0.0
        %v4621 = vmax.f32 %v4549, 0.0
        %v4622 = vmax.f32 %v4550, 0.0
        %v4623 = vmax.f32 %v4551, 0.0
        %v4624 = vmax.f32 %v4552, 0.0
        %v4625 = vmax.f32 %v4553, 0.0
        %v4626 = vmax.f32 %v4554, 0.0
        %v4627 = vmax.f32 %v4555, 0.0
        %v4628 = vmax.f32 %v4556, 0.0
        %v4629 = vmax.f32 %v4557, 0.0
        %v4630 = vmax.f32 %v4558, 0.0
        %v4631 = vmax.f32 %v4559, 0.0
        %v4632 = vmax.f32 %v4560, 0.0
        %v4633 = vmax.f32 %v4561, 0.0
        %v4634 = vmax.f32 %v4562, 0.0
        %v4635 = vmax.f32 %v4563, 0.0
        %v4636 = vmax.f32 %v4564, 0.0
        %v4637 = vmax.f32 %v4565, 0.0
        %v4638 = vmax.f32 %v4566, 0.0
        %v4639 = vmax.f32 %v4567, 0.0
        %v4640 = vmax.f32 %v4568, 0.0
        %v4641 = vmax.f32 %v4569, 0.0
        %v4642 = vmax.f32 %v4570, 0.0
        %v4643 = vmax.f32 %v4571, 0.0
        %v4644 = vmax.f32 %v4572, 0.0
        %v4645 = vmax.f32 %v4573, 0.0
        %v4646 = vmax.f32 %v4574, 0.0
        %v4647 = vmax.f32 %v4575, 0.0
        %v4648 = vmax.f32 %v4576, 0.0
        %v4649 = vmax.f32 %v4577, 0.0
        %v4650 = vmax.f32 %v4578, 0.0
        %v4651 = vmax.f32 %v4579, 0.0
        %v4652 = vmax.f32 %v4580, 0.0
        %v4653 = vmax.f32 %v4581, 0.0
        %v4654 = vmax.f32 %v4582, 0.0
        %v4655 = vmax.f32 %v4583, 0.0
        %v4656 = vmax.f32 %v4584, 0.0
        %v4657 = vmax.f32 %v4585, 0.0
        %v4658 = vmax.f32 %v4586, 0.0
        %v4659 = vmax.f32 %v4587, 0.0
        %v4660 = vmax.f32 %v4588, 0.0
        %v4661 = vmax.f32 %v4589, 0.0
        %v4662 = vmax.f32 %v4590, 0.0
        %v4663 = vmax.f32 %v4591, 0.0
        %v4664 = vmax.f32 %v4592, 0.0
        %v4665 = vmax.f32 %v4593, 0.0
        %v4666 = vmax.f32 %v4594, 0.0
        %v4667 = vmax.f32 %v4595, 0.0
        %v4668 = vmax.f32 %v4596, 0.0
        %v4669 = vmax.f32 %v4597, 0.0
        %v4670 = vmax.f32 %v4598, 0.0
        %v4671 = vmax.f32 %v4599, 0.0
        %v4672 = vmax.f32 %v4600, 0.0
        %v4673 = vmax.f32 %v4601, 0.0
        %v4674 = vmax.f32 %v4602, 0.0
        %v4675 = vmax.f32 %v4603, 0.0
        %v4676 = vmax.f32 %v4604, 0.0
        %v4677 = vmax.f32 %v4605, 0.0
        %v4678 = vmax.f32 %v4606, 0.0
        %v4679 = vmax.f32 %v4607, 0.0
        %v4680 = vmax.f32 %v4608, 0.0
        %v4681 = vmax.f32 %v4609, 0.0
        %v4682 = vmax.f32 %v4610, 0.0
        %v4683 = vmax.f32 %v4611, 0.0
        %v4684 = vmax.f32 %v4612, 0.0
        %v4685 = vpack.c.bf16 %v4614, %v4613
        %v4686 = vpack.c.bf16 %v4616, %v4615
        %v4687 = vpack.c.bf16 %v4618, %v4617
        %v4688 = vpack.c.bf16 %v4620, %v4619
        %v4689 = vpack.c.bf16 %v4622, %v4621
        %v4690 = vpack.c.bf16 %v4624, %v4623
        %v4691 = vpack.c.bf16 %v4626, %v4625
        %v4692 = vpack.c.bf16 %v4628, %v4627
        %v4693 = vpack.c.bf16 %v4630, %v4629
        %v4694 = vpack.c.bf16 %v4632, %v4631
        %v4695 = vpack.c.bf16 %v4634, %v4633
        %v4696 = vpack.c.bf16 %v4636, %v4635
        %v4697 = vpack.c.bf16 %v4638, %v4637
        %v4698 = vpack.c.bf16 %v4640, %v4639
        %v4699 = vpack.c.bf16 %v4642, %v4641
        %v4700 = vpack.c.bf16 %v4644, %v4643
        %v4701 = vpack.c.bf16 %v4646, %v4645
        %v4702 = vpack.c.bf16 %v4648, %v4647
        %v4703 = vpack.c.bf16 %v4650, %v4649
        %v4704 = vpack.c.bf16 %v4652, %v4651
        %v4705 = vpack.c.bf16 %v4654, %v4653
        %v4706 = vpack.c.bf16 %v4656, %v4655
        %v4707 = vpack.c.bf16 %v4658, %v4657
        %v4708 = vpack.c.bf16 %v4660, %v4659
        %v4709 = vpack.c.bf16 %v4662, %v4661
        %v4710 = vpack.c.bf16 %v4664, %v4663
        %v4711 = vpack.c.bf16 %v4666, %v4665
        %v4712 = vpack.c.bf16 %v4668, %v4667
        %v4713 = vpack.c.bf16 %v4670, %v4669
        %v4714 = vpack.c.bf16 %v4672, %v4671
        %v4715 = vpack.c.bf16 %v4674, %v4673
        %v4716 = vpack.c.bf16 %v4676, %v4675
        %v4717 = vpack.c.bf16 %v4678, %v4677
        %v4718 = vpack.c.bf16 %v4680, %v4679
        %v4719 = vpack.c.bf16 %v4682, %v4681
        %v4720 = vpack.c.bf16 %v4684, %v4683
        %v4722 = vlaneseq
        %v4723 = vshrl.u32 %v4722, 7
        %v4724 = vsub.s32 0, %v4723
        %v4725 = vrot.slane %v535, %v4724
        %v4743 = vunpack.c.l.b16 %v517
        %v4744 = vunpack.c.l.b16 %v518
        %v4745 = vunpack.c.l.b16 %v519
        %v4746 = vunpack.c.l.b16 %v520
        %v4747 = vunpack.c.l.b16 %v521
        %v4748 = vunpack.c.l.b16 %v522
        %v4749 = vunpack.c.l.b16 %v523
        %v4750 = vunpack.c.l.b16 %v524
        %v4751 = vunpack.c.l.b16 %v525
        %v4752 = vunpack.c.l.b16 %v526
        %v4753 = vunpack.c.l.b16 %v527
        %v4754 = vunpack.c.l.b16 %v528
        %v4755 = vunpack.c.l.b16 %v529
        %v4756 = vunpack.c.l.b16 %v530
        %v4757 = vunpack.c.l.b16 %v531
        %v4758 = vunpack.c.l.b16 %v532
        %v4759 = vpack.c.b16 %v4744, %v4743
        %v4760 = vpack.c.b16 %v4746, %v4745
        %v4761 = vpack.c.b16 %v4748, %v4747
        %v4762 = vpack.c.b16 %v4750, %v4749
        %v4763 = vpack.c.b16 %v4752, %v4751
        %v4764 = vpack.c.b16 %v4754, %v4753
        %v4765 = vpack.c.b16 %v4756, %v4755
        %v4766 = vpack.c.b16 %v4758, %v4757
        %4775 = vmatprep.subr.bf16.mxu0 0
        %4776 = vmatpush1.bf16.msra.mxu0 %v4766
        %4777 = vmatprep.subr.bf16.mxu0 0
        %4778 = vmatpush1.bf16.msra.mxu0 %v4765
        %4779 = vmatprep.subr.bf16.mxu0 0
        %4780 = vmatpush1.bf16.msra.mxu0 %v4764
        %4781 = vmatprep.subr.bf16.mxu0 0
        %4782 = vmatpush1.bf16.msra.mxu0 %v4763
        %4783 = vmatprep.subr.bf16.mxu0 0
        %4784 = vmatpush1.bf16.msra.mxu0 %v4762
        %4785 = vmatprep.subr.bf16.mxu0 0
        %4786 = vmatpush1.bf16.msra.mxu0 %v4761
        %4787 = vmatprep.subr.bf16.mxu0 0
        %4788 = vmatpush1.bf16.msra.mxu0 %v4760
        %4789 = vmatprep.subr.bf16.mxu0 0
        %4790 = vmatpush1.bf16.msra.mxu0 %v4759
        %4791 = vmatprep.subr.bf16.mxu0 0
        %4792 = vmatpush2.bf16.msra.mxu0 0
        %4793 = vmatprep.subr.bf16.mxu0 0
        %4794 = vmatpush2.bf16.msra.mxu0 0
        %4795 = vmatprep.subr.bf16.mxu0 0
        %4796 = vmatpush2.bf16.msra.mxu0 0
        %4797 = vmatprep.subr.bf16.mxu0 0
        %4798 = vmatpush2.bf16.msra.mxu0 0
        %4799 = vmatprep.subr.bf16.mxu0 0
        %4800 = vmatpush2.bf16.msra.mxu0 0
        %4801 = vmatprep.subr.bf16.mxu0 0
        %4802 = vmatpush2.bf16.msra.mxu0 0
        %4803 = vmatprep.subr.bf16.mxu0 0
        %4804 = vmatpush2.bf16.msra.mxu0 0
        %4805 = vmatprep.subr.bf16.mxu0 0
        %4806 = vmatpush2.bf16.msra.mxu0 0
        %4807 = vmatprep.mubr.bf16.mxu0 0
        %4808 = vmatmul.mubr.bf16.gmra.mxu0 %v4685
        %v4809 = vpop.f32.mrf.mxu0
        %v4810 = vadd.f32 %v4725, %v4809
        %v4811 = vpop.f32.mrf.mxu0
        %v4812 = vpop.f32.mrf.mxu0
        %v4813 = vadd.f32 %v4725, %v4812
        %v4814 = vpop.f32.mrf.mxu0
        %4815 = vmatprep.mubr.bf16.mxu0 0
        %4816 = vmatmul.mubr.bf16.gmra.mxu0 %v4686
        %v4817 = vpop.f32.mrf.mxu0
        %v4818 = vadd.f32 %v4725, %v4817
        %v4819 = vpop.f32.mrf.mxu0
        %v4820 = vpop.f32.mrf.mxu0
        %v4821 = vadd.f32 %v4725, %v4820
        %v4822 = vpop.f32.mrf.mxu0
        %4823 = vmatprep.mubr.bf16.mxu0 0
        %4824 = vmatmul.mubr.bf16.gmra.mxu0 %v4687
        %v4825 = vpop.f32.mrf.mxu0
        %v4826 = vadd.f32 %v4725, %v4825
        %v4827 = vpop.f32.mrf.mxu0
        %v4828 = vpop.f32.mrf.mxu0
        %v4829 = vadd.f32 %v4725, %v4828
        %v4830 = vpop.f32.mrf.mxu0
        %4831 = vmatprep.mubr.bf16.mxu0 0
        %4832 = vmatmul.mubr.bf16.gmra.mxu0 %v4688
        %v4833 = vpop.f32.mrf.mxu0
        %v4834 = vadd.f32 %v4725, %v4833
        %v4835 = vpop.f32.mrf.mxu0
        %v4836 = vpop.f32.mrf.mxu0
        %v4837 = vadd.f32 %v4725, %v4836
        %v4838 = vpop.f32.mrf.mxu0
        %4839 = vmatprep.mubr.bf16.mxu0 0
        %4840 = vmatmul.mubr.bf16.gmra.mxu0 %v4689
        %v4841 = vpop.f32.mrf.mxu0
        %v4842 = vadd.f32 %v4725, %v4841
        %v4843 = vpop.f32.mrf.mxu0
        %v4844 = vpop.f32.mrf.mxu0
        %v4845 = vadd.f32 %v4725, %v4844
        %v4846 = vpop.f32.mrf.mxu0
        %4847 = vmatprep.mubr.bf16.mxu0 0
        %4848 = vmatmul.mubr.bf16.gmra.mxu0 %v4690
        %v4849 = vpop.f32.mrf.mxu0
        %v4850 = vadd.f32 %v4725, %v4849
        %v4851 = vpop.f32.mrf.mxu0
        %v4852 = vpop.f32.mrf.mxu0
        %v4853 = vadd.f32 %v4725, %v4852
        %v4854 = vpop.f32.mrf.mxu0
        %4855 = vmatprep.mubr.bf16.mxu0 0
        %4856 = vmatmul.mubr.bf16.gmra.mxu0 %v4691
        %v4857 = vpop.f32.mrf.mxu0
        %v4858 = vadd.f32 %v4725, %v4857
        %v4859 = vpop.f32.mrf.mxu0
        %v4860 = vpop.f32.mrf.mxu0
        %v4861 = vadd.f32 %v4725, %v4860
        %v4862 = vpop.f32.mrf.mxu0
        %4863 = vmatprep.mubr.bf16.mxu0 0
        %4864 = vmatmul.mubr.bf16.gmra.mxu0 %v4692
        %v4865 = vpop.f32.mrf.mxu0
        %v4866 = vadd.f32 %v4725, %v4865
        %v4867 = vpop.f32.mrf.mxu0
        %v4868 = vpop.f32.mrf.mxu0
        %v4869 = vadd.f32 %v4725, %v4868
        %v4870 = vpop.f32.mrf.mxu0
        %4871 = vmatprep.mubr.bf16.mxu0 0
        %4872 = vmatmul.mubr.bf16.gmra.mxu0 %v4693
        %v4873 = vpop.f32.mrf.mxu0
        %v4874 = vadd.f32 %v4725, %v4873
        %v4875 = vpop.f32.mrf.mxu0
        %v4876 = vpop.f32.mrf.mxu0
        %v4877 = vadd.f32 %v4725, %v4876
        %v4878 = vpop.f32.mrf.mxu0
        %4879 = vmatprep.mubr.bf16.mxu0 0
        %4880 = vmatmul.mubr.bf16.gmra.mxu0 %v4694
        %v4881 = vpop.f32.mrf.mxu0
        %v4882 = vadd.f32 %v4725, %v4881
        %v4883 = vpop.f32.mrf.mxu0
        %v4884 = vpop.f32.mrf.mxu0
        %v4885 = vadd.f32 %v4725, %v4884
        %v4886 = vpop.f32.mrf.mxu0
        %4887 = vmatprep.mubr.bf16.mxu0 0
        %4888 = vmatmul.mubr.bf16.gmra.mxu0 %v4695
        %v4889 = vpop.f32.mrf.mxu0
        %v4890 = vadd.f32 %v4725, %v4889
        %v4891 = vpop.f32.mrf.mxu0
        %v4892 = vpop.f32.mrf.mxu0
        %v4893 = vadd.f32 %v4725, %v4892
        %v4894 = vpop.f32.mrf.mxu0
        %4895 = vmatprep.mubr.bf16.mxu0 0
        %4896 = vmatmul.mubr.bf16.gmra.mxu0 %v4696
        %v4897 = vpop.f32.mrf.mxu0
        %v4898 = vadd.f32 %v4725, %v4897
        %v4899 = vpop.f32.mrf.mxu0
        %v4900 = vpop.f32.mrf.mxu0
        %v4901 = vadd.f32 %v4725, %v4900
        %v4902 = vpop.f32.mrf.mxu0
        %4903 = vmatprep.mubr.bf16.mxu0 0
        %4904 = vmatmul.mubr.bf16.gmra.mxu0 %v4697
        %v4905 = vpop.f32.mrf.mxu0
        %v4906 = vadd.f32 %v4725, %v4905
        %v4907 = vpop.f32.mrf.mxu0
        %v4908 = vpop.f32.mrf.mxu0
        %v4909 = vadd.f32 %v4725, %v4908
        %v4910 = vpop.f32.mrf.mxu0
        %4911 = vmatprep.mubr.bf16.mxu0 0
        %4912 = vmatmul.mubr.bf16.gmra.mxu0 %v4698
        %v4913 = vpop.f32.mrf.mxu0
        %v4914 = vadd.f32 %v4725, %v4913
        %v4915 = vpop.f32.mrf.mxu0
        %v4916 = vpop.f32.mrf.mxu0
        %v4917 = vadd.f32 %v4725, %v4916
        %v4918 = vpop.f32.mrf.mxu0
        %4919 = vmatprep.mubr.bf16.mxu0 0
        %4920 = vmatmul.mubr.bf16.gmra.mxu0 %v4699
        %v4921 = vpop.f32.mrf.mxu0
        %v4922 = vadd.f32 %v4725, %v4921
        %v4923 = vpop.f32.mrf.mxu0
        %v4924 = vpop.f32.mrf.mxu0
        %v4925 = vadd.f32 %v4725, %v4924
        %v4926 = vpop.f32.mrf.mxu0
        %4927 = vmatprep.mubr.bf16.mxu0 0
        %4928 = vmatmul.mubr.bf16.gmra.mxu0 %v4700
        %v4929 = vpop.f32.mrf.mxu0
        %v4930 = vadd.f32 %v4725, %v4929
        %v4931 = vpop.f32.mrf.mxu0
        %v4932 = vpop.f32.mrf.mxu0
        %v4933 = vadd.f32 %v4725, %v4932
        %v4934 = vpop.f32.mrf.mxu0
        %4935 = vmatprep.mubr.bf16.mxu0 0
        %4936 = vmatmul.mubr.bf16.gmra.mxu0 %v4701
        %v4937 = vpop.f32.mrf.mxu0
        %v4938 = vadd.f32 %v4725, %v4937
        %v4939 = vpop.f32.mrf.mxu0
        %v4940 = vpop.f32.mrf.mxu0
        %v4941 = vadd.f32 %v4725, %v4940
        %v4942 = vpop.f32.mrf.mxu0
        %4943 = vmatprep.mubr.bf16.mxu0 0
        %4944 = vmatmul.mubr.bf16.gmra.mxu0 %v4702
        %v4945 = vpop.f32.mrf.mxu0
        %v4946 = vadd.f32 %v4725, %v4945
        %v4947 = vpop.f32.mrf.mxu0
        %v4948 = vpop.f32.mrf.mxu0
        %v4949 = vadd.f32 %v4725, %v4948
        %v4950 = vpop.f32.mrf.mxu0
        %4951 = vmatprep.mubr.bf16.mxu0 0
        %4952 = vmatmul.mubr.bf16.gmra.mxu0 %v4703
        %v4953 = vpop.f32.mrf.mxu0
        %v4954 = vadd.f32 %v4725, %v4953
        %v4955 = vpop.f32.mrf.mxu0
        %v4956 = vpop.f32.mrf.mxu0
        %v4957 = vadd.f32 %v4725, %v4956
        %v4958 = vpop.f32.mrf.mxu0
        %4959 = vmatprep.mubr.bf16.mxu0 0
        %4960 = vmatmul.mubr.bf16.gmra.mxu0 %v4704
        %v4961 = vpop.f32.mrf.mxu0
        %v4962 = vadd.f32 %v4725, %v4961
        %v4963 = vpop.f32.mrf.mxu0
        %v4964 = vpop.f32.mrf.mxu0
        %v4965 = vadd.f32 %v4725, %v4964
        %v4966 = vpop.f32.mrf.mxu0
        %4967 = vmatprep.mubr.bf16.mxu0 0
        %4968 = vmatmul.mubr.bf16.gmra.mxu0 %v4705
        %v4969 = vpop.f32.mrf.mxu0
        %v4970 = vadd.f32 %v4725, %v4969
        %v4971 = vpop.f32.mrf.mxu0
        %v4972 = vpop.f32.mrf.mxu0
        %v4973 = vadd.f32 %v4725, %v4972
        %v4974 = vpop.f32.mrf.mxu0
        %4975 = vmatprep.mubr.bf16.mxu0 0
        %4976 = vmatmul.mubr.bf16.gmra.mxu0 %v4706
        %v4977 = vpop.f32.mrf.mxu0
        %v4978 = vadd.f32 %v4725, %v4977
        %v4979 = vpop.f32.mrf.mxu0
        %v4980 = vpop.f32.mrf.mxu0
        %v4981 = vadd.f32 %v4725, %v4980
        %v4982 = vpop.f32.mrf.mxu0
        %4983 = vmatprep.mubr.bf16.mxu0 0
        %4984 = vmatmul.mubr.bf16.gmra.mxu0 %v4707
        %v4985 = vpop.f32.mrf.mxu0
        %v4986 = vadd.f32 %v4725, %v4985
        %v4987 = vpop.f32.mrf.mxu0
        %v4988 = vpop.f32.mrf.mxu0
        %v4989 = vadd.f32 %v4725, %v4988
        %v4990 = vpop.f32.mrf.mxu0
        %4991 = vmatprep.mubr.bf16.mxu0 0
        %4992 = vmatmul.mubr.bf16.gmra.mxu0 %v4708
        %v4993 = vpop.f32.mrf.mxu0
        %v4994 = vadd.f32 %v4725, %v4993
        %v4995 = vpop.f32.mrf.mxu0
        %v4996 = vpop.f32.mrf.mxu0
        %v4997 = vadd.f32 %v4725, %v4996
        %v4998 = vpop.f32.mrf.mxu0
        %4999 = vmatprep.mubr.bf16.mxu0 0
        %5000 = vmatmul.mubr.bf16.gmra.mxu0 %v4709
        %v5001 = vpop.f32.mrf.mxu0
        %v5002 = vadd.f32 %v4725, %v5001
        %v5003 = vpop.f32.mrf.mxu0
        %v5004 = vpop.f32.mrf.mxu0
        %v5005 = vadd.f32 %v4725, %v5004
        %v5006 = vpop.f32.mrf.mxu0
        %5007 = vmatprep.mubr.bf16.mxu0 0
        %5008 = vmatmul.mubr.bf16.gmra.mxu0 %v4710
        %v5009 = vpop.f32.mrf.mxu0
        %v5010 = vadd.f32 %v4725, %v5009
        %v5011 = vpop.f32.mrf.mxu0
        %v5012 = vpop.f32.mrf.mxu0
        %v5013 = vadd.f32 %v4725, %v5012
        %v5014 = vpop.f32.mrf.mxu0
        %5015 = vmatprep.mubr.bf16.mxu0 0
        %5016 = vmatmul.mubr.bf16.gmra.mxu0 %v4711
        %v5017 = vpop.f32.mrf.mxu0
        %v5018 = vadd.f32 %v4725, %v5017
        %v5019 = vpop.f32.mrf.mxu0
        %v5020 = vpop.f32.mrf.mxu0
        %v5021 = vadd.f32 %v4725, %v5020
        %v5022 = vpop.f32.mrf.mxu0
        %5023 = vmatprep.mubr.bf16.mxu0 0
        %5024 = vmatmul.mubr.bf16.gmra.mxu0 %v4712
        %v5025 = vpop.f32.mrf.mxu0
        %v5026 = vadd.f32 %v4725, %v5025
        %v5027 = vpop.f32.mrf.mxu0
        %v5028 = vpop.f32.mrf.mxu0
        %v5029 = vadd.f32 %v4725, %v5028
        %v5030 = vpop.f32.mrf.mxu0
        %5031 = vmatprep.mubr.bf16.mxu0 0
        %5032 = vmatmul.mubr.bf16.gmra.mxu0 %v4713
        %v5033 = vpop.f32.mrf.mxu0
        %v5034 = vadd.f32 %v4725, %v5033
        %v5035 = vpop.f32.mrf.mxu0
        %v5036 = vpop.f32.mrf.mxu0
        %v5037 = vadd.f32 %v4725, %v5036
        %v5038 = vpop.f32.mrf.mxu0
        %5039 = vmatprep.mubr.bf16.mxu0 0
        %5040 = vmatmul.mubr.bf16.gmra.mxu0 %v4714
        %v5041 = vpop.f32.mrf.mxu0
        %v5042 = vadd.f32 %v4725, %v5041
        %v5043 = vpop.f32.mrf.mxu0
        %v5044 = vpop.f32.mrf.mxu0
        %v5045 = vadd.f32 %v4725, %v5044
        %v5046 = vpop.f32.mrf.mxu0
        %5047 = vmatprep.mubr.bf16.mxu0 0
        %5048 = vmatmul.mubr.bf16.gmra.mxu0 %v4715
        %v5049 = vpop.f32.mrf.mxu0
        %v5050 = vadd.f32 %v4725, %v5049
        %v5051 = vpop.f32.mrf.mxu0
        %v5052 = vpop.f32.mrf.mxu0
        %v5053 = vadd.f32 %v4725, %v5052
        %v5054 = vpop.f32.mrf.mxu0
        %5055 = vmatprep.mubr.bf16.mxu0 0
        %5056 = vmatmul.mubr.bf16.gmra.mxu0 %v4716
        %v5057 = vpop.f32.mrf.mxu0
        %v5058 = vadd.f32 %v4725, %v5057
        %v5059 = vpop.f32.mrf.mxu0
        %v5060 = vpop.f32.mrf.mxu0
        %v5061 = vadd.f32 %v4725, %v5060
        %v5062 = vpop.f32.mrf.mxu0
        %5063 = vmatprep.mubr.bf16.mxu0 0
        %5064 = vmatmul.mubr.bf16.gmra.mxu0 %v4717
        %v5065 = vpop.f32.mrf.mxu0
        %v5066 = vadd.f32 %v4725, %v5065
        %v5067 = vpop.f32.mrf.mxu0
        %v5068 = vpop.f32.mrf.mxu0
        %v5069 = vadd.f32 %v4725, %v5068
        %v5070 = vpop.f32.mrf.mxu0
        %5071 = vmatprep.mubr.bf16.mxu0 0
        %5072 = vmatmul.mubr.bf16.gmra.mxu0 %v4718
        %v5073 = vpop.f32.mrf.mxu0
        %v5074 = vadd.f32 %v4725, %v5073
        %v5075 = vpop.f32.mrf.mxu0
        %v5076 = vpop.f32.mrf.mxu0
        %v5077 = vadd.f32 %v4725, %v5076
        %v5078 = vpop.f32.mrf.mxu0
        %5079 = vmatprep.mubr.bf16.mxu0 0
        %5080 = vmatmul.mubr.bf16.gmra.mxu0 %v4719
        %v5081 = vpop.f32.mrf.mxu0
        %v5082 = vadd.f32 %v4725, %v5081
        %v5083 = vpop.f32.mrf.mxu0
        %v5084 = vpop.f32.mrf.mxu0
        %v5085 = vadd.f32 %v4725, %v5084
        %v5086 = vpop.f32.mrf.mxu0
        %5087 = vmatprep.mubr.bf16.mxu0 0
        %5088 = vmatmul.mubr.bf16.gmra.mxu0 %v4720
        %v5089 = vpop.f32.mrf.mxu0
        %v5090 = vadd.f32 %v4725, %v5089
        %v5091 = vpop.f32.mrf.mxu0
        %v5092 = vpop.f32.mrf.mxu0
        %v5093 = vadd.f32 %v4725, %v5092
        %v5094 = vpop.f32.mrf.mxu0
        %5095 = vdwg.mxu0
        %v5096 = vunpack.c.l.bf16 %v540
        %v5097 = vunpack.c.l.bf16 %v541
        %v5098 = vunpack.c.l.bf16 %v542
        %v5099 = vunpack.c.l.bf16 %v543
        %v5100 = vunpack.c.l.bf16 %v544
        %v5101 = vunpack.c.l.bf16 %v545
        %v5102 = vunpack.c.l.bf16 %v546
        %v5103 = vunpack.c.l.bf16 %v547
        %v5104 = vunpack.c.l.bf16 %v548
        %v5105 = vunpack.c.l.bf16 %v549
        %v5106 = vunpack.c.l.bf16 %v550
        %v5107 = vunpack.c.l.bf16 %v551
        %v5108 = vunpack.c.l.bf16 %v552
        %v5109 = vunpack.c.l.bf16 %v553
        %v5110 = vunpack.c.l.bf16 %v554
        %v5111 = vunpack.c.l.bf16 %v555
        %v5112 = vunpack.c.l.bf16 %v556
        %v5113 = vunpack.c.l.bf16 %v557
        %v5114 = vunpack.c.l.bf16 %v558
        %v5115 = vunpack.c.l.bf16 %v559
        %v5116 = vunpack.c.l.bf16 %v560
        %v5117 = vunpack.c.l.bf16 %v561
        %v5118 = vunpack.c.l.bf16 %v562
        %v5119 = vunpack.c.l.bf16 %v563
        %v5120 = vunpack.c.l.bf16 %v564
        %v5121 = vunpack.c.l.bf16 %v565
        %v5122 = vunpack.c.l.bf16 %v566
        %v5123 = vunpack.c.l.bf16 %v567
        %v5124 = vunpack.c.l.bf16 %v568
        %v5125 = vunpack.c.l.bf16 %v569
        %v5126 = vunpack.c.l.bf16 %v570
        %v5127 = vunpack.c.l.bf16 %v571
        %v5128 = vunpack.c.l.bf16 %v572
        %v5129 = vunpack.c.l.bf16 %v573
        %v5130 = vunpack.c.l.bf16 %v574
        %v5131 = vunpack.c.l.bf16 %v575
        %v5132 = vunpack.c.l.bf16 %v576
        %v5133 = vunpack.c.l.bf16 %v577
        %v5134 = vunpack.c.l.bf16 %v578
        %v5135 = vunpack.c.l.bf16 %v579
        %v5136 = vunpack.c.l.bf16 %v580
        %v5137 = vunpack.c.l.bf16 %v581
        %v5138 = vunpack.c.l.bf16 %v582
        %v5139 = vunpack.c.l.bf16 %v583
        %v5140 = vunpack.c.l.bf16 %v584
        %v5141 = vunpack.c.l.bf16 %v585
        %v5142 = vunpack.c.l.bf16 %v586
        %v5143 = vunpack.c.l.bf16 %v587
        %v5144 = vunpack.c.l.bf16 %v588
        %v5145 = vunpack.c.l.bf16 %v589
        %v5146 = vunpack.c.l.bf16 %v590
        %v5147 = vunpack.c.l.bf16 %v591
        %v5148 = vunpack.c.l.bf16 %v592
        %v5149 = vunpack.c.l.bf16 %v593
        %v5150 = vunpack.c.l.bf16 %v594
        %v5151 = vunpack.c.l.bf16 %v595
        %v5152 = vunpack.c.l.bf16 %v596
        %v5153 = vunpack.c.l.bf16 %v597
        %v5154 = vunpack.c.l.bf16 %v598
        %v5155 = vunpack.c.l.bf16 %v599
        %v5156 = vunpack.c.l.bf16 %v600
        %v5157 = vunpack.c.l.bf16 %v601
        %v5158 = vunpack.c.l.bf16 %v602
        %v5159 = vunpack.c.l.bf16 %v603
        %v5160 = vunpack.c.l.bf16 %v604
        %v5161 = vunpack.c.l.bf16 %v605
        %v5162 = vunpack.c.l.bf16 %v606
        %v5163 = vunpack.c.l.bf16 %v607
        %v5164 = vunpack.c.l.bf16 %v608
        %v5165 = vunpack.c.l.bf16 %v609
        %v5166 = vunpack.c.l.bf16 %v610
        %v5167 = vunpack.c.l.bf16 %v611
        %v5168 = vadd.f32 %v4810, %v5096
        %v5169 = vadd.f32 %v4813, %v5097
        %v5170 = vadd.f32 %v4818, %v5098
        %v5171 = vadd.f32 %v4821, %v5099
        %v5172 = vadd.f32 %v4826, %v5100
        %v5173 = vadd.f32 %v4829, %v5101
        %v5174 = vadd.f32 %v4834, %v5102
        %v5175 = vadd.f32 %v4837, %v5103
        %v5176 = vadd.f32 %v4842, %v5104
        %v5177 = vadd.f32 %v4845, %v5105
        %v5178 = vadd.f32 %v4850, %v5106
        %v5179 = vadd.f32 %v4853, %v5107
        %v5180 = vadd.f32 %v4858, %v5108
        %v5181 = vadd.f32 %v4861, %v5109
        %v5182 = vadd.f32 %v4866, %v5110
        %v5183 = vadd.f32 %v4869, %v5111
        %v5184 = vadd.f32 %v4874, %v5112
        %v5185 = vadd.f32 %v4877, %v5113
        %v5186 = vadd.f32 %v4882, %v5114
        %v5187 = vadd.f32 %v4885, %v5115
        %v5188 = vadd.f32 %v4890, %v5116
        %v5189 = vadd.f32 %v4893, %v5117
        %v5190 = vadd.f32 %v4898, %v5118
        %v5191 = vadd.f32 %v4901, %v5119
        %v5192 = vadd.f32 %v4906, %v5120
        %v5193 = vadd.f32 %v4909, %v5121
        %v5194 = vadd.f32 %v4914, %v5122
        %v5195 = vadd.f32 %v4917, %v5123
        %v5196 = vadd.f32 %v4922, %v5124
        %v5197 = vadd.f32 %v4925, %v5125
        %v5198 = vadd.f32 %v4930, %v5126
        %v5199 = vadd.f32 %v4933, %v5127
        %v5200 = vadd.f32 %v4938, %v5128
        %v5201 = vadd.f32 %v4941, %v5129
        %v5202 = vadd.f32 %v4946, %v5130
        %v5203 = vadd.f32 %v4949, %v5131
        %v5204 = vadd.f32 %v4954, %v5132
        %v5205 = vadd.f32 %v4957, %v5133
        %v5206 = vadd.f32 %v4962, %v5134
        %v5207 = vadd.f32 %v4965, %v5135
        %v5208 = vadd.f32 %v4970, %v5136
        %v5209 = vadd.f32 %v4973, %v5137
        %v5210 = vadd.f32 %v4978, %v5138
        %v5211 = vadd.f32 %v4981, %v5139
        %v5212 = vadd.f32 %v4986, %v5140
        %v5213 = vadd.f32 %v4989, %v5141
        %v5214 = vadd.f32 %v4994, %v5142
        %v5215 = vadd.f32 %v4997, %v5143
        %v5216 = vadd.f32 %v5002, %v5144
        %v5217 = vadd.f32 %v5005, %v5145
        %v5218 = vadd.f32 %v5010, %v5146
        %v5219 = vadd.f32 %v5013, %v5147
        %v5220 = vadd.f32 %v5018, %v5148
        %v5221 = vadd.f32 %v5021, %v5149
        %v5222 = vadd.f32 %v5026, %v5150
        %v5223 = vadd.f32 %v5029, %v5151
        %v5224 = vadd.f32 %v5034, %v5152
        %v5225 = vadd.f32 %v5037, %v5153
        %v5226 = vadd.f32 %v5042, %v5154
        %v5227 = vadd.f32 %v5045, %v5155
        %v5228 = vadd.f32 %v5050, %v5156
        %v5229 = vadd.f32 %v5053, %v5157
        %v5230 = vadd.f32 %v5058, %v5158
        %v5231 = vadd.f32 %v5061, %v5159
        %v5232 = vadd.f32 %v5066, %v5160
        %v5233 = vadd.f32 %v5069, %v5161
        %v5234 = vadd.f32 %v5074, %v5162
        %v5235 = vadd.f32 %v5077, %v5163
        %v5236 = vadd.f32 %v5082, %v5164
        %v5237 = vadd.f32 %v5085, %v5165
        %v5238 = vadd.f32 %v5090, %v5166
        %v5239 = vadd.f32 %v5093, %v5167
        %v5240 = vmax.f32 %v5168, 0.0
        %v5241 = vmax.f32 %v5169, 0.0
        %v5242 = vmax.f32 %v5170, 0.0
        %v5243 = vmax.f32 %v5171, 0.0
        %v5244 = vmax.f32 %v5172, 0.0
        %v5245 = vmax.f32 %v5173, 0.0
        %v5246 = vmax.f32 %v5174, 0.0
        %v5247 = vmax.f32 %v5175, 0.0
        %v5248 = vmax.f32 %v5176, 0.0
        %v5249 = vmax.f32 %v5177, 0.0
        %v5250 = vmax.f32 %v5178, 0.0
        %v5251 = vmax.f32 %v5179, 0.0
        %v5252 = vmax.f32 %v5180, 0.0
        %v5253 = vmax.f32 %v5181, 0.0
        %v5254 = vmax.f32 %v5182, 0.0
        %v5255 = vmax.f32 %v5183, 0.0
        %v5256 = vmax.f32 %v5184, 0.0
        %v5257 = vmax.f32 %v5185, 0.0
        %v5258 = vmax.f32 %v5186, 0.0
        %v5259 = vmax.f32 %v5187, 0.0
        %v5260 = vmax.f32 %v5188, 0.0
        %v5261 = vmax.f32 %v5189, 0.0
        %v5262 = vmax.f32 %v5190, 0.0
        %v5263 = vmax.f32 %v5191, 0.0
        %v5264 = vmax.f32 %v5192, 0.0
        %v5265 = vmax.f32 %v5193, 0.0
        %v5266 = vmax.f32 %v5194, 0.0
        %v5267 = vmax.f32 %v5195, 0.0
        %v5268 = vmax.f32 %v5196, 0.0
        %v5269 = vmax.f32 %v5197, 0.0
        %v5270 = vmax.f32 %v5198, 0.0
        %v5271 = vmax.f32 %v5199, 0.0
        %v5272 = vmax.f32 %v5200, 0.0
        %v5273 = vmax.f32 %v5201, 0.0
        %v5274 = vmax.f32 %v5202, 0.0
        %v5275 = vmax.f32 %v5203, 0.0
        %v5276 = vmax.f32 %v5204, 0.0
        %v5277 = vmax.f32 %v5205, 0.0
        %v5278 = vmax.f32 %v5206, 0.0
        %v5279 = vmax.f32 %v5207, 0.0
        %v5280 = vmax.f32 %v5208, 0.0
        %v5281 = vmax.f32 %v5209, 0.0
        %v5282 = vmax.f32 %v5210, 0.0
        %v5283 = vmax.f32 %v5211, 0.0
        %v5284 = vmax.f32 %v5212, 0.0
        %v5285 = vmax.f32 %v5213, 0.0
        %v5286 = vmax.f32 %v5214, 0.0
        %v5287 = vmax.f32 %v5215, 0.0
        %v5288 = vmax.f32 %v5216, 0.0
        %v5289 = vmax.f32 %v5217, 0.0
        %v5290 = vmax.f32 %v5218, 0.0
        %v5291 = vmax.f32 %v5219, 0.0
        %v5292 = vmax.f32 %v5220, 0.0
        %v5293 = vmax.f32 %v5221, 0.0
        %v5294 = vmax.f32 %v5222, 0.0
        %v5295 = vmax.f32 %v5223, 0.0
        %v5296 = vmax.f32 %v5224, 0.0
        %v5297 = vmax.f32 %v5225, 0.0
        %v5298 = vmax.f32 %v5226, 0.0
        %v5299 = vmax.f32 %v5227, 0.0
        %v5300 = vmax.f32 %v5228, 0.0
        %v5301 = vmax.f32 %v5229, 0.0
        %v5302 = vmax.f32 %v5230, 0.0
        %v5303 = vmax.f32 %v5231, 0.0
        %v5304 = vmax.f32 %v5232, 0.0
        %v5305 = vmax.f32 %v5233, 0.0
        %v5306 = vmax.f32 %v5234, 0.0
        %v5307 = vmax.f32 %v5235, 0.0
        %v5308 = vmax.f32 %v5236, 0.0
        %v5309 = vmax.f32 %v5237, 0.0
        %v5310 = vmax.f32 %v5238, 0.0
        %v5311 = vmax.f32 %v5239, 0.0
        %v5312 = vpack.c.bf16 %v5241, %v5240
        %v5313 = vpack.c.bf16 %v5242, %v5242
        %v5314 = vpack.c.bf16 %v5244, %v5243
        %v5315 = vpack.c.bf16 %v5245, %v5245
        %v5316 = vpack.c.bf16 %v5247, %v5246
        %v5317 = vpack.c.bf16 %v5248, %v5248
        %v5318 = vpack.c.bf16 %v5250, %v5249
        %v5319 = vpack.c.bf16 %v5251, %v5251
        %v5320 = vpack.c.bf16 %v5253, %v5252
        %v5321 = vpack.c.bf16 %v5254, %v5254
        %v5322 = vpack.c.bf16 %v5256, %v5255
        %v5323 = vpack.c.bf16 %v5257, %v5257
        %v5324 = vpack.c.bf16 %v5259, %v5258
        %v5325 = vpack.c.bf16 %v5260, %v5260
        %v5326 = vpack.c.bf16 %v5262, %v5261
        %v5327 = vpack.c.bf16 %v5263, %v5263
        %v5328 = vpack.c.bf16 %v5265, %v5264
        %v5329 = vpack.c.bf16 %v5266, %v5266
        %v5330 = vpack.c.bf16 %v5268, %v5267
        %v5331 = vpack.c.bf16 %v5269, %v5269
        %v5332 = vpack.c.bf16 %v5271, %v5270
        %v5333 = vpack.c.bf16 %v5272, %v5272
        %v5334 = vpack.c.bf16 %v5274, %v5273
        %v5335 = vpack.c.bf16 %v5275, %v5275
        %v5336 = vpack.c.bf16 %v5277, %v5276
        %v5337 = vpack.c.bf16 %v5278, %v5278
        %v5338 = vpack.c.bf16 %v5280, %v5279
        %v5339 = vpack.c.bf16 %v5281, %v5281
        %v5340 = vpack.c.bf16 %v5283, %v5282
        %v5341 = vpack.c.bf16 %v5284, %v5284
        %v5342 = vpack.c.bf16 %v5286, %v5285
        %v5343 = vpack.c.bf16 %v5287, %v5287
        %v5344 = vpack.c.bf16 %v5289, %v5288
        %v5345 = vpack.c.bf16 %v5290, %v5290
        %v5346 = vpack.c.bf16 %v5292, %v5291
        %v5347 = vpack.c.bf16 %v5293, %v5293
        %v5348 = vpack.c.bf16 %v5295, %v5294
        %v5349 = vpack.c.bf16 %v5296, %v5296
        %v5350 = vpack.c.bf16 %v5298, %v5297
        %v5351 = vpack.c.bf16 %v5299, %v5299
        %v5352 = vpack.c.bf16 %v5301, %v5300
        %v5353 = vpack.c.bf16 %v5302, %v5302
        %v5354 = vpack.c.bf16 %v5304, %v5303
        %v5355 = vpack.c.bf16 %v5305, %v5305
        %v5356 = vpack.c.bf16 %v5307, %v5306
        %v5357 = vpack.c.bf16 %v5308, %v5308
        %v5358 = vpack.c.bf16 %v5310, %v5309
        %v5359 = vpack.c.bf16 %v5311, %v5311
        %v5408 = vunpack.c.l.b16 %v5312
        %v5409 = vunpack.c.h.b16 %v5312
        %v5410 = vunpack.c.l.b16 %v5313
        %v5411 = vunpack.c.l.b16 %v5314
        %v5412 = vunpack.c.h.b16 %v5314
        %v5413 = vunpack.c.l.b16 %v5315
        %v5414 = vunpack.c.l.b16 %v5316
        %v5415 = vunpack.c.h.b16 %v5316
        %v5416 = vunpack.c.l.b16 %v5317
        %v5417 = vunpack.c.l.b16 %v5318
        %v5418 = vunpack.c.h.b16 %v5318
        %v5419 = vunpack.c.l.b16 %v5319
        %v5420 = vunpack.c.l.b16 %v5320
        %v5421 = vunpack.c.h.b16 %v5320
        %v5422 = vunpack.c.l.b16 %v5321
        %v5423 = vunpack.c.l.b16 %v5322
        %v5424 = vunpack.c.h.b16 %v5322
        %v5425 = vunpack.c.l.b16 %v5323
        %v5426 = vunpack.c.l.b16 %v5324
        %v5427 = vunpack.c.h.b16 %v5324
        %v5428 = vunpack.c.l.b16 %v5325
        %v5429 = vunpack.c.l.b16 %v5326
        %v5430 = vunpack.c.h.b16 %v5326
        %v5431 = vunpack.c.l.b16 %v5327
        %v5432 = vunpack.c.l.b16 %v5328
        %v5433 = vunpack.c.h.b16 %v5328
        %v5434 = vunpack.c.l.b16 %v5329
        %v5435 = vunpack.c.l.b16 %v5330
        %v5436 = vunpack.c.h.b16 %v5330
        %v5437 = vunpack.c.l.b16 %v5331
        %v5438 = vunpack.c.l.b16 %v5332
        %v5439 = vunpack.c.h.b16 %v5332
        %v5440 = vunpack.c.l.b16 %v5333
        %v5441 = vunpack.c.l.b16 %v5334
        %v5442 = vunpack.c.h.b16 %v5334
        %v5443 = vunpack.c.l.b16 %v5335
        %v5444 = vunpack.c.l.b16 %v5336
        %v5445 = vunpack.c.h.b16 %v5336
        %v5446 = vunpack.c.l.b16 %v5337
        %v5447 = vunpack.c.l.b16 %v5338
        %v5448 = vunpack.c.h.b16 %v5338
        %v5449 = vunpack.c.l.b16 %v5339
        %v5450 = vunpack.c.l.b16 %v5340
        %v5451 = vunpack.c.h.b16 %v5340
        %v5452 = vunpack.c.l.b16 %v5341
        %v5453 = vunpack.c.l.b16 %v5342
        %v5454 = vunpack.c.h.b16 %v5342
        %v5455 = vunpack.c.l.b16 %v5343
        %v5456 = vunpack.c.l.b16 %v5344
        %v5457 = vunpack.c.h.b16 %v5344
        %v5458 = vunpack.c.l.b16 %v5345
        %v5459 = vunpack.c.l.b16 %v5346
        %v5460 = vunpack.c.h.b16 %v5346
        %v5461 = vunpack.c.l.b16 %v5347
        %v5462 = vunpack.c.l.b16 %v5348
        %v5463 = vunpack.c.h.b16 %v5348
        %v5464 = vunpack.c.l.b16 %v5349
        %v5465 = vunpack.c.l.b16 %v5350
        %v5466 = vunpack.c.h.b16 %v5350
        %v5467 = vunpack.c.l.b16 %v5351
        %v5468 = vunpack.c.l.b16 %v5352
        %v5469 = vunpack.c.h.b16 %v5352
        %v5470 = vunpack.c.l.b16 %v5353
        %v5471 = vunpack.c.l.b16 %v5354
        %v5472 = vunpack.c.h.b16 %v5354
        %v5473 = vunpack.c.l.b16 %v5355
        %v5474 = vunpack.c.l.b16 %v5356
        %v5475 = vunpack.c.h.b16 %v5356
        %v5476 = vunpack.c.l.b16 %v5357
        %v5477 = vunpack.c.l.b16 %v5358
        %v5478 = vunpack.c.h.b16 %v5358
        %v5479 = vunpack.c.l.b16 %v5359
        %v5480 = vpack.c.b16 %v5408, %v5408
        %v5481 = vpack.c.b16 %v5409, %v5409
        %v5482 = vpack.c.b16 %v5410, %v5410
        %v5483 = vpack.c.b16 %v5411, %v5411
        %v5484 = vpack.c.b16 %v5412, %v5412
        %v5485 = vpack.c.b16 %v5413, %v5413
        %v5486 = vpack.c.b16 %v5414, %v5414
        %v5487 = vpack.c.b16 %v5415, %v5415
        %v5488 = vpack.c.b16 %v5416, %v5416
        %v5489 = vpack.c.b16 %v5417, %v5417
        %v5490 = vpack.c.b16 %v5418, %v5418
        %v5491 = vpack.c.b16 %v5419, %v5419
        %v5492 = vpack.c.b16 %v5420, %v5420
        %v5493 = vpack.c.b16 %v5421, %v5421
        %v5494 = vpack.c.b16 %v5422, %v5422
        %v5495 = vpack.c.b16 %v5423, %v5423
        %v5496 = vpack.c.b16 %v5424, %v5424
        %v5497 = vpack.c.b16 %v5425, %v5425
        %v5498 = vpack.c.b16 %v5426, %v5426
        %v5499 = vpack.c.b16 %v5427, %v5427
        %v5500 = vpack.c.b16 %v5428, %v5428
        %v5501 = vpack.c.b16 %v5429, %v5429
        %v5502 = vpack.c.b16 %v5430, %v5430
        %v5503 = vpack.c.b16 %v5431, %v5431
        %v5504 = vpack.c.b16 %v5432, %v5432
        %v5505 = vpack.c.b16 %v5433, %v5433
        %v5506 = vpack.c.b16 %v5434, %v5434
        %v5507 = vpack.c.b16 %v5435, %v5435
        %v5508 = vpack.c.b16 %v5436, %v5436
        %v5509 = vpack.c.b16 %v5437, %v5437
        %v5510 = vpack.c.b16 %v5438, %v5438
        %v5511 = vpack.c.b16 %v5439, %v5439
        %v5512 = vpack.c.b16 %v5440, %v5440
        %v5513 = vpack.c.b16 %v5441, %v5441
        %v5514 = vpack.c.b16 %v5442, %v5442
        %v5515 = vpack.c.b16 %v5443, %v5443
        %v5516 = vpack.c.b16 %v5444, %v5444
        %v5517 = vpack.c.b16 %v5445, %v5445
        %v5518 = vpack.c.b16 %v5446, %v5446
        %v5519 = vpack.c.b16 %v5447, %v5447
        %v5520 = vpack.c.b16 %v5448, %v5448
        %v5521 = vpack.c.b16 %v5449, %v5449
        %v5522 = vpack.c.b16 %v5450, %v5450
        %v5523 = vpack.c.b16 %v5451, %v5451
        %v5524 = vpack.c.b16 %v5452, %v5452
        %v5525 = vpack.c.b16 %v5453, %v5453
        %v5526 = vpack.c.b16 %v5454, %v5454
        %v5527 = vpack.c.b16 %v5455, %v5455
        %v5528 = vpack.c.b16 %v5456, %v5456
        %v5529 = vpack.c.b16 %v5457, %v5457
        %v5530 = vpack.c.b16 %v5458, %v5458
        %v5531 = vpack.c.b16 %v5459, %v5459
        %v5532 = vpack.c.b16 %v5460, %v5460
        %v5533 = vpack.c.b16 %v5461, %v5461
        %v5534 = vpack.c.b16 %v5462, %v5462
        %v5535 = vpack.c.b16 %v5463, %v5463
        %v5536 = vpack.c.b16 %v5464, %v5464
        %v5537 = vpack.c.b16 %v5465, %v5465
        %v5538 = vpack.c.b16 %v5466, %v5466
        %v5539 = vpack.c.b16 %v5467, %v5467
        %v5540 = vpack.c.b16 %v5468, %v5468
        %v5541 = vpack.c.b16 %v5469, %v5469
        %v5542 = vpack.c.b16 %v5470, %v5470
        %v5543 = vpack.c.b16 %v5471, %v5471
        %v5544 = vpack.c.b16 %v5472, %v5472
        %v5545 = vpack.c.b16 %v5473, %v5473
        %v5546 = vpack.c.b16 %v5474, %v5474
        %v5547 = vpack.c.b16 %v5475, %v5475
        %v5548 = vpack.c.b16 %v5476, %v5476
        %v5549 = vpack.c.b16 %v5477, %v5477
        %v5550 = vpack.c.b16 %v5478, %v5478
        %v5551 = vpack.c.b16 %v5479, %v5479
        %5624 = vst [vmem:[%s354] sm:$0xf] %v5480
        %5625 = vst [vmem:[%s354 + $0x4] sm:$0xf] %v5481
        %5626 = vst [vmem:[%s354 + $0x8] sm:$0xf] %v5482
        %5627 = vst [vmem:[%s354 + $0xc] sm:$0xf] %v5483
        %5628 = vst [vmem:[%s354 + $0x10] sm:$0xf] %v5484
        %5629 = vst [vmem:[%s354 + $0x14] sm:$0xf] %v5485
        %5630 = vst [vmem:[%s354 + $0x18] sm:$0xf] %v5486
        %5631 = vst [vmem:[%s354 + $0x1c] sm:$0xf] %v5487
        %5632 = vst [vmem:[%s354 + $0x20] sm:$0xf] %v5488
        %5633 = vst [vmem:[%s354 + $0x24] sm:$0xf] %v5489
        %5634 = vst [vmem:[%s354 + $0x28] sm:$0xf] %v5490
        %5635 = vst [vmem:[%s354 + $0x2c] sm:$0xf] %v5491
        %5636 = vst [vmem:[%s354 + $0x30] sm:$0xf] %v5492
        %5637 = vst [vmem:[%s354 + $0x34] sm:$0xf] %v5493
        %5638 = vst [vmem:[%s354 + $0x38] sm:$0xf] %v5494
        %5639 = vst [vmem:[%s354 + $0x3c] sm:$0xf] %v5495
        %5640 = vst [vmem:[%s354 + $0x40] sm:$0xf] %v5496
        %5641 = vst [vmem:[%s354 + $0x44] sm:$0xf] %v5497
        %5642 = vst [vmem:[%s354 + $0x48] sm:$0xf] %v5498
        %5643 = vst [vmem:[%s354 + $0x4c] sm:$0xf] %v5499
        %5644 = vst [vmem:[%s354 + $0x50] sm:$0xf] %v5500
        %5645 = vst [vmem:[%s354 + $0x54] sm:$0xf] %v5501
        %5646 = vst [vmem:[%s354 + $0x58] sm:$0xf] %v5502
        %5647 = vst [vmem:[%s354 + $0x5c] sm:$0xf] %v5503
        %5648 = vst [vmem:[%s354 + $0x60] sm:$0xf] %v5504
        %5649 = vst [vmem:[%s354 + $0x64] sm:$0xf] %v5505
        %5650 = vst [vmem:[%s354 + $0x68] sm:$0xf] %v5506
        %5651 = vst [vmem:[%s354 + $0x6c] sm:$0xf] %v5507
        %5652 = vst [vmem:[%s354 + $0x70] sm:$0xf] %v5508
        %5653 = vst [vmem:[%s354 + $0x74] sm:$0xf] %v5509
        %5654 = vst [vmem:[%s354 + $0x78] sm:$0xf] %v5510
        %5655 = vst [vmem:[%s354 + $0x7c] sm:$0xf] %v5511
        %5656 = vst [vmem:[%s354 + $0x80] sm:$0xf] %v5512
        %5657 = vst [vmem:[%s354 + $0x84] sm:$0xf] %v5513
        %5658 = vst [vmem:[%s354 + $0x88] sm:$0xf] %v5514
        %5659 = vst [vmem:[%s354 + $0x8c] sm:$0xf] %v5515
        %5660 = vst [vmem:[%s354 + $0x90] sm:$0xf] %v5516
        %5661 = vst [vmem:[%s354 + $0x94] sm:$0xf] %v5517
        %5662 = vst [vmem:[%s354 + $0x98] sm:$0xf] %v5518
        %5663 = vst [vmem:[%s354 + $0x9c] sm:$0xf] %v5519
        %5664 = vst [vmem:[%s354 + $0xa0] sm:$0xf] %v5520
        %5665 = vst [vmem:[%s354 + $0xa4] sm:$0xf] %v5521
        %5666 = vst [vmem:[%s354 + $0xa8] sm:$0xf] %v5522
        %5667 = vst [vmem:[%s354 + $0xac] sm:$0xf] %v5523
        %5668 = vst [vmem:[%s354 + $0xb0] sm:$0xf] %v5524
        %5669 = vst [vmem:[%s354 + $0xb4] sm:$0xf] %v5525
        %5670 = vst [vmem:[%s354 + $0xb8] sm:$0xf] %v5526
        %5671 = vst [vmem:[%s354 + $0xbc] sm:$0xf] %v5527
        %5672 = vst [vmem:[%s354 + $0xc0] sm:$0xf] %v5528
        %5673 = vst [vmem:[%s354 + $0xc4] sm:$0xf] %v5529
        %5674 = vst [vmem:[%s354 + $0xc8] sm:$0xf] %v5530
        %5675 = vst [vmem:[%s354 + $0xcc] sm:$0xf] %v5531
        %5676 = vst [vmem:[%s354 + $0xd0] sm:$0xf] %v5532
        %5677 = vst [vmem:[%s354 + $0xd4] sm:$0xf] %v5533
        %5678 = vst [vmem:[%s354 + $0xd8] sm:$0xf] %v5534
        %5679 = vst [vmem:[%s354 + $0xdc] sm:$0xf] %v5535
        %5680 = vst [vmem:[%s354 + $0xe0] sm:$0xf] %v5536
        %5681 = vst [vmem:[%s354 + $0xe4] sm:$0xf] %v5537
        %5682 = vst [vmem:[%s354 + $0xe8] sm:$0xf] %v5538
        %5683 = vst [vmem:[%s354 + $0xec] sm:$0xf] %v5539
        %5684 = vst [vmem:[%s354 + $0xf0] sm:$0xf] %v5540
        %5685 = vst [vmem:[%s354 + $0xf4] sm:$0xf] %v5541
        %5686 = vst [vmem:[%s354 + $0xf8] sm:$0xf] %v5542
        %5687 = vst [vmem:[%s354 + $0xfc] sm:$0xf] %v5543
        %5688 = vst [vmem:[%s354 + $0x100] sm:$0xf] %v5544
        %5689 = vst [vmem:[%s354 + $0x104] sm:$0xf] %v5545
        %5690 = vst [vmem:[%s354 + $0x108] sm:$0xf] %v5546
        %5691 = vst [vmem:[%s354 + $0x10c] sm:$0xf] %v5547
        %5692 = vst [vmem:[%s354 + $0x110] sm:$0xf] %v5548
        %5693 = vst [vmem:[%s354 + $0x114] sm:$0xf] %v5549
        %5694 = vst [vmem:[%s354 + $0x118] sm:$0xf] %v5550
        %5695 = vst [vmem:[%s354 + $0x11c] sm:$0xf] %v5551
        %s5696 = sand.u32 %s200, 1
        %s5697 = scalar_lea.sflag [#allocation4], %s5696
        %s5698 = sand.u32 %s200, 1
        %s5699 = smul.addr %s5698, 288
        %s5700 = scalar_lea.vmem [#allocation10], %s5699
        // Predicated region
        $region65: #{tpu_custom_call.1} parent=47 // pred_check
          %p5701 = pneg %p210
        $region66: #{tpu_custom_call.1} parent=47 // pred_check_branch
          %5703 = sbr.rel (%p5701) target = $region68
        $region67: #{tpu_custom_call.1} parent=47 // pred_region
          %s5704 = smul.u32 24, %s31
          %s5706 = ssub.s32 4608, 4608
          %5707 = vsyncadd %s5697, %s5706
          %s5708 = smul.addr %s5704, 3
          %s5709 = smul.addr %s30, 72
          %s5710 = sadd.s32 %s5708, %s5709
          %s5711 = smul.addr %s5710, 64
          %s5712 = scalar_lea.hbm %s7, %s5711
          %s5713 = sshll.u32 %s5700, 4
          %s5714 = int_to_ptr.vmem [resolvable:$true] %s5713
          %5719 = dma.vmem_to_hbm [thread:$0]  %s5714, 4608, %s5712, %s5697, 64, 64, 4
        $region68: #{tpu_custom_call.1} parent=47 // pred_fallthru
          _
      $region48: #{tpu_custom_call.1} parent=5 // pred_fallthru
        _
      %p5720 = scmp.le.s32.totalorder 2, %s21
      // Predicated region
      $region69: #{tpu_custom_call.1} parent=5 // pred_check
        %p5721 = pneg %p5720
      $region70: #{tpu_custom_call.1} parent=5 // pred_check_branch
        %5723 = sbr.rel (%p5721) target = $region72
      $region71: #{tpu_custom_call.1} parent=5 // pred_region
        %s5724 = ssub.s32 %s21, 2
        // Predicated region
        $region73: #{tpu_custom_call.1} parent=71 // pred_check
          %p5725 = pneg %p216
        $region74: #{tpu_custom_call.1} parent=71 // pred_check_branch
          %5727 = sbr.rel (%p5725) target = $region76
        $region75: #{tpu_custom_call.1} parent=71 // pred_region
          %s5728 = sand.u32 %s201, 1
          %s5729 = scalar_lea.sflag [#allocation4], %s5728
          %s5730 = sand.u32 %s201, 1
          %s5731 = smul.addr %s5730, 288
          %s5732 = scalar_lea.vmem [#allocation10], %s5731
          %5733 = dma.done %s5729, 4608
        $region76: #{tpu_custom_call.1} parent=71 // pred_fallthru
          _
      $region72: #{tpu_custom_call.1} parent=5 // pred_fallthru
        _
    $region6: #{tpu_custom_call.1} parent=1 // loop_footer
      %s25 = sadd.s32 1, %s21
    $region7: #{tpu_custom_call.1} parent=1 // loop_footer_branch
      %20 = sbr.rel target = $region3
    $region8: #{tpu_custom_call.1} parent=1 // loop_exit
      _
    %5734 = vsyncpa [#allocation3], 1
    %s5735 = scalar_lea.sflag [#allocation3], 1
    %5736 = vsyncpa %s5735, 1
    %5737 = vsyncpa [#allocation6], 1
    %5738 = vsyncpa [#allocation9], 1
    %5739 = vsyncpa [#allocation4], 1
    %s5740 = scalar_lea.sflag [#allocation4], 1
    %5741 = vsyncpa %s5740, 1

// kernel: tpu_custom_call.1
$region0: #{tpu_custom_call.1}
  #allocation0 [shape = 'u32[]', space=smem, size = 0x4, offset = 0x4, fixed_abs, tag = 'smem constant byte address 0x4 - core index']
  #allocation1 [shape = 'u32[144,128]{1,0:T(1,128)}', space=vmem, size = 0x12000, scoped, tag = 'internal scratch']
  %s0 = inlined_call_operand.hbm [shape: bf16[2,24,24,128], index: 0, kind: input, shape index: {}]
  %s1 = inlined_call_operand.hbm [shape: bf16[128,128], index: 1, kind: input, shape index: {}]
  %s2 = inlined_call_operand.vmem [shape: f32[1,128], index: 2, kind: input, shape index: {}]
  %s3 = inlined_call_operand.hbm [shape: bf16[3,384,128], index: 3, kind: input, shape index: {}]
  %s4 = inlined_call_operand.vmem [shape: f32[1,128], index: 4, kind: input, shape index: {}]
  %s5 = inlined_call_operand.hbm [shape: bf16[128,128], index: 5, kind: input, shape index: {}]
  %s6 = inlined_call_operand.vmem [shape: f32[1,128], index: 6, kind: input, shape index: {}]
  %s7 = inlined_call_operand.hbm [shape: bf16[2,24,24,128], index: 7, kind: output, shape index: {}]
  %s8 = sld [smem:[#allocation0]]
  $region77: #{tpu_custom_call.1} parent=0
    _
  %s10 = ssub.s32 1, %s8
  %s11 = scalar_select 0, %s10, %s8
  $region1: #{tpu_custom_call.1} parent=0
    #allocation2 [shape = 'u8[294912]{0}', space=vmem, size = 0x48000, scoped, tag = 'input window, operand 0']
    #allocation3 [shape = 's32[2]{0}', space=sflag, size = 0x8, scoped, tag = 'scoped memory for tpu_custom_call.1']
    #allocation4 [shape = 's32[2]{0}', space=sflag, size = 0x8, scoped, tag = 'scoped memory for tpu_custom_call.1']
    #allocation5 [shape = 'u8[32768]{0}', space=vmem, size = 0x8000, scoped, tag = 'input window, operand 1, single buffered']
    #allocation6 [shape = 's32[1]{0}', space=sflag, size = 0x4, scoped, tag = 'scoped memory for tpu_custom_call.1']
    #allocation7 [shape = 'u8[294912]{0}', space=vmem, size = 0x48000, scoped, tag = 'input window, operand 3, single buffered']
    #allocation8 [shape = 'u8[32768]{0}', space=vmem, size = 0x8000, scoped, tag = 'input window, operand 5, single buffered']
    #allocation9 [shape = 's32[1]{0}', space=sflag, size = 0x4, scoped, tag = 'scoped memory for tpu_custom_call.1']
    #allocation10 [shape = 'u8[294912]{0}', space=vmem, size = 0x48000, scoped, tag = 'output window, operand 0']
    %12 = vsyncpa [#allocation3], 0
    %s13 = scalar_lea.sflag [#allocation3], 1
    %14 = vsyncpa %s13, 0
    %15 = vsyncpa [#allocation6], 0
    %16 = vsyncpa [#allocation9], 0
    %17 = vsyncpa [#allocation4], 0
    %s18 = scalar_lea.sflag [#allocation4], 1
    %19 = vsyncpa %s18, 0
    loop: start=0, step=1, limit=4
    $region2: #{tpu_custom_call.1} parent=1 // loop_pre_header
      _
    $region3: #{tpu_custom_call.1} parent=1 // loop_header
      %s21 = sphi 0, %s25
      %p22 = scmp.ge.s32.totalorder %s21, 4
      %s28 = sphi 0, %s40
      %s29 = sphi 0, %s36
      %s30 = sphi 0, %s28
      %s31 = sphi 0, %s29
      %s32 = sphi 0, %s30
      %s33 = sphi 0, %s31
      %s43 = sphi 0, %s45
      %s46 = sphi 0, %s43
      %s47 = sphi 0, %s46
      %s63 = sphi 0, %s47
      %s67 = sphi 0, %s67
      %s69 = sphi 0, %s67
      %s70 = sphi 0, %s69
      %s84 = sphi 0, %s70
      %s88 = sphi 0, %s88
      %s90 = sphi 0, %s88
      %s91 = sphi 0, %s90
      %s105 = sphi 0, %s91
      %s109 = sphi 0, %s109
      %s111 = sphi 0, %s109
      %s112 = sphi 0, %s111
      %s126 = sphi 0, %s112
      %s130 = sphi 0, %s130
      %s132 = sphi 0, %s130
      %s133 = sphi 0, %s132
      %s147 = sphi 0, %s133
      %s151 = sphi 0, %s151
      %s153 = sphi 0, %s151
      %s154 = sphi 0, %s153
      %s168 = sphi 0, %s154
      %s172 = sphi 0, %s172
      %s174 = sphi 0, %s172
      %s175 = sphi 0, %s174
      %s189 = sphi 0, %s175
      %s197 = sphi 0, %s199
      %s200 = sphi 0, %s197
      %s201 = sphi 0, %s200
      %s217 = sphi 0, %s201
    $region4: #{tpu_custom_call.1} parent=1 // loop_header_branch
      %24 = sbr.rel (%p22) target = $region8
    $region5: #{tpu_custom_call.1} parent=1 // loop_body
      %s26 = ssub.s32 %s21, 1
      %s27 = ssub.s32 %s21, 2
      %s34 = sadd.s32 1, %s29
      %p35 = scmp.ge.s32.totalorder %s34, 1
      %s36 = scalar_select %p35, 0, %s34
      %s37 = sadd.s32 1, %s28
      %s38 = scalar_select %p35, %s37, %s28
      %p39 = scmp.ge.s32.totalorder %s38, 2
      %s40 = scalar_select %p39, 0, %s38
      %s41 = ssub.s32 %s28, %s40
      %p42 = scmp.eq.s32.totalorder %s41, 0
      %s44 = sadd.s32 %s43, 1
      %s45 = scalar_select %p42, %s43, %s44
      %p48 = pneg %p42
      %p49 = scmp.eq.s32.totalorder %s21, 1
      %p50 = por %p48, %p49
      %p51 = scmp.ne.s32.totalorder %s43, %s46
      %p52 = scmp.eq.s32.totalorder %s21, 0
      %p53 = por %p51, %p52
      %p54 = scmp.ne.s32.totalorder %s43, %s46
      %p55 = scmp.eq.s32.totalorder %s26, 1
      %p56 = por %p54, %p55
      %p57 = scmp.ne.s32.totalorder %s46, %s47
      %p58 = scmp.eq.s32.totalorder %s26, 0
      %p59 = por %p57, %p58
      %p60 = scmp.ne.s32.totalorder %s46, %s47
      %p61 = scmp.eq.s32.totalorder %s27, 1
      %p62 = por %p60, %p61
      %p64 = scmp.ne.s32.totalorder %s47, %s63
      %p65 = scmp.eq.s32.totalorder %s27, 0
      %p66 = por %p64, %p65
      %s68 = sadd.s32 %s67, 1
      %p71 = scmp.eq.s32.totalorder %s21, 1
      %p72 = scmp.ne.s32.totalorder %s67, %s69
      %p73 = scmp.eq.s32.totalorder %s21, 0
      %p74 = por %p72, %p73
      %p75 = scmp.ne.s32.totalorder %s67, %s69
      %p76 = scmp.eq.s32.totalorder %s26, 1
      %p77 = por %p75, %p76
      %p78 = scmp.ne.s32.totalorder %s69, %s70
      %p79 = scmp.eq.s32.totalorder %s26, 0
      %p80 = por %p78, %p79
      %p81 = scmp.ne.s32.totalorder %s69, %s70
      %p82 = scmp.eq.s32.totalorder %s27, 1
      %p83 = por %p81, %p82
      %p85 = scmp.ne.s32.totalorder %s70, %s84
      %p86 = scmp.eq.s32.totalorder %s27, 0
      %p87 = por %p85, %p86
      %s89 = sadd.s32 %s88, 1
      %p92 = scmp.eq.s32.totalorder %s21, 1
      %p93 = scmp.ne.s32.totalorder %s88, %s90
      %p94 = scmp.eq.s32.totalorder %s21, 0
      %p95 = por %p93, %p94
      %p96 = scmp.ne.s32.totalorder %s88, %s90
      %p97 = scmp.eq.s32.totalorder %s26, 1
      %p98 = por %p96, %p97
      %p99 = scmp.ne.s32.totalorder %s90, %s91
      %p100 = scmp.eq.s32.totalorder %s26, 0
      %p101 = por %p99, %p100
      %p102 = scmp.ne.s32.totalorder %s90, %s91
      %p103 = scmp.eq.s32.totalorder %s27, 1
      %p104 = por %p102, %p103
      %p106 = scmp.ne.s32.totalorder %s91, %s105
      %p107 = scmp.eq.s32.totalorder %s27, 0
      %p108 = por %p106, %p107
      %s110 = sadd.s32 %s109, 1
      %p113 = scmp.eq.s32.totalorder %s21, 1
      %p114 = scmp.ne.s32.totalorder %s109, %s111
      %p115 = scmp.eq.s32.totalorder %s21, 0
      %p116 = por %p114, %p115
      %p117 = scmp.ne.s32.totalorder %s109, %s111
      %p118 = scmp.eq.s32.totalorder %s26, 1
      %p119 = por %p117, %p118
      %p120 = scmp.ne.s32.totalorder %s111, %s112
      %p121 = scmp.eq.s32.totalorder %s26, 0
      %p122 = por %p120, %p121
      %p123 = scmp.ne.s32.totalorder %s111, %s112
      %p124 = scmp.eq.s32.totalorder %s27, 1
      %p125 = por %p123, %p124
      %p127 = scmp.ne.s32.totalorder %s112, %s126
      %p128 = scmp.eq.s32.totalorder %s27, 0
      %p129 = por %p127, %p128
      %s131 = sadd.s32 %s130, 1
      %p134 = scmp.eq.s32.totalorder %s21, 1
      %p135 = scmp.ne.s32.totalorder %s130, %s132
      %p136 = scmp.eq.s32.totalorder %s21, 0
      %p137 = por %p135, %p136
      %p138 = scmp.ne.s32.totalorder %s130, %s132
      %p139 = scmp.eq.s32.totalorder %s26, 1
      %p140 = por %p138, %p139
      %p141 = scmp.ne.s32.totalorder %s132, %s133
      %p142 = scmp.eq.s32.totalorder %s26, 0
      %p143 = por %p141, %p142
      %p144 = scmp.ne.s32.totalorder %s132, %s133
      %p145 = scmp.eq.s32.totalorder %s27, 1
      %p146 = por %p144, %p145
      %p148 = scmp.ne.s32.totalorder %s133, %s147
      %p149 = scmp.eq.s32.totalorder %s27, 0
      %p150 = por %p148, %p149
      %s152 = sadd.s32 %s151, 1
      %p155 = scmp.eq.s32.totalorder %s21, 1
      %p156 = scmp.ne.s32.totalorder %s151, %s153
      %p157 = scmp.eq.s32.totalorder %s21, 0
      %p158 = por %p156, %p157
      %p159 = scmp.ne.s32.totalorder %s151, %s153
      %p160 = scmp.eq.s32.totalorder %s26, 1
      %p161 = por %p159, %p160
      %p162 = scmp.ne.s32.totalorder %s153, %s154
      %p163 = scmp.eq.s32.totalorder %s26, 0
      %p164 = por %p162, %p163
      %p165 = scmp.ne.s32.totalorder %s153, %s154
      %p166 = scmp.eq.s32.totalorder %s27, 1
      %p167 = por %p165, %p166
      %p169 = scmp.ne.s32.totalorder %s154, %s168
      %p170 = scmp.eq.s32.totalorder %s27, 0
      %p171 = por %p169, %p170
      %s173 = sadd.s32 %s172, 1
      %p176 = scmp.eq.s32.totalorder %s21, 1
      %p177 = scmp.ne.s32.totalorder %s172, %s174
      %p178 = scmp.eq.s32.totalorder %s21, 0
      %p179 = por %p177, %p178
      %p180 = scmp.ne.s32.totalorder %s172, %s174
      %p181 = scmp.eq.s32.totalorder %s26, 1
      %p182 = por %p180, %p181
      %p183 = scmp.ne.s32.totalorder %s174, %s175
      %p184 = scmp.eq.s32.totalorder %s26, 0
      %p185 = por %p183, %p184
      %p186 = scmp.ne.s32.totalorder %s174, %s175
      %p187 = scmp.eq.s32.totalorder %s27, 1
      %p188 = por %p186, %p187
      %p190 = scmp.ne.s32.totalorder %s175, %s189
      %p191 = scmp.eq.s32.totalorder %s27, 0
      %p192 = por %p190, %p191
      %s193 = ssub.s32 %s28, %s40
      %s194 = ssub.s32 %s29, %s36
      %s195 = sor.u32 %s193, %s194
      %p196 = scmp.eq.s32.totalorder %s195, 0
      %s198 = sadd.s32 %s197, 1
      %s199 = scalar_select %p196, %s197, %s198
      %p202 = pneg %p196
      %p203 = scmp.eq.s32.totalorder %s21, 1
      %p204 = por %p202, %p203
      %p205 = scmp.ne.s32.totalorder %s197, %s200
      %p206 = scmp.eq.s32.totalorder %s21, 0
      %p207 = por %p205, %p206
      %p208 = scmp.ne.s32.totalorder %s197, %s200
      %p209 = scmp.eq.s32.totalorder %s26, 1
      %p210 = por %p208, %p209
      %p211 = scmp.ne.s32.totalorder %s200, %s201
      %p212 = scmp.eq.s32.totalorder %s26, 0
      %p213 = por %p211, %p212
      %p214 = scmp.ne.s32.totalorder %s200, %s201
      %p215 = scmp.eq.s32.totalorder %s27, 1
      %p216 = por %p214, %p215
      %p218 = scmp.ne.s32.totalorder %s201, %s217
      %p219 = scmp.eq.s32.totalorder %s27, 0
      %p220 = por %p218, %p219
      %p221 = scmp.le.s32.totalorder 1, %s21
      %p222 = scmp.lt.s32.totalorder %s21, 3
      %p223 = pnand %p221, %p222
      %p224 = pneg %p223
      // Predicated region
      $region9: #{tpu_custom_call.1} parent=5 // pred_check
        _
      $region10: #{tpu_custom_call.1} parent=5 // pred_check_branch
        %226 = sbr.rel (%p223) target = $region12
      $region11: #{tpu_custom_call.1} parent=5 // pred_region
        %s227 = ssub.s32 %s21, 1
        // Predicated region
        $region13: #{tpu_custom_call.1} parent=11 // pred_check
          %p228 = pneg %p80
        $region14: #{tpu_custom_call.1} parent=11 // pred_check_branch
          %230 = sbr.rel (%p228) target = $region16
        $region15: #{tpu_custom_call.1} parent=11 // pred_region
          %s232 = ssub.s32 1024, 1024
          %233 = vsyncadd [#allocation6], %s232
          %s234 = sshll.u32 [#allocation5], 4
          %s235 = int_to_ptr.vmem [resolvable:$true] %s234
          %240 = dma.hbm_to_vmem [thread:$0]  %s1, 1024, %s235, [#allocation6], 64, 64, 4
        $region16: #{tpu_custom_call.1} parent=11 // pred_fallthru
          _
        // Predicated region
        $region17: #{tpu_custom_call.1} parent=11 // pred_check
          %p241 = pneg %p101
        $region18: #{tpu_custom_call.1} parent=11 // pred_check_branch
          %243 = sbr.rel (%p241) target = $region20
        $region19: #{tpu_custom_call.1} parent=11 // pred_region
          _
        $region20: #{tpu_custom_call.1} parent=11 // pred_fallthru
          _
        // Predicated region
        $region21: #{tpu_custom_call.1} parent=11 // pred_check
          %p244 = pneg %p122
        $region22: #{tpu_custom_call.1} parent=11 // pred_check_branch
          %246 = sbr.rel (%p244) target = $region24
        $region23: #{tpu_custom_call.1} parent=11 // pred_region
          %s248 = ssub.s32 9216, 9216
          %249 = vsyncadd [#allocation6], %s248
          %s250 = sshll.u32 [#allocation7], 4
          %s251 = int_to_ptr.vmem [resolvable:$true] %s250
          %256 = dma.hbm_to_vmem [thread:$0]  %s3, 9216, %s251, [#allocation6], 64, 64, 4
        $region24: #{tpu_custom_call.1} parent=11 // pred_fallthru
          _
        // Predicated region
        $region25: #{tpu_custom_call.1} parent=11 // pred_check
          %p257 = pneg %p143
        $region26: #{tpu_custom_call.1} parent=11 // pred_check_branch
          %259 = sbr.rel (%p257) target = $region28
        $region27: #{tpu_custom_call.1} parent=11 // pred_region
          _
        $region28: #{tpu_custom_call.1} parent=11 // pred_fallthru
          _
        // Predicated region
        $region29: #{tpu_custom_call.1} parent=11 // pred_check
          %p260 = pneg %p164
        $region30: #{tpu_custom_call.1} parent=11 // pred_check_branch
          %262 = sbr.rel (%p260) target = $region32
        $region31: #{tpu_custom_call.1} parent=11 // pred_region
          %s264 = ssub.s32 1024, 1024
          %265 = vsyncadd [#allocation9], %s264
          %s266 = sshll.u32 [#allocation8], 4
          %s267 = int_to_ptr.vmem [resolvable:$true] %s266
          %272 = dma.hbm_to_vmem [thread:$0]  %s5, 1024, %s267, [#allocation9], 64, 64, 4
        $region32: #{tpu_custom_call.1} parent=11 // pred_fallthru
          _
        // Predicated region
        $region33: #{tpu_custom_call.1} parent=11 // pred_check
          %p273 = pneg %p185
        $region34: #{tpu_custom_call.1} parent=11 // pred_check_branch
          %275 = sbr.rel (%p273) target = $region36
        $region35: #{tpu_custom_call.1} parent=11 // pred_region
          _
        $region36: #{tpu_custom_call.1} parent=11 // pred_fallthru
          _
      $region12: #{tpu_custom_call.1} parent=5 // pred_fallthru
        _
      %p276 = scmp.lt.s32.totalorder %s21, 2
      // Predicated region
      $region37: #{tpu_custom_call.1} parent=5 // pred_check
        %p277 = pneg %p276
      $region38: #{tpu_custom_call.1} parent=5 // pred_check_branch
        %279 = sbr.rel (%p277) target = $region40
      $region39: #{tpu_custom_call.1} parent=5 // pred_region
        // Predicated region
        $region41: #{tpu_custom_call.1} parent=39 // pred_check
          %p280 = pneg %p53
        $region42: #{tpu_custom_call.1} parent=39 // pred_check_branch
          %282 = sbr.rel (%p280) target = $region44
        $region43: #{tpu_custom_call.1} parent=39 // pred_region
          %s283 = sand.u32 %s43, 1
          %s284 = scalar_lea.sflag [#allocation3], %s283
          %s285 = sand.u32 %s43, 1
          %s286 = smul.addr %s285, 288
          %s287 = scalar_lea.vmem [#allocation2], %s286
          %s289 = ssub.s32 4608, 4608
          %290 = vsyncadd %s284, %s289
          %s291 = smul.addr %s28, 72
          %s292 = smul.addr %s291, 64
          %s293 = scalar_lea.hbm %s0, %s292
          %s294 = sshll.u32 %s287, 4
          %s295 = int_to_ptr.vmem [resolvable:$true] %s294
          %300 = dma.hbm_to_vmem [thread:$0]  %s293, 4608, %s295, %s284, 64, 64, 4
        $region44: #{tpu_custom_call.1} parent=39 // pred_fallthru
          _
      $region40: #{tpu_custom_call.1} parent=5 // pred_fallthru
        _
      %p301 = scmp.le.s32.totalorder 1, %s21
      %p302 = scmp.lt.s32.totalorder %s21, 3
      %p303 = pnand %p301, %p302
      %p304 = pneg %p303
      // Predicated region
      $region45: #{tpu_custom_call.1} parent=5 // pred_check
        _
      $region46: #{tpu_custom_call.1} parent=5 // pred_check_branch
        %306 = sbr.rel (%p303) target = $region48
      $region47: #{tpu_custom_call.1} parent=5 // pred_region
        %s307 = ssub.s32 %s21, 1
        %s308 = sand.u32 %s46, 1
        %s309 = scalar_lea.sflag [#allocation3], %s308
        %s310 = sand.u32 %s46, 1
        %s311 = smul.addr %s310, 288
        %s312 = scalar_lea.vmem [#allocation2], %s311
        // Predicated region
        $region49: #{tpu_custom_call.1} parent=47 // pred_check
          %p313 = pneg %p59
        $region50: #{tpu_custom_call.1} parent=47 // pred_check_branch
          %315 = sbr.rel (%p313) target = $region52
        $region51: #{tpu_custom_call.1} parent=47 // pred_region
          %316 = dma.done %s309, 4608
        $region52: #{tpu_custom_call.1} parent=47 // pred_fallthru
          _
        // Predicated region
        $region53: #{tpu_custom_call.1} parent=47 // pred_check
          %p317 = pneg %p80
        $region54: #{tpu_custom_call.1} parent=47 // pred_check_branch
          %319 = sbr.rel (%p317) target = $region56
        $region55: #{tpu_custom_call.1} parent=47 // pred_region
          %320 = dma.done [#allocation6], 1024
        $region56: #{tpu_custom_call.1} parent=47 // pred_fallthru
          _
        // Predicated region
        $region57: #{tpu_custom_call.1} parent=47 // pred_check
          %p321 = pneg %p122
        $region58: #{tpu_custom_call.1} parent=47 // pred_check_branch
          %323 = sbr.rel (%p321) target = $region60
        $region59: #{tpu_custom_call.1} parent=47 // pred_region
          %324 = dma.done [#allocation6], 9216
        $region60: #{tpu_custom_call.1} parent=47 // pred_fallthru
          _
        // Predicated region
        $region61: #{tpu_custom_call.1} parent=47 // pred_check
          %p325 = pneg %p164
        $region62: #{tpu_custom_call.1} parent=47 // pred_check_branch
          %327 = sbr.rel (%p325) target = $region64
        $region63: #{tpu_custom_call.1} parent=47 // pred_region
          %328 = dma.done [#allocation9], 1024
        $region64: #{tpu_custom_call.1} parent=47 // pred_fallthru
          _
        %s329 = sand.u32 %s46, 1
        %s330 = scalar_lea.sflag [#allocation3], %s329
        %s331 = sand.u32 %s46, 1
        %s332 = smul.addr %s331, 288
        %s333 = scalar_lea.vmem [#allocation2], %s332
        %p334 = pneg %p59
        %p335 = pneg %p56
        %p336 = pneg %p80
        %p337 = pneg %p77
        %p338 = pneg %p101
        %p339 = pneg %p98
        %p340 = pneg %p122
        %p341 = pneg %p119
        %p342 = pneg %p143
        %p343 = pneg %p140
        %p344 = pneg %p164
        %p345 = pneg %p161
        %p346 = pneg %p185
        %p347 = pneg %p182
        %p348 = pneg %p213
        %p349 = pneg %p210
        %s350 = sand.u32 %s200, 1
        %s351 = scalar_lea.sflag [#allocation4], %s350
        %s352 = sand.u32 %s200, 1
        %s353 = smul.addr %s352, 288
        %s354 = scalar_lea.vmem [#allocation10], %s353
        %s355 = smul.u32 24, %s31
        %v357 = vld [vmem:[#allocation5] sm:$0xf]
        %v358 = vld [vmem:[#allocation5 + $0x4] sm:$0xf]
        %v359 = vld [vmem:[#allocation5 + $0x8] sm:$0xf]
        %v360 = vld [vmem:[#allocation5 + $0xc] sm:$0xf]
        %v361 = vld [vmem:[#allocation5 + $0x10] sm:$0xf]
        %v362 = vld [vmem:[#allocation5 + $0x14] sm:$0xf]
        %v363 = vld [vmem:[#allocation5 + $0x18] sm:$0xf]
        %v364 = vld [vmem:[#allocation5 + $0x1c] sm:$0xf]
        %v365 = vld [vmem:[#allocation5 + $0x20] sm:$0xf]
        %v366 = vld [vmem:[#allocation5 + $0x24] sm:$0xf]
        %v367 = vld [vmem:[#allocation5 + $0x28] sm:$0xf]
        %v368 = vld [vmem:[#allocation5 + $0x2c] sm:$0xf]
        %v369 = vld [vmem:[#allocation5 + $0x30] sm:$0xf]
        %v370 = vld [vmem:[#allocation5 + $0x34] sm:$0xf]
        %v371 = vld [vmem:[#allocation5 + $0x38] sm:$0xf]
        %v372 = vld [vmem:[#allocation5 + $0x3c] sm:$0xf]
        %v373 = vld [vmem:[#allocation7] sm:$0xf]
        %v374 = vld [vmem:[#allocation7 + $0x4] sm:$0xf]
        %v375 = vld [vmem:[#allocation7 + $0x8] sm:$0xf]
        %v376 = vld [vmem:[#allocation7 + $0xc] sm:$0xf]
        %v377 = vld [vmem:[#allocation7 + $0x10] sm:$0xf]
        %v378 = vld [vmem:[#allocation7 + $0x14] sm:$0xf]
        %v379 = vld [vmem:[#allocation7 + $0x18] sm:$0xf]
        %v380 = vld [vmem:[#allocation7 + $0x1c] sm:$0xf]
        %v381 = vld [vmem:[#allocation7 + $0x20] sm:$0xf]
        %v382 = vld [vmem:[#allocation7 + $0x24] sm:$0xf]
        %v383 = vld [vmem:[#allocation7 + $0x28] sm:$0xf]
        %v384 = vld [vmem:[#allocation7 + $0x2c] sm:$0xf]
        %v385 = vld [vmem:[#allocation7 + $0x30] sm:$0xf]
        %v386 = vld [vmem:[#allocation7 + $0x34] sm:$0xf]
        %v387 = vld [vmem:[#allocation7 + $0x38] sm:$0xf]
        %v388 = vld [vmem:[#allocation7 + $0x3c] sm:$0xf]
        %v389 = vld [vmem:[#allocation7 + $0x40] sm:$0xf]
        %v390 = vld [vmem:[#allocation7 + $0x44] sm:$0xf]
        %v391 = vld [vmem:[#allocation7 + $0x48] sm:$0xf]
        %v392 = vld [vmem:[#allocation7 + $0x4c] sm:$0xf]
        %v393 = vld [vmem:[#allocation7 + $0x50] sm:$0xf]
        %v394 = vld [vmem:[#allocation7 + $0x54] sm:$0xf]
        %v395 = vld [vmem:[#allocation7 + $0x58] sm:$0xf]
        %v396 = vld [vmem:[#allocation7 + $0x5c] sm:$0xf]
        %v397 = vld [vmem:[#allocation7 + $0x60] sm:$0xf]
        %v398 = vld [vmem:[#allocation7 + $0x64] sm:$0xf]
        %v399 = vld [vmem:[#allocation7 + $0x68] sm:$0xf]
        %v400 = vld [vmem:[#allocation7 + $0x6c] sm:$0xf]
        %v401 = vld [vmem:[#allocation7 + $0x70] sm:$0xf]
        %v402 = vld [vmem:[#allocation7 + $0x74] sm:$0xf]
        %v403 = vld [vmem:[#allocation7 + $0x78] sm:$0xf]
        %v404 = vld [vmem:[#allocation7 + $0x7c] sm:$0xf]
        %v405 = vld [vmem:[#allocation7 + $0x80] sm:$0xf]
        %v406 = vld [vmem:[#allocation7 + $0x84] sm:$0xf]
        %v407 = vld [vmem:[#allocation7 + $0x88] sm:$0xf]
        %v408 = vld [vmem:[#allocation7 + $0x8c] sm:$0xf]
        %v409 = vld [vmem:[#allocation7 + $0x90] sm:$0xf]
        %v410 = vld [vmem:[#allocation7 + $0x94] sm:$0xf]
        %v411 = vld [vmem:[#allocation7 + $0x98] sm:$0xf]
        %v412 = vld [vmem:[#allocation7 + $0x9c] sm:$0xf]
        %v413 = vld [vmem:[#allocation7 + $0xa0] sm:$0xf]
        %v414 = vld [vmem:[#allocation7 + $0xa4] sm:$0xf]
        %v415 = vld [vmem:[#allocation7 + $0xa8] sm:$0xf]
        %v416 = vld [vmem:[#allocation7 + $0xac] sm:$0xf]
        %v417 = vld [vmem:[#allocation7 + $0xb0] sm:$0xf]
        %v418 = vld [vmem:[#allocation7 + $0xb4] sm:$0xf]
        %v419 = vld [vmem:[#allocation7 + $0xb8] sm:$0xf]
        %v420 = vld [vmem:[#allocation7 + $0xbc] sm:$0xf]
        %v421 = vld [vmem:[#allocation7 + $0xc0] sm:$0xf]
        %v422 = vld [vmem:[#allocation7 + $0xc4] sm:$0xf]
        %v423 = vld [vmem:[#allocation7 + $0xc8] sm:$0xf]
        %v424 = vld [vmem:[#allocation7 + $0xcc] sm:$0xf]
        %v425 = vld [vmem:[#allocation7 + $0xd0] sm:$0xf]
        %v426 = vld [vmem:[#allocation7 + $0xd4] sm:$0xf]
        %v427 = vld [vmem:[#allocation7 + $0xd8] sm:$0xf]
        %v428 = vld [vmem:[#allocation7 + $0xdc] sm:$0xf]
        %v429 = vld [vmem:[#allocation7 + $0xe0] sm:$0xf]
        %v430 = vld [vmem:[#allocation7 + $0xe4] sm:$0xf]
        %v431 = vld [vmem:[#allocation7 + $0xe8] sm:$0xf]
        %v432 = vld [vmem:[#allocation7 + $0xec] sm:$0xf]
        %v433 = vld [vmem:[#allocation7 + $0xf0] sm:$0xf]
        %v434 = vld [vmem:[#allocation7 + $0xf4] sm:$0xf]
        %v435 = vld [vmem:[#allocation7 + $0xf8] sm:$0xf]
        %v436 = vld [vmem:[#allocation7 + $0xfc] sm:$0xf]
        %v437 = vld [vmem:[#allocation7 + $0x100] sm:$0xf]
        %v438 = vld [vmem:[#allocation7 + $0x104] sm:$0xf]
        %v439 = vld [vmem:[#allocation7 + $0x108] sm:$0xf]
        %v440 = vld [vmem:[#allocation7 + $0x10c] sm:$0xf]
        %v441 = vld [vmem:[#allocation7 + $0x110] sm:$0xf]
        %v442 = vld [vmem:[#allocation7 + $0x114] sm:$0xf]
        %v443 = vld [vmem:[#allocation7 + $0x118] sm:$0xf]
        %v444 = vld [vmem:[#allocation7 + $0x11c] sm:$0xf]
        %v445 = vld [vmem:[#allocation7 + $0x120] sm:$0xf]
        %v446 = vld [vmem:[#allocation7 + $0x124] sm:$0xf]
        %v447 = vld [vmem:[#allocation7 + $0x128] sm:$0xf]
        %v448 = vld [vmem:[#allocation7 + $0x12c] sm:$0xf]
        %v449 = vld [vmem:[#allocation7 + $0x130] sm:$0xf]
        %v450 = vld [vmem:[#allocation7 + $0x134] sm:$0xf]
        %v451 = vld [vmem:[#allocation7 + $0x138] sm:$0xf]
        %v452 = vld [vmem:[#allocation7 + $0x13c] sm:$0xf]
        %v453 = vld [vmem:[#allocation7 + $0x140] sm:$0xf]
        %v454 = vld [vmem:[#allocation7 + $0x144] sm:$0xf]
        %v455 = vld [vmem:[#allocation7 + $0x148] sm:$0xf]
        %v456 = vld [vmem:[#allocation7 + $0x14c] sm:$0xf]
        %v457 = vld [vmem:[#allocation7 + $0x150] sm:$0xf]
        %v458 = vld [vmem:[#allocation7 + $0x154] sm:$0xf]
        %v459 = vld [vmem:[#allocation7 + $0x158] sm:$0xf]
        %v460 = vld [vmem:[#allocation7 + $0x15c] sm:$0xf]
        %v461 = vld [vmem:[#allocation7 + $0x160] sm:$0xf]
        %v462 = vld [vmem:[#allocation7 + $0x164] sm:$0xf]
        %v463 = vld [vmem:[#allocation7 + $0x168] sm:$0xf]
        %v464 = vld [vmem:[#allocation7 + $0x16c] sm:$0xf]
        %v465 = vld [vmem:[#allocation7 + $0x170] sm:$0xf]
        %v466 = vld [vmem:[#allocation7 + $0x174] sm:$0xf]
        %v467 = vld [vmem:[#allocation7 + $0x178] sm:$0xf]
        %v468 = vld [vmem:[#allocation7 + $0x17c] sm:$0xf]
        %v469 = vld [vmem:[#allocation7 + $0x180] sm:$0xf]
        %v470 = vld [vmem:[#allocation7 + $0x184] sm:$0xf]
        %v471 = vld [vmem:[#allocation7 + $0x188] sm:$0xf]
        %v472 = vld [vmem:[#allocation7 + $0x18c] sm:$0xf]
        %v473 = vld [vmem:[#allocation7 + $0x190] sm:$0xf]
        %v474 = vld [vmem:[#allocation7 + $0x194] sm:$0xf]
        %v475 = vld [vmem:[#allocation7 + $0x198] sm:$0xf]
        %v476 = vld [vmem:[#allocation7 + $0x19c] sm:$0xf]
        %v477 = vld [vmem:[#allocation7 + $0x1a0] sm:$0xf]
        %v478 = vld [vmem:[#allocation7 + $0x1a4] sm:$0xf]
        %v479 = vld [vmem:[#allocation7 + $0x1a8] sm:$0xf]
        %v480 = vld [vmem:[#allocation7 + $0x1ac] sm:$0xf]
        %v481 = vld [vmem:[#allocation7 + $0x1b0] sm:$0xf]
        %v482 = vld [vmem:[#allocation7 + $0x1b4] sm:$0xf]
        %v483 = vld [vmem:[#allocation7 + $0x1b8] sm:$0xf]
        %v484 = vld [vmem:[#allocation7 + $0x1bc] sm:$0xf]
        %v485 = vld [vmem:[#allocation7 + $0x1c0] sm:$0xf]
        %v486 = vld [vmem:[#allocation7 + $0x1c4] sm:$0xf]
        %v487 = vld [vmem:[#allocation7 + $0x1c8] sm:$0xf]
        %v488 = vld [vmem:[#allocation7 + $0x1cc] sm:$0xf]
        %v489 = vld [vmem:[#allocation7 + $0x1d0] sm:$0xf]
        %v490 = vld [vmem:[#allocation7 + $0x1d4] sm:$0xf]
        %v491 = vld [vmem:[#allocation7 + $0x1d8] sm:$0xf]
        %v492 = vld [vmem:[#allocation7 + $0x1dc] sm:$0xf]
        %v493 = vld [vmem:[#allocation7 + $0x1e0] sm:$0xf]
        %v494 = vld [vmem:[#allocation7 + $0x1e4] sm:$0xf]
        %v495 = vld [vmem:[#allocation7 + $0x1e8] sm:$0xf]
        %v496 = vld [vmem:[#allocation7 + $0x1ec] sm:$0xf]
        %v497 = vld [vmem:[#allocation7 + $0x1f0] sm:$0xf]
        %v498 = vld [vmem:[#allocation7 + $0x1f4] sm:$0xf]
        %v499 = vld [vmem:[#allocation7 + $0x1f8] sm:$0xf]
        %v500 = vld [vmem:[#allocation7 + $0x1fc] sm:$0xf]
        %v501 = vld [vmem:[#allocation7 + $0x200] sm:$0xf]
        %v502 = vld [vmem:[#allocation7 + $0x204] sm:$0xf]
        %v503 = vld [vmem:[#allocation7 + $0x208] sm:$0xf]
        %v504 = vld [vmem:[#allocation7 + $0x20c] sm:$0xf]
        %v505 = vld [vmem:[#allocation7 + $0x210] sm:$0xf]
        %v506 = vld [vmem:[#allocation7 + $0x214] sm:$0xf]
        %v507 = vld [vmem:[#allocation7 + $0x218] sm:$0xf]
        %v508 = vld [vmem:[#allocation7 + $0x21c] sm:$0xf]
        %v509 = vld [vmem:[#allocation7 + $0x220] sm:$0xf]
        %v510 = vld [vmem:[#allocation7 + $0x224] sm:$0xf]
        %v511 = vld [vmem:[#allocation7 + $0x228] sm:$0xf]
        %v512 = vld [vmem:[#allocation7 + $0x22c] sm:$0xf]
        %v513 = vld [vmem:[#allocation7 + $0x230] sm:$0xf]
        %v514 = vld [vmem:[#allocation7 + $0x234] sm:$0xf]
        %v515 = vld [vmem:[#allocation7 + $0x238] sm:$0xf]
        %v516 = vld [vmem:[#allocation7 + $0x23c] sm:$0xf]
        %v517 = vld [vmem:[#allocation8] sm:$0xf]
        %v518 = vld [vmem:[#allocation8 + $0x4] sm:$0xf]
        %v519 = vld [vmem:[#allocation8 + $0x8] sm:$0xf]
        %v520 = vld [vmem:[#allocation8 + $0xc] sm:$0xf]
        %v521 = vld [vmem:[#allocation8 + $0x10] sm:$0xf]
        %v522 = vld [vmem:[#allocation8 + $0x14] sm:$0xf]
        %v523 = vld [vmem:[#allocation8 + $0x18] sm:$0xf]
        %v524 = vld [vmem:[#allocation8 + $0x1c] sm:$0xf]
        %v525 = vld [vmem:[#allocation8 + $0x20] sm:$0xf]
        %v526 = vld [vmem:[#allocation8 + $0x24] sm:$0xf]
        %v527 = vld [vmem:[#allocation8 + $0x28] sm:$0xf]
        %v528 = vld [vmem:[#allocation8 + $0x2c] sm:$0xf]
        %v529 = vld [vmem:[#allocation8 + $0x30] sm:$0xf]
        %v530 = vld [vmem:[#allocation8 + $0x34] sm:$0xf]
        %v531 = vld [vmem:[#allocation8 + $0x38] sm:$0xf]
        %v532 = vld [vmem:[#allocation8 + $0x3c] sm:$0xf]
        %v533 = vld [vmem:[%s2] sm:$0x1]
        %v534 = vld [vmem:[%s4] sm:$0x1]
        %v535 = vld [vmem:[%s6] sm:$0x1]
        %s536 = smul.u32 %s31, 24
        %s537 = smul.u32 %s536, 3
        %s538 = smul.addr %s537, 4
        %s539 = scalar_lea.vmem %s312, %s538 [#allocation2]
        %v540 = vld [vmem:[%s539] sm:$0xf]
        %v541 = vld [vmem:[%s539 + $0x4] sm:$0xf]
        %v542 = vld [vmem:[%s539 + $0x8] sm:$0xf]
        %v543 = vld [vmem:[%s539 + $0xc] sm:$0xf]
        %v544 = vld [vmem:[%s539 + $0x10] sm:$0xf]
        %v545 = vld [vmem:[%s539 + $0x14] sm:$0xf]
        %v546 = vld [vmem:[%s539 + $0x18] sm:$0xf]
        %v547 = vld [vmem:[%s539 + $0x1c] sm:$0xf]
        %v548 = vld [vmem:[%s539 + $0x20] sm:$0xf]
        %v549 = vld [vmem:[%s539 + $0x24] sm:$0xf]
        %v550 = vld [vmem:[%s539 + $0x28] sm:$0xf]
        %v551 = vld [vmem:[%s539 + $0x2c] sm:$0xf]
        %v552 = vld [vmem:[%s539 + $0x30] sm:$0xf]
        %v553 = vld [vmem:[%s539 + $0x34] sm:$0xf]
        %v554 = vld [vmem:[%s539 + $0x38] sm:$0xf]
        %v555 = vld [vmem:[%s539 + $0x3c] sm:$0xf]
        %v556 = vld [vmem:[%s539 + $0x40] sm:$0xf]
        %v557 = vld [vmem:[%s539 + $0x44] sm:$0xf]
        %v558 = vld [vmem:[%s539 + $0x48] sm:$0xf]
        %v559 = vld [vmem:[%s539 + $0x4c] sm:$0xf]
        %v560 = vld [vmem:[%s539 + $0x50] sm:$0xf]
        %v561 = vld [vmem:[%s539 + $0x54] sm:$0xf]
        %v562 = vld [vmem:[%s539 + $0x58] sm:$0xf]
        %v563 = vld [vmem:[%s539 + $0x5c] sm:$0xf]
        %v564 = vld [vmem:[%s539 + $0x60] sm:$0xf]
        %v565 = vld [vmem:[%s539 + $0x64] sm:$0xf]
        %v566 = vld [vmem:[%s539 + $0x68] sm:$0xf]
        %v567 = vld [vmem:[%s539 + $0x6c] sm:$0xf]
        %v568 = vld [vmem:[%s539 + $0x70] sm:$0xf]
        %v569 = vld [vmem:[%s539 + $0x74] sm:$0xf]
        %v570 = vld [vmem:[%s539 + $0x78] sm:$0xf]
        %v571 = vld [vmem:[%s539 + $0x7c] sm:$0xf]
        %v572 = vld [vmem:[%s539 + $0x80] sm:$0xf]
        %v573 = vld [vmem:[%s539 + $0x84] sm:$0xf]
        %v574 = vld [vmem:[%s539 + $0x88] sm:$0xf]
        %v575 = vld [vmem:[%s539 + $0x8c] sm:$0xf]
        %v576 = vld [vmem:[%s539 + $0x90] sm:$0xf]
        %v577 = vld [vmem:[%s539 + $0x94] sm:$0xf]
        %v578 = vld [vmem:[%s539 + $0x98] sm:$0xf]
        %v579 = vld [vmem:[%s539 + $0x9c] sm:$0xf]
        %v580 = vld [vmem:[%s539 + $0xa0] sm:$0xf]
        %v581 = vld [vmem:[%s539 + $0xa4] sm:$0xf]
        %v582 = vld [vmem:[%s539 + $0xa8] sm:$0xf]
        %v583 = vld [vmem:[%s539 + $0xac] sm:$0xf]
        %v584 = vld [vmem:[%s539 + $0xb0] sm:$0xf]
        %v585 = vld [vmem:[%s539 + $0xb4] sm:$0xf]
        %v586 = vld [vmem:[%s539 + $0xb8] sm:$0xf]
        %v587 = vld [vmem:[%s539 + $0xbc] sm:$0xf]
        %v588 = vld [vmem:[%s539 + $0xc0] sm:$0xf]
        %v589 = vld [vmem:[%s539 + $0xc4] sm:$0xf]
        %v590 = vld [vmem:[%s539 + $0xc8] sm:$0xf]
        %v591 = vld [vmem:[%s539 + $0xcc] sm:$0xf]
        %v592 = vld [vmem:[%s539 + $0xd0] sm:$0xf]
        %v593 = vld [vmem:[%s539 + $0xd4] sm:$0xf]
        %v594 = vld [vmem:[%s539 + $0xd8] sm:$0xf]
        %v595 = vld [vmem:[%s539 + $0xdc] sm:$0xf]
        %v596 = vld [vmem:[%s539 + $0xe0] sm:$0xf]
        %v597 = vld [vmem:[%s539 + $0xe4] sm:$0xf]
        %v598 = vld [vmem:[%s539 + $0xe8] sm:$0xf]
        %v599 = vld [vmem:[%s539 + $0xec] sm:$0xf]
        %v600 = vld [vmem:[%s539 + $0xf0] sm:$0xf]
        %v601 = vld [vmem:[%s539 + $0xf4] sm:$0xf]
        %v602 = vld [vmem:[%s539 + $0xf8] sm:$0xf]
        %v603 = vld [vmem:[%s539 + $0xfc] sm:$0xf]
        %v604 = vld [vmem:[%s539 + $0x100] sm:$0xf]
        %v605 = vld [vmem:[%s539 + $0x104] sm:$0xf]
        %v606 = vld [vmem:[%s539 + $0x108] sm:$0xf]
        %v607 = vld [vmem:[%s539 + $0x10c] sm:$0xf]
        %v608 = vld [vmem:[%s539 + $0x110] sm:$0xf]
        %v609 = vld [vmem:[%s539 + $0x114] sm:$0xf]
        %v610 = vld [vmem:[%s539 + $0x118] sm:$0xf]
        %v611 = vld [vmem:[%s539 + $0x11c] sm:$0xf]
        %v613 = vlaneseq
        %v614 = vshrl.u32 %v613, 7
        %v615 = vsub.s32 0, %v614
        %v616 = vrot.slane %v533, %v615
        %v690 = vunpack.c.l.b16 %v540
        %v691 = vunpack.c.l.b16 %v541
        %v692 = vunpack.c.l.b16 %v542
        %v693 = vunpack.c.l.b16 %v543
        %v694 = vunpack.c.l.b16 %v544
        %v695 = vunpack.c.l.b16 %v545
        %v696 = vunpack.c.l.b16 %v546
        %v697 = vunpack.c.l.b16 %v547
        %v698 = vunpack.c.l.b16 %v548
        %v699 = vunpack.c.l.b16 %v549
        %v700 = vunpack.c.l.b16 %v550
        %v701 = vunpack.c.l.b16 %v551
        %v702 = vunpack.c.l.b16 %v552
        %v703 = vunpack.c.l.b16 %v553
        %v704 = vunpack.c.l.b16 %v554
        %v705 = vunpack.c.l.b16 %v555
        %v706 = vunpack.c.l.b16 %v556
        %v707 = vunpack.c.l.b16 %v557
        %v708 = vunpack.c.l.b16 %v558
        %v709 = vunpack.c.l.b16 %v559
        %v710 = vunpack.c.l.b16 %v560
        %v711 = vunpack.c.l.b16 %v561
        %v712 = vunpack.c.l.b16 %v562
        %v713 = vunpack.c.l.b16 %v563
        %v714 = vunpack.c.l.b16 %v564
        %v715 = vunpack.c.l.b16 %v565
        %v716 = vunpack.c.l.b16 %v566
        %v717 = vunpack.c.l.b16 %v567
        %v718 = vunpack.c.l.b16 %v568
        %v719 = vunpack.c.l.b16 %v569
        %v720 = vunpack.c.l.b16 %v570
        %v721 = vunpack.c.l.b16 %v571
        %v722 = vunpack.c.l.b16 %v572
        %v723 = vunpack.c.l.b16 %v573
        %v724 = vunpack.c.l.b16 %v574
        %v725 = vunpack.c.l.b16 %v575
        %v726 = vunpack.c.l.b16 %v576
        %v727 = vunpack.c.l.b16 %v577
        %v728 = vunpack.c.l.b16 %v578
        %v729 = vunpack.c.l.b16 %v579
        %v730 = vunpack.c.l.b16 %v580
        %v731 = vunpack.c.l.b16 %v581
        %v732 = vunpack.c.l.b16 %v582
        %v733 = vunpack.c.l.b16 %v583
        %v734 = vunpack.c.l.b16 %v584
        %v735 = vunpack.c.l.b16 %v585
        %v736 = vunpack.c.l.b16 %v586
        %v737 = vunpack.c.l.b16 %v587
        %v738 = vunpack.c.l.b16 %v588
        %v739 = vunpack.c.l.b16 %v589
        %v740 = vunpack.c.l.b16 %v590
        %v741 = vunpack.c.l.b16 %v591
        %v742 = vunpack.c.l.b16 %v592
        %v743 = vunpack.c.l.b16 %v593
        %v744 = vunpack.c.l.b16 %v594
        %v745 = vunpack.c.l.b16 %v595
        %v746 = vunpack.c.l.b16 %v596
        %v747 = vunpack.c.l.b16 %v597
        %v748 = vunpack.c.l.b16 %v598
        %v749 = vunpack.c.l.b16 %v599
        %v750 = vunpack.c.l.b16 %v600
        %v751 = vunpack.c.l.b16 %v601
        %v752 = vunpack.c.l.b16 %v602
        %v753 = vunpack.c.l.b16 %v603
        %v754 = vunpack.c.l.b16 %v604
        %v755 = vunpack.c.l.b16 %v605
        %v756 = vunpack.c.l.b16 %v606
        %v757 = vunpack.c.l.b16 %v607
        %v758 = vunpack.c.l.b16 %v608
        %v759 = vunpack.c.l.b16 %v609
        %v760 = vunpack.c.l.b16 %v610
        %v761 = vunpack.c.l.b16 %v611
        %v762 = vpack.c.b16 %v691, %v690
        %v763 = vpack.c.b16 %v693, %v692
        %v764 = vpack.c.b16 %v695, %v694
        %v765 = vpack.c.b16 %v697, %v696
        %v766 = vpack.c.b16 %v699, %v698
        %v767 = vpack.c.b16 %v701, %v700
        %v768 = vpack.c.b16 %v703, %v702
        %v769 = vpack.c.b16 %v705, %v704
        %v770 = vpack.c.b16 %v707, %v706
        %v771 = vpack.c.b16 %v709, %v708
        %v772 = vpack.c.b16 %v711, %v710
        %v773 = vpack.c.b16 %v713, %v712
        %v774 = vpack.c.b16 %v715, %v714
        %v775 = vpack.c.b16 %v717, %v716
        %v776 = vpack.c.b16 %v719, %v718
        %v777 = vpack.c.b16 %v721, %v720
        %v778 = vpack.c.b16 %v723, %v722
        %v779 = vpack.c.b16 %v725, %v724
        %v780 = vpack.c.b16 %v727, %v726
        %v781 = vpack.c.b16 %v729, %v728
        %v782 = vpack.c.b16 %v731, %v730
        %v783 = vpack.c.b16 %v733, %v732
        %v784 = vpack.c.b16 %v735, %v734
        %v785 = vpack.c.b16 %v737, %v736
        %v786 = vpack.c.b16 %v739, %v738
        %v787 = vpack.c.b16 %v741, %v740
        %v788 = vpack.c.b16 %v743, %v742
        %v789 = vpack.c.b16 %v745, %v744
        %v790 = vpack.c.b16 %v747, %v746
        %v791 = vpack.c.b16 %v749, %v748
        %v792 = vpack.c.b16 %v751, %v750
        %v793 = vpack.c.b16 %v753, %v752
        %v794 = vpack.c.b16 %v755, %v754
        %v795 = vpack.c.b16 %v757, %v756
        %v796 = vpack.c.b16 %v759, %v758
        %v797 = vpack.c.b16 %v761, %v760
        %v850 = vunpack.c.l.b16 %v357
        %v851 = vunpack.c.l.b16 %v358
        %v852 = vunpack.c.l.b16 %v359
        %v853 = vunpack.c.l.b16 %v360
        %v854 = vunpack.c.l.b16 %v361
        %v855 = vunpack.c.l.b16 %v362
        %v856 = vunpack.c.l.b16 %v363
        %v857 = vunpack.c.l.b16 %v364
        %v858 = vunpack.c.l.b16 %v365
        %v859 = vunpack.c.l.b16 %v366
        %v860 = vunpack.c.l.b16 %v367
        %v861 = vunpack.c.l.b16 %v368
        %v862 = vunpack.c.l.b16 %v369
        %v863 = vunpack.c.l.b16 %v370
        %v864 = vunpack.c.l.b16 %v371
        %v865 = vunpack.c.l.b16 %v372
        %v866 = vpack.c.b16 %v851, %v850
        %v867 = vpack.c.b16 %v853, %v852
        %v868 = vpack.c.b16 %v855, %v854
        %v869 = vpack.c.b16 %v857, %v856
        %v870 = vpack.c.b16 %v859, %v858
        %v871 = vpack.c.b16 %v861, %v860
        %v872 = vpack.c.b16 %v863, %v862
        %v873 = vpack.c.b16 %v865, %v864
        %882 = vmatprep.subr.bf16.mxu0 0
        %883 = vmatpush1.bf16.msra.mxu0 %v873
        %884 = vmatprep.subr.bf16.mxu0 0
        %885 = vmatpush1.bf16.msra.mxu0 %v872
        %886 = vmatprep.subr.bf16.mxu0 0
        %887 = vmatpush1.bf16.msra.mxu0 %v871
        %888 = vmatprep.subr.bf16.mxu0 0
        %889 = vmatpush1.bf16.msra.mxu0 %v870
        %890 = vmatprep.subr.bf16.mxu0 0
        %891 = vmatpush1.bf16.msra.mxu0 %v869
        %892 = vmatprep.subr.bf16.mxu0 0
        %893 = vmatpush1.bf16.msra.mxu0 %v868
        %894 = vmatprep.subr.bf16.mxu0 0
        %895 = vmatpush1.bf16.msra.mxu0 %v867
        %896 = vmatprep.subr.bf16.mxu0 0
        %897 = vmatpush1.bf16.msra.mxu0 %v866
        %898 = vmatprep.subr.bf16.mxu0 0
        %899 = vmatpush2.bf16.msra.mxu0 0
        %900 = vmatprep.subr.bf16.mxu0 0
        %901 = vmatpush2.bf16.msra.mxu0 0
        %902 = vmatprep.subr.bf16.mxu0 0
        %903 = vmatpush2.bf16.msra.mxu0 0
        %904 = vmatprep.subr.bf16.mxu0 0
        %905 = vmatpush2.bf16.msra.mxu0 0
        %906 = vmatprep.subr.bf16.mxu0 0
        %907 = vmatpush2.bf16.msra.mxu0 0
        %908 = vmatprep.subr.bf16.mxu0 0
        %909 = vmatpush2.bf16.msra.mxu0 0
        %910 = vmatprep.subr.bf16.mxu0 0
        %911 = vmatpush2.bf16.msra.mxu0 0
        %912 = vmatprep.subr.bf16.mxu0 0
        %913 = vmatpush2.bf16.msra.mxu0 0
        %914 = vmatprep.mubr.bf16.mxu0 0
        %915 = vmatmul.mubr.bf16.gmra.mxu0 %v762
        %v916 = vpop.f32.mrf.mxu0
        %v917 = vadd.f32 %v616, %v916
        %v918 = vpop.f32.mrf.mxu0
        %v919 = vpop.f32.mrf.mxu0
        %v920 = vadd.f32 %v616, %v919
        %v921 = vpop.f32.mrf.mxu0
        %922 = vmatprep.mubr.bf16.mxu0 0
        %923 = vmatmul.mubr.bf16.gmra.mxu0 %v763
        %v924 = vpop.f32.mrf.mxu0
        %v925 = vadd.f32 %v616, %v924
        %v926 = vpop.f32.mrf.mxu0
        %v927 = vpop.f32.mrf.mxu0
        %v928 = vadd.f32 %v616, %v927
        %v929 = vpop.f32.mrf.mxu0
        %930 = vmatprep.mubr.bf16.mxu0 0
        %931 = vmatmul.mubr.bf16.gmra.mxu0 %v764
        %v932 = vpop.f32.mrf.mxu0
        %v933 = vadd.f32 %v616, %v932
        %v934 = vpop.f32.mrf.mxu0
        %v935 = vpop.f32.mrf.mxu0
        %v936 = vadd.f32 %v616, %v935
        %v937 = vpop.f32.mrf.mxu0
        %938 = vmatprep.mubr.bf16.mxu0 0
        %939 = vmatmul.mubr.bf16.gmra.mxu0 %v765
        %v940 = vpop.f32.mrf.mxu0
        %v941 = vadd.f32 %v616, %v940
        %v942 = vpop.f32.mrf.mxu0
        %v943 = vpop.f32.mrf.mxu0
        %v944 = vadd.f32 %v616, %v943
        %v945 = vpop.f32.mrf.mxu0
        %946 = vmatprep.mubr.bf16.mxu0 0
        %947 = vmatmul.mubr.bf16.gmra.mxu0 %v766
        %v948 = vpop.f32.mrf.mxu0
        %v949 = vadd.f32 %v616, %v948
        %v950 = vpop.f32.mrf.mxu0
        %v951 = vpop.f32.mrf.mxu0
        %v952 = vadd.f32 %v616, %v951
        %v953 = vpop.f32.mrf.mxu0
        %954 = vmatprep.mubr.bf16.mxu0 0
        %955 = vmatmul.mubr.bf16.gmra.mxu0 %v767
        %v956 = vpop.f32.mrf.mxu0
        %v957 = vadd.f32 %v616, %v956
        %v958 = vpop.f32.mrf.mxu0
        %v959 = vpop.f32.mrf.mxu0
        %v960 = vadd.f32 %v616, %v959
        %v961 = vpop.f32.mrf.mxu0
        %962 = vmatprep.mubr.bf16.mxu0 0
        %963 = vmatmul.mubr.bf16.gmra.mxu0 %v768
        %v964 = vpop.f32.mrf.mxu0
        %v965 = vadd.f32 %v616, %v964
        %v966 = vpop.f32.mrf.mxu0
        %v967 = vpop.f32.mrf.mxu0
        %v968 = vadd.f32 %v616, %v967
        %v969 = vpop.f32.mrf.mxu0
        %970 = vmatprep.mubr.bf16.mxu0 0
        %971 = vmatmul.mubr.bf16.gmra.mxu0 %v769
        %v972 = vpop.f32.mrf.mxu0
        %v973 = vadd.f32 %v616, %v972
        %v974 = vpop.f32.mrf.mxu0
        %v975 = vpop.f32.mrf.mxu0
        %v976 = vadd.f32 %v616, %v975
        %v977 = vpop.f32.mrf.mxu0
        %978 = vmatprep.mubr.bf16.mxu0 0
        %979 = vmatmul.mubr.bf16.gmra.mxu0 %v770
        %v980 = vpop.f32.mrf.mxu0
        %v981 = vadd.f32 %v616, %v980
        %v982 = vpop.f32.mrf.mxu0
        %v983 = vpop.f32.mrf.mxu0
        %v984 = vadd.f32 %v616, %v983
        %v985 = vpop.f32.mrf.mxu0
        %986 = vmatprep.mubr.bf16.mxu0 0
        %987 = vmatmul.mubr.bf16.gmra.mxu0 %v771
        %v988 = vpop.f32.mrf.mxu0
        %v989 = vadd.f32 %v616, %v988
        %v990 = vpop.f32.mrf.mxu0
        %v991 = vpop.f32.mrf.mxu0
        %v992 = vadd.f32 %v616, %v991
        %v993 = vpop.f32.mrf.mxu0
        %994 = vmatprep.mubr.bf16.mxu0 0
        %995 = vmatmul.mubr.bf16.gmra.mxu0 %v772
        %v996 = vpop.f32.mrf.mxu0
        %v997 = vadd.f32 %v616, %v996
        %v998 = vpop.f32.mrf.mxu0
        %v999 = vpop.f32.mrf.mxu0
        %v1000 = vadd.f32 %v616, %v999
        %v1001 = vpop.f32.mrf.mxu0
        %1002 = vmatprep.mubr.bf16.mxu0 0
        %1003 = vmatmul.mubr.bf16.gmra.mxu0 %v773
        %v1004 = vpop.f32.mrf.mxu0
        %v1005 = vadd.f32 %v616, %v1004
        %v1006 = vpop.f32.mrf.mxu0
        %v1007 = vpop.f32.mrf.mxu0
        %v1008 = vadd.f32 %v616, %v1007
        %v1009 = vpop.f32.mrf.mxu0
        %1010 = vmatprep.mubr.bf16.mxu0 0
        %1011 = vmatmul.mubr.bf16.gmra.mxu0 %v774
        %v1012 = vpop.f32.mrf.mxu0
        %v1013 = vadd.f32 %v616, %v1012
        %v1014 = vpop.f32.mrf.mxu0
        %v1015 = vpop.f32.mrf.mxu0
        %v1016 = vadd.f32 %v616, %v1015
        %v1017 = vpop.f32.mrf.mxu0
        %1018 = vmatprep.mubr.bf16.mxu0 0
        %1019 = vmatmul.mubr.bf16.gmra.mxu0 %v775
        %v1020 = vpop.f32.mrf.mxu0
        %v1021 = vadd.f32 %v616, %v1020
        %v1022 = vpop.f32.mrf.mxu0
        %v1023 = vpop.f32.mrf.mxu0
        %v1024 = vadd.f32 %v616, %v1023
        %v1025 = vpop.f32.mrf.mxu0
        %1026 = vmatprep.mubr.bf16.mxu0 0
        %1027 = vmatmul.mubr.bf16.gmra.mxu0 %v776
        %v1028 = vpop.f32.mrf.mxu0
        %v1029 = vadd.f32 %v616, %v1028
        %v1030 = vpop.f32.mrf.mxu0
        %v1031 = vpop.f32.mrf.mxu0
        %v1032 = vadd.f32 %v616, %v1031
        %v1033 = vpop.f32.mrf.mxu0
        %1034 = vmatprep.mubr.bf16.mxu0 0
        %1035 = vmatmul.mubr.bf16.gmra.mxu0 %v777
        %v1036 = vpop.f32.mrf.mxu0
        %v1037 = vadd.f32 %v616, %v1036
        %v1038 = vpop.f32.mrf.mxu0
        %v1039 = vpop.f32.mrf.mxu0
        %v1040 = vadd.f32 %v616, %v1039
        %v1041 = vpop.f32.mrf.mxu0
        %1042 = vmatprep.mubr.bf16.mxu0 0
        %1043 = vmatmul.mubr.bf16.gmra.mxu0 %v778
        %v1044 = vpop.f32.mrf.mxu0
        %v1045 = vadd.f32 %v616, %v1044
        %v1046 = vpop.f32.mrf.mxu0
        %v1047 = vpop.f32.mrf.mxu0
        %v1048 = vadd.f32 %v616, %v1047
        %v1049 = vpop.f32.mrf.mxu0
        %1050 = vmatprep.mubr.bf16.mxu0 0
        %1051 = vmatmul.mubr.bf16.gmra.mxu0 %v779
        %v1052 = vpop.f32.mrf.mxu0
        %v1053 = vadd.f32 %v616, %v1052
        %v1054 = vpop.f32.mrf.mxu0
        %v1055 = vpop.f32.mrf.mxu0
        %v1056 = vadd.f32 %v616, %v1055
        %v1057 = vpop.f32.mrf.mxu0
        %1058 = vmatprep.mubr.bf16.mxu0 0
        %1059 = vmatmul.mubr.bf16.gmra.mxu0 %v780
        %v1060 = vpop.f32.mrf.mxu0
        %v1061 = vadd.f32 %v616, %v1060
        %v1062 = vpop.f32.mrf.mxu0
        %v1063 = vpop.f32.mrf.mxu0
        %v1064 = vadd.f32 %v616, %v1063
        %v1065 = vpop.f32.mrf.mxu0
        %1066 = vmatprep.mubr.bf16.mxu0 0
        %1067 = vmatmul.mubr.bf16.gmra.mxu0 %v781
        %v1068 = vpop.f32.mrf.mxu0
        %v1069 = vadd.f32 %v616, %v1068
        %v1070 = vpop.f32.mrf.mxu0
        %v1071 = vpop.f32.mrf.mxu0
        %v1072 = vadd.f32 %v616, %v1071
        %v1073 = vpop.f32.mrf.mxu0
        %1074 = vmatprep.mubr.bf16.mxu0 0
        %1075 = vmatmul.mubr.bf16.gmra.mxu0 %v782
        %v1076 = vpop.f32.mrf.mxu0
        %v1077 = vadd.f32 %v616, %v1076
        %v1078 = vpop.f32.mrf.mxu0
        %v1079 = vpop.f32.mrf.mxu0
        %v1080 = vadd.f32 %v616, %v1079
        %v1081 = vpop.f32.mrf.mxu0
        %1082 = vmatprep.mubr.bf16.mxu0 0
        %1083 = vmatmul.mubr.bf16.gmra.mxu0 %v783
        %v1084 = vpop.f32.mrf.mxu0
        %v1085 = vadd.f32 %v616, %v1084
        %v1086 = vpop.f32.mrf.mxu0
        %v1087 = vpop.f32.mrf.mxu0
        %v1088 = vadd.f32 %v616, %v1087
        %v1089 = vpop.f32.mrf.mxu0
        %1090 = vmatprep.mubr.bf16.mxu0 0
        %1091 = vmatmul.mubr.bf16.gmra.mxu0 %v784
        %v1092 = vpop.f32.mrf.mxu0
        %v1093 = vadd.f32 %v616, %v1092
        %v1094 = vpop.f32.mrf.mxu0
        %v1095 = vpop.f32.mrf.mxu0
        %v1096 = vadd.f32 %v616, %v1095
        %v1097 = vpop.f32.mrf.mxu0
        %1098 = vmatprep.mubr.bf16.mxu0 0
        %1099 = vmatmul.mubr.bf16.gmra.mxu0 %v785
        %v1100 = vpop.f32.mrf.mxu0
        %v1101 = vadd.f32 %v616, %v1100
        %v1102 = vpop.f32.mrf.mxu0
        %v1103 = vpop.f32.mrf.mxu0
        %v1104 = vadd.f32 %v616, %v1103
        %v1105 = vpop.f32.mrf.mxu0
        %1106 = vmatprep.mubr.bf16.mxu0 0
        %1107 = vmatmul.mubr.bf16.gmra.mxu0 %v786
        %v1108 = vpop.f32.mrf.mxu0
        %v1109 = vadd.f32 %v616, %v1108
        %v1110 = vpop.f32.mrf.mxu0
        %v1111 = vpop.f32.mrf.mxu0
        %v1112 = vadd.f32 %v616, %v1111
        %v1113 = vpop.f32.mrf.mxu0
        %1114 = vmatprep.mubr.bf16.mxu0 0
        %1115 = vmatmul.mubr.bf16.gmra.mxu0 %v787
        %v1116 = vpop.f32.mrf.mxu0
        %v1117 = vadd.f32 %v616, %v1116
        %v1118 = vpop.f32.mrf.mxu0
        %v1119 = vpop.f32.mrf.mxu0
        %v1120 = vadd.f32 %v616, %v1119
        %v1121 = vpop.f32.mrf.mxu0
        %1122 = vmatprep.mubr.bf16.mxu0 0
        %1123 = vmatmul.mubr.bf16.gmra.mxu0 %v788
        %v1124 = vpop.f32.mrf.mxu0
        %v1125 = vadd.f32 %v616, %v1124
        %v1126 = vpop.f32.mrf.mxu0
        %v1127 = vpop.f32.mrf.mxu0
        %v1128 = vadd.f32 %v616, %v1127
        %v1129 = vpop.f32.mrf.mxu0
        %1130 = vmatprep.mubr.bf16.mxu0 0
        %1131 = vmatmul.mubr.bf16.gmra.mxu0 %v789
        %v1132 = vpop.f32.mrf.mxu0
        %v1133 = vadd.f32 %v616, %v1132
        %v1134 = vpop.f32.mrf.mxu0
        %v1135 = vpop.f32.mrf.mxu0
        %v1136 = vadd.f32 %v616, %v1135
        %v1137 = vpop.f32.mrf.mxu0
        %1138 = vmatprep.mubr.bf16.mxu0 0
        %1139 = vmatmul.mubr.bf16.gmra.mxu0 %v790
        %v1140 = vpop.f32.mrf.mxu0
        %v1141 = vadd.f32 %v616, %v1140
        %v1142 = vpop.f32.mrf.mxu0
        %v1143 = vpop.f32.mrf.mxu0
        %v1144 = vadd.f32 %v616, %v1143
        %v1145 = vpop.f32.mrf.mxu0
        %1146 = vmatprep.mubr.bf16.mxu0 0
        %1147 = vmatmul.mubr.bf16.gmra.mxu0 %v791
        %v1148 = vpop.f32.mrf.mxu0
        %v1149 = vadd.f32 %v616, %v1148
        %v1150 = vpop.f32.mrf.mxu0
        %v1151 = vpop.f32.mrf.mxu0
        %v1152 = vadd.f32 %v616, %v1151
        %v1153 = vpop.f32.mrf.mxu0
        %1154 = vmatprep.mubr.bf16.mxu0 0
        %1155 = vmatmul.mubr.bf16.gmra.mxu0 %v792
        %v1156 = vpop.f32.mrf.mxu0
        %v1157 = vadd.f32 %v616, %v1156
        %v1158 = vpop.f32.mrf.mxu0
        %v1159 = vpop.f32.mrf.mxu0
        %v1160 = vadd.f32 %v616, %v1159
        %v1161 = vpop.f32.mrf.mxu0
        %1162 = vmatprep.mubr.bf16.mxu0 0
        %1163 = vmatmul.mubr.bf16.gmra.mxu0 %v793
        %v1164 = vpop.f32.mrf.mxu0
        %v1165 = vadd.f32 %v616, %v1164
        %v1166 = vpop.f32.mrf.mxu0
        %v1167 = vpop.f32.mrf.mxu0
        %v1168 = vadd.f32 %v616, %v1167
        %v1169 = vpop.f32.mrf.mxu0
        %1170 = vmatprep.mubr.bf16.mxu0 0
        %1171 = vmatmul.mubr.bf16.gmra.mxu0 %v794
        %v1172 = vpop.f32.mrf.mxu0
        %v1173 = vadd.f32 %v616, %v1172
        %v1174 = vpop.f32.mrf.mxu0
        %v1175 = vpop.f32.mrf.mxu0
        %v1176 = vadd.f32 %v616, %v1175
        %v1177 = vpop.f32.mrf.mxu0
        %1178 = vmatprep.mubr.bf16.mxu0 0
        %1179 = vmatmul.mubr.bf16.gmra.mxu0 %v795
        %v1180 = vpop.f32.mrf.mxu0
        %v1181 = vadd.f32 %v616, %v1180
        %v1182 = vpop.f32.mrf.mxu0
        %v1183 = vpop.f32.mrf.mxu0
        %v1184 = vadd.f32 %v616, %v1183
        %v1185 = vpop.f32.mrf.mxu0
        %1186 = vmatprep.mubr.bf16.mxu0 0
        %1187 = vmatmul.mubr.bf16.gmra.mxu0 %v796
        %v1188 = vpop.f32.mrf.mxu0
        %v1189 = vadd.f32 %v616, %v1188
        %v1190 = vpop.f32.mrf.mxu0
        %v1191 = vpop.f32.mrf.mxu0
        %v1192 = vadd.f32 %v616, %v1191
        %v1193 = vpop.f32.mrf.mxu0
        %1194 = vmatprep.mubr.bf16.mxu0 0
        %1195 = vmatmul.mubr.bf16.gmra.mxu0 %v797
        %v1196 = vpop.f32.mrf.mxu0
        %v1197 = vadd.f32 %v616, %v1196
        %v1198 = vpop.f32.mrf.mxu0
        %v1199 = vpop.f32.mrf.mxu0
        %v1200 = vadd.f32 %v616, %v1199
        %v1201 = vpop.f32.mrf.mxu0
        %1202 = vdwg.mxu0
        %v1203 = vmax.f32 %v917, 0.0
        %v1204 = vmax.f32 %v920, 0.0
        %v1205 = vmax.f32 %v925, 0.0
        %v1206 = vmax.f32 %v928, 0.0
        %v1207 = vmax.f32 %v933, 0.0
        %v1208 = vmax.f32 %v936, 0.0
        %v1209 = vmax.f32 %v941, 0.0
        %v1210 = vmax.f32 %v944, 0.0
        %v1211 = vmax.f32 %v949, 0.0
        %v1212 = vmax.f32 %v952, 0.0
        %v1213 = vmax.f32 %v957, 0.0
        %v1214 = vmax.f32 %v960, 0.0
        %v1215 = vmax.f32 %v965, 0.0
        %v1216 = vmax.f32 %v968, 0.0
        %v1217 = vmax.f32 %v973, 0.0
        %v1218 = vmax.f32 %v976, 0.0
        %v1219 = vmax.f32 %v981, 0.0
        %v1220 = vmax.f32 %v984, 0.0
        %v1221 = vmax.f32 %v989, 0.0
        %v1222 = vmax.f32 %v992, 0.0
        %v1223 = vmax.f32 %v997, 0.0
        %v1224 = vmax.f32 %v1000, 0.0
        %v1225 = vmax.f32 %v1005, 0.0
        %v1226 = vmax.f32 %v1008, 0.0
        %v1227 = vmax.f32 %v1013, 0.0
        %v1228 = vmax.f32 %v1016, 0.0
        %v1229 = vmax.f32 %v1021, 0.0
        %v1230 = vmax.f32 %v1024, 0.0
        %v1231 = vmax.f32 %v1029, 0.0
        %v1232 = vmax.f32 %v1032, 0.0
        %v1233 = vmax.f32 %v1037, 0.0
        %v1234 = vmax.f32 %v1040, 0.0
        %v1235 = vmax.f32 %v1045, 0.0
        %v1236 = vmax.f32 %v1048, 0.0
        %v1237 = vmax.f32 %v1053, 0.0
        %v1238 = vmax.f32 %v1056, 0.0
        %v1239 = vmax.f32 %v1061, 0.0
        %v1240 = vmax.f32 %v1064, 0.0
        %v1241 = vmax.f32 %v1069, 0.0
        %v1242 = vmax.f32 %v1072, 0.0
        %v1243 = vmax.f32 %v1077, 0.0
        %v1244 = vmax.f32 %v1080, 0.0
        %v1245 = vmax.f32 %v1085, 0.0
        %v1246 = vmax.f32 %v1088, 0.0
        %v1247 = vmax.f32 %v1093, 0.0
        %v1248 = vmax.f32 %v1096, 0.0
        %v1249 = vmax.f32 %v1101, 0.0
        %v1250 = vmax.f32 %v1104, 0.0
        %v1251 = vmax.f32 %v1109, 0.0
        %v1252 = vmax.f32 %v1112, 0.0
        %v1253 = vmax.f32 %v1117, 0.0
        %v1254 = vmax.f32 %v1120, 0.0
        %v1255 = vmax.f32 %v1125, 0.0
        %v1256 = vmax.f32 %v1128, 0.0
        %v1257 = vmax.f32 %v1133, 0.0
        %v1258 = vmax.f32 %v1136, 0.0
        %v1259 = vmax.f32 %v1141, 0.0
        %v1260 = vmax.f32 %v1144, 0.0
        %v1261 = vmax.f32 %v1149, 0.0
        %v1262 = vmax.f32 %v1152, 0.0
        %v1263 = vmax.f32 %v1157, 0.0
        %v1264 = vmax.f32 %v1160, 0.0
        %v1265 = vmax.f32 %v1165, 0.0
        %v1266 = vmax.f32 %v1168, 0.0
        %v1267 = vmax.f32 %v1173, 0.0
        %v1268 = vmax.f32 %v1176, 0.0
        %v1269 = vmax.f32 %v1181, 0.0
        %v1270 = vmax.f32 %v1184, 0.0
        %v1271 = vmax.f32 %v1189, 0.0
        %v1272 = vmax.f32 %v1192, 0.0
        %v1273 = vmax.f32 %v1197, 0.0
        %v1274 = vmax.f32 %v1200, 0.0
        %s1275 = ssub.s32 %s536, 1
        %p1276 = scmp.gt.s32.totalorder %s1275, 0
        %s1277 = scalar_select %p1276, %s1275, 0
        %s1278 = smul.u32 %s1277, 3
        %s1279 = smul.addr %s1278, 4
        %s1280 = scalar_lea.vmem %s312, %s1279 [#allocation2]
        %v1281 = vld [vmem:[%s1280] sm:$0xf]
        %v1282 = vld [vmem:[%s1280 + $0x4] sm:$0xf]
        %v1283 = vld [vmem:[%s1280 + $0x8] sm:$0xf]
        %s1284 = sadd.s32 %s536, 24
        %p1285 = scmp.lt.s32.totalorder %s1284, 23
        %s1286 = scalar_select %p1285, %s1284, 23
        %s1287 = smul.u32 %s1286, 3
        %s1288 = smul.addr %s1287, 4
        %s1289 = scalar_lea.vmem %s312, %s1288 [#allocation2]
        %v1290 = vld [vmem:[%s1289] sm:$0xf]
        %v1291 = vld [vmem:[%s1289 + $0x4] sm:$0xf]
        %v1292 = vld [vmem:[%s1289 + $0x8] sm:$0xf]
        %v1299 = vunpack.c.l.b16 %v1281
        %v1300 = vunpack.c.l.b16 %v1282
        %v1301 = vunpack.c.l.b16 %v1283
        %v1302 = vunpack.c.l.b16 %v1290
        %v1303 = vunpack.c.l.b16 %v1291
        %v1304 = vunpack.c.l.b16 %v1292
        %v1305 = vpack.c.b16 %v1300, %v1299
        %v1306 = vpack.c.b16 %v1302, %v1301
        %v1307 = vpack.c.b16 %v1304, %v1303
        %1311 = vmatprep.subr.bf16.mxu0 0
        %1312 = vmatpush1.bf16.msra.mxu0 %v873
        %1313 = vmatprep.subr.bf16.mxu0 0
        %1314 = vmatpush1.bf16.msra.mxu0 %v872
        %1315 = vmatprep.subr.bf16.mxu0 0
        %1316 = vmatpush1.bf16.msra.mxu0 %v871
        %1317 = vmatprep.subr.bf16.mxu0 0
        %1318 = vmatpush1.bf16.msra.mxu0 %v870
        %1319 = vmatprep.subr.bf16.mxu0 0
        %1320 = vmatpush1.bf16.msra.mxu0 %v869
        %1321 = vmatprep.subr.bf16.mxu0 0
        %1322 = vmatpush1.bf16.msra.mxu0 %v868
        %1323 = vmatprep.subr.bf16.mxu0 0
        %1324 = vmatpush1.bf16.msra.mxu0 %v867
        %1325 = vmatprep.subr.bf16.mxu0 0
        %1326 = vmatpush1.bf16.msra.mxu0 %v866
        %1327 = vmatprep.subr.bf16.mxu0 0
        %1328 = vmatpush2.bf16.msra.mxu0 0
        %1329 = vmatprep.subr.bf16.mxu0 0
        %1330 = vmatpush2.bf16.msra.mxu0 0
        %1331 = vmatprep.subr.bf16.mxu0 0
        %1332 = vmatpush2.bf16.msra.mxu0 0
        %1333 = vmatprep.subr.bf16.mxu0 0
        %1334 = vmatpush2.bf16.msra.mxu0 0
        %1335 = vmatprep.subr.bf16.mxu0 0
        %1336 = vmatpush2.bf16.msra.mxu0 0
        %1337 = vmatprep.subr.bf16.mxu0 0
        %1338 = vmatpush2.bf16.msra.mxu0 0
        %1339 = vmatprep.subr.bf16.mxu0 0
        %1340 = vmatpush2.bf16.msra.mxu0 0
        %1341 = vmatprep.subr.bf16.mxu0 0
        %1342 = vmatpush2.bf16.msra.mxu0 0
        %1343 = vmatprep.mubr.bf16.mxu0 0
        %1344 = vmatmul.mubr.bf16.gmra.mxu0 %v1305
        %v1345 = vpop.f32.mrf.mxu0
        %v1346 = vadd.f32 %v616, %v1345
        %v1347 = vpop.f32.mrf.mxu0
        %v1348 = vpop.f32.mrf.mxu0
        %v1349 = vadd.f32 %v616, %v1348
        %v1350 = vpop.f32.mrf.mxu0
        %1351 = vmatprep.mubr.bf16.mxu0 0
        %1352 = vmatmul.mubr.bf16.gmra.mxu0 %v1306
        %v1353 = vpop.f32.mrf.mxu0
        %v1354 = vadd.f32 %v616, %v1353
        %v1355 = vpop.f32.mrf.mxu0
        %v1356 = vpop.f32.mrf.mxu0
        %v1357 = vadd.f32 %v616, %v1356
        %v1358 = vpop.f32.mrf.mxu0
        %1359 = vmatprep.mubr.bf16.mxu0 0
        %1360 = vmatmul.mubr.bf16.gmra.mxu0 %v1307
        %v1361 = vpop.f32.mrf.mxu0
        %v1362 = vadd.f32 %v616, %v1361
        %v1363 = vpop.f32.mrf.mxu0
        %v1364 = vpop.f32.mrf.mxu0
        %v1365 = vadd.f32 %v616, %v1364
        %v1366 = vpop.f32.mrf.mxu0
        %1367 = vdwg.mxu0
        %v1368 = vmax.f32 %v1346, 0.0
        %v1369 = vmax.f32 %v1349, 0.0
        %v1370 = vmax.f32 %v1354, 0.0
        %v1371 = vmax.f32 %v1357, 0.0
        %v1372 = vmax.f32 %v1362, 0.0
        %v1373 = vmax.f32 %v1365, 0.0
        %p1374 = scmp.gt.s32.totalorder %s536, 0
        %s1375 = scalar_select %p1374, 1, 0
        %s1376 = scvt.s32.f32 %s1375
        %v1377 = vstv %s1376
        %v1378 = vmul.f32 %v1368, %v1377
        %v1379 = vmul.f32 %v1369, %v1377
        %v1380 = vmul.f32 %v1370, %v1377
        %p1381 = scmp.lt.s32.totalorder %s1284, 24
        %s1382 = scalar_select %p1381, 1, 0
        %s1383 = scvt.s32.f32 %s1382
        %v1384 = vstv %s1383
        %v1385 = vmul.f32 %v1371, %v1384
        %v1386 = vmul.f32 %v1372, %v1384
        %v1387 = vmul.f32 %v1373, %v1384
        %v1388 = vlaneseq
        %v1389 = vshrl.u32 %v1388, 7
        %v1390 = vadd.s32 %v1389, 8
        %v1391 = vadd.s32 %v1389, 16
        %vm1392 = vcmp.gt.s32.totalorder %v1389, 0
        %vm1393 = vcmp.gt.s32.totalorder %v1390, 0
        %vm1394 = vcmp.gt.s32.totalorder %v1391, 0
        %v1395 = vsel %vm1392, 1, 0
        %v1396 = vsel %vm1393, 1, 0
        %v1397 = vsel %vm1394, 1, 0
        %v1398 = vcvt.s32.f32 %v1395
        %v1399 = vcvt.s32.f32 %v1396
        %v1400 = vcvt.s32.f32 %v1397
        %vm1401 = vcmp.lt.s32.totalorder %v1389, 23
        %vm1402 = vcmp.lt.s32.totalorder %v1390, 23
        %vm1403 = vcmp.lt.s32.totalorder %v1391, 23
        %v1404 = vsel %vm1401, 1, 0
        %v1405 = vsel %vm1402, 1, 0
        %v1406 = vsel %vm1403, 1, 0
        %v1407 = vcvt.s32.f32 %v1404
        %v1408 = vcvt.s32.f32 %v1405
        %v1409 = vcvt.s32.f32 %v1406
        %vm1488 = vcmask 1040384
        %v1489 = vrot.slane %v1378, 7
        %v1490 = vrot.slane %v1379, 7
        %v1491 = vsel %vm1488, %v1489, %v1490
        %v1492 = vrot.slane %v1380, 7
        %v1493 = vsel %vm1488, %v1490, %v1492
        %v1494 = vrot.slane %v1203, 7
        %v1495 = vrot.slane %v1204, 7
        %v1496 = vsel %vm1488, %v1494, %v1495
        %v1497 = vrot.slane %v1205, 7
        %v1498 = vsel %vm1488, %v1495, %v1497
        %v1499 = vrot.slane %v1206, 7
        %v1500 = vrot.slane %v1207, 7
        %v1501 = vsel %vm1488, %v1499, %v1500
        %v1502 = vrot.slane %v1208, 7
        %v1503 = vsel %vm1488, %v1500, %v1502
        %v1504 = vrot.slane %v1209, 7
        %v1505 = vrot.slane %v1210, 7
        %v1506 = vsel %vm1488, %v1504, %v1505
        %v1507 = vrot.slane %v1211, 7
        %v1508 = vsel %vm1488, %v1505, %v1507
        %v1509 = vrot.slane %v1212, 7
        %v1510 = vrot.slane %v1213, 7
        %v1511 = vsel %vm1488, %v1509, %v1510
        %v1512 = vrot.slane %v1214, 7
        %v1513 = vsel %vm1488, %v1510, %v1512
        %v1514 = vrot.slane %v1215, 7
        %v1515 = vrot.slane %v1216, 7
        %v1516 = vsel %vm1488, %v1514, %v1515
        %v1517 = vrot.slane %v1217, 7
        %v1518 = vsel %vm1488, %v1515, %v1517
        %v1519 = vrot.slane %v1218, 7
        %v1520 = vrot.slane %v1219, 7
        %v1521 = vsel %vm1488, %v1519, %v1520
        %v1522 = vrot.slane %v1220, 7
        %v1523 = vsel %vm1488, %v1520, %v1522
        %v1524 = vrot.slane %v1221, 7
        %v1525 = vrot.slane %v1222, 7
        %v1526 = vsel %vm1488, %v1524, %v1525
        %v1527 = vrot.slane %v1223, 7
        %v1528 = vsel %vm1488, %v1525, %v1527
        %v1529 = vrot.slane %v1224, 7
        %v1530 = vrot.slane %v1225, 7
        %v1531 = vsel %vm1488, %v1529, %v1530
        %v1532 = vrot.slane %v1226, 7
        %v1533 = vsel %vm1488, %v1530, %v1532
        %v1534 = vrot.slane %v1227, 7
        %v1535 = vrot.slane %v1228, 7
        %v1536 = vsel %vm1488, %v1534, %v1535
        %v1537 = vrot.slane %v1229, 7
        %v1538 = vsel %vm1488, %v1535, %v1537
        %v1539 = vrot.slane %v1230, 7
        %v1540 = vrot.slane %v1231, 7
        %v1541 = vsel %vm1488, %v1539, %v1540
        %v1542 = vrot.slane %v1232, 7
        %v1543 = vsel %vm1488, %v1540, %v1542
        %v1544 = vrot.slane %v1233, 7
        %v1545 = vrot.slane %v1234, 7
        %v1546 = vsel %vm1488, %v1544, %v1545
        %v1547 = vrot.slane %v1235, 7
        %v1548 = vsel %vm1488, %v1545, %v1547
        %v1549 = vrot.slane %v1236, 7
        %v1550 = vrot.slane %v1237, 7
        %v1551 = vsel %vm1488, %v1549, %v1550
        %v1552 = vrot.slane %v1238, 7
        %v1553 = vsel %vm1488, %v1550, %v1552
        %v1554 = vrot.slane %v1239, 7
        %v1555 = vrot.slane %v1240, 7
        %v1556 = vsel %vm1488, %v1554, %v1555
        %v1557 = vrot.slane %v1241, 7
        %v1558 = vsel %vm1488, %v1555, %v1557
        %v1559 = vrot.slane %v1242, 7
        %v1560 = vrot.slane %v1243, 7
        %v1561 = vsel %vm1488, %v1559, %v1560
        %v1562 = vrot.slane %v1244, 7
        %v1563 = vsel %vm1488, %v1560, %v1562
        %v1564 = vrot.slane %v1245, 7
        %v1565 = vrot.slane %v1246, 7
        %v1566 = vsel %vm1488, %v1564, %v1565
        %v1567 = vrot.slane %v1247, 7
        %v1568 = vsel %vm1488, %v1565, %v1567
        %v1569 = vrot.slane %v1248, 7
        %v1570 = vrot.slane %v1249, 7
        %v1571 = vsel %vm1488, %v1569, %v1570
        %v1572 = vrot.slane %v1250, 7
        %v1573 = vsel %vm1488, %v1570, %v1572
        %v1574 = vrot.slane %v1251, 7
        %v1575 = vrot.slane %v1252, 7
        %v1576 = vsel %vm1488, %v1574, %v1575
        %v1577 = vrot.slane %v1253, 7
        %v1578 = vsel %vm1488, %v1575, %v1577
        %v1579 = vrot.slane %v1254, 7
        %v1580 = vrot.slane %v1255, 7
        %v1581 = vsel %vm1488, %v1579, %v1580
        %v1582 = vrot.slane %v1256, 7
        %v1583 = vsel %vm1488, %v1580, %v1582
        %v1584 = vrot.slane %v1257, 7
        %v1585 = vrot.slane %v1258, 7
        %v1586 = vsel %vm1488, %v1584, %v1585
        %v1587 = vrot.slane %v1259, 7
        %v1588 = vsel %vm1488, %v1585, %v1587
        %v1589 = vrot.slane %v1260, 7
        %v1590 = vrot.slane %v1261, 7
        %v1591 = vsel %vm1488, %v1589, %v1590
        %v1592 = vrot.slane %v1262, 7
        %v1593 = vsel %vm1488, %v1590, %v1592
        %v1594 = vrot.slane %v1263, 7
        %v1595 = vrot.slane %v1264, 7
        %v1596 = vsel %vm1488, %v1594, %v1595
        %v1597 = vrot.slane %v1265, 7
        %v1598 = vsel %vm1488, %v1595, %v1597
        %v1599 = vrot.slane %v1266, 7
        %v1600 = vrot.slane %v1267, 7
        %v1601 = vsel %vm1488, %v1599, %v1600
        %v1602 = vrot.slane %v1268, 7
        %v1603 = vsel %vm1488, %v1600, %v1602
        %v1604 = vrot.slane %v1269, 7
        %v1605 = vrot.slane %v1270, 7
        %v1606 = vsel %vm1488, %v1604, %v1605
        %v1607 = vrot.slane %v1271, 7
        %v1608 = vsel %vm1488, %v1605, %v1607
        %v1609 = vrot.slane %v1272, 7
        %v1610 = vrot.slane %v1273, 7
        %v1611 = vsel %vm1488, %v1609, %v1610
        %v1612 = vrot.slane %v1274, 7
        %v1613 = vsel %vm1488, %v1610, %v1612
        %v1614 = vrot.slane %v1385, 7
        %v1615 = vrot.slane %v1386, 7
        %v1616 = vsel %vm1488, %v1614, %v1615
        %v1617 = vrot.slane %v1387, 7
        %v1618 = vsel %vm1488, %v1615, %v1617
        %v1723 = vsel %vm1488, 0.0, %v1489
        %v1724 = vsel %vm1488, 0.0, %v1494
        %v1725 = vsel %vm1488, 0.0, %v1499
        %v1726 = vsel %vm1488, 0.0, %v1504
        %v1727 = vsel %vm1488, 0.0, %v1509
        %v1728 = vsel %vm1488, 0.0, %v1514
        %v1729 = vsel %vm1488, 0.0, %v1519
        %v1730 = vsel %vm1488, 0.0, %v1524
        %v1731 = vsel %vm1488, 0.0, %v1529
        %v1732 = vsel %vm1488, 0.0, %v1534
        %v1733 = vsel %vm1488, 0.0, %v1539
        %v1734 = vsel %vm1488, 0.0, %v1544
        %v1735 = vsel %vm1488, 0.0, %v1549
        %v1736 = vsel %vm1488, 0.0, %v1554
        %v1737 = vsel %vm1488, 0.0, %v1559
        %v1738 = vsel %vm1488, 0.0, %v1564
        %v1739 = vsel %vm1488, 0.0, %v1569
        %v1740 = vsel %vm1488, 0.0, %v1574
        %v1741 = vsel %vm1488, 0.0, %v1579
        %v1742 = vsel %vm1488, 0.0, %v1584
        %v1743 = vsel %vm1488, 0.0, %v1589
        %v1744 = vsel %vm1488, 0.0, %v1594
        %v1745 = vsel %vm1488, 0.0, %v1599
        %v1746 = vsel %vm1488, 0.0, %v1604
        %v1747 = vsel %vm1488, 0.0, %v1609
        %v1748 = vsel %vm1488, 0.0, %v1614
        %v1749 = vsel %vm1488, %v1492, 0.0
        %v1750 = vsel %vm1488, %v1497, 0.0
        %v1751 = vsel %vm1488, %v1502, 0.0
        %v1752 = vsel %vm1488, %v1507, 0.0
        %v1753 = vsel %vm1488, %v1512, 0.0
        %v1754 = vsel %vm1488, %v1517, 0.0
        %v1755 = vsel %vm1488, %v1522, 0.0
        %v1756 = vsel %vm1488, %v1527, 0.0
        %v1757 = vsel %vm1488, %v1532, 0.0
        %v1758 = vsel %vm1488, %v1537, 0.0
        %v1759 = vsel %vm1488, %v1542, 0.0
        %v1760 = vsel %vm1488, %v1547, 0.0
        %v1761 = vsel %vm1488, %v1552, 0.0
        %v1762 = vsel %vm1488, %v1557, 0.0
        %v1763 = vsel %vm1488, %v1562, 0.0
        %v1764 = vsel %vm1488, %v1567, 0.0
        %v1765 = vsel %vm1488, %v1572, 0.0
        %v1766 = vsel %vm1488, %v1577, 0.0
        %v1767 = vsel %vm1488, %v1582, 0.0
        %v1768 = vsel %vm1488, %v1587, 0.0
        %v1769 = vsel %vm1488, %v1592, 0.0
        %v1770 = vsel %vm1488, %v1597, 0.0
        %v1771 = vsel %vm1488, %v1602, 0.0
        %v1772 = vsel %vm1488, %v1607, 0.0
        %v1773 = vsel %vm1488, %v1612, 0.0
        %v1774 = vsel %vm1488, %v1617, 0.0
        %v1775 = vmul.f32 %v1723, %v1398
        %v1776 = vmul.f32 %v1491, %v1399
        %v1777 = vmul.f32 %v1493, %v1400
        %v1778 = vmul.f32 %v1724, %v1398
        %v1779 = vmul.f32 %v1496, %v1399
        %v1780 = vmul.f32 %v1498, %v1400
        %v1781 = vmul.f32 %v1725, %v1398
        %v1782 = vmul.f32 %v1501, %v1399
        %v1783 = vmul.f32 %v1503, %v1400
        %v1784 = vmul.f32 %v1726, %v1398
        %v1785 = vmul.f32 %v1506, %v1399
        %v1786 = vmul.f32 %v1508, %v1400
        %v1787 = vmul.f32 %v1727, %v1398
        %v1788 = vmul.f32 %v1511, %v1399
        %v1789 = vmul.f32 %v1513, %v1400
        %v1790 = vmul.f32 %v1728, %v1398
        %v1791 = vmul.f32 %v1516, %v1399
        %v1792 = vmul.f32 %v1518, %v1400
        %v1793 = vmul.f32 %v1729, %v1398
        %v1794 = vmul.f32 %v1521, %v1399
        %v1795 = vmul.f32 %v1523, %v1400
        %v1796 = vmul.f32 %v1730, %v1398
        %v1797 = vmul.f32 %v1526, %v1399
        %v1798 = vmul.f32 %v1528, %v1400
        %v1799 = vmul.f32 %v1731, %v1398
        %v1800 = vmul.f32 %v1531, %v1399
        %v1801 = vmul.f32 %v1533, %v1400
        %v1802 = vmul.f32 %v1732, %v1398
        %v1803 = vmul.f32 %v1536, %v1399
        %v1804 = vmul.f32 %v1538, %v1400
        %v1805 = vmul.f32 %v1733, %v1398
        %v1806 = vmul.f32 %v1541, %v1399
        %v1807 = vmul.f32 %v1543, %v1400
        %v1808 = vmul.f32 %v1734, %v1398
        %v1809 = vmul.f32 %v1546, %v1399
        %v1810 = vmul.f32 %v1548, %v1400
        %v1811 = vmul.f32 %v1735, %v1398
        %v1812 = vmul.f32 %v1551, %v1399
        %v1813 = vmul.f32 %v1553, %v1400
        %v1814 = vmul.f32 %v1736, %v1398
        %v1815 = vmul.f32 %v1556, %v1399
        %v1816 = vmul.f32 %v1558, %v1400
        %v1817 = vmul.f32 %v1737, %v1398
        %v1818 = vmul.f32 %v1561, %v1399
        %v1819 = vmul.f32 %v1563, %v1400
        %v1820 = vmul.f32 %v1738, %v1398
        %v1821 = vmul.f32 %v1566, %v1399
        %v1822 = vmul.f32 %v1568, %v1400
        %v1823 = vmul.f32 %v1739, %v1398
        %v1824 = vmul.f32 %v1571, %v1399
        %v1825 = vmul.f32 %v1573, %v1400
        %v1826 = vmul.f32 %v1740, %v1398
        %v1827 = vmul.f32 %v1576, %v1399
        %v1828 = vmul.f32 %v1578, %v1400
        %v1829 = vmul.f32 %v1741, %v1398
        %v1830 = vmul.f32 %v1581, %v1399
        %v1831 = vmul.f32 %v1583, %v1400
        %v1832 = vmul.f32 %v1742, %v1398
        %v1833 = vmul.f32 %v1586, %v1399
        %v1834 = vmul.f32 %v1588, %v1400
        %v1835 = vmul.f32 %v1743, %v1398
        %v1836 = vmul.f32 %v1591, %v1399
        %v1837 = vmul.f32 %v1593, %v1400
        %v1838 = vmul.f32 %v1744, %v1398
        %v1839 = vmul.f32 %v1596, %v1399
        %v1840 = vmul.f32 %v1598, %v1400
        %v1841 = vmul.f32 %v1745, %v1398
        %v1842 = vmul.f32 %v1601, %v1399
        %v1843 = vmul.f32 %v1603, %v1400
        %v1844 = vmul.f32 %v1746, %v1398
        %v1845 = vmul.f32 %v1606, %v1399
        %v1846 = vmul.f32 %v1608, %v1400
        %v1847 = vmul.f32 %v1747, %v1398
        %v1848 = vmul.f32 %v1611, %v1399
        %v1849 = vmul.f32 %v1613, %v1400
        %v1850 = vmul.f32 %v1748, %v1398
        %v1851 = vmul.f32 %v1616, %v1399
        %v1852 = vmul.f32 %v1618, %v1400
        %vm1856 = vcmask 1041408
        %v1857 = vrot.slane %v1407, 6
        %v1858 = vrot.slane %v1408, 6
        %v1859 = vsel %vm1856, %v1857, %v1858
        %v1860 = vrot.slane %v1409, 6
        %v1861 = vsel %vm1856, %v1858, %v1860
        %v1866 = vmul.f32 %v1723, %v1857
        %v1867 = vmul.f32 %v1491, %v1859
        %v1868 = vmul.f32 %v1493, %v1861
        %v1869 = vmul.f32 %v1749, %v1860
        %v1870 = vmul.f32 %v1724, %v1857
        %v1871 = vmul.f32 %v1496, %v1859
        %v1872 = vmul.f32 %v1498, %v1861
        %v1873 = vmul.f32 %v1750, %v1860
        %v1874 = vmul.f32 %v1725, %v1857
        %v1875 = vmul.f32 %v1501, %v1859
        %v1876 = vmul.f32 %v1503, %v1861
        %v1877 = vmul.f32 %v1751, %v1860
        %v1878 = vmul.f32 %v1726, %v1857
        %v1879 = vmul.f32 %v1506, %v1859
        %v1880 = vmul.f32 %v1508, %v1861
        %v1881 = vmul.f32 %v1752, %v1860
        %v1882 = vmul.f32 %v1727, %v1857
        %v1883 = vmul.f32 %v1511, %v1859
        %v1884 = vmul.f32 %v1513, %v1861
        %v1885 = vmul.f32 %v1753, %v1860
        %v1886 = vmul.f32 %v1728, %v1857
        %v1887 = vmul.f32 %v1516, %v1859
        %v1888 = vmul.f32 %v1518, %v1861
        %v1889 = vmul.f32 %v1754, %v1860
        %v1890 = vmul.f32 %v1729, %v1857
        %v1891 = vmul.f32 %v1521, %v1859
        %v1892 = vmul.f32 %v1523, %v1861
        %v1893 = vmul.f32 %v1755, %v1860
        %v1894 = vmul.f32 %v1730, %v1857
        %v1895 = vmul.f32 %v1526, %v1859
        %v1896 = vmul.f32 %v1528, %v1861
        %v1897 = vmul.f32 %v1756, %v1860
        %v1898 = vmul.f32 %v1731, %v1857
        %v1899 = vmul.f32 %v1531, %v1859
        %v1900 = vmul.f32 %v1533, %v1861
        %v1901 = vmul.f32 %v1757, %v1860
        %v1902 = vmul.f32 %v1732, %v1857
        %v1903 = vmul.f32 %v1536, %v1859
        %v1904 = vmul.f32 %v1538, %v1861
        %v1905 = vmul.f32 %v1758, %v1860
        %v1906 = vmul.f32 %v1733, %v1857
        %v1907 = vmul.f32 %v1541, %v1859
        %v1908 = vmul.f32 %v1543, %v1861
        %v1909 = vmul.f32 %v1759, %v1860
        %v1910 = vmul.f32 %v1734, %v1857
        %v1911 = vmul.f32 %v1546, %v1859
        %v1912 = vmul.f32 %v1548, %v1861
        %v1913 = vmul.f32 %v1760, %v1860
        %v1914 = vmul.f32 %v1735, %v1857
        %v1915 = vmul.f32 %v1551, %v1859
        %v1916 = vmul.f32 %v1553, %v1861
        %v1917 = vmul.f32 %v1761, %v1860
        %v1918 = vmul.f32 %v1736, %v1857
        %v1919 = vmul.f32 %v1556, %v1859
        %v1920 = vmul.f32 %v1558, %v1861
        %v1921 = vmul.f32 %v1762, %v1860
        %v1922 = vmul.f32 %v1737, %v1857
        %v1923 = vmul.f32 %v1561, %v1859
        %v1924 = vmul.f32 %v1563, %v1861
        %v1925 = vmul.f32 %v1763, %v1860
        %v1926 = vmul.f32 %v1738, %v1857
        %v1927 = vmul.f32 %v1566, %v1859
        %v1928 = vmul.f32 %v1568, %v1861
        %v1929 = vmul.f32 %v1764, %v1860
        %v1930 = vmul.f32 %v1739, %v1857
        %v1931 = vmul.f32 %v1571, %v1859
        %v1932 = vmul.f32 %v1573, %v1861
        %v1933 = vmul.f32 %v1765, %v1860
        %v1934 = vmul.f32 %v1740, %v1857
        %v1935 = vmul.f32 %v1576, %v1859
        %v1936 = vmul.f32 %v1578, %v1861
        %v1937 = vmul.f32 %v1766, %v1860
        %v1938 = vmul.f32 %v1741, %v1857
        %v1939 = vmul.f32 %v1581, %v1859
        %v1940 = vmul.f32 %v1583, %v1861
        %v1941 = vmul.f32 %v1767, %v1860
        %v1942 = vmul.f32 %v1742, %v1857
        %v1943 = vmul.f32 %v1586, %v1859
        %v1944 = vmul.f32 %v1588, %v1861
        %v1945 = vmul.f32 %v1768, %v1860
        %v1946 = vmul.f32 %v1743, %v1857
        %v1947 = vmul.f32 %v1591, %v1859
        %v1948 = vmul.f32 %v1593, %v1861
        %v1949 = vmul.f32 %v1769, %v1860
        %v1950 = vmul.f32 %v1744, %v1857
        %v1951 = vmul.f32 %v1596, %v1859
        %v1952 = vmul.f32 %v1598, %v1861
        %v1953 = vmul.f32 %v1770, %v1860
        %v1954 = vmul.f32 %v1745, %v1857
        %v1955 = vmul.f32 %v1601, %v1859
        %v1956 = vmul.f32 %v1603, %v1861
        %v1957 = vmul.f32 %v1771, %v1860
        %v1958 = vmul.f32 %v1746, %v1857
        %v1959 = vmul.f32 %v1606, %v1859
        %v1960 = vmul.f32 %v1608, %v1861
        %v1961 = vmul.f32 %v1772, %v1860
        %v1962 = vmul.f32 %v1747, %v1857
        %v1963 = vmul.f32 %v1611, %v1859
        %v1964 = vmul.f32 %v1613, %v1861
        %v1965 = vmul.f32 %v1773, %v1860
        %v1966 = vmul.f32 %v1748, %v1857
        %v1967 = vmul.f32 %v1616, %v1859
        %v1968 = vmul.f32 %v1618, %v1861
        %v1969 = vmul.f32 %v1774, %v1860
        %vm2074 = vcmask 1045504
        %v2075 = vrot.slane %v1866, 2
        %v2076 = vrot.slane %v1867, 2
        %v2077 = vsel %vm2074, %v2075, %v2076
        %v2078 = vrot.slane %v1868, 2
        %v2079 = vsel %vm2074, %v2076, %v2078
        %v2080 = vrot.slane %v1869, 2
        %v2081 = vsel %vm2074, %v2078, %v2080
        %v2082 = vrot.slane %v1870, 2
        %v2083 = vrot.slane %v1871, 2
        %v2084 = vsel %vm2074, %v2082, %v2083
        %v2085 = vrot.slane %v1872, 2
        %v2086 = vsel %vm2074, %v2083, %v2085
        %v2087 = vrot.slane %v1873, 2
        %v2088 = vsel %vm2074, %v2085, %v2087
        %v2089 = vrot.slane %v1874, 2
        %v2090 = vrot.slane %v1875, 2
        %v2091 = vsel %vm2074, %v2089, %v2090
        %v2092 = vrot.slane %v1876, 2
        %v2093 = vsel %vm2074, %v2090, %v2092
        %v2094 = vrot.slane %v1877, 2
        %v2095 = vsel %vm2074, %v2092, %v2094
        %v2096 = vrot.slane %v1878, 2
        %v2097 = vrot.slane %v1879, 2
        %v2098 = vsel %vm2074, %v2096, %v2097
        %v2099 = vrot.slane %v1880, 2
        %v2100 = vsel %vm2074, %v2097, %v2099
        %v2101 = vrot.slane %v1881, 2
        %v2102 = vsel %vm2074, %v2099, %v2101
        %v2103 = vrot.slane %v1882, 2
        %v2104 = vrot.slane %v1883, 2
        %v2105 = vsel %vm2074, %v2103, %v2104
        %v2106 = vrot.slane %v1884, 2
        %v2107 = vsel %vm2074, %v2104, %v2106
        %v2108 = vrot.slane %v1885, 2
        %v2109 = vsel %vm2074, %v2106, %v2108
        %v2110 = vrot.slane %v1886, 2
        %v2111 = vrot.slane %v1887, 2
        %v2112 = vsel %vm2074, %v2110, %v2111
        %v2113 = vrot.slane %v1888, 2
        %v2114 = vsel %vm2074, %v2111, %v2113
        %v2115 = vrot.slane %v1889, 2
        %v2116 = vsel %vm2074, %v2113, %v2115
        %v2117 = vrot.slane %v1890, 2
        %v2118 = vrot.slane %v1891, 2
        %v2119 = vsel %vm2074, %v2117, %v2118
        %v2120 = vrot.slane %v1892, 2
        %v2121 = vsel %vm2074, %v2118, %v2120
        %v2122 = vrot.slane %v1893, 2
        %v2123 = vsel %vm2074, %v2120, %v2122
        %v2124 = vrot.slane %v1894, 2
        %v2125 = vrot.slane %v1895, 2
        %v2126 = vsel %vm2074, %v2124, %v2125
        %v2127 = vrot.slane %v1896, 2
        %v2128 = vsel %vm2074, %v2125, %v2127
        %v2129 = vrot.slane %v1897, 2
        %v2130 = vsel %vm2074, %v2127, %v2129
        %v2131 = vrot.slane %v1898, 2
        %v2132 = vrot.slane %v1899, 2
        %v2133 = vsel %vm2074, %v2131, %v2132
        %v2134 = vrot.slane %v1900, 2
        %v2135 = vsel %vm2074, %v2132, %v2134
        %v2136 = vrot.slane %v1901, 2
        %v2137 = vsel %vm2074, %v2134, %v2136
        %v2138 = vrot.slane %v1902, 2
        %v2139 = vrot.slane %v1903, 2
        %v2140 = vsel %vm2074, %v2138, %v2139
        %v2141 = vrot.slane %v1904, 2
        %v2142 = vsel %vm2074, %v2139, %v2141
        %v2143 = vrot.slane %v1905, 2
        %v2144 = vsel %vm2074, %v2141, %v2143
        %v2145 = vrot.slane %v1906, 2
        %v2146 = vrot.slane %v1907, 2
        %v2147 = vsel %vm2074, %v2145, %v2146
        %v2148 = vrot.slane %v1908, 2
        %v2149 = vsel %vm2074, %v2146, %v2148
        %v2150 = vrot.slane %v1909, 2
        %v2151 = vsel %vm2074, %v2148, %v2150
        %v2152 = vrot.slane %v1910, 2
        %v2153 = vrot.slane %v1911, 2
        %v2154 = vsel %vm2074, %v2152, %v2153
        %v2155 = vrot.slane %v1912, 2
        %v2156 = vsel %vm2074, %v2153, %v2155
        %v2157 = vrot.slane %v1913, 2
        %v2158 = vsel %vm2074, %v2155, %v2157
        %v2159 = vrot.slane %v1914, 2
        %v2160 = vrot.slane %v1915, 2
        %v2161 = vsel %vm2074, %v2159, %v2160
        %v2162 = vrot.slane %v1916, 2
        %v2163 = vsel %vm2074, %v2160, %v2162
        %v2164 = vrot.slane %v1917, 2
        %v2165 = vsel %vm2074, %v2162, %v2164
        %v2166 = vrot.slane %v1918, 2
        %v2167 = vrot.slane %v1919, 2
        %v2168 = vsel %vm2074, %v2166, %v2167
        %v2169 = vrot.slane %v1920, 2
        %v2170 = vsel %vm2074, %v2167, %v2169
        %v2171 = vrot.slane %v1921, 2
        %v2172 = vsel %vm2074, %v2169, %v2171
        %v2173 = vrot.slane %v1922, 2
        %v2174 = vrot.slane %v1923, 2
        %v2175 = vsel %vm2074, %v2173, %v2174
        %v2176 = vrot.slane %v1924, 2
        %v2177 = vsel %vm2074, %v2174, %v2176
        %v2178 = vrot.slane %v1925, 2
        %v2179 = vsel %vm2074, %v2176, %v2178
        %v2180 = vrot.slane %v1926, 2
        %v2181 = vrot.slane %v1927, 2
        %v2182 = vsel %vm2074, %v2180, %v2181
        %v2183 = vrot.slane %v1928, 2
        %v2184 = vsel %vm2074, %v2181, %v2183
        %v2185 = vrot.slane %v1929, 2
        %v2186 = vsel %vm2074, %v2183, %v2185
        %v2187 = vrot.slane %v1930, 2
        %v2188 = vrot.slane %v1931, 2
        %v2189 = vsel %vm2074, %v2187, %v2188
        %v2190 = vrot.slane %v1932, 2
        %v2191 = vsel %vm2074, %v2188, %v2190
        %v2192 = vrot.slane %v1933, 2
        %v2193 = vsel %vm2074, %v2190, %v2192
        %v2194 = vrot.slane %v1934, 2
        %v2195 = vrot.slane %v1935, 2
        %v2196 = vsel %vm2074, %v2194, %v2195
        %v2197 = vrot.slane %v1936, 2
        %v2198 = vsel %vm2074, %v2195, %v2197
        %v2199 = vrot.slane %v1937, 2
        %v2200 = vsel %vm2074, %v2197, %v2199
        %v2201 = vrot.slane %v1938, 2
        %v2202 = vrot.slane %v1939, 2
        %v2203 = vsel %vm2074, %v2201, %v2202
        %v2204 = vrot.slane %v1940, 2
        %v2205 = vsel %vm2074, %v2202, %v2204
        %v2206 = vrot.slane %v1941, 2
        %v2207 = vsel %vm2074, %v2204, %v2206
        %v2208 = vrot.slane %v1942, 2
        %v2209 = vrot.slane %v1943, 2
        %v2210 = vsel %vm2074, %v2208, %v2209
        %v2211 = vrot.slane %v1944, 2
        %v2212 = vsel %vm2074, %v2209, %v2211
        %v2213 = vrot.slane %v1945, 2
        %v2214 = vsel %vm2074, %v2211, %v2213
        %v2215 = vrot.slane %v1946, 2
        %v2216 = vrot.slane %v1947, 2
        %v2217 = vsel %vm2074, %v2215, %v2216
        %v2218 = vrot.slane %v1948, 2
        %v2219 = vsel %vm2074, %v2216, %v2218
        %v2220 = vrot.slane %v1949, 2
        %v2221 = vsel %vm2074, %v2218, %v2220
        %v2222 = vrot.slane %v1950, 2
        %v2223 = vrot.slane %v1951, 2
        %v2224 = vsel %vm2074, %v2222, %v2223
        %v2225 = vrot.slane %v1952, 2
        %v2226 = vsel %vm2074, %v2223, %v2225
        %v2227 = vrot.slane %v1953, 2
        %v2228 = vsel %vm2074, %v2225, %v2227
        %v2229 = vrot.slane %v1954, 2
        %v2230 = vrot.slane %v1955, 2
        %v2231 = vsel %vm2074, %v2229, %v2230
        %v2232 = vrot.slane %v1956, 2
        %v2233 = vsel %vm2074, %v2230, %v2232
        %v2234 = vrot.slane %v1957, 2
        %v2235 = vsel %vm2074, %v2232, %v2234
        %v2236 = vrot.slane %v1958, 2
        %v2237 = vrot.slane %v1959, 2
        %v2238 = vsel %vm2074, %v2236, %v2237
        %v2239 = vrot.slane %v1960, 2
        %v2240 = vsel %vm2074, %v2237, %v2239
        %v2241 = vrot.slane %v1961, 2
        %v2242 = vsel %vm2074, %v2239, %v2241
        %v2243 = vrot.slane %v1962, 2
        %v2244 = vrot.slane %v1963, 2
        %v2245 = vsel %vm2074, %v2243, %v2244
        %v2246 = vrot.slane %v1964, 2
        %v2247 = vsel %vm2074, %v2244, %v2246
        %v2248 = vrot.slane %v1965, 2
        %v2249 = vsel %vm2074, %v2246, %v2248
        %v2250 = vrot.slane %v1966, 2
        %v2251 = vrot.slane %v1967, 2
        %v2252 = vsel %vm2074, %v2250, %v2251
        %v2253 = vrot.slane %v1968, 2
        %v2254 = vsel %vm2074, %v2251, %v2253
        %v2255 = vrot.slane %v1969, 2
        %v2256 = vsel %vm2074, %v2253, %v2255
        %v2335 = vpack.c.bf16 %v1776, %v1775
        %v2336 = vpack.c.bf16 %v1379, %v1378
        %v2337 = vpack.c.bf16 %v2079, %v2077
        %v2338 = vpack.c.bf16 %v1778, %v1777
        %v2339 = vpack.c.bf16 %v1203, %v1380
        %v2340 = vpack.c.bf16 %v2084, %v2081
        %v2341 = vpack.c.bf16 %v1780, %v1779
        %v2342 = vpack.c.bf16 %v1205, %v1204
        %v2343 = vpack.c.bf16 %v2088, %v2086
        %v2344 = vpack.c.bf16 %v1782, %v1781
        %v2345 = vpack.c.bf16 %v1207, %v1206
        %v2346 = vpack.c.bf16 %v2093, %v2091
        %v2347 = vpack.c.bf16 %v1784, %v1783
        %v2348 = vpack.c.bf16 %v1209, %v1208
        %v2349 = vpack.c.bf16 %v2098, %v2095
        %v2350 = vpack.c.bf16 %v1786, %v1785
        %v2351 = vpack.c.bf16 %v1211, %v1210
        %v2352 = vpack.c.bf16 %v2102, %v2100
        %v2353 = vpack.c.bf16 %v1788, %v1787
        %v2354 = vpack.c.bf16 %v1213, %v1212
        %v2355 = vpack.c.bf16 %v2107, %v2105
        %v2356 = vpack.c.bf16 %v1790, %v1789
        %v2357 = vpack.c.bf16 %v1215, %v1214
        %v2358 = vpack.c.bf16 %v2112, %v2109
        %v2359 = vpack.c.bf16 %v1792, %v1791
        %v2360 = vpack.c.bf16 %v1217, %v1216
        %v2361 = vpack.c.bf16 %v2116, %v2114
        %v2362 = vpack.c.bf16 %v1794, %v1793
        %v2363 = vpack.c.bf16 %v1219, %v1218
        %v2364 = vpack.c.bf16 %v2121, %v2119
        %v2365 = vpack.c.bf16 %v1796, %v1795
        %v2366 = vpack.c.bf16 %v1221, %v1220
        %v2367 = vpack.c.bf16 %v2126, %v2123
        %v2368 = vpack.c.bf16 %v1798, %v1797
        %v2369 = vpack.c.bf16 %v1223, %v1222
        %v2370 = vpack.c.bf16 %v2130, %v2128
        %v2371 = vpack.c.bf16 %v1800, %v1799
        %v2372 = vpack.c.bf16 %v1225, %v1224
        %v2373 = vpack.c.bf16 %v2135, %v2133
        %v2374 = vpack.c.bf16 %v1802, %v1801
        %v2375 = vpack.c.bf16 %v1227, %v1226
        %v2376 = vpack.c.bf16 %v2140, %v2137
        %v2377 = vpack.c.bf16 %v1804, %v1803
        %v2378 = vpack.c.bf16 %v1229, %v1228
        %v2379 = vpack.c.bf16 %v2144, %v2142
        %v2380 = vpack.c.bf16 %v1806, %v1805
        %v2381 = vpack.c.bf16 %v1231, %v1230
        %v2382 = vpack.c.bf16 %v2149, %v2147
        %v2383 = vpack.c.bf16 %v1808, %v1807
        %v2384 = vpack.c.bf16 %v1233, %v1232
        %v2385 = vpack.c.bf16 %v2154, %v2151
        %v2386 = vpack.c.bf16 %v1810, %v1809
        %v2387 = vpack.c.bf16 %v1235, %v1234
        %v2388 = vpack.c.bf16 %v2158, %v2156
        %v2389 = vpack.c.bf16 %v1812, %v1811
        %v2390 = vpack.c.bf16 %v1237, %v1236
        %v2391 = vpack.c.bf16 %v2163, %v2161
        %v2392 = vpack.c.bf16 %v1814, %v1813
        %v2393 = vpack.c.bf16 %v1239, %v1238
        %v2394 = vpack.c.bf16 %v2168, %v2165
        %v2395 = vpack.c.bf16 %v1816, %v1815
        %v2396 = vpack.c.bf16 %v1241, %v1240
        %v2397 = vpack.c.bf16 %v2172, %v2170
        %v2398 = vpack.c.bf16 %v1818, %v1817
        %v2399 = vpack.c.bf16 %v1243, %v1242
        %v2400 = vpack.c.bf16 %v2177, %v2175
        %v2401 = vpack.c.bf16 %v1820, %v1819
        %v2402 = vpack.c.bf16 %v1245, %v1244
        %v2403 = vpack.c.bf16 %v2182, %v2179
        %v2404 = vpack.c.bf16 %v1822, %v1821
        %v2405 = vpack.c.bf16 %v1247, %v1246
        %v2406 = vpack.c.bf16 %v2186, %v2184
        %v2407 = vpack.c.bf16 %v1824, %v1823
        %v2408 = vpack.c.bf16 %v1249, %v1248
        %v2409 = vpack.c.bf16 %v2191, %v2189
        %v2410 = vpack.c.bf16 %v1826, %v1825
        %v2411 = vpack.c.bf16 %v1251, %v1250
        %v2412 = vpack.c.bf16 %v2196, %v2193
        %v2413 = vpack.c.bf16 %v1828, %v1827
        %v2414 = vpack.c.bf16 %v1253, %v1252
        %v2415 = vpack.c.bf16 %v2200, %v2198
        %v2416 = vpack.c.bf16 %v1830, %v1829
        %v2417 = vpack.c.bf16 %v1255, %v1254
        %v2418 = vpack.c.bf16 %v2205, %v2203
        %v2419 = vpack.c.bf16 %v1832, %v1831
        %v2420 = vpack.c.bf16 %v1257, %v1256
        %v2421 = vpack.c.bf16 %v2210, %v2207
        %v2422 = vpack.c.bf16 %v1834, %v1833
        %v2423 = vpack.c.bf16 %v1259, %v1258
        %v2424 = vpack.c.bf16 %v2214, %v2212
        %v2425 = vpack.c.bf16 %v1836, %v1835
        %v2426 = vpack.c.bf16 %v1261, %v1260
        %v2427 = vpack.c.bf16 %v2219, %v2217
        %v2428 = vpack.c.bf16 %v1838, %v1837
        %v2429 = vpack.c.bf16 %v1263, %v1262
        %v2430 = vpack.c.bf16 %v2224, %v2221
        %v2431 = vpack.c.bf16 %v1840, %v1839
        %v2432 = vpack.c.bf16 %v1265, %v1264
        %v2433 = vpack.c.bf16 %v2228, %v2226
        %v2434 = vpack.c.bf16 %v1842, %v1841
        %v2435 = vpack.c.bf16 %v1267, %v1266
        %v2436 = vpack.c.bf16 %v2233, %v2231
        %v2437 = vpack.c.bf16 %v1844, %v1843
        %v2438 = vpack.c.bf16 %v1269, %v1268
        %v2439 = vpack.c.bf16 %v2238, %v2235
        %v2440 = vpack.c.bf16 %v1846, %v1845
        %v2441 = vpack.c.bf16 %v1271, %v1270
        %v2442 = vpack.c.bf16 %v2242, %v2240
        %v2443 = vpack.c.bf16 %v1779, %v1778
        %v2444 = vpack.c.bf16 %v1204, %v1203
        %v2445 = vpack.c.bf16 %v2086, %v2084
        %v2446 = vpack.c.bf16 %v1781, %v1780
        %v2447 = vpack.c.bf16 %v1206, %v1205
        %v2448 = vpack.c.bf16 %v2091, %v2088
        %v2449 = vpack.c.bf16 %v1783, %v1782
        %v2450 = vpack.c.bf16 %v1208, %v1207
        %v2451 = vpack.c.bf16 %v2095, %v2093
        %v2452 = vpack.c.bf16 %v1785, %v1784
        %v2453 = vpack.c.bf16 %v1210, %v1209
        %v2454 = vpack.c.bf16 %v2100, %v2098
        %v2455 = vpack.c.bf16 %v1787, %v1786
        %v2456 = vpack.c.bf16 %v1212, %v1211
        %v2457 = vpack.c.bf16 %v2105, %v2102
        %v2458 = vpack.c.bf16 %v1789, %v1788
        %v2459 = vpack.c.bf16 %v1214, %v1213
        %v2460 = vpack.c.bf16 %v2109, %v2107
        %v2461 = vpack.c.bf16 %v1791, %v1790
        %v2462 = vpack.c.bf16 %v1216, %v1215
        %v2463 = vpack.c.bf16 %v2114, %v2112
        %v2464 = vpack.c.bf16 %v1793, %v1792
        %v2465 = vpack.c.bf16 %v1218, %v1217
        %v2466 = vpack.c.bf16 %v2119, %v2116
        %v2467 = vpack.c.bf16 %v1795, %v1794
        %v2468 = vpack.c.bf16 %v1220, %v1219
        %v2469 = vpack.c.bf16 %v2123, %v2121
        %v2470 = vpack.c.bf16 %v1797, %v1796
        %v2471 = vpack.c.bf16 %v1222, %v1221
        %v2472 = vpack.c.bf16 %v2128, %v2126
        %v2473 = vpack.c.bf16 %v1799, %v1798
        %v2474 = vpack.c.bf16 %v1224, %v1223
        %v2475 = vpack.c.bf16 %v2133, %v2130
        %v2476 = vpack.c.bf16 %v1801, %v1800
        %v2477 = vpack.c.bf16 %v1226, %v1225
        %v2478 = vpack.c.bf16 %v2137, %v2135
        %v2479 = vpack.c.bf16 %v1803, %v1802
        %v2480 = vpack.c.bf16 %v1228, %v1227
        %v2481 = vpack.c.bf16 %v2142, %v2140
        %v2482 = vpack.c.bf16 %v1805, %v1804
        %v2483 = vpack.c.bf16 %v1230, %v1229
        %v2484 = vpack.c.bf16 %v2147, %v2144
        %v2485 = vpack.c.bf16 %v1807, %v1806
        %v2486 = vpack.c.bf16 %v1232, %v1231
        %v2487 = vpack.c.bf16 %v2151, %v2149
        %v2488 = vpack.c.bf16 %v1809, %v1808
        %v2489 = vpack.c.bf16 %v1234, %v1233
        %v2490 = vpack.c.bf16 %v2156, %v2154
        %v2491 = vpack.c.bf16 %v1811, %v1810
        %v2492 = vpack.c.bf16 %v1236, %v1235
        %v2493 = vpack.c.bf16 %v2161, %v2158
        %v2494 = vpack.c.bf16 %v1813, %v1812
        %v2495 = vpack.c.bf16 %v1238, %v1237
        %v2496 = vpack.c.bf16 %v2165, %v2163
        %v2497 = vpack.c.bf16 %v1815, %v1814
        %v2498 = vpack.c.bf16 %v1240, %v1239
        %v2499 = vpack.c.bf16 %v2170, %v2168
        %v2500 = vpack.c.bf16 %v1817, %v1816
        %v2501 = vpack.c.bf16 %v1242, %v1241
        %v2502 = vpack.c.bf16 %v2175, %v2172
        %v2503 = vpack.c.bf16 %v1819, %v1818
        %v2504 = vpack.c.bf16 %v1244, %v1243
        %v2505 = vpack.c.bf16 %v2179, %v2177
        %v2506 = vpack.c.bf16 %v1821, %v1820
        %v2507 = vpack.c.bf16 %v1246, %v1245
        %v2508 = vpack.c.bf16 %v2184, %v2182
        %v2509 = vpack.c.bf16 %v1823, %v1822
        %v2510 = vpack.c.bf16 %v1248, %v1247
        %v2511 = vpack.c.bf16 %v2189, %v2186
        %v2512 = vpack.c.bf16 %v1825, %v1824
        %v2513 = vpack.c.bf16 %v1250, %v1249
        %v2514 = vpack.c.bf16 %v2193, %v2191
        %v2515 = vpack.c.bf16 %v1827, %v1826
        %v2516 = vpack.c.bf16 %v1252, %v1251
        %v2517 = vpack.c.bf16 %v2198, %v2196
        %v2518 = vpack.c.bf16 %v1829, %v1828
        %v2519 = vpack.c.bf16 %v1254, %v1253
        %v2520 = vpack.c.bf16 %v2203, %v2200
        %v2521 = vpack.c.bf16 %v1831, %v1830
        %v2522 = vpack.c.bf16 %v1256, %v1255
        %v2523 = vpack.c.bf16 %v2207, %v2205
        %v2524 = vpack.c.bf16 %v1833, %v1832
        %v2525 = vpack.c.bf16 %v1258, %v1257
        %v2526 = vpack.c.bf16 %v2212, %v2210
        %v2527 = vpack.c.bf16 %v1835, %v1834
        %v2528 = vpack.c.bf16 %v1260, %v1259
        %v2529 = vpack.c.bf16 %v2217, %v2214
        %v2530 = vpack.c.bf16 %v1837, %v1836
        %v2531 = vpack.c.bf16 %v1262, %v1261
        %v2532 = vpack.c.bf16 %v2221, %v2219
        %v2533 = vpack.c.bf16 %v1839, %v1838
        %v2534 = vpack.c.bf16 %v1264, %v1263
        %v2535 = vpack.c.bf16 %v2226, %v2224
        %v2536 = vpack.c.bf16 %v1841, %v1840
        %v2537 = vpack.c.bf16 %v1266, %v1265
        %v2538 = vpack.c.bf16 %v2231, %v2228
        %v2539 = vpack.c.bf16 %v1843, %v1842
        %v2540 = vpack.c.bf16 %v1268, %v1267
        %v2541 = vpack.c.bf16 %v2235, %v2233
        %v2542 = vpack.c.bf16 %v1845, %v1844
        %v2543 = vpack.c.bf16 %v1270, %v1269
        %v2544 = vpack.c.bf16 %v2240, %v2238
        %v2545 = vpack.c.bf16 %v1847, %v1846
        %v2546 = vpack.c.bf16 %v1272, %v1271
        %v2547 = vpack.c.bf16 %v2245, %v2242
        %v2548 = vpack.c.bf16 %v1849, %v1848
        %v2549 = vpack.c.bf16 %v1274, %v1273
        %v2550 = vpack.c.bf16 %v2249, %v2247
        %v2599 = vunpack.c.l.b16 %v421
        %v2600 = vunpack.c.l.b16 %v422
        %v2601 = vunpack.c.l.b16 %v423
        %v2602 = vunpack.c.l.b16 %v424
        %v2603 = vunpack.c.l.b16 %v425
        %v2604 = vunpack.c.l.b16 %v426
        %v2605 = vunpack.c.l.b16 %v427
        %v2606 = vunpack.c.l.b16 %v428
        %v2607 = vunpack.c.l.b16 %v429
        %v2608 = vunpack.c.l.b16 %v430
        %v2609 = vunpack.c.l.b16 %v431
        %v2610 = vunpack.c.l.b16 %v432
        %v2611 = vunpack.c.l.b16 %v433
        %v2612 = vunpack.c.l.b16 %v434
        %v2613 = vunpack.c.l.b16 %v435
        %v2614 = vunpack.c.l.b16 %v436
        %v2615 = vunpack.c.l.b16 %v437
        %v2616 = vunpack.c.l.b16 %v438
        %v2617 = vunpack.c.l.b16 %v439
        %v2618 = vunpack.c.l.b16 %v440
        %v2619 = vunpack.c.l.b16 %v441
        %v2620 = vunpack.c.l.b16 %v442
        %v2621 = vunpack.c.l.b16 %v443
        %v2622 = vunpack.c.l.b16 %v444
        %v2623 = vunpack.c.l.b16 %v445
        %v2624 = vunpack.c.l.b16 %v446
        %v2625 = vunpack.c.l.b16 %v447
        %v2626 = vunpack.c.l.b16 %v448
        %v2627 = vunpack.c.l.b16 %v449
        %v2628 = vunpack.c.l.b16 %v450
        %v2629 = vunpack.c.l.b16 %v451
        %v2630 = vunpack.c.l.b16 %v452
        %v2631 = vunpack.c.l.b16 %v453
        %v2632 = vunpack.c.l.b16 %v454
        %v2633 = vunpack.c.l.b16 %v455
        %v2634 = vunpack.c.l.b16 %v456
        %v2635 = vunpack.c.l.b16 %v457
        %v2636 = vunpack.c.l.b16 %v458
        %v2637 = vunpack.c.l.b16 %v459
        %v2638 = vunpack.c.l.b16 %v460
        %v2639 = vunpack.c.l.b16 %v461
        %v2640 = vunpack.c.l.b16 %v462
        %v2641 = vunpack.c.l.b16 %v463
        %v2642 = vunpack.c.l.b16 %v464
        %v2643 = vunpack.c.l.b16 %v465
        %v2644 = vunpack.c.l.b16 %v466
        %v2645 = vunpack.c.l.b16 %v467
        %v2646 = vunpack.c.l.b16 %v468
        %v2647 = vpack.c.b16 %v2600, %v2599
        %v2648 = vpack.c.b16 %v2602, %v2601
        %v2649 = vpack.c.b16 %v2604, %v2603
        %v2650 = vpack.c.b16 %v2606, %v2605
        %v2651 = vpack.c.b16 %v2608, %v2607
        %v2652 = vpack.c.b16 %v2610, %v2609
        %v2653 = vpack.c.b16 %v2612, %v2611
        %v2654 = vpack.c.b16 %v2614, %v2613
        %v2655 = vpack.c.b16 %v2616, %v2615
        %v2656 = vpack.c.b16 %v2618, %v2617
        %v2657 = vpack.c.b16 %v2620, %v2619
        %v2658 = vpack.c.b16 %v2622, %v2621
        %v2659 = vpack.c.b16 %v2624, %v2623
        %v2660 = vpack.c.b16 %v2626, %v2625
        %v2661 = vpack.c.b16 %v2628, %v2627
        %v2662 = vpack.c.b16 %v2630, %v2629
        %v2663 = vpack.c.b16 %v2632, %v2631
        %v2664 = vpack.c.b16 %v2634, %v2633
        %v2665 = vpack.c.b16 %v2636, %v2635
        %v2666 = vpack.c.b16 %v2638, %v2637
        %v2667 = vpack.c.b16 %v2640, %v2639
        %v2668 = vpack.c.b16 %v2642, %v2641
        %v2669 = vpack.c.b16 %v2644, %v2643
        %v2670 = vpack.c.b16 %v2646, %v2645
        %2695 = vmatprep.subr.bf16.mxu0 0
        %2696 = vmatpush1.bf16.msra.mxu0 %v2654
        %2697 = vmatprep.subr.bf16.mxu0 0
        %2698 = vmatpush1.bf16.msra.mxu0 %v2653
        %2699 = vmatprep.subr.bf16.mxu0 0
        %2700 = vmatpush1.bf16.msra.mxu0 %v2652
        %2701 = vmatprep.subr.bf16.mxu0 0
        %2702 = vmatpush1.bf16.msra.mxu0 %v2651
        %2703 = vmatprep.subr.bf16.mxu0 0
        %2704 = vmatpush1.bf16.msra.mxu0 %v2650
        %2705 = vmatprep.subr.bf16.mxu0 0
        %2706 = vmatpush1.bf16.msra.mxu0 %v2649
        %2707 = vmatprep.subr.bf16.mxu0 0
        %2708 = vmatpush1.bf16.msra.mxu0 %v2648
        %2709 = vmatprep.subr.bf16.mxu0 0
        %2710 = vmatpush1.bf16.msra.mxu0 %v2647
        %2711 = vmatprep.subr.bf16.mxu0 0
        %2712 = vmatpush2.bf16.msra.mxu0 %v2662
        %2713 = vmatprep.subr.bf16.mxu0 0
        %2714 = vmatpush2.bf16.msra.mxu0 %v2661
        %2715 = vmatprep.subr.bf16.mxu0 0
        %2716 = vmatpush2.bf16.msra.mxu0 %v2660
        %2717 = vmatprep.subr.bf16.mxu0 0
        %2718 = vmatpush2.bf16.msra.mxu0 %v2659
        %2719 = vmatprep.subr.bf16.mxu0 0
        %2720 = vmatpush2.bf16.msra.mxu0 %v2658
        %2721 = vmatprep.subr.bf16.mxu0 0
        %2722 = vmatpush2.bf16.msra.mxu0 %v2657
        %2723 = vmatprep.subr.bf16.mxu0 0
        %2724 = vmatpush2.bf16.msra.mxu0 %v2656
        %2725 = vmatprep.subr.bf16.mxu0 0
        %2726 = vmatpush2.bf16.msra.mxu0 %v2655
        %2727 = vmatprep.mubr.bf16.mxu0 %v2444
        %2728 = vmatmul.mubr.bf16.gmra.mxu0 %v2443
        %v2729 = vpop.f32.mrf.mxu0
        %v2730 = vadd.f32 0.0, %v2729
        %v2731 = vpop.f32.mrf.mxu0
        %v2732 = vpop.f32.mrf.mxu0
        %v2733 = vadd.f32 0.0, %v2732
        %v2734 = vpop.f32.mrf.mxu0
        %2735 = vmatprep.mubr.bf16.mxu0 %v2447
        %2736 = vmatmul.mubr.bf16.gmra.mxu0 %v2446
        %v2737 = vpop.f32.mrf.mxu0
        %v2738 = vadd.f32 0.0, %v2737
        %v2739 = vpop.f32.mrf.mxu0
        %v2740 = vpop.f32.mrf.mxu0
        %v2741 = vadd.f32 0.0, %v2740
        %v2742 = vpop.f32.mrf.mxu0
        %2743 = vmatprep.mubr.bf16.mxu0 %v2450
        %2744 = vmatmul.mubr.bf16.gmra.mxu0 %v2449
        %v2745 = vpop.f32.mrf.mxu0
        %v2746 = vadd.f32 0.0, %v2745
        %v2747 = vpop.f32.mrf.mxu0
        %v2748 = vpop.f32.mrf.mxu0
        %v2749 = vadd.f32 0.0, %v2748
        %v2750 = vpop.f32.mrf.mxu0
        %2751 = vmatprep.mubr.bf16.mxu0 %v2453
        %2752 = vmatmul.mubr.bf16.gmra.mxu0 %v2452
        %v2753 = vpop.f32.mrf.mxu0
        %v2754 = vadd.f32 0.0, %v2753
        %v2755 = vpop.f32.mrf.mxu0
        %v2756 = vpop.f32.mrf.mxu0
        %v2757 = vadd.f32 0.0, %v2756
        %v2758 = vpop.f32.mrf.mxu0
        %2759 = vmatprep.mubr.bf16.mxu0 %v2456
        %2760 = vmatmul.mubr.bf16.gmra.mxu0 %v2455
        %v2761 = vpop.f32.mrf.mxu0
        %v2762 = vadd.f32 0.0, %v2761
        %v2763 = vpop.f32.mrf.mxu0
        %v2764 = vpop.f32.mrf.mxu0
        %v2765 = vadd.f32 0.0, %v2764
        %v2766 = vpop.f32.mrf.mxu0
        %2767 = vmatprep.mubr.bf16.mxu0 %v2459
        %2768 = vmatmul.mubr.bf16.gmra.mxu0 %v2458
        %v2769 = vpop.f32.mrf.mxu0
        %v2770 = vadd.f32 0.0, %v2769
        %v2771 = vpop.f32.mrf.mxu0
        %v2772 = vpop.f32.mrf.mxu0
        %v2773 = vadd.f32 0.0, %v2772
        %v2774 = vpop.f32.mrf.mxu0
        %2775 = vmatprep.mubr.bf16.mxu0 %v2462
        %2776 = vmatmul.mubr.bf16.gmra.mxu0 %v2461
        %v2777 = vpop.f32.mrf.mxu0
        %v2778 = vadd.f32 0.0, %v2777
        %v2779 = vpop.f32.mrf.mxu0
        %v2780 = vpop.f32.mrf.mxu0
        %v2781 = vadd.f32 0.0, %v2780
        %v2782 = vpop.f32.mrf.mxu0
        %2783 = vmatprep.mubr.bf16.mxu0 %v2465
        %2784 = vmatmul.mubr.bf16.gmra.mxu0 %v2464
        %v2785 = vpop.f32.mrf.mxu0
        %v2786 = vadd.f32 0.0, %v2785
        %v2787 = vpop.f32.mrf.mxu0
        %v2788 = vpop.f32.mrf.mxu0
        %v2789 = vadd.f32 0.0, %v2788
        %v2790 = vpop.f32.mrf.mxu0
        %2791 = vmatprep.mubr.bf16.mxu0 %v2468
        %2792 = vmatmul.mubr.bf16.gmra.mxu0 %v2467
        %v2793 = vpop.f32.mrf.mxu0
        %v2794 = vadd.f32 0.0, %v2793
        %v2795 = vpop.f32.mrf.mxu0
        %v2796 = vpop.f32.mrf.mxu0
        %v2797 = vadd.f32 0.0, %v2796
        %v2798 = vpop.f32.mrf.mxu0
        %2799 = vmatprep.mubr.bf16.mxu0 %v2471
        %2800 = vmatmul.mubr.bf16.gmra.mxu0 %v2470
        %v2801 = vpop.f32.mrf.mxu0
        %v2802 = vadd.f32 0.0, %v2801
        %v2803 = vpop.f32.mrf.mxu0
        %v2804 = vpop.f32.mrf.mxu0
        %v2805 = vadd.f32 0.0, %v2804
        %v2806 = vpop.f32.mrf.mxu0
        %2807 = vmatprep.mubr.bf16.mxu0 %v2474
        %2808 = vmatmul.mubr.bf16.gmra.mxu0 %v2473
        %v2809 = vpop.f32.mrf.mxu0
        %v2810 = vadd.f32 0.0, %v2809
        %v2811 = vpop.f32.mrf.mxu0
        %v2812 = vpop.f32.mrf.mxu0
        %v2813 = vadd.f32 0.0, %v2812
        %v2814 = vpop.f32.mrf.mxu0
        %2815 = vmatprep.mubr.bf16.mxu0 %v2477
        %2816 = vmatmul.mubr.bf16.gmra.mxu0 %v2476
        %v2817 = vpop.f32.mrf.mxu0
        %v2818 = vadd.f32 0.0, %v2817
        %v2819 = vpop.f32.mrf.mxu0
        %v2820 = vpop.f32.mrf.mxu0
        %v2821 = vadd.f32 0.0, %v2820
        %v2822 = vpop.f32.mrf.mxu0
        %2823 = vmatprep.mubr.bf16.mxu0 %v2480
        %2824 = vmatmul.mubr.bf16.gmra.mxu0 %v2479
        %v2825 = vpop.f32.mrf.mxu0
        %v2826 = vadd.f32 0.0, %v2825
        %v2827 = vpop.f32.mrf.mxu0
        %v2828 = vpop.f32.mrf.mxu0
        %v2829 = vadd.f32 0.0, %v2828
        %v2830 = vpop.f32.mrf.mxu0
        %2831 = vmatprep.mubr.bf16.mxu0 %v2483
        %2832 = vmatmul.mubr.bf16.gmra.mxu0 %v2482
        %v2833 = vpop.f32.mrf.mxu0
        %v2834 = vadd.f32 0.0, %v2833
        %v2835 = vpop.f32.mrf.mxu0
        %v2836 = vpop.f32.mrf.mxu0
        %v2837 = vadd.f32 0.0, %v2836
        %v2838 = vpop.f32.mrf.mxu0
        %2839 = vmatprep.mubr.bf16.mxu0 %v2486
        %2840 = vmatmul.mubr.bf16.gmra.mxu0 %v2485
        %v2841 = vpop.f32.mrf.mxu0
        %v2842 = vadd.f32 0.0, %v2841
        %v2843 = vpop.f32.mrf.mxu0
        %v2844 = vpop.f32.mrf.mxu0
        %v2845 = vadd.f32 0.0, %v2844
        %v2846 = vpop.f32.mrf.mxu0
        %2847 = vmatprep.mubr.bf16.mxu0 %v2489
        %2848 = vmatmul.mubr.bf16.gmra.mxu0 %v2488
        %v2849 = vpop.f32.mrf.mxu0
        %v2850 = vadd.f32 0.0, %v2849
        %v2851 = vpop.f32.mrf.mxu0
        %v2852 = vpop.f32.mrf.mxu0
        %v2853 = vadd.f32 0.0, %v2852
        %v2854 = vpop.f32.mrf.mxu0
        %2855 = vmatprep.mubr.bf16.mxu0 %v2492
        %2856 = vmatmul.mubr.bf16.gmra.mxu0 %v2491
        %v2857 = vpop.f32.mrf.mxu0
        %v2858 = vadd.f32 0.0, %v2857
        %v2859 = vpop.f32.mrf.mxu0
        %v2860 = vpop.f32.mrf.mxu0
        %v2861 = vadd.f32 0.0, %v2860
        %v2862 = vpop.f32.mrf.mxu0
        %2863 = vmatprep.mubr.bf16.mxu0 %v2495
        %2864 = vmatmul.mubr.bf16.gmra.mxu0 %v2494
        %v2865 = vpop.f32.mrf.mxu0
        %v2866 = vadd.f32 0.0, %v2865
        %v2867 = vpop.f32.mrf.mxu0
        %v2868 = vpop.f32.mrf.mxu0
        %v2869 = vadd.f32 0.0, %v2868
        %v2870 = vpop.f32.mrf.mxu0
        %2871 = vmatprep.mubr.bf16.mxu0 %v2498
        %2872 = vmatmul.mubr.bf16.gmra.mxu0 %v2497
        %v2873 = vpop.f32.mrf.mxu0
        %v2874 = vadd.f32 0.0, %v2873
        %v2875 = vpop.f32.mrf.mxu0
        %v2876 = vpop.f32.mrf.mxu0
        %v2877 = vadd.f32 0.0, %v2876
        %v2878 = vpop.f32.mrf.mxu0
        %2879 = vmatprep.mubr.bf16.mxu0 %v2501
        %2880 = vmatmul.mubr.bf16.gmra.mxu0 %v2500
        %v2881 = vpop.f32.mrf.mxu0
        %v2882 = vadd.f32 0.0, %v2881
        %v2883 = vpop.f32.mrf.mxu0
        %v2884 = vpop.f32.mrf.mxu0
        %v2885 = vadd.f32 0.0, %v2884
        %v2886 = vpop.f32.mrf.mxu0
        %2887 = vmatprep.mubr.bf16.mxu0 %v2504
        %2888 = vmatmul.mubr.bf16.gmra.mxu0 %v2503
        %v2889 = vpop.f32.mrf.mxu0
        %v2890 = vadd.f32 0.0, %v2889
        %v2891 = vpop.f32.mrf.mxu0
        %v2892 = vpop.f32.mrf.mxu0
        %v2893 = vadd.f32 0.0, %v2892
        %v2894 = vpop.f32.mrf.mxu0
        %2895 = vmatprep.mubr.bf16.mxu0 %v2507
        %2896 = vmatmul.mubr.bf16.gmra.mxu0 %v2506
        %v2897 = vpop.f32.mrf.mxu0
        %v2898 = vadd.f32 0.0, %v2897
        %v2899 = vpop.f32.mrf.mxu0
        %v2900 = vpop.f32.mrf.mxu0
        %v2901 = vadd.f32 0.0, %v2900
        %v2902 = vpop.f32.mrf.mxu0
        %2903 = vmatprep.mubr.bf16.mxu0 %v2510
        %2904 = vmatmul.mubr.bf16.gmra.mxu0 %v2509
        %v2905 = vpop.f32.mrf.mxu0
        %v2906 = vadd.f32 0.0, %v2905
        %v2907 = vpop.f32.mrf.mxu0
        %v2908 = vpop.f32.mrf.mxu0
        %v2909 = vadd.f32 0.0, %v2908
        %v2910 = vpop.f32.mrf.mxu0
        %2911 = vmatprep.mubr.bf16.mxu0 %v2513
        %2912 = vmatmul.mubr.bf16.gmra.mxu0 %v2512
        %v2913 = vpop.f32.mrf.mxu0
        %v2914 = vadd.f32 0.0, %v2913
        %v2915 = vpop.f32.mrf.mxu0
        %v2916 = vpop.f32.mrf.mxu0
        %v2917 = vadd.f32 0.0, %v2916
        %v2918 = vpop.f32.mrf.mxu0
        %2919 = vmatprep.mubr.bf16.mxu0 %v2516
        %2920 = vmatmul.mubr.bf16.gmra.mxu0 %v2515
        %v2921 = vpop.f32.mrf.mxu0
        %v2922 = vadd.f32 0.0, %v2921
        %v2923 = vpop.f32.mrf.mxu0
        %v2924 = vpop.f32.mrf.mxu0
        %v2925 = vadd.f32 0.0, %v2924
        %v2926 = vpop.f32.mrf.mxu0
        %2927 = vmatprep.mubr.bf16.mxu0 %v2519
        %2928 = vmatmul.mubr.bf16.gmra.mxu0 %v2518
        %v2929 = vpop.f32.mrf.mxu0
        %v2930 = vadd.f32 0.0, %v2929
        %v2931 = vpop.f32.mrf.mxu0
        %v2932 = vpop.f32.mrf.mxu0
        %v2933 = vadd.f32 0.0, %v2932
        %v2934 = vpop.f32.mrf.mxu0
        %2935 = vmatprep.mubr.bf16.mxu0 %v2522
        %2936 = vmatmul.mubr.bf16.gmra.mxu0 %v2521
        %v2937 = vpop.f32.mrf.mxu0
        %v2938 = vadd.f32 0.0, %v2937
        %v2939 = vpop.f32.mrf.mxu0
        %v2940 = vpop.f32.mrf.mxu0
        %v2941 = vadd.f32 0.0, %v2940
        %v2942 = vpop.f32.mrf.mxu0
        %2943 = vmatprep.mubr.bf16.mxu0 %v2525
        %2944 = vmatmul.mubr.bf16.gmra.mxu0 %v2524
        %v2945 = vpop.f32.mrf.mxu0
        %v2946 = vadd.f32 0.0, %v2945
        %v2947 = vpop.f32.mrf.mxu0
        %v2948 = vpop.f32.mrf.mxu0
        %v2949 = vadd.f32 0.0, %v2948
        %v2950 = vpop.f32.mrf.mxu0
        %2951 = vmatprep.mubr.bf16.mxu0 %v2528
        %2952 = vmatmul.mubr.bf16.gmra.mxu0 %v2527
        %v2953 = vpop.f32.mrf.mxu0
        %v2954 = vadd.f32 0.0, %v2953
        %v2955 = vpop.f32.mrf.mxu0
        %v2956 = vpop.f32.mrf.mxu0
        %v2957 = vadd.f32 0.0, %v2956
        %v2958 = vpop.f32.mrf.mxu0
        %2959 = vmatprep.mubr.bf16.mxu0 %v2531
        %2960 = vmatmul.mubr.bf16.gmra.mxu0 %v2530
        %v2961 = vpop.f32.mrf.mxu0
        %v2962 = vadd.f32 0.0, %v2961
        %v2963 = vpop.f32.mrf.mxu0
        %v2964 = vpop.f32.mrf.mxu0
        %v2965 = vadd.f32 0.0, %v2964
        %v2966 = vpop.f32.mrf.mxu0
        %2967 = vmatprep.mubr.bf16.mxu0 %v2534
        %2968 = vmatmul.mubr.bf16.gmra.mxu0 %v2533
        %v2969 = vpop.f32.mrf.mxu0
        %v2970 = vadd.f32 0.0, %v2969
        %v2971 = vpop.f32.mrf.mxu0
        %v2972 = vpop.f32.mrf.mxu0
        %v2973 = vadd.f32 0.0, %v2972
        %v2974 = vpop.f32.mrf.mxu0
        %2975 = vmatprep.mubr.bf16.mxu0 %v2537
        %2976 = vmatmul.mubr.bf16.gmra.mxu0 %v2536
        %v2977 = vpop.f32.mrf.mxu0
        %v2978 = vadd.f32 0.0, %v2977
        %v2979 = vpop.f32.mrf.mxu0
        %v2980 = vpop.f32.mrf.mxu0
        %v2981 = vadd.f32 0.0, %v2980
        %v2982 = vpop.f32.mrf.mxu0
        %2983 = vmatprep.mubr.bf16.mxu0 %v2540
        %2984 = vmatmul.mubr.bf16.gmra.mxu0 %v2539
        %v2985 = vpop.f32.mrf.mxu0
        %v2986 = vadd.f32 0.0, %v2985
        %v2987 = vpop.f32.mrf.mxu0
        %v2988 = vpop.f32.mrf.mxu0
        %v2989 = vadd.f32 0.0, %v2988
        %v2990 = vpop.f32.mrf.mxu0
        %2991 = vmatprep.mubr.bf16.mxu0 %v2543
        %2992 = vmatmul.mubr.bf16.gmra.mxu0 %v2542
        %v2993 = vpop.f32.mrf.mxu0
        %v2994 = vadd.f32 0.0, %v2993
        %v2995 = vpop.f32.mrf.mxu0
        %v2996 = vpop.f32.mrf.mxu0
        %v2997 = vadd.f32 0.0, %v2996
        %v2998 = vpop.f32.mrf.mxu0
        %2999 = vmatprep.mubr.bf16.mxu0 %v2546
        %3000 = vmatmul.mubr.bf16.gmra.mxu0 %v2545
        %v3001 = vpop.f32.mrf.mxu0
        %v3002 = vadd.f32 0.0, %v3001
        %v3003 = vpop.f32.mrf.mxu0
        %v3004 = vpop.f32.mrf.mxu0
        %v3005 = vadd.f32 0.0, %v3004
        %v3006 = vpop.f32.mrf.mxu0
        %3007 = vmatprep.mubr.bf16.mxu0 %v2549
        %3008 = vmatmul.mubr.bf16.gmra.mxu0 %v2548
        %v3009 = vpop.f32.mrf.mxu0
        %v3010 = vadd.f32 0.0, %v3009
        %v3011 = vpop.f32.mrf.mxu0
        %v3012 = vpop.f32.mrf.mxu0
        %v3013 = vadd.f32 0.0, %v3012
        %v3014 = vpop.f32.mrf.mxu0
        %3015 = vdwg.mxu0
        %3016 = vmatprep.subr.bf16.mxu0 0
        %3017 = vmatpush1.bf16.msra.mxu0 %v2670
        %3018 = vmatprep.subr.bf16.mxu0 0
        %3019 = vmatpush1.bf16.msra.mxu0 %v2669
        %3020 = vmatprep.subr.bf16.mxu0 0
        %3021 = vmatpush1.bf16.msra.mxu0 %v2668
        %3022 = vmatprep.subr.bf16.mxu0 0
        %3023 = vmatpush1.bf16.msra.mxu0 %v2667
        %3024 = vmatprep.subr.bf16.mxu0 0
        %3025 = vmatpush1.bf16.msra.mxu0 %v2666
        %3026 = vmatprep.subr.bf16.mxu0 0
        %3027 = vmatpush1.bf16.msra.mxu0 %v2665
        %3028 = vmatprep.subr.bf16.mxu0 0
        %3029 = vmatpush1.bf16.msra.mxu0 %v2664
        %3030 = vmatprep.subr.bf16.mxu0 0
        %3031 = vmatpush1.bf16.msra.mxu0 %v2663
        %3032 = vmatprep.subr.bf16.mxu0 0
        %3033 = vmatpush2.bf16.msra.mxu0 0
        %3034 = vmatprep.subr.bf16.mxu0 0
        %3035 = vmatpush2.bf16.msra.mxu0 0
        %3036 = vmatprep.subr.bf16.mxu0 0
        %3037 = vmatpush2.bf16.msra.mxu0 0
        %3038 = vmatprep.subr.bf16.mxu0 0
        %3039 = vmatpush2.bf16.msra.mxu0 0
        %3040 = vmatprep.subr.bf16.mxu0 0
        %3041 = vmatpush2.bf16.msra.mxu0 0
        %3042 = vmatprep.subr.bf16.mxu0 0
        %3043 = vmatpush2.bf16.msra.mxu0 0
        %3044 = vmatprep.subr.bf16.mxu0 0
        %3045 = vmatpush2.bf16.msra.mxu0 0
        %3046 = vmatprep.subr.bf16.mxu0 0
        %3047 = vmatpush2.bf16.msra.mxu0 0
        %3048 = vmatprep.mubr.bf16.mxu0 0
        %3049 = vmatmul.mubr.bf16.gmra.mxu0 %v2445
        %v3050 = vpop.f32.mrf.mxu0
        %v3051 = vadd.f32 %v2730, %v3050
        %v3052 = vpop.f32.mrf.mxu0
        %v3053 = vpop.f32.mrf.mxu0
        %v3054 = vadd.f32 %v2733, %v3053
        %v3055 = vpop.f32.mrf.mxu0
        %3056 = vmatprep.mubr.bf16.mxu0 0
        %3057 = vmatmul.mubr.bf16.gmra.mxu0 %v2448
        %v3058 = vpop.f32.mrf.mxu0
        %v3059 = vadd.f32 %v2738, %v3058
        %v3060 = vpop.f32.mrf.mxu0
        %v3061 = vpop.f32.mrf.mxu0
        %v3062 = vadd.f32 %v2741, %v3061
        %v3063 = vpop.f32.mrf.mxu0
        %3064 = vmatprep.mubr.bf16.mxu0 0
        %3065 = vmatmul.mubr.bf16.gmra.mxu0 %v2451
        %v3066 = vpop.f32.mrf.mxu0
        %v3067 = vadd.f32 %v2746, %v3066
        %v3068 = vpop.f32.mrf.mxu0
        %v3069 = vpop.f32.mrf.mxu0
        %v3070 = vadd.f32 %v2749, %v3069
        %v3071 = vpop.f32.mrf.mxu0
        %3072 = vmatprep.mubr.bf16.mxu0 0
        %3073 = vmatmul.mubr.bf16.gmra.mxu0 %v2454
        %v3074 = vpop.f32.mrf.mxu0
        %v3075 = vadd.f32 %v2754, %v3074
        %v3076 = vpop.f32.mrf.mxu0
        %v3077 = vpop.f32.mrf.mxu0
        %v3078 = vadd.f32 %v2757, %v3077
        %v3079 = vpop.f32.mrf.mxu0
        %3080 = vmatprep.mubr.bf16.mxu0 0
        %3081 = vmatmul.mubr.bf16.gmra.mxu0 %v2457
        %v3082 = vpop.f32.mrf.mxu0
        %v3083 = vadd.f32 %v2762, %v3082
        %v3084 = vpop.f32.mrf.mxu0
        %v3085 = vpop.f32.mrf.mxu0
        %v3086 = vadd.f32 %v2765, %v3085
        %v3087 = vpop.f32.mrf.mxu0
        %3088 = vmatprep.mubr.bf16.mxu0 0
        %3089 = vmatmul.mubr.bf16.gmra.mxu0 %v2460
        %v3090 = vpop.f32.mrf.mxu0
        %v3091 = vadd.f32 %v2770, %v3090
        %v3092 = vpop.f32.mrf.mxu0
        %v3093 = vpop.f32.mrf.mxu0
        %v3094 = vadd.f32 %v2773, %v3093
        %v3095 = vpop.f32.mrf.mxu0
        %3096 = vmatprep.mubr.bf16.mxu0 0
        %3097 = vmatmul.mubr.bf16.gmra.mxu0 %v2463
        %v3098 = vpop.f32.mrf.mxu0
        %v3099 = vadd.f32 %v2778, %v3098
        %v3100 = vpop.f32.mrf.mxu0
        %v3101 = vpop.f32.mrf.mxu0
        %v3102 = vadd.f32 %v2781, %v3101
        %v3103 = vpop.f32.mrf.mxu0
        %3104 = vmatprep.mubr.bf16.mxu0 0
        %3105 = vmatmul.mubr.bf16.gmra.mxu0 %v2466
        %v3106 = vpop.f32.mrf.mxu0
        %v3107 = vadd.f32 %v2786, %v3106
        %v3108 = vpop.f32.mrf.mxu0
        %v3109 = vpop.f32.mrf.mxu0
        %v3110 = vadd.f32 %v2789, %v3109
        %v3111 = vpop.f32.mrf.mxu0
        %3112 = vmatprep.mubr.bf16.mxu0 0
        %3113 = vmatmul.mubr.bf16.gmra.mxu0 %v2469
        %v3114 = vpop.f32.mrf.mxu0
        %v3115 = vadd.f32 %v2794, %v3114
        %v3116 = vpop.f32.mrf.mxu0
        %v3117 = vpop.f32.mrf.mxu0
        %v3118 = vadd.f32 %v2797, %v3117
        %v3119 = vpop.f32.mrf.mxu0
        %3120 = vmatprep.mubr.bf16.mxu0 0
        %3121 = vmatmul.mubr.bf16.gmra.mxu0 %v2472
        %v3122 = vpop.f32.mrf.mxu0
        %v3123 = vadd.f32 %v2802, %v3122
        %v3124 = vpop.f32.mrf.mxu0
        %v3125 = vpop.f32.mrf.mxu0
        %v3126 = vadd.f32 %v2805, %v3125
        %v3127 = vpop.f32.mrf.mxu0
        %3128 = vmatprep.mubr.bf16.mxu0 0
        %3129 = vmatmul.mubr.bf16.gmra.mxu0 %v2475
        %v3130 = vpop.f32.mrf.mxu0
        %v3131 = vadd.f32 %v2810, %v3130
        %v3132 = vpop.f32.mrf.mxu0
        %v3133 = vpop.f32.mrf.mxu0
        %v3134 = vadd.f32 %v2813, %v3133
        %v3135 = vpop.f32.mrf.mxu0
        %3136 = vmatprep.mubr.bf16.mxu0 0
        %3137 = vmatmul.mubr.bf16.gmra.mxu0 %v2478
        %v3138 = vpop.f32.mrf.mxu0
        %v3139 = vadd.f32 %v2818, %v3138
        %v3140 = vpop.f32.mrf.mxu0
        %v3141 = vpop.f32.mrf.mxu0
        %v3142 = vadd.f32 %v2821, %v3141
        %v3143 = vpop.f32.mrf.mxu0
        %3144 = vmatprep.mubr.bf16.mxu0 0
        %3145 = vmatmul.mubr.bf16.gmra.mxu0 %v2481
        %v3146 = vpop.f32.mrf.mxu0
        %v3147 = vadd.f32 %v2826, %v3146
        %v3148 = vpop.f32.mrf.mxu0
        %v3149 = vpop.f32.mrf.mxu0
        %v3150 = vadd.f32 %v2829, %v3149
        %v3151 = vpop.f32.mrf.mxu0
        %3152 = vmatprep.mubr.bf16.mxu0 0
        %3153 = vmatmul.mubr.bf16.gmra.mxu0 %v2484
        %v3154 = vpop.f32.mrf.mxu0
        %v3155 = vadd.f32 %v2834, %v3154
        %v3156 = vpop.f32.mrf.mxu0
        %v3157 = vpop.f32.mrf.mxu0
        %v3158 = vadd.f32 %v2837, %v3157
        %v3159 = vpop.f32.mrf.mxu0
        %3160 = vmatprep.mubr.bf16.mxu0 0
        %3161 = vmatmul.mubr.bf16.gmra.mxu0 %v2487
        %v3162 = vpop.f32.mrf.mxu0
        %v3163 = vadd.f32 %v2842, %v3162
        %v3164 = vpop.f32.mrf.mxu0
        %v3165 = vpop.f32.mrf.mxu0
        %v3166 = vadd.f32 %v2845, %v3165
        %v3167 = vpop.f32.mrf.mxu0
        %3168 = vmatprep.mubr.bf16.mxu0 0
        %3169 = vmatmul.mubr.bf16.gmra.mxu0 %v2490
        %v3170 = vpop.f32.mrf.mxu0
        %v3171 = vadd.f32 %v2850, %v3170
        %v3172 = vpop.f32.mrf.mxu0
        %v3173 = vpop.f32.mrf.mxu0
        %v3174 = vadd.f32 %v2853, %v3173
        %v3175 = vpop.f32.mrf.mxu0
        %3176 = vmatprep.mubr.bf16.mxu0 0
        %3177 = vmatmul.mubr.bf16.gmra.mxu0 %v2493
        %v3178 = vpop.f32.mrf.mxu0
        %v3179 = vadd.f32 %v2858, %v3178
        %v3180 = vpop.f32.mrf.mxu0
        %v3181 = vpop.f32.mrf.mxu0
        %v3182 = vadd.f32 %v2861, %v3181
        %v3183 = vpop.f32.mrf.mxu0
        %3184 = vmatprep.mubr.bf16.mxu0 0
        %3185 = vmatmul.mubr.bf16.gmra.mxu0 %v2496
        %v3186 = vpop.f32.mrf.mxu0
        %v3187 = vadd.f32 %v2866, %v3186
        %v3188 = vpop.f32.mrf.mxu0
        %v3189 = vpop.f32.mrf.mxu0
        %v3190 = vadd.f32 %v2869, %v3189
        %v3191 = vpop.f32.mrf.mxu0
        %3192 = vmatprep.mubr.bf16.mxu0 0
        %3193 = vmatmul.mubr.bf16.gmra.mxu0 %v2499
        %v3194 = vpop.f32.mrf.mxu0
        %v3195 = vadd.f32 %v2874, %v3194
        %v3196 = vpop.f32.mrf.mxu0
        %v3197 = vpop.f32.mrf.mxu0
        %v3198 = vadd.f32 %v2877, %v3197
        %v3199 = vpop.f32.mrf.mxu0
        %3200 = vmatprep.mubr.bf16.mxu0 0
        %3201 = vmatmul.mubr.bf16.gmra.mxu0 %v2502
        %v3202 = vpop.f32.mrf.mxu0
        %v3203 = vadd.f32 %v2882, %v3202
        %v3204 = vpop.f32.mrf.mxu0
        %v3205 = vpop.f32.mrf.mxu0
        %v3206 = vadd.f32 %v2885, %v3205
        %v3207 = vpop.f32.mrf.mxu0
        %3208 = vmatprep.mubr.bf16.mxu0 0
        %3209 = vmatmul.mubr.bf16.gmra.mxu0 %v2505
        %v3210 = vpop.f32.mrf.mxu0
        %v3211 = vadd.f32 %v2890, %v3210
        %v3212 = vpop.f32.mrf.mxu0
        %v3213 = vpop.f32.mrf.mxu0
        %v3214 = vadd.f32 %v2893, %v3213
        %v3215 = vpop.f32.mrf.mxu0
        %3216 = vmatprep.mubr.bf16.mxu0 0
        %3217 = vmatmul.mubr.bf16.gmra.mxu0 %v2508
        %v3218 = vpop.f32.mrf.mxu0
        %v3219 = vadd.f32 %v2898, %v3218
        %v3220 = vpop.f32.mrf.mxu0
        %v3221 = vpop.f32.mrf.mxu0
        %v3222 = vadd.f32 %v2901, %v3221
        %v3223 = vpop.f32.mrf.mxu0
        %3224 = vmatprep.mubr.bf16.mxu0 0
        %3225 = vmatmul.mubr.bf16.gmra.mxu0 %v2511
        %v3226 = vpop.f32.mrf.mxu0
        %v3227 = vadd.f32 %v2906, %v3226
        %v3228 = vpop.f32.mrf.mxu0
        %v3229 = vpop.f32.mrf.mxu0
        %v3230 = vadd.f32 %v2909, %v3229
        %v3231 = vpop.f32.mrf.mxu0
        %3232 = vmatprep.mubr.bf16.mxu0 0
        %3233 = vmatmul.mubr.bf16.gmra.mxu0 %v2514
        %v3234 = vpop.f32.mrf.mxu0
        %v3235 = vadd.f32 %v2914, %v3234
        %v3236 = vpop.f32.mrf.mxu0
        %v3237 = vpop.f32.mrf.mxu0
        %v3238 = vadd.f32 %v2917, %v3237
        %v3239 = vpop.f32.mrf.mxu0
        %3240 = vmatprep.mubr.bf16.mxu0 0
        %3241 = vmatmul.mubr.bf16.gmra.mxu0 %v2517
        %v3242 = vpop.f32.mrf.mxu0
        %v3243 = vadd.f32 %v2922, %v3242
        %v3244 = vpop.f32.mrf.mxu0
        %v3245 = vpop.f32.mrf.mxu0
        %v3246 = vadd.f32 %v2925, %v3245
        %v3247 = vpop.f32.mrf.mxu0
        %3248 = vmatprep.mubr.bf16.mxu0 0
        %3249 = vmatmul.mubr.bf16.gmra.mxu0 %v2520
        %v3250 = vpop.f32.mrf.mxu0
        %v3251 = vadd.f32 %v2930, %v3250
        %v3252 = vpop.f32.mrf.mxu0
        %v3253 = vpop.f32.mrf.mxu0
        %v3254 = vadd.f32 %v2933, %v3253
        %v3255 = vpop.f32.mrf.mxu0
        %3256 = vmatprep.mubr.bf16.mxu0 0
        %3257 = vmatmul.mubr.bf16.gmra.mxu0 %v2523
        %v3258 = vpop.f32.mrf.mxu0
        %v3259 = vadd.f32 %v2938, %v3258
        %v3260 = vpop.f32.mrf.mxu0
        %v3261 = vpop.f32.mrf.mxu0
        %v3262 = vadd.f32 %v2941, %v3261
        %v3263 = vpop.f32.mrf.mxu0
        %3264 = vmatprep.mubr.bf16.mxu0 0
        %3265 = vmatmul.mubr.bf16.gmra.mxu0 %v2526
        %v3266 = vpop.f32.mrf.mxu0
        %v3267 = vadd.f32 %v2946, %v3266
        %v3268 = vpop.f32.mrf.mxu0
        %v3269 = vpop.f32.mrf.mxu0
        %v3270 = vadd.f32 %v2949, %v3269
        %v3271 = vpop.f32.mrf.mxu0
        %3272 = vmatprep.mubr.bf16.mxu0 0
        %3273 = vmatmul.mubr.bf16.gmra.mxu0 %v2529
        %v3274 = vpop.f32.mrf.mxu0
        %v3275 = vadd.f32 %v2954, %v3274
        %v3276 = vpop.f32.mrf.mxu0
        %v3277 = vpop.f32.mrf.mxu0
        %v3278 = vadd.f32 %v2957, %v3277
        %v3279 = vpop.f32.mrf.mxu0
        %3280 = vmatprep.mubr.bf16.mxu0 0
        %3281 = vmatmul.mubr.bf16.gmra.mxu0 %v2532
        %v3282 = vpop.f32.mrf.mxu0
        %v3283 = vadd.f32 %v2962, %v3282
        %v3284 = vpop.f32.mrf.mxu0
        %v3285 = vpop.f32.mrf.mxu0
        %v3286 = vadd.f32 %v2965, %v3285
        %v3287 = vpop.f32.mrf.mxu0
        %3288 = vmatprep.mubr.bf16.mxu0 0
        %3289 = vmatmul.mubr.bf16.gmra.mxu0 %v2535
        %v3290 = vpop.f32.mrf.mxu0
        %v3291 = vadd.f32 %v2970, %v3290
        %v3292 = vpop.f32.mrf.mxu0
        %v3293 = vpop.f32.mrf.mxu0
        %v3294 = vadd.f32 %v2973, %v3293
        %v3295 = vpop.f32.mrf.mxu0
        %3296 = vmatprep.mubr.bf16.mxu0 0
        %3297 = vmatmul.mubr.bf16.gmra.mxu0 %v2538
        %v3298 = vpop.f32.mrf.mxu0
        %v3299 = vadd.f32 %v2978, %v3298
        %v3300 = vpop.f32.mrf.mxu0
        %v3301 = vpop.f32.mrf.mxu0
        %v3302 = vadd.f32 %v2981, %v3301
        %v3303 = vpop.f32.mrf.mxu0
        %3304 = vmatprep.mubr.bf16.mxu0 0
        %3305 = vmatmul.mubr.bf16.gmra.mxu0 %v2541
        %v3306 = vpop.f32.mrf.mxu0
        %v3307 = vadd.f32 %v2986, %v3306
        %v3308 = vpop.f32.mrf.mxu0
        %v3309 = vpop.f32.mrf.mxu0
        %v3310 = vadd.f32 %v2989, %v3309
        %v3311 = vpop.f32.mrf.mxu0
        %3312 = vmatprep.mubr.bf16.mxu0 0
        %3313 = vmatmul.mubr.bf16.gmra.mxu0 %v2544
        %v3314 = vpop.f32.mrf.mxu0
        %v3315 = vadd.f32 %v2994, %v3314
        %v3316 = vpop.f32.mrf.mxu0
        %v3317 = vpop.f32.mrf.mxu0
        %v3318 = vadd.f32 %v2997, %v3317
        %v3319 = vpop.f32.mrf.mxu0
        %3320 = vmatprep.mubr.bf16.mxu0 0
        %3321 = vmatmul.mubr.bf16.gmra.mxu0 %v2547
        %v3322 = vpop.f32.mrf.mxu0
        %v3323 = vadd.f32 %v3002, %v3322
        %v3324 = vpop.f32.mrf.mxu0
        %v3325 = vpop.f32.mrf.mxu0
        %v3326 = vadd.f32 %v3005, %v3325
        %v3327 = vpop.f32.mrf.mxu0
        %3328 = vmatprep.mubr.bf16.mxu0 0
        %3329 = vmatmul.mubr.bf16.gmra.mxu0 %v2550
        %v3330 = vpop.f32.mrf.mxu0
        %v3331 = vadd.f32 %v3010, %v3330
        %v3332 = vpop.f32.mrf.mxu0
        %v3333 = vpop.f32.mrf.mxu0
        %v3334 = vadd.f32 %v3013, %v3333
        %v3335 = vpop.f32.mrf.mxu0
        %3336 = vdwg.mxu0
        %v3385 = vunpack.c.l.b16 %v373
        %v3386 = vunpack.c.l.b16 %v374
        %v3387 = vunpack.c.l.b16 %v375
        %v3388 = vunpack.c.l.b16 %v376
        %v3389 = vunpack.c.l.b16 %v377
        %v3390 = vunpack.c.l.b16 %v378
        %v3391 = vunpack.c.l.b16 %v379
        %v3392 = vunpack.c.l.b16 %v380
        %v3393 = vunpack.c.l.b16 %v381
        %v3394 = vunpack.c.l.b16 %v382
        %v3395 = vunpack.c.l.b16 %v383
        %v3396 = vunpack.c.l.b16 %v384
        %v3397 = vunpack.c.l.b16 %v385
        %v3398 = vunpack.c.l.b16 %v386
        %v3399 = vunpack.c.l.b16 %v387
        %v3400 = vunpack.c.l.b16 %v388
        %v3401 = vunpack.c.l.b16 %v389
        %v3402 = vunpack.c.l.b16 %v390
        %v3403 = vunpack.c.l.b16 %v391
        %v3404 = vunpack.c.l.b16 %v392
        %v3405 = vunpack.c.l.b16 %v393
        %v3406 = vunpack.c.l.b16 %v394
        %v3407 = vunpack.c.l.b16 %v395
        %v3408 = vunpack.c.l.b16 %v396
        %v3409 = vunpack.c.l.b16 %v397
        %v3410 = vunpack.c.l.b16 %v398
        %v3411 = vunpack.c.l.b16 %v399
        %v3412 = vunpack.c.l.b16 %v400
        %v3413 = vunpack.c.l.b16 %v401
        %v3414 = vunpack.c.l.b16 %v402
        %v3415 = vunpack.c.l.b16 %v403
        %v3416 = vunpack.c.l.b16 %v404
        %v3417 = vunpack.c.l.b16 %v405
        %v3418 = vunpack.c.l.b16 %v406
        %v3419 = vunpack.c.l.b16 %v407
        %v3420 = vunpack.c.l.b16 %v408
        %v3421 = vunpack.c.l.b16 %v409
        %v3422 = vunpack.c.l.b16 %v410
        %v3423 = vunpack.c.l.b16 %v411
        %v3424 = vunpack.c.l.b16 %v412
        %v3425 = vunpack.c.l.b16 %v413
        %v3426 = vunpack.c.l.b16 %v414
        %v3427 = vunpack.c.l.b16 %v415
        %v3428 = vunpack.c.l.b16 %v416
        %v3429 = vunpack.c.l.b16 %v417
        %v3430 = vunpack.c.l.b16 %v418
        %v3431 = vunpack.c.l.b16 %v419
        %v3432 = vunpack.c.l.b16 %v420
        %v3433 = vpack.c.b16 %v3386, %v3385
        %v3434 = vpack.c.b16 %v3388, %v3387
        %v3435 = vpack.c.b16 %v3390, %v3389
        %v3436 = vpack.c.b16 %v3392, %v3391
        %v3437 = vpack.c.b16 %v3394, %v3393
        %v3438 = vpack.c.b16 %v3396, %v3395
        %v3439 = vpack.c.b16 %v3398, %v3397
        %v3440 = vpack.c.b16 %v3400, %v3399
        %v3441 = vpack.c.b16 %v3402, %v3401
        %v3442 = vpack.c.b16 %v3404, %v3403
        %v3443 = vpack.c.b16 %v3406, %v3405
        %v3444 = vpack.c.b16 %v3408, %v3407
        %v3445 = vpack.c.b16 %v3410, %v3409
        %v3446 = vpack.c.b16 %v3412, %v3411
        %v3447 = vpack.c.b16 %v3414, %v3413
        %v3448 = vpack.c.b16 %v3416, %v3415
        %v3449 = vpack.c.b16 %v3418, %v3417
        %v3450 = vpack.c.b16 %v3420, %v3419
        %v3451 = vpack.c.b16 %v3422, %v3421
        %v3452 = vpack.c.b16 %v3424, %v3423
        %v3453 = vpack.c.b16 %v3426, %v3425
        %v3454 = vpack.c.b16 %v3428, %v3427
        %v3455 = vpack.c.b16 %v3430, %v3429
        %v3456 = vpack.c.b16 %v3432, %v3431
        %3481 = vmatprep.subr.bf16.mxu0 0
        %3482 = vmatpush1.bf16.msra.mxu0 %v3440
        %3483 = vmatprep.subr.bf16.mxu0 0
        %3484 = vmatpush1.bf16.msra.mxu0 %v3439
        %3485 = vmatprep.subr.bf16.mxu0 0
        %3486 = vmatpush1.bf16.msra.mxu0 %v3438
        %3487 = vmatprep.subr.bf16.mxu0 0
        %3488 = vmatpush1.bf16.msra.mxu0 %v3437
        %3489 = vmatprep.subr.bf16.mxu0 0
        %3490 = vmatpush1.bf16.msra.mxu0 %v3436
        %3491 = vmatprep.subr.bf16.mxu0 0
        %3492 = vmatpush1.bf16.msra.mxu0 %v3435
        %3493 = vmatprep.subr.bf16.mxu0 0
        %3494 = vmatpush1.bf16.msra.mxu0 %v3434
        %3495 = vmatprep.subr.bf16.mxu0 0
        %3496 = vmatpush1.bf16.msra.mxu0 %v3433
        %3497 = vmatprep.subr.bf16.mxu0 0
        %3498 = vmatpush2.bf16.msra.mxu0 %v3448
        %3499 = vmatprep.subr.bf16.mxu0 0
        %3500 = vmatpush2.bf16.msra.mxu0 %v3447
        %3501 = vmatprep.subr.bf16.mxu0 0
        %3502 = vmatpush2.bf16.msra.mxu0 %v3446
        %3503 = vmatprep.subr.bf16.mxu0 0
        %3504 = vmatpush2.bf16.msra.mxu0 %v3445
        %3505 = vmatprep.subr.bf16.mxu0 0
        %3506 = vmatpush2.bf16.msra.mxu0 %v3444
        %3507 = vmatprep.subr.bf16.mxu0 0
        %3508 = vmatpush2.bf16.msra.mxu0 %v3443
        %3509 = vmatprep.subr.bf16.mxu0 0
        %3510 = vmatpush2.bf16.msra.mxu0 %v3442
        %3511 = vmatprep.subr.bf16.mxu0 0
        %3512 = vmatpush2.bf16.msra.mxu0 %v3441
        %3513 = vmatprep.mubr.bf16.mxu0 %v2336
        %3514 = vmatmul.mubr.bf16.gmra.mxu0 %v2335
        %v3515 = vpop.f32.mrf.mxu0
        %v3516 = vadd.f32 %v3051, %v3515
        %v3517 = vpop.f32.mrf.mxu0
        %v3518 = vpop.f32.mrf.mxu0
        %v3519 = vadd.f32 %v3054, %v3518
        %v3520 = vpop.f32.mrf.mxu0
        %3521 = vmatprep.mubr.bf16.mxu0 %v2339
        %3522 = vmatmul.mubr.bf16.gmra.mxu0 %v2338
        %v3523 = vpop.f32.mrf.mxu0
        %v3524 = vadd.f32 %v3059, %v3523
        %v3525 = vpop.f32.mrf.mxu0
        %v3526 = vpop.f32.mrf.mxu0
        %v3527 = vadd.f32 %v3062, %v3526
        %v3528 = vpop.f32.mrf.mxu0
        %3529 = vmatprep.mubr.bf16.mxu0 %v2342
        %3530 = vmatmul.mubr.bf16.gmra.mxu0 %v2341
        %v3531 = vpop.f32.mrf.mxu0
        %v3532 = vadd.f32 %v3067, %v3531
        %v3533 = vpop.f32.mrf.mxu0
        %v3534 = vpop.f32.mrf.mxu0
        %v3535 = vadd.f32 %v3070, %v3534
        %v3536 = vpop.f32.mrf.mxu0
        %3537 = vmatprep.mubr.bf16.mxu0 %v2345
        %3538 = vmatmul.mubr.bf16.gmra.mxu0 %v2344
        %v3539 = vpop.f32.mrf.mxu0
        %v3540 = vadd.f32 %v3075, %v3539
        %v3541 = vpop.f32.mrf.mxu0
        %v3542 = vpop.f32.mrf.mxu0
        %v3543 = vadd.f32 %v3078, %v3542
        %v3544 = vpop.f32.mrf.mxu0
        %3545 = vmatprep.mubr.bf16.mxu0 %v2348
        %3546 = vmatmul.mubr.bf16.gmra.mxu0 %v2347
        %v3547 = vpop.f32.mrf.mxu0
        %v3548 = vadd.f32 %v3083, %v3547
        %v3549 = vpop.f32.mrf.mxu0
        %v3550 = vpop.f32.mrf.mxu0
        %v3551 = vadd.f32 %v3086, %v3550
        %v3552 = vpop.f32.mrf.mxu0
        %3553 = vmatprep.mubr.bf16.mxu0 %v2351
        %3554 = vmatmul.mubr.bf16.gmra.mxu0 %v2350
        %v3555 = vpop.f32.mrf.mxu0
        %v3556 = vadd.f32 %v3091, %v3555
        %v3557 = vpop.f32.mrf.mxu0
        %v3558 = vpop.f32.mrf.mxu0
        %v3559 = vadd.f32 %v3094, %v3558
        %v3560 = vpop.f32.mrf.mxu0
        %3561 = vmatprep.mubr.bf16.mxu0 %v2354
        %3562 = vmatmul.mubr.bf16.gmra.mxu0 %v2353
        %v3563 = vpop.f32.mrf.mxu0
        %v3564 = vadd.f32 %v3099, %v3563
        %v3565 = vpop.f32.mrf.mxu0
        %v3566 = vpop.f32.mrf.mxu0
        %v3567 = vadd.f32 %v3102, %v3566
        %v3568 = vpop.f32.mrf.mxu0
        %3569 = vmatprep.mubr.bf16.mxu0 %v2357
        %3570 = vmatmul.mubr.bf16.gmra.mxu0 %v2356
        %v3571 = vpop.f32.mrf.mxu0
        %v3572 = vadd.f32 %v3107, %v3571
        %v3573 = vpop.f32.mrf.mxu0
        %v3574 = vpop.f32.mrf.mxu0
        %v3575 = vadd.f32 %v3110, %v3574
        %v3576 = vpop.f32.mrf.mxu0
        %3577 = vmatprep.mubr.bf16.mxu0 %v2360
        %3578 = vmatmul.mubr.bf16.gmra.mxu0 %v2359
        %v3579 = vpop.f32.mrf.mxu0
        %v3580 = vadd.f32 %v3115, %v3579
        %v3581 = vpop.f32.mrf.mxu0
        %v3582 = vpop.f32.mrf.mxu0
        %v3583 = vadd.f32 %v3118, %v3582
        %v3584 = vpop.f32.mrf.mxu0
        %3585 = vmatprep.mubr.bf16.mxu0 %v2363
        %3586 = vmatmul.mubr.bf16.gmra.mxu0 %v2362
        %v3587 = vpop.f32.mrf.mxu0
        %v3588 = vadd.f32 %v3123, %v3587
        %v3589 = vpop.f32.mrf.mxu0
        %v3590 = vpop.f32.mrf.mxu0
        %v3591 = vadd.f32 %v3126, %v3590
        %v3592 = vpop.f32.mrf.mxu0
        %3593 = vmatprep.mubr.bf16.mxu0 %v2366
        %3594 = vmatmul.mubr.bf16.gmra.mxu0 %v2365
        %v3595 = vpop.f32.mrf.mxu0
        %v3596 = vadd.f32 %v3131, %v3595
        %v3597 = vpop.f32.mrf.mxu0
        %v3598 = vpop.f32.mrf.mxu0
        %v3599 = vadd.f32 %v3134, %v3598
        %v3600 = vpop.f32.mrf.mxu0
        %3601 = vmatprep.mubr.bf16.mxu0 %v2369
        %3602 = vmatmul.mubr.bf16.gmra.mxu0 %v2368
        %v3603 = vpop.f32.mrf.mxu0
        %v3604 = vadd.f32 %v3139, %v3603
        %v3605 = vpop.f32.mrf.mxu0
        %v3606 = vpop.f32.mrf.mxu0
        %v3607 = vadd.f32 %v3142, %v3606
        %v3608 = vpop.f32.mrf.mxu0
        %3609 = vmatprep.mubr.bf16.mxu0 %v2372
        %3610 = vmatmul.mubr.bf16.gmra.mxu0 %v2371
        %v3611 = vpop.f32.mrf.mxu0
        %v3612 = vadd.f32 %v3147, %v3611
        %v3613 = vpop.f32.mrf.mxu0
        %v3614 = vpop.f32.mrf.mxu0
        %v3615 = vadd.f32 %v3150, %v3614
        %v3616 = vpop.f32.mrf.mxu0
        %3617 = vmatprep.mubr.bf16.mxu0 %v2375
        %3618 = vmatmul.mubr.bf16.gmra.mxu0 %v2374
        %v3619 = vpop.f32.mrf.mxu0
        %v3620 = vadd.f32 %v3155, %v3619
        %v3621 = vpop.f32.mrf.mxu0
        %v3622 = vpop.f32.mrf.mxu0
        %v3623 = vadd.f32 %v3158, %v3622
        %v3624 = vpop.f32.mrf.mxu0
        %3625 = vmatprep.mubr.bf16.mxu0 %v2378
        %3626 = vmatmul.mubr.bf16.gmra.mxu0 %v2377
        %v3627 = vpop.f32.mrf.mxu0
        %v3628 = vadd.f32 %v3163, %v3627
        %v3629 = vpop.f32.mrf.mxu0
        %v3630 = vpop.f32.mrf.mxu0
        %v3631 = vadd.f32 %v3166, %v3630
        %v3632 = vpop.f32.mrf.mxu0
        %3633 = vmatprep.mubr.bf16.mxu0 %v2381
        %3634 = vmatmul.mubr.bf16.gmra.mxu0 %v2380
        %v3635 = vpop.f32.mrf.mxu0
        %v3636 = vadd.f32 %v3171, %v3635
        %v3637 = vpop.f32.mrf.mxu0
        %v3638 = vpop.f32.mrf.mxu0
        %v3639 = vadd.f32 %v3174, %v3638
        %v3640 = vpop.f32.mrf.mxu0
        %3641 = vmatprep.mubr.bf16.mxu0 %v2384
        %3642 = vmatmul.mubr.bf16.gmra.mxu0 %v2383
        %v3643 = vpop.f32.mrf.mxu0
        %v3644 = vadd.f32 %v3179, %v3643
        %v3645 = vpop.f32.mrf.mxu0
        %v3646 = vpop.f32.mrf.mxu0
        %v3647 = vadd.f32 %v3182, %v3646
        %v3648 = vpop.f32.mrf.mxu0
        %3649 = vmatprep.mubr.bf16.mxu0 %v2387
        %3650 = vmatmul.mubr.bf16.gmra.mxu0 %v2386
        %v3651 = vpop.f32.mrf.mxu0
        %v3652 = vadd.f32 %v3187, %v3651
        %v3653 = vpop.f32.mrf.mxu0
        %v3654 = vpop.f32.mrf.mxu0
        %v3655 = vadd.f32 %v3190, %v3654
        %v3656 = vpop.f32.mrf.mxu0
        %3657 = vmatprep.mubr.bf16.mxu0 %v2390
        %3658 = vmatmul.mubr.bf16.gmra.mxu0 %v2389
        %v3659 = vpop.f32.mrf.mxu0
        %v3660 = vadd.f32 %v3195, %v3659
        %v3661 = vpop.f32.mrf.mxu0
        %v3662 = vpop.f32.mrf.mxu0
        %v3663 = vadd.f32 %v3198, %v3662
        %v3664 = vpop.f32.mrf.mxu0
        %3665 = vmatprep.mubr.bf16.mxu0 %v2393
        %3666 = vmatmul.mubr.bf16.gmra.mxu0 %v2392
        %v3667 = vpop.f32.mrf.mxu0
        %v3668 = vadd.f32 %v3203, %v3667
        %v3669 = vpop.f32.mrf.mxu0
        %v3670 = vpop.f32.mrf.mxu0
        %v3671 = vadd.f32 %v3206, %v3670
        %v3672 = vpop.f32.mrf.mxu0
        %3673 = vmatprep.mubr.bf16.mxu0 %v2396
        %3674 = vmatmul.mubr.bf16.gmra.mxu0 %v2395
        %v3675 = vpop.f32.mrf.mxu0
        %v3676 = vadd.f32 %v3211, %v3675
        %v3677 = vpop.f32.mrf.mxu0
        %v3678 = vpop.f32.mrf.mxu0
        %v3679 = vadd.f32 %v3214, %v3678
        %v3680 = vpop.f32.mrf.mxu0
        %3681 = vmatprep.mubr.bf16.mxu0 %v2399
        %3682 = vmatmul.mubr.bf16.gmra.mxu0 %v2398
        %v3683 = vpop.f32.mrf.mxu0
        %v3684 = vadd.f32 %v3219, %v3683
        %v3685 = vpop.f32.mrf.mxu0
        %v3686 = vpop.f32.mrf.mxu0
        %v3687 = vadd.f32 %v3222, %v3686
        %v3688 = vpop.f32.mrf.mxu0
        %3689 = vmatprep.mubr.bf16.mxu0 %v2402
        %3690 = vmatmul.mubr.bf16.gmra.mxu0 %v2401
        %v3691 = vpop.f32.mrf.mxu0
        %v3692 = vadd.f32 %v3227, %v3691
        %v3693 = vpop.f32.mrf.mxu0
        %v3694 = vpop.f32.mrf.mxu0
        %v3695 = vadd.f32 %v3230, %v3694
        %v3696 = vpop.f32.mrf.mxu0
        %3697 = vmatprep.mubr.bf16.mxu0 %v2405
        %3698 = vmatmul.mubr.bf16.gmra.mxu0 %v2404
        %v3699 = vpop.f32.mrf.mxu0
        %v3700 = vadd.f32 %v3235, %v3699
        %v3701 = vpop.f32.mrf.mxu0
        %v3702 = vpop.f32.mrf.mxu0
        %v3703 = vadd.f32 %v3238, %v3702
        %v3704 = vpop.f32.mrf.mxu0
        %3705 = vmatprep.mubr.bf16.mxu0 %v2408
        %3706 = vmatmul.mubr.bf16.gmra.mxu0 %v2407
        %v3707 = vpop.f32.mrf.mxu0
        %v3708 = vadd.f32 %v3243, %v3707
        %v3709 = vpop.f32.mrf.mxu0
        %v3710 = vpop.f32.mrf.mxu0
        %v3711 = vadd.f32 %v3246, %v3710
        %v3712 = vpop.f32.mrf.mxu0
        %3713 = vmatprep.mubr.bf16.mxu0 %v2411
        %3714 = vmatmul.mubr.bf16.gmra.mxu0 %v2410
        %v3715 = vpop.f32.mrf.mxu0
        %v3716 = vadd.f32 %v3251, %v3715
        %v3717 = vpop.f32.mrf.mxu0
        %v3718 = vpop.f32.mrf.mxu0
        %v3719 = vadd.f32 %v3254, %v3718
        %v3720 = vpop.f32.mrf.mxu0
        %3721 = vmatprep.mubr.bf16.mxu0 %v2414
        %3722 = vmatmul.mubr.bf16.gmra.mxu0 %v2413
        %v3723 = vpop.f32.mrf.mxu0
        %v3724 = vadd.f32 %v3259, %v3723
        %v3725 = vpop.f32.mrf.mxu0
        %v3726 = vpop.f32.mrf.mxu0
        %v3727 = vadd.f32 %v3262, %v3726
        %v3728 = vpop.f32.mrf.mxu0
        %3729 = vmatprep.mubr.bf16.mxu0 %v2417
        %3730 = vmatmul.mubr.bf16.gmra.mxu0 %v2416
        %v3731 = vpop.f32.mrf.mxu0
        %v3732 = vadd.f32 %v3267, %v3731
        %v3733 = vpop.f32.mrf.mxu0
        %v3734 = vpop.f32.mrf.mxu0
        %v3735 = vadd.f32 %v3270, %v3734
        %v3736 = vpop.f32.mrf.mxu0
        %3737 = vmatprep.mubr.bf16.mxu0 %v2420
        %3738 = vmatmul.mubr.bf16.gmra.mxu0 %v2419
        %v3739 = vpop.f32.mrf.mxu0
        %v3740 = vadd.f32 %v3275, %v3739
        %v3741 = vpop.f32.mrf.mxu0
        %v3742 = vpop.f32.mrf.mxu0
        %v3743 = vadd.f32 %v3278, %v3742
        %v3744 = vpop.f32.mrf.mxu0
        %3745 = vmatprep.mubr.bf16.mxu0 %v2423
        %3746 = vmatmul.mubr.bf16.gmra.mxu0 %v2422
        %v3747 = vpop.f32.mrf.mxu0
        %v3748 = vadd.f32 %v3283, %v3747
        %v3749 = vpop.f32.mrf.mxu0
        %v3750 = vpop.f32.mrf.mxu0
        %v3751 = vadd.f32 %v3286, %v3750
        %v3752 = vpop.f32.mrf.mxu0
        %3753 = vmatprep.mubr.bf16.mxu0 %v2426
        %3754 = vmatmul.mubr.bf16.gmra.mxu0 %v2425
        %v3755 = vpop.f32.mrf.mxu0
        %v3756 = vadd.f32 %v3291, %v3755
        %v3757 = vpop.f32.mrf.mxu0
        %v3758 = vpop.f32.mrf.mxu0
        %v3759 = vadd.f32 %v3294, %v3758
        %v3760 = vpop.f32.mrf.mxu0
        %3761 = vmatprep.mubr.bf16.mxu0 %v2429
        %3762 = vmatmul.mubr.bf16.gmra.mxu0 %v2428
        %v3763 = vpop.f32.mrf.mxu0
        %v3764 = vadd.f32 %v3299, %v3763
        %v3765 = vpop.f32.mrf.mxu0
        %v3766 = vpop.f32.mrf.mxu0
        %v3767 = vadd.f32 %v3302, %v3766
        %v3768 = vpop.f32.mrf.mxu0
        %3769 = vmatprep.mubr.bf16.mxu0 %v2432
        %3770 = vmatmul.mubr.bf16.gmra.mxu0 %v2431
        %v3771 = vpop.f32.mrf.mxu0
        %v3772 = vadd.f32 %v3307, %v3771
        %v3773 = vpop.f32.mrf.mxu0
        %v3774 = vpop.f32.mrf.mxu0
        %v3775 = vadd.f32 %v3310, %v3774
        %v3776 = vpop.f32.mrf.mxu0
        %3777 = vmatprep.mubr.bf16.mxu0 %v2435
        %3778 = vmatmul.mubr.bf16.gmra.mxu0 %v2434
        %v3779 = vpop.f32.mrf.mxu0
        %v3780 = vadd.f32 %v3315, %v3779
        %v3781 = vpop.f32.mrf.mxu0
        %v3782 = vpop.f32.mrf.mxu0
        %v3783 = vadd.f32 %v3318, %v3782
        %v3784 = vpop.f32.mrf.mxu0
        %3785 = vmatprep.mubr.bf16.mxu0 %v2438
        %3786 = vmatmul.mubr.bf16.gmra.mxu0 %v2437
        %v3787 = vpop.f32.mrf.mxu0
        %v3788 = vadd.f32 %v3323, %v3787
        %v3789 = vpop.f32.mrf.mxu0
        %v3790 = vpop.f32.mrf.mxu0
        %v3791 = vadd.f32 %v3326, %v3790
        %v3792 = vpop.f32.mrf.mxu0
        %3793 = vmatprep.mubr.bf16.mxu0 %v2441
        %3794 = vmatmul.mubr.bf16.gmra.mxu0 %v2440
        %v3795 = vpop.f32.mrf.mxu0
        %v3796 = vadd.f32 %v3331, %v3795
        %v3797 = vpop.f32.mrf.mxu0
        %v3798 = vpop.f32.mrf.mxu0
        %v3799 = vadd.f32 %v3334, %v3798
        %v3800 = vpop.f32.mrf.mxu0
        %3801 = vdwg.mxu0
        %3802 = vmatprep.subr.bf16.mxu0 0
        %3803 = vmatpush1.bf16.msra.mxu0 %v3456
        %3804 = vmatprep.subr.bf16.mxu0 0
        %3805 = vmatpush1.bf16.msra.mxu0 %v3455
        %3806 = vmatprep.subr.bf16.mxu0 0
        %3807 = vmatpush1.bf16.msra.mxu0 %v3454
        %3808 = vmatprep.subr.bf16.mxu0 0
        %3809 = vmatpush1.bf16.msra.mxu0 %v3453
        %3810 = vmatprep.subr.bf16.mxu0 0
        %3811 = vmatpush1.bf16.msra.mxu0 %v3452
        %3812 = vmatprep.subr.bf16.mxu0 0
        %3813 = vmatpush1.bf16.msra.mxu0 %v3451
        %3814 = vmatprep.subr.bf16.mxu0 0
        %3815 = vmatpush1.bf16.msra.mxu0 %v3450
        %3816 = vmatprep.subr.bf16.mxu0 0
        %3817 = vmatpush1.bf16.msra.mxu0 %v3449
        %3818 = vmatprep.subr.bf16.mxu0 0
        %3819 = vmatpush2.bf16.msra.mxu0 0
        %3820 = vmatprep.subr.bf16.mxu0 0
        %3821 = vmatpush2.bf16.msra.mxu0 0
        %3822 = vmatprep.subr.bf16.mxu0 0
        %3823 = vmatpush2.bf16.msra.mxu0 0
        %3824 = vmatprep.subr.bf16.mxu0 0
        %3825 = vmatpush2.bf16.msra.mxu0 0
        %3826 = vmatprep.subr.bf16.mxu0 0
        %3827 = vmatpush2.bf16.msra.mxu0 0
        %3828 = vmatprep.subr.bf16.mxu0 0
        %3829 = vmatpush2.bf16.msra.mxu0 0
        %3830 = vmatprep.subr.bf16.mxu0 0
        %3831 = vmatpush2.bf16.msra.mxu0 0
        %3832 = vmatprep.subr.bf16.mxu0 0
        %3833 = vmatpush2.bf16.msra.mxu0 0
        %3834 = vmatprep.mubr.bf16.mxu0 0
        %3835 = vmatmul.mubr.bf16.gmra.mxu0 %v2337
        %v3836 = vpop.f32.mrf.mxu0
        %v3837 = vadd.f32 %v3516, %v3836
        %v3838 = vpop.f32.mrf.mxu0
        %v3839 = vpop.f32.mrf.mxu0
        %v3840 = vadd.f32 %v3519, %v3839
        %v3841 = vpop.f32.mrf.mxu0
        %3842 = vmatprep.mubr.bf16.mxu0 0
        %3843 = vmatmul.mubr.bf16.gmra.mxu0 %v2340
        %v3844 = vpop.f32.mrf.mxu0
        %v3845 = vadd.f32 %v3524, %v3844
        %v3846 = vpop.f32.mrf.mxu0
        %v3847 = vpop.f32.mrf.mxu0
        %v3848 = vadd.f32 %v3527, %v3847
        %v3849 = vpop.f32.mrf.mxu0
        %3850 = vmatprep.mubr.bf16.mxu0 0
        %3851 = vmatmul.mubr.bf16.gmra.mxu0 %v2343
        %v3852 = vpop.f32.mrf.mxu0
        %v3853 = vadd.f32 %v3532, %v3852
        %v3854 = vpop.f32.mrf.mxu0
        %v3855 = vpop.f32.mrf.mxu0
        %v3856 = vadd.f32 %v3535, %v3855
        %v3857 = vpop.f32.mrf.mxu0
        %3858 = vmatprep.mubr.bf16.mxu0 0
        %3859 = vmatmul.mubr.bf16.gmra.mxu0 %v2346
        %v3860 = vpop.f32.mrf.mxu0
        %v3861 = vadd.f32 %v3540, %v3860
        %v3862 = vpop.f32.mrf.mxu0
        %v3863 = vpop.f32.mrf.mxu0
        %v3864 = vadd.f32 %v3543, %v3863
        %v3865 = vpop.f32.mrf.mxu0
        %3866 = vmatprep.mubr.bf16.mxu0 0
        %3867 = vmatmul.mubr.bf16.gmra.mxu0 %v2349
        %v3868 = vpop.f32.mrf.mxu0
        %v3869 = vadd.f32 %v3548, %v3868
        %v3870 = vpop.f32.mrf.mxu0
        %v3871 = vpop.f32.mrf.mxu0
        %v3872 = vadd.f32 %v3551, %v3871
        %v3873 = vpop.f32.mrf.mxu0
        %3874 = vmatprep.mubr.bf16.mxu0 0
        %3875 = vmatmul.mubr.bf16.gmra.mxu0 %v2352
        %v3876 = vpop.f32.mrf.mxu0
        %v3877 = vadd.f32 %v3556, %v3876
        %v3878 = vpop.f32.mrf.mxu0
        %v3879 = vpop.f32.mrf.mxu0
        %v3880 = vadd.f32 %v3559, %v3879
        %v3881 = vpop.f32.mrf.mxu0
        %3882 = vmatprep.mubr.bf16.mxu0 0
        %3883 = vmatmul.mubr.bf16.gmra.mxu0 %v2355
        %v3884 = vpop.f32.mrf.mxu0
        %v3885 = vadd.f32 %v3564, %v3884
        %v3886 = vpop.f32.mrf.mxu0
        %v3887 = vpop.f32.mrf.mxu0
        %v3888 = vadd.f32 %v3567, %v3887
        %v3889 = vpop.f32.mrf.mxu0
        %3890 = vmatprep.mubr.bf16.mxu0 0
        %3891 = vmatmul.mubr.bf16.gmra.mxu0 %v2358
        %v3892 = vpop.f32.mrf.mxu0
        %v3893 = vadd.f32 %v3572, %v3892
        %v3894 = vpop.f32.mrf.mxu0
        %v3895 = vpop.f32.mrf.mxu0
        %v3896 = vadd.f32 %v3575, %v3895
        %v3897 = vpop.f32.mrf.mxu0
        %3898 = vmatprep.mubr.bf16.mxu0 0
        %3899 = vmatmul.mubr.bf16.gmra.mxu0 %v2361
        %v3900 = vpop.f32.mrf.mxu0
        %v3901 = vadd.f32 %v3580, %v3900
        %v3902 = vpop.f32.mrf.mxu0
        %v3903 = vpop.f32.mrf.mxu0
        %v3904 = vadd.f32 %v3583, %v3903
        %v3905 = vpop.f32.mrf.mxu0
        %3906 = vmatprep.mubr.bf16.mxu0 0
        %3907 = vmatmul.mubr.bf16.gmra.mxu0 %v2364
        %v3908 = vpop.f32.mrf.mxu0
        %v3909 = vadd.f32 %v3588, %v3908
        %v3910 = vpop.f32.mrf.mxu0
        %v3911 = vpop.f32.mrf.mxu0
        %v3912 = vadd.f32 %v3591, %v3911
        %v3913 = vpop.f32.mrf.mxu0
        %3914 = vmatprep.mubr.bf16.mxu0 0
        %3915 = vmatmul.mubr.bf16.gmra.mxu0 %v2367
        %v3916 = vpop.f32.mrf.mxu0
        %v3917 = vadd.f32 %v3596, %v3916
        %v3918 = vpop.f32.mrf.mxu0
        %v3919 = vpop.f32.mrf.mxu0
        %v3920 = vadd.f32 %v3599, %v3919
        %v3921 = vpop.f32.mrf.mxu0
        %3922 = vmatprep.mubr.bf16.mxu0 0
        %3923 = vmatmul.mubr.bf16.gmra.mxu0 %v2370
        %v3924 = vpop.f32.mrf.mxu0
        %v3925 = vadd.f32 %v3604, %v3924
        %v3926 = vpop.f32.mrf.mxu0
        %v3927 = vpop.f32.mrf.mxu0
        %v3928 = vadd.f32 %v3607, %v3927
        %v3929 = vpop.f32.mrf.mxu0
        %3930 = vmatprep.mubr.bf16.mxu0 0
        %3931 = vmatmul.mubr.bf16.gmra.mxu0 %v2373
        %v3932 = vpop.f32.mrf.mxu0
        %v3933 = vadd.f32 %v3612, %v3932
        %v3934 = vpop.f32.mrf.mxu0
        %v3935 = vpop.f32.mrf.mxu0
        %v3936 = vadd.f32 %v3615, %v3935
        %v3937 = vpop.f32.mrf.mxu0
        %3938 = vmatprep.mubr.bf16.mxu0 0
        %3939 = vmatmul.mubr.bf16.gmra.mxu0 %v2376
        %v3940 = vpop.f32.mrf.mxu0
        %v3941 = vadd.f32 %v3620, %v3940
        %v3942 = vpop.f32.mrf.mxu0
        %v3943 = vpop.f32.mrf.mxu0
        %v3944 = vadd.f32 %v3623, %v3943
        %v3945 = vpop.f32.mrf.mxu0
        %3946 = vmatprep.mubr.bf16.mxu0 0
        %3947 = vmatmul.mubr.bf16.gmra.mxu0 %v2379
        %v3948 = vpop.f32.mrf.mxu0
        %v3949 = vadd.f32 %v3628, %v3948
        %v3950 = vpop.f32.mrf.mxu0
        %v3951 = vpop.f32.mrf.mxu0
        %v3952 = vadd.f32 %v3631, %v3951
        %v3953 = vpop.f32.mrf.mxu0
        %3954 = vmatprep.mubr.bf16.mxu0 0
        %3955 = vmatmul.mubr.bf16.gmra.mxu0 %v2382
        %v3956 = vpop.f32.mrf.mxu0
        %v3957 = vadd.f32 %v3636, %v3956
        %v3958 = vpop.f32.mrf.mxu0
        %v3959 = vpop.f32.mrf.mxu0
        %v3960 = vadd.f32 %v3639, %v3959
        %v3961 = vpop.f32.mrf.mxu0
        %3962 = vmatprep.mubr.bf16.mxu0 0
        %3963 = vmatmul.mubr.bf16.gmra.mxu0 %v2385
        %v3964 = vpop.f32.mrf.mxu0
        %v3965 = vadd.f32 %v3644, %v3964
        %v3966 = vpop.f32.mrf.mxu0
        %v3967 = vpop.f32.mrf.mxu0
        %v3968 = vadd.f32 %v3647, %v3967
        %v3969 = vpop.f32.mrf.mxu0
        %3970 = vmatprep.mubr.bf16.mxu0 0
        %3971 = vmatmul.mubr.bf16.gmra.mxu0 %v2388
        %v3972 = vpop.f32.mrf.mxu0
        %v3973 = vadd.f32 %v3652, %v3972
        %v3974 = vpop.f32.mrf.mxu0
        %v3975 = vpop.f32.mrf.mxu0
        %v3976 = vadd.f32 %v3655, %v3975
        %v3977 = vpop.f32.mrf.mxu0
        %3978 = vmatprep.mubr.bf16.mxu0 0
        %3979 = vmatmul.mubr.bf16.gmra.mxu0 %v2391
        %v3980 = vpop.f32.mrf.mxu0
        %v3981 = vadd.f32 %v3660, %v3980
        %v3982 = vpop.f32.mrf.mxu0
        %v3983 = vpop.f32.mrf.mxu0
        %v3984 = vadd.f32 %v3663, %v3983
        %v3985 = vpop.f32.mrf.mxu0
        %3986 = vmatprep.mubr.bf16.mxu0 0
        %3987 = vmatmul.mubr.bf16.gmra.mxu0 %v2394
        %v3988 = vpop.f32.mrf.mxu0
        %v3989 = vadd.f32 %v3668, %v3988
        %v3990 = vpop.f32.mrf.mxu0
        %v3991 = vpop.f32.mrf.mxu0
        %v3992 = vadd.f32 %v3671, %v3991
        %v3993 = vpop.f32.mrf.mxu0
        %3994 = vmatprep.mubr.bf16.mxu0 0
        %3995 = vmatmul.mubr.bf16.gmra.mxu0 %v2397
        %v3996 = vpop.f32.mrf.mxu0
        %v3997 = vadd.f32 %v3676, %v3996
        %v3998 = vpop.f32.mrf.mxu0
        %v3999 = vpop.f32.mrf.mxu0
        %v4000 = vadd.f32 %v3679, %v3999
        %v4001 = vpop.f32.mrf.mxu0
        %4002 = vmatprep.mubr.bf16.mxu0 0
        %4003 = vmatmul.mubr.bf16.gmra.mxu0 %v2400
        %v4004 = vpop.f32.mrf.mxu0
        %v4005 = vadd.f32 %v3684, %v4004
        %v4006 = vpop.f32.mrf.mxu0
        %v4007 = vpop.f32.mrf.mxu0
        %v4008 = vadd.f32 %v3687, %v4007
        %v4009 = vpop.f32.mrf.mxu0
        %4010 = vmatprep.mubr.bf16.mxu0 0
        %4011 = vmatmul.mubr.bf16.gmra.mxu0 %v2403
        %v4012 = vpop.f32.mrf.mxu0
        %v4013 = vadd.f32 %v3692, %v4012
        %v4014 = vpop.f32.mrf.mxu0
        %v4015 = vpop.f32.mrf.mxu0
        %v4016 = vadd.f32 %v3695, %v4015
        %v4017 = vpop.f32.mrf.mxu0
        %4018 = vmatprep.mubr.bf16.mxu0 0
        %4019 = vmatmul.mubr.bf16.gmra.mxu0 %v2406
        %v4020 = vpop.f32.mrf.mxu0
        %v4021 = vadd.f32 %v3700, %v4020
        %v4022 = vpop.f32.mrf.mxu0
        %v4023 = vpop.f32.mrf.mxu0
        %v4024 = vadd.f32 %v3703, %v4023
        %v4025 = vpop.f32.mrf.mxu0
        %4026 = vmatprep.mubr.bf16.mxu0 0
        %4027 = vmatmul.mubr.bf16.gmra.mxu0 %v2409
        %v4028 = vpop.f32.mrf.mxu0
        %v4029 = vadd.f32 %v3708, %v4028
        %v4030 = vpop.f32.mrf.mxu0
        %v4031 = vpop.f32.mrf.mxu0
        %v4032 = vadd.f32 %v3711, %v4031
        %v4033 = vpop.f32.mrf.mxu0
        %4034 = vmatprep.mubr.bf16.mxu0 0
        %4035 = vmatmul.mubr.bf16.gmra.mxu0 %v2412
        %v4036 = vpop.f32.mrf.mxu0
        %v4037 = vadd.f32 %v3716, %v4036
        %v4038 = vpop.f32.mrf.mxu0
        %v4039 = vpop.f32.mrf.mxu0
        %v4040 = vadd.f32 %v3719, %v4039
        %v4041 = vpop.f32.mrf.mxu0
        %4042 = vmatprep.mubr.bf16.mxu0 0
        %4043 = vmatmul.mubr.bf16.gmra.mxu0 %v2415
        %v4044 = vpop.f32.mrf.mxu0
        %v4045 = vadd.f32 %v3724, %v4044
        %v4046 = vpop.f32.mrf.mxu0
        %v4047 = vpop.f32.mrf.mxu0
        %v4048 = vadd.f32 %v3727, %v4047
        %v4049 = vpop.f32.mrf.mxu0
        %4050 = vmatprep.mubr.bf16.mxu0 0
        %4051 = vmatmul.mubr.bf16.gmra.mxu0 %v2418
        %v4052 = vpop.f32.mrf.mxu0
        %v4053 = vadd.f32 %v3732, %v4052
        %v4054 = vpop.f32.mrf.mxu0
        %v4055 = vpop.f32.mrf.mxu0
        %v4056 = vadd.f32 %v3735, %v4055
        %v4057 = vpop.f32.mrf.mxu0
        %4058 = vmatprep.mubr.bf16.mxu0 0
        %4059 = vmatmul.mubr.bf16.gmra.mxu0 %v2421
        %v4060 = vpop.f32.mrf.mxu0
        %v4061 = vadd.f32 %v3740, %v4060
        %v4062 = vpop.f32.mrf.mxu0
        %v4063 = vpop.f32.mrf.mxu0
        %v4064 = vadd.f32 %v3743, %v4063
        %v4065 = vpop.f32.mrf.mxu0
        %4066 = vmatprep.mubr.bf16.mxu0 0
        %4067 = vmatmul.mubr.bf16.gmra.mxu0 %v2424
        %v4068 = vpop.f32.mrf.mxu0
        %v4069 = vadd.f32 %v3748, %v4068
        %v4070 = vpop.f32.mrf.mxu0
        %v4071 = vpop.f32.mrf.mxu0
        %v4072 = vadd.f32 %v3751, %v4071
        %v4073 = vpop.f32.mrf.mxu0
        %4074 = vmatprep.mubr.bf16.mxu0 0
        %4075 = vmatmul.mubr.bf16.gmra.mxu0 %v2427
        %v4076 = vpop.f32.mrf.mxu0
        %v4077 = vadd.f32 %v3756, %v4076
        %v4078 = vpop.f32.mrf.mxu0
        %v4079 = vpop.f32.mrf.mxu0
        %v4080 = vadd.f32 %v3759, %v4079
        %v4081 = vpop.f32.mrf.mxu0
        %4082 = vmatprep.mubr.bf16.mxu0 0
        %4083 = vmatmul.mubr.bf16.gmra.mxu0 %v2430
        %v4084 = vpop.f32.mrf.mxu0
        %v4085 = vadd.f32 %v3764, %v4084
        %v4086 = vpop.f32.mrf.mxu0
        %v4087 = vpop.f32.mrf.mxu0
        %v4088 = vadd.f32 %v3767, %v4087
        %v4089 = vpop.f32.mrf.mxu0
        %4090 = vmatprep.mubr.bf16.mxu0 0
        %4091 = vmatmul.mubr.bf16.gmra.mxu0 %v2433
        %v4092 = vpop.f32.mrf.mxu0
        %v4093 = vadd.f32 %v3772, %v4092
        %v4094 = vpop.f32.mrf.mxu0
        %v4095 = vpop.f32.mrf.mxu0
        %v4096 = vadd.f32 %v3775, %v4095
        %v4097 = vpop.f32.mrf.mxu0
        %4098 = vmatprep.mubr.bf16.mxu0 0
        %4099 = vmatmul.mubr.bf16.gmra.mxu0 %v2436
        %v4100 = vpop.f32.mrf.mxu0
        %v4101 = vadd.f32 %v3780, %v4100
        %v4102 = vpop.f32.mrf.mxu0
        %v4103 = vpop.f32.mrf.mxu0
        %v4104 = vadd.f32 %v3783, %v4103
        %v4105 = vpop.f32.mrf.mxu0
        %4106 = vmatprep.mubr.bf16.mxu0 0
        %4107 = vmatmul.mubr.bf16.gmra.mxu0 %v2439
        %v4108 = vpop.f32.mrf.mxu0
        %v4109 = vadd.f32 %v3788, %v4108
        %v4110 = vpop.f32.mrf.mxu0
        %v4111 = vpop.f32.mrf.mxu0
        %v4112 = vadd.f32 %v3791, %v4111
        %v4113 = vpop.f32.mrf.mxu0
        %4114 = vmatprep.mubr.bf16.mxu0 0
        %4115 = vmatmul.mubr.bf16.gmra.mxu0 %v2442
        %v4116 = vpop.f32.mrf.mxu0
        %v4117 = vadd.f32 %v3796, %v4116
        %v4118 = vpop.f32.mrf.mxu0
        %v4119 = vpop.f32.mrf.mxu0
        %v4120 = vadd.f32 %v3799, %v4119
        %v4121 = vpop.f32.mrf.mxu0
        %4122 = vdwg.mxu0
        %v4123 = vpack.c.bf16 %v1848, %v1847
        %v4124 = vpack.c.bf16 %v1273, %v1272
        %v4125 = vpack.c.bf16 %v2247, %v2245
        %v4126 = vpack.c.bf16 %v1850, %v1849
        %v4127 = vpack.c.bf16 %v1385, %v1274
        %v4128 = vpack.c.bf16 %v2252, %v2249
        %v4129 = vpack.c.bf16 %v1852, %v1851
        %v4130 = vpack.c.bf16 %v1387, %v1386
        %v4131 = vpack.c.bf16 %v2256, %v2254
        %v4180 = vunpack.c.l.b16 %v469
        %v4181 = vunpack.c.l.b16 %v470
        %v4182 = vunpack.c.l.b16 %v471
        %v4183 = vunpack.c.l.b16 %v472
        %v4184 = vunpack.c.l.b16 %v473
        %v4185 = vunpack.c.l.b16 %v474
        %v4186 = vunpack.c.l.b16 %v475
        %v4187 = vunpack.c.l.b16 %v476
        %v4188 = vunpack.c.l.b16 %v477
        %v4189 = vunpack.c.l.b16 %v478
        %v4190 = vunpack.c.l.b16 %v479
        %v4191 = vunpack.c.l.b16 %v480
        %v4192 = vunpack.c.l.b16 %v481
        %v4193 = vunpack.c.l.b16 %v482
        %v4194 = vunpack.c.l.b16 %v483
        %v4195 = vunpack.c.l.b16 %v484
        %v4196 = vunpack.c.l.b16 %v485
        %v4197 = vunpack.c.l.b16 %v486
        %v4198 = vunpack.c.l.b16 %v487
        %v4199 = vunpack.c.l.b16 %v488
        %v4200 = vunpack.c.l.b16 %v489
        %v4201 = vunpack.c.l.b16 %v490
        %v4202 = vunpack.c.l.b16 %v491
        %v4203 = vunpack.c.l.b16 %v492
        %v4204 = vunpack.c.l.b16 %v493
        %v4205 = vunpack.c.l.b16 %v494
        %v4206 = vunpack.c.l.b16 %v495
        %v4207 = vunpack.c.l.b16 %v496
        %v4208 = vunpack.c.l.b16 %v497
        %v4209 = vunpack.c.l.b16 %v498
        %v4210 = vunpack.c.l.b16 %v499
        %v4211 = vunpack.c.l.b16 %v500
        %v4212 = vunpack.c.l.b16 %v501
        %v4213 = vunpack.c.l.b16 %v502
        %v4214 = vunpack.c.l.b16 %v503
        %v4215 = vunpack.c.l.b16 %v504
        %v4216 = vunpack.c.l.b16 %v505
        %v4217 = vunpack.c.l.b16 %v506
        %v4218 = vunpack.c.l.b16 %v507
        %v4219 = vunpack.c.l.b16 %v508
        %v4220 = vunpack.c.l.b16 %v509
        %v4221 = vunpack.c.l.b16 %v510
        %v4222 = vunpack.c.l.b16 %v511
        %v4223 = vunpack.c.l.b16 %v512
        %v4224 = vunpack.c.l.b16 %v513
        %v4225 = vunpack.c.l.b16 %v514
        %v4226 = vunpack.c.l.b16 %v515
        %v4227 = vunpack.c.l.b16 %v516
        %v4228 = vpack.c.b16 %v4181, %v4180
        %v4229 = vpack.c.b16 %v4183, %v4182
        %v4230 = vpack.c.b16 %v4185, %v4184
        %v4231 = vpack.c.b16 %v4187, %v4186
        %v4232 = vpack.c.b16 %v4189, %v4188
        %v4233 = vpack.c.b16 %v4191, %v4190
        %v4234 = vpack.c.b16 %v4193, %v4192
        %v4235 = vpack.c.b16 %v4195, %v4194
        %v4236 = vpack.c.b16 %v4197, %v4196
        %v4237 = vpack.c.b16 %v4199, %v4198
        %v4238 = vpack.c.b16 %v4201, %v4200
        %v4239 = vpack.c.b16 %v4203, %v4202
        %v4240 = vpack.c.b16 %v4205, %v4204
        %v4241 = vpack.c.b16 %v4207, %v4206
        %v4242 = vpack.c.b16 %v4209, %v4208
        %v4243 = vpack.c.b16 %v4211, %v4210
        %v4244 = vpack.c.b16 %v4213, %v4212
        %v4245 = vpack.c.b16 %v4215, %v4214
        %v4246 = vpack.c.b16 %v4217, %v4216
        %v4247 = vpack.c.b16 %v4219, %v4218
        %v4248 = vpack.c.b16 %v4221, %v4220
        %v4249 = vpack.c.b16 %v4223, %v4222
        %v4250 = vpack.c.b16 %v4225, %v4224
        %v4251 = vpack.c.b16 %v4227, %v4226
        %4276 = vmatprep.subr.bf16.mxu0 0
        %4277 = vmatpush1.bf16.msra.mxu0 %v4235
        %4278 = vmatprep.subr.bf16.mxu0 0
        %4279 = vmatpush1.bf16.msra.mxu0 %v4234
        %4280 = vmatprep.subr.bf16.mxu0 0
        %4281 = vmatpush1.bf16.msra.mxu0 %v4233
        %4282 = vmatprep.subr.bf16.mxu0 0
        %4283 = vmatpush1.bf16.msra.mxu0 %v4232
        %4284 = vmatprep.subr.bf16.mxu0 0
        %4285 = vmatpush1.bf16.msra.mxu0 %v4231
        %4286 = vmatprep.subr.bf16.mxu0 0
        %4287 = vmatpush1.bf16.msra.mxu0 %v4230
        %4288 = vmatprep.subr.bf16.mxu0 0
        %4289 = vmatpush1.bf16.msra.mxu0 %v4229
        %4290 = vmatprep.subr.bf16.mxu0 0
        %4291 = vmatpush1.bf16.msra.mxu0 %v4228
        %4292 = vmatprep.subr.bf16.mxu0 0
        %4293 = vmatpush2.bf16.msra.mxu0 %v4243
        %4294 = vmatprep.subr.bf16.mxu0 0
        %4295 = vmatpush2.bf16.msra.mxu0 %v4242
        %4296 = vmatprep.subr.bf16.mxu0 0
        %4297 = vmatpush2.bf16.msra.mxu0 %v4241
        %4298 = vmatprep.subr.bf16.mxu0 0
        %4299 = vmatpush2.bf16.msra.mxu0 %v4240
        %4300 = vmatprep.subr.bf16.mxu0 0
        %4301 = vmatpush2.bf16.msra.mxu0 %v4239
        %4302 = vmatprep.subr.bf16.mxu0 0
        %4303 = vmatpush2.bf16.msra.mxu0 %v4238
        %4304 = vmatprep.subr.bf16.mxu0 0
        %4305 = vmatpush2.bf16.msra.mxu0 %v4237
        %4306 = vmatprep.subr.bf16.mxu0 0
        %4307 = vmatpush2.bf16.msra.mxu0 %v4236
        %4308 = vmatprep.mubr.bf16.mxu0 %v2345
        %4309 = vmatmul.mubr.bf16.gmra.mxu0 %v2344
        %v4310 = vpop.f32.mrf.mxu0
        %v4311 = vadd.f32 0.0, %v4310
        %v4312 = vpop.f32.mrf.mxu0
        %v4313 = vpop.f32.mrf.mxu0
        %v4314 = vadd.f32 0.0, %v4313
        %v4315 = vpop.f32.mrf.mxu0
        %4316 = vmatprep.mubr.bf16.mxu0 %v2348
        %4317 = vmatmul.mubr.bf16.gmra.mxu0 %v2347
        %v4318 = vpop.f32.mrf.mxu0
        %v4319 = vadd.f32 0.0, %v4318
        %v4320 = vpop.f32.mrf.mxu0
        %v4321 = vpop.f32.mrf.mxu0
        %v4322 = vadd.f32 0.0, %v4321
        %v4323 = vpop.f32.mrf.mxu0
        %4324 = vmatprep.mubr.bf16.mxu0 %v2351
        %4325 = vmatmul.mubr.bf16.gmra.mxu0 %v2350
        %v4326 = vpop.f32.mrf.mxu0
        %v4327 = vadd.f32 0.0, %v4326
        %v4328 = vpop.f32.mrf.mxu0
        %v4329 = vpop.f32.mrf.mxu0
        %v4330 = vadd.f32 0.0, %v4329
        %v4331 = vpop.f32.mrf.mxu0
        %4332 = vmatprep.mubr.bf16.mxu0 %v2354
        %4333 = vmatmul.mubr.bf16.gmra.mxu0 %v2353
        %v4334 = vpop.f32.mrf.mxu0
        %v4335 = vadd.f32 0.0, %v4334
        %v4336 = vpop.f32.mrf.mxu0
        %v4337 = vpop.f32.mrf.mxu0
        %v4338 = vadd.f32 0.0, %v4337
        %v4339 = vpop.f32.mrf.mxu0
        %4340 = vmatprep.mubr.bf16.mxu0 %v2357
        %4341 = vmatmul.mubr.bf16.gmra.mxu0 %v2356
        %v4342 = vpop.f32.mrf.mxu0
        %v4343 = vadd.f32 0.0, %v4342
        %v4344 = vpop.f32.mrf.mxu0
        %v4345 = vpop.f32.mrf.mxu0
        %v4346 = vadd.f32 0.0, %v4345
        %v4347 = vpop.f32.mrf.mxu0
        %4348 = vmatprep.mubr.bf16.mxu0 %v2360
        %4349 = vmatmul.mubr.bf16.gmra.mxu0 %v2359
        %v4350 = vpop.f32.mrf.mxu0
        %v4351 = vadd.f32 0.0, %v4350
        %v4352 = vpop.f32.mrf.mxu0
        %v4353 = vpop.f32.mrf.mxu0
        %v4354 = vadd.f32 0.0, %v4353
        %v4355 = vpop.f32.mrf.mxu0
        %4356 = vmatprep.mubr.bf16.mxu0 %v2363
        %4357 = vmatmul.mubr.bf16.gmra.mxu0 %v2362
        %v4358 = vpop.f32.mrf.mxu0
        %v4359 = vadd.f32 0.0, %v4358
        %v4360 = vpop.f32.mrf.mxu0
        %v4361 = vpop.f32.mrf.mxu0
        %v4362 = vadd.f32 0.0, %v4361
        %v4363 = vpop.f32.mrf.mxu0
        %4364 = vmatprep.mubr.bf16.mxu0 %v2366
        %4365 = vmatmul.mubr.bf16.gmra.mxu0 %v2365
        %v4366 = vpop.f32.mrf.mxu0
        %v4367 = vadd.f32 0.0, %v4366
        %v4368 = vpop.f32.mrf.mxu0
        %v4369 = vpop.f32.mrf.mxu0
        %v4370 = vadd.f32 0.0, %v4369
        %v4371 = vpop.f32.mrf.mxu0
        %4372 = vmatprep.mubr.bf16.mxu0 %v2369
        %4373 = vmatmul.mubr.bf16.gmra.mxu0 %v2368
        %v4374 = vpop.f32.mrf.mxu0
        %v4375 = vadd.f32 0.0, %v4374
        %v4376 = vpop.f32.mrf.mxu0
        %v4377 = vpop.f32.mrf.mxu0
        %v4378 = vadd.f32 0.0, %v4377
        %v4379 = vpop.f32.mrf.mxu0
        %4380 = vmatprep.mubr.bf16.mxu0 %v2372
        %4381 = vmatmul.mubr.bf16.gmra.mxu0 %v2371
        %v4382 = vpop.f32.mrf.mxu0
        %v4383 = vadd.f32 0.0, %v4382
        %v4384 = vpop.f32.mrf.mxu0
        %v4385 = vpop.f32.mrf.mxu0
        %v4386 = vadd.f32 0.0, %v4385
        %v4387 = vpop.f32.mrf.mxu0
        %4388 = vmatprep.mubr.bf16.mxu0 %v2375
        %4389 = vmatmul.mubr.bf16.gmra.mxu0 %v2374
        %v4390 = vpop.f32.mrf.mxu0
        %v4391 = vadd.f32 0.0, %v4390
        %v4392 = vpop.f32.mrf.mxu0
        %v4393 = vpop.f32.mrf.mxu0
        %v4394 = vadd.f32 0.0, %v4393
        %v4395 = vpop.f32.mrf.mxu0
        %4396 = vmatprep.mubr.bf16.mxu0 %v2378
        %4397 = vmatmul.mubr.bf16.gmra.mxu0 %v2377
        %v4398 = vpop.f32.mrf.mxu0
        %v4399 = vadd.f32 0.0, %v4398
        %v4400 = vpop.f32.mrf.mxu0
        %v4401 = vpop.f32.mrf.mxu0
        %v4402 = vadd.f32 0.0, %v4401
        %v4403 = vpop.f32.mrf.mxu0
        %4404 = vmatprep.mubr.bf16.mxu0 %v2381
        %4405 = vmatmul.mubr.bf16.gmra.mxu0 %v2380
        %v4406 = vpop.f32.mrf.mxu0
        %v4407 = vadd.f32 0.0, %v4406
        %v4408 = vpop.f32.mrf.mxu0
        %v4409 = vpop.f32.mrf.mxu0
        %v4410 = vadd.f32 0.0, %v4409
        %v4411 = vpop.f32.mrf.mxu0
        %4412 = vmatprep.mubr.bf16.mxu0 %v2384
        %4413 = vmatmul.mubr.bf16.gmra.mxu0 %v2383
        %v4414 = vpop.f32.mrf.mxu0
        %v4415 = vadd.f32 0.0, %v4414
        %v4416 = vpop.f32.mrf.mxu0
        %v4417 = vpop.f32.mrf.mxu0
        %v4418 = vadd.f32 0.0, %v4417
        %v4419 = vpop.f32.mrf.mxu0
        %4420 = vmatprep.mubr.bf16.mxu0 %v2387
        %4421 = vmatmul.mubr.bf16.gmra.mxu0 %v2386
        %v4422 = vpop.f32.mrf.mxu0
        %v4423 = vadd.f32 0.0, %v4422
        %v4424 = vpop.f32.mrf.mxu0
        %v4425 = vpop.f32.mrf.mxu0
        %v4426 = vadd.f32 0.0, %v4425
        %v4427 = vpop.f32.mrf.mxu0
        %4428 = vmatprep.mubr.bf16.mxu0 %v2390
        %4429 = vmatmul.mubr.bf16.gmra.mxu0 %v2389
        %v4430 = vpop.f32.mrf.mxu0
        %v4431 = vadd.f32 0.0, %v4430
        %v4432 = vpop.f32.mrf.mxu0
        %v4433 = vpop.f32.mrf.mxu0
        %v4434 = vadd.f32 0.0, %v4433
        %v4435 = vpop.f32.mrf.mxu0
        %4436 = vmatprep.mubr.bf16.mxu0 %v2393
        %4437 = vmatmul.mubr.bf16.gmra.mxu0 %v2392
        %v4438 = vpop.f32.mrf.mxu0
        %v4439 = vadd.f32 0.0, %v4438
        %v4440 = vpop.f32.mrf.mxu0
        %v4441 = vpop.f32.mrf.mxu0
        %v4442 = vadd.f32 0.0, %v4441
        %v4443 = vpop.f32.mrf.mxu0
        %4444 = vmatprep.mubr.bf16.mxu0 %v2396
        %4445 = vmatmul.mubr.bf16.gmra.mxu0 %v2395
        %v4446 = vpop.f32.mrf.mxu0
        %v4447 = vadd.f32 0.0, %v4446
        %v4448 = vpop.f32.mrf.mxu0
        %v4449 = vpop.f32.mrf.mxu0
        %v4450 = vadd.f32 0.0, %v4449
        %v4451 = vpop.f32.mrf.mxu0
        %4452 = vmatprep.mubr.bf16.mxu0 %v2399
        %4453 = vmatmul.mubr.bf16.gmra.mxu0 %v2398
        %v4454 = vpop.f32.mrf.mxu0
        %v4455 = vadd.f32 0.0, %v4454
        %v4456 = vpop.f32.mrf.mxu0
        %v4457 = vpop.f32.mrf.mxu0
        %v4458 = vadd.f32 0.0, %v4457
        %v4459 = vpop.f32.mrf.mxu0
        %4460 = vmatprep.mubr.bf16.mxu0 %v2402
        %4461 = vmatmul.mubr.bf16.gmra.mxu0 %v2401
        %v4462 = vpop.f32.mrf.mxu0
        %v4463 = vadd.f32 0.0, %v4462
        %v4464 = vpop.f32.mrf.mxu0
        %v4465 = vpop.f32.mrf.mxu0
        %v4466 = vadd.f32 0.0, %v4465
        %v4467 = vpop.f32.mrf.mxu0
        %4468 = vmatprep.mubr.bf16.mxu0 %v2405
        %4469 = vmatmul.mubr.bf16.gmra.mxu0 %v2404
        %v4470 = vpop.f32.mrf.mxu0
        %v4471 = vadd.f32 0.0, %v4470
        %v4472 = vpop.f32.mrf.mxu0
        %v4473 = vpop.f32.mrf.mxu0
        %v4474 = vadd.f32 0.0, %v4473
        %v4475 = vpop.f32.mrf.mxu0
        %4476 = vmatprep.mubr.bf16.mxu0 %v2408
        %4477 = vmatmul.mubr.bf16.gmra.mxu0 %v2407
        %v4478 = vpop.f32.mrf.mxu0
        %v4479 = vadd.f32 0.0, %v4478
        %v4480 = vpop.f32.mrf.mxu0
        %v4481 = vpop.f32.mrf.mxu0
        %v4482 = vadd.f32 0.0, %v4481
        %v4483 = vpop.f32.mrf.mxu0
        %4484 = vmatprep.mubr.bf16.mxu0 %v2411
        %4485 = vmatmul.mubr.bf16.gmra.mxu0 %v2410
        %v4486 = vpop.f32.mrf.mxu0
        %v4487 = vadd.f32 0.0, %v4486
        %v4488 = vpop.f32.mrf.mxu0
        %v4489 = vpop.f32.mrf.mxu0
        %v4490 = vadd.f32 0.0, %v4489
        %v4491 = vpop.f32.mrf.mxu0
        %4492 = vmatprep.mubr.bf16.mxu0 %v2414
        %4493 = vmatmul.mubr.bf16.gmra.mxu0 %v2413
        %v4494 = vpop.f32.mrf.mxu0
        %v4495 = vadd.f32 0.0, %v4494
        %v4496 = vpop.f32.mrf.mxu0
        %v4497 = vpop.f32.mrf.mxu0
        %v4498 = vadd.f32 0.0, %v4497
        %v4499 = vpop.f32.mrf.mxu0
        %4500 = vmatprep.mubr.bf16.mxu0 %v2417
        %4501 = vmatmul.mubr.bf16.gmra.mxu0 %v2416
        %v4502 = vpop.f32.mrf.mxu0
        %v4503 = vadd.f32 0.0, %v4502
        %v4504 = vpop.f32.mrf.mxu0
        %v4505 = vpop.f32.mrf.mxu0
        %v4506 = vadd.f32 0.0, %v4505
        %v4507 = vpop.f32.mrf.mxu0
        %4508 = vmatprep.mubr.bf16.mxu0 %v2420
        %4509 = vmatmul.mubr.bf16.gmra.mxu0 %v2419
        %v4510 = vpop.f32.mrf.mxu0
        %v4511 = vadd.f32 0.0, %v4510
        %v4512 = vpop.f32.mrf.mxu0
        %v4513 = vpop.f32.mrf.mxu0
        %v4514 = vadd.f32 0.0, %v4513
        %v4515 = vpop.f32.mrf.mxu0
        %4516 = vmatprep.mubr.bf16.mxu0 %v2423
        %4517 = vmatmul.mubr.bf16.gmra.mxu0 %v2422
        %v4518 = vpop.f32.mrf.mxu0
        %v4519 = vadd.f32 0.0, %v4518
        %v4520 = vpop.f32.mrf.mxu0
        %v4521 = vpop.f32.mrf.mxu0
        %v4522 = vadd.f32 0.0, %v4521
        %v4523 = vpop.f32.mrf.mxu0
        %4524 = vmatprep.mubr.bf16.mxu0 %v2426
        %4525 = vmatmul.mubr.bf16.gmra.mxu0 %v2425
        %v4526 = vpop.f32.mrf.mxu0
        %v4527 = vadd.f32 0.0, %v4526
        %v4528 = vpop.f32.mrf.mxu0
        %v4529 = vpop.f32.mrf.mxu0
        %v4530 = vadd.f32 0.0, %v4529
        %v4531 = vpop.f32.mrf.mxu0
        %4532 = vmatprep.mubr.bf16.mxu0 %v2429
        %4533 = vmatmul.mubr.bf16.gmra.mxu0 %v2428
        %v4534 = vpop.f32.mrf.mxu0
        %v4535 = vadd.f32 0.0, %v4534
        %v4536 = vpop.f32.mrf.mxu0
        %v4537 = vpop.f32.mrf.mxu0
        %v4538 = vadd.f32 0.0, %v4537
        %v4539 = vpop.f32.mrf.mxu0
        %4540 = vmatprep.mubr.bf16.mxu0 %v2432
        %4541 = vmatmul.mubr.bf16.gmra.mxu0 %v2431
        %v4542 = vpop.f32.mrf.mxu0
        %v4543 = vadd.f32 0.0, %v4542
        %v4544 = vpop.f32.mrf.mxu0
        %v4545 = vpop.f32.mrf.mxu0
        %v4546 = vadd.f32 0.0, %v4545
        %v4547 = vpop.f32.mrf.mxu0
        %4548 = vmatprep.mubr.bf16.mxu0 %v2435
        %4549 = vmatmul.mubr.bf16.gmra.mxu0 %v2434
        %v4550 = vpop.f32.mrf.mxu0
        %v4551 = vadd.f32 0.0, %v4550
        %v4552 = vpop.f32.mrf.mxu0
        %v4553 = vpop.f32.mrf.mxu0
        %v4554 = vadd.f32 0.0, %v4553
        %v4555 = vpop.f32.mrf.mxu0
        %4556 = vmatprep.mubr.bf16.mxu0 %v2438
        %4557 = vmatmul.mubr.bf16.gmra.mxu0 %v2437
        %v4558 = vpop.f32.mrf.mxu0
        %v4559 = vadd.f32 0.0, %v4558
        %v4560 = vpop.f32.mrf.mxu0
        %v4561 = vpop.f32.mrf.mxu0
        %v4562 = vadd.f32 0.0, %v4561
        %v4563 = vpop.f32.mrf.mxu0
        %4564 = vmatprep.mubr.bf16.mxu0 %v2441
        %4565 = vmatmul.mubr.bf16.gmra.mxu0 %v2440
        %v4566 = vpop.f32.mrf.mxu0
        %v4567 = vadd.f32 0.0, %v4566
        %v4568 = vpop.f32.mrf.mxu0
        %v4569 = vpop.f32.mrf.mxu0
        %v4570 = vadd.f32 0.0, %v4569
        %v4571 = vpop.f32.mrf.mxu0
        %4572 = vmatprep.mubr.bf16.mxu0 %v4124
        %4573 = vmatmul.mubr.bf16.gmra.mxu0 %v4123
        %v4574 = vpop.f32.mrf.mxu0
        %v4575 = vadd.f32 0.0, %v4574
        %v4576 = vpop.f32.mrf.mxu0
        %v4577 = vpop.f32.mrf.mxu0
        %v4578 = vadd.f32 0.0, %v4577
        %v4579 = vpop.f32.mrf.mxu0
        %4580 = vmatprep.mubr.bf16.mxu0 %v4127
        %4581 = vmatmul.mubr.bf16.gmra.mxu0 %v4126
        %v4582 = vpop.f32.mrf.mxu0
        %v4583 = vadd.f32 0.0, %v4582
        %v4584 = vpop.f32.mrf.mxu0
        %v4585 = vpop.f32.mrf.mxu0
        %v4586 = vadd.f32 0.0, %v4585
        %v4587 = vpop.f32.mrf.mxu0
        %4588 = vmatprep.mubr.bf16.mxu0 %v4130
        %4589 = vmatmul.mubr.bf16.gmra.mxu0 %v4129
        %v4590 = vpop.f32.mrf.mxu0
        %v4591 = vadd.f32 0.0, %v4590
        %v4592 = vpop.f32.mrf.mxu0
        %v4593 = vpop.f32.mrf.mxu0
        %v4594 = vadd.f32 0.0, %v4593
        %v4595 = vpop.f32.mrf.mxu0
        %4596 = vdwg.mxu0
        %4597 = vmatprep.subr.bf16.mxu0 0
        %4598 = vmatpush1.bf16.msra.mxu0 %v4251
        %4599 = vmatprep.subr.bf16.mxu0 0
        %4600 = vmatpush1.bf16.msra.mxu0 %v4250
        %4601 = vmatprep.subr.bf16.mxu0 0
        %4602 = vmatpush1.bf16.msra.mxu0 %v4249
        %4603 = vmatprep.subr.bf16.mxu0 0
        %4604 = vmatpush1.bf16.msra.mxu0 %v4248
        %4605 = vmatprep.subr.bf16.mxu0 0
        %4606 = vmatpush1.bf16.msra.mxu0 %v4247
        %4607 = vmatprep.subr.bf16.mxu0 0
        %4608 = vmatpush1.bf16.msra.mxu0 %v4246
        %4609 = vmatprep.subr.bf16.mxu0 0
        %4610 = vmatpush1.bf16.msra.mxu0 %v4245
        %4611 = vmatprep.subr.bf16.mxu0 0
        %4612 = vmatpush1.bf16.msra.mxu0 %v4244
        %4613 = vmatprep.subr.bf16.mxu0 0
        %4614 = vmatpush2.bf16.msra.mxu0 0
        %4615 = vmatprep.subr.bf16.mxu0 0
        %4616 = vmatpush2.bf16.msra.mxu0 0
        %4617 = vmatprep.subr.bf16.mxu0 0
        %4618 = vmatpush2.bf16.msra.mxu0 0
        %4619 = vmatprep.subr.bf16.mxu0 0
        %4620 = vmatpush2.bf16.msra.mxu0 0
        %4621 = vmatprep.subr.bf16.mxu0 0
        %4622 = vmatpush2.bf16.msra.mxu0 0
        %4623 = vmatprep.subr.bf16.mxu0 0
        %4624 = vmatpush2.bf16.msra.mxu0 0
        %4625 = vmatprep.subr.bf16.mxu0 0
        %4626 = vmatpush2.bf16.msra.mxu0 0
        %4627 = vmatprep.subr.bf16.mxu0 0
        %4628 = vmatpush2.bf16.msra.mxu0 0
        %4629 = vmatprep.mubr.bf16.mxu0 0
        %4630 = vmatmul.mubr.bf16.gmra.mxu0 %v2346
        %v4631 = vpop.f32.mrf.mxu0
        %v4632 = vadd.f32 %v4311, %v4631
        %v4633 = vpop.f32.mrf.mxu0
        %v4634 = vpop.f32.mrf.mxu0
        %v4635 = vadd.f32 %v4314, %v4634
        %v4636 = vpop.f32.mrf.mxu0
        %4637 = vmatprep.mubr.bf16.mxu0 0
        %4638 = vmatmul.mubr.bf16.gmra.mxu0 %v2349
        %v4639 = vpop.f32.mrf.mxu0
        %v4640 = vadd.f32 %v4319, %v4639
        %v4641 = vpop.f32.mrf.mxu0
        %v4642 = vpop.f32.mrf.mxu0
        %v4643 = vadd.f32 %v4322, %v4642
        %v4644 = vpop.f32.mrf.mxu0
        %4645 = vmatprep.mubr.bf16.mxu0 0
        %4646 = vmatmul.mubr.bf16.gmra.mxu0 %v2352
        %v4647 = vpop.f32.mrf.mxu0
        %v4648 = vadd.f32 %v4327, %v4647
        %v4649 = vpop.f32.mrf.mxu0
        %v4650 = vpop.f32.mrf.mxu0
        %v4651 = vadd.f32 %v4330, %v4650
        %v4652 = vpop.f32.mrf.mxu0
        %4653 = vmatprep.mubr.bf16.mxu0 0
        %4654 = vmatmul.mubr.bf16.gmra.mxu0 %v2355
        %v4655 = vpop.f32.mrf.mxu0
        %v4656 = vadd.f32 %v4335, %v4655
        %v4657 = vpop.f32.mrf.mxu0
        %v4658 = vpop.f32.mrf.mxu0
        %v4659 = vadd.f32 %v4338, %v4658
        %v4660 = vpop.f32.mrf.mxu0
        %4661 = vmatprep.mubr.bf16.mxu0 0
        %4662 = vmatmul.mubr.bf16.gmra.mxu0 %v2358
        %v4663 = vpop.f32.mrf.mxu0
        %v4664 = vadd.f32 %v4343, %v4663
        %v4665 = vpop.f32.mrf.mxu0
        %v4666 = vpop.f32.mrf.mxu0
        %v4667 = vadd.f32 %v4346, %v4666
        %v4668 = vpop.f32.mrf.mxu0
        %4669 = vmatprep.mubr.bf16.mxu0 0
        %4670 = vmatmul.mubr.bf16.gmra.mxu0 %v2361
        %v4671 = vpop.f32.mrf.mxu0
        %v4672 = vadd.f32 %v4351, %v4671
        %v4673 = vpop.f32.mrf.mxu0
        %v4674 = vpop.f32.mrf.mxu0
        %v4675 = vadd.f32 %v4354, %v4674
        %v4676 = vpop.f32.mrf.mxu0
        %4677 = vmatprep.mubr.bf16.mxu0 0
        %4678 = vmatmul.mubr.bf16.gmra.mxu0 %v2364
        %v4679 = vpop.f32.mrf.mxu0
        %v4680 = vadd.f32 %v4359, %v4679
        %v4681 = vpop.f32.mrf.mxu0
        %v4682 = vpop.f32.mrf.mxu0
        %v4683 = vadd.f32 %v4362, %v4682
        %v4684 = vpop.f32.mrf.mxu0
        %4685 = vmatprep.mubr.bf16.mxu0 0
        %4686 = vmatmul.mubr.bf16.gmra.mxu0 %v2367
        %v4687 = vpop.f32.mrf.mxu0
        %v4688 = vadd.f32 %v4367, %v4687
        %v4689 = vpop.f32.mrf.mxu0
        %v4690 = vpop.f32.mrf.mxu0
        %v4691 = vadd.f32 %v4370, %v4690
        %v4692 = vpop.f32.mrf.mxu0
        %4693 = vmatprep.mubr.bf16.mxu0 0
        %4694 = vmatmul.mubr.bf16.gmra.mxu0 %v2370
        %v4695 = vpop.f32.mrf.mxu0
        %v4696 = vadd.f32 %v4375, %v4695
        %v4697 = vpop.f32.mrf.mxu0
        %v4698 = vpop.f32.mrf.mxu0
        %v4699 = vadd.f32 %v4378, %v4698
        %v4700 = vpop.f32.mrf.mxu0
        %4701 = vmatprep.mubr.bf16.mxu0 0
        %4702 = vmatmul.mubr.bf16.gmra.mxu0 %v2373
        %v4703 = vpop.f32.mrf.mxu0
        %v4704 = vadd.f32 %v4383, %v4703
        %v4705 = vpop.f32.mrf.mxu0
        %v4706 = vpop.f32.mrf.mxu0
        %v4707 = vadd.f32 %v4386, %v4706
        %v4708 = vpop.f32.mrf.mxu0
        %4709 = vmatprep.mubr.bf16.mxu0 0
        %4710 = vmatmul.mubr.bf16.gmra.mxu0 %v2376
        %v4711 = vpop.f32.mrf.mxu0
        %v4712 = vadd.f32 %v4391, %v4711
        %v4713 = vpop.f32.mrf.mxu0
        %v4714 = vpop.f32.mrf.mxu0
        %v4715 = vadd.f32 %v4394, %v4714
        %v4716 = vpop.f32.mrf.mxu0
        %4717 = vmatprep.mubr.bf16.mxu0 0
        %4718 = vmatmul.mubr.bf16.gmra.mxu0 %v2379
        %v4719 = vpop.f32.mrf.mxu0
        %v4720 = vadd.f32 %v4399, %v4719
        %v4721 = vpop.f32.mrf.mxu0
        %v4722 = vpop.f32.mrf.mxu0
        %v4723 = vadd.f32 %v4402, %v4722
        %v4724 = vpop.f32.mrf.mxu0
        %4725 = vmatprep.mubr.bf16.mxu0 0
        %4726 = vmatmul.mubr.bf16.gmra.mxu0 %v2382
        %v4727 = vpop.f32.mrf.mxu0
        %v4728 = vadd.f32 %v4407, %v4727
        %v4729 = vpop.f32.mrf.mxu0
        %v4730 = vpop.f32.mrf.mxu0
        %v4731 = vadd.f32 %v4410, %v4730
        %v4732 = vpop.f32.mrf.mxu0
        %4733 = vmatprep.mubr.bf16.mxu0 0
        %4734 = vmatmul.mubr.bf16.gmra.mxu0 %v2385
        %v4735 = vpop.f32.mrf.mxu0
        %v4736 = vadd.f32 %v4415, %v4735
        %v4737 = vpop.f32.mrf.mxu0
        %v4738 = vpop.f32.mrf.mxu0
        %v4739 = vadd.f32 %v4418, %v4738
        %v4740 = vpop.f32.mrf.mxu0
        %4741 = vmatprep.mubr.bf16.mxu0 0
        %4742 = vmatmul.mubr.bf16.gmra.mxu0 %v2388
        %v4743 = vpop.f32.mrf.mxu0
        %v4744 = vadd.f32 %v4423, %v4743
        %v4745 = vpop.f32.mrf.mxu0
        %v4746 = vpop.f32.mrf.mxu0
        %v4747 = vadd.f32 %v4426, %v4746
        %v4748 = vpop.f32.mrf.mxu0
        %4749 = vmatprep.mubr.bf16.mxu0 0
        %4750 = vmatmul.mubr.bf16.gmra.mxu0 %v2391
        %v4751 = vpop.f32.mrf.mxu0
        %v4752 = vadd.f32 %v4431, %v4751
        %v4753 = vpop.f32.mrf.mxu0
        %v4754 = vpop.f32.mrf.mxu0
        %v4755 = vadd.f32 %v4434, %v4754
        %v4756 = vpop.f32.mrf.mxu0
        %4757 = vmatprep.mubr.bf16.mxu0 0
        %4758 = vmatmul.mubr.bf16.gmra.mxu0 %v2394
        %v4759 = vpop.f32.mrf.mxu0
        %v4760 = vadd.f32 %v4439, %v4759
        %v4761 = vpop.f32.mrf.mxu0
        %v4762 = vpop.f32.mrf.mxu0
        %v4763 = vadd.f32 %v4442, %v4762
        %v4764 = vpop.f32.mrf.mxu0
        %4765 = vmatprep.mubr.bf16.mxu0 0
        %4766 = vmatmul.mubr.bf16.gmra.mxu0 %v2397
        %v4767 = vpop.f32.mrf.mxu0
        %v4768 = vadd.f32 %v4447, %v4767
        %v4769 = vpop.f32.mrf.mxu0
        %v4770 = vpop.f32.mrf.mxu0
        %v4771 = vadd.f32 %v4450, %v4770
        %v4772 = vpop.f32.mrf.mxu0
        %4773 = vmatprep.mubr.bf16.mxu0 0
        %4774 = vmatmul.mubr.bf16.gmra.mxu0 %v2400
        %v4775 = vpop.f32.mrf.mxu0
        %v4776 = vadd.f32 %v4455, %v4775
        %v4777 = vpop.f32.mrf.mxu0
        %v4778 = vpop.f32.mrf.mxu0
        %v4779 = vadd.f32 %v4458, %v4778
        %v4780 = vpop.f32.mrf.mxu0
        %4781 = vmatprep.mubr.bf16.mxu0 0
        %4782 = vmatmul.mubr.bf16.gmra.mxu0 %v2403
        %v4783 = vpop.f32.mrf.mxu0
        %v4784 = vadd.f32 %v4463, %v4783
        %v4785 = vpop.f32.mrf.mxu0
        %v4786 = vpop.f32.mrf.mxu0
        %v4787 = vadd.f32 %v4466, %v4786
        %v4788 = vpop.f32.mrf.mxu0
        %4789 = vmatprep.mubr.bf16.mxu0 0
        %4790 = vmatmul.mubr.bf16.gmra.mxu0 %v2406
        %v4791 = vpop.f32.mrf.mxu0
        %v4792 = vadd.f32 %v4471, %v4791
        %v4793 = vpop.f32.mrf.mxu0
        %v4794 = vpop.f32.mrf.mxu0
        %v4795 = vadd.f32 %v4474, %v4794
        %v4796 = vpop.f32.mrf.mxu0
        %4797 = vmatprep.mubr.bf16.mxu0 0
        %4798 = vmatmul.mubr.bf16.gmra.mxu0 %v2409
        %v4799 = vpop.f32.mrf.mxu0
        %v4800 = vadd.f32 %v4479, %v4799
        %v4801 = vpop.f32.mrf.mxu0
        %v4802 = vpop.f32.mrf.mxu0
        %v4803 = vadd.f32 %v4482, %v4802
        %v4804 = vpop.f32.mrf.mxu0
        %4805 = vmatprep.mubr.bf16.mxu0 0
        %4806 = vmatmul.mubr.bf16.gmra.mxu0 %v2412
        %v4807 = vpop.f32.mrf.mxu0
        %v4808 = vadd.f32 %v4487, %v4807
        %v4809 = vpop.f32.mrf.mxu0
        %v4810 = vpop.f32.mrf.mxu0
        %v4811 = vadd.f32 %v4490, %v4810
        %v4812 = vpop.f32.mrf.mxu0
        %4813 = vmatprep.mubr.bf16.mxu0 0
        %4814 = vmatmul.mubr.bf16.gmra.mxu0 %v2415
        %v4815 = vpop.f32.mrf.mxu0
        %v4816 = vadd.f32 %v4495, %v4815
        %v4817 = vpop.f32.mrf.mxu0
        %v4818 = vpop.f32.mrf.mxu0
        %v4819 = vadd.f32 %v4498, %v4818
        %v4820 = vpop.f32.mrf.mxu0
        %4821 = vmatprep.mubr.bf16.mxu0 0
        %4822 = vmatmul.mubr.bf16.gmra.mxu0 %v2418
        %v4823 = vpop.f32.mrf.mxu0
        %v4824 = vadd.f32 %v4503, %v4823
        %v4825 = vpop.f32.mrf.mxu0
        %v4826 = vpop.f32.mrf.mxu0
        %v4827 = vadd.f32 %v4506, %v4826
        %v4828 = vpop.f32.mrf.mxu0
        %4829 = vmatprep.mubr.bf16.mxu0 0
        %4830 = vmatmul.mubr.bf16.gmra.mxu0 %v2421
        %v4831 = vpop.f32.mrf.mxu0
        %v4832 = vadd.f32 %v4511, %v4831
        %v4833 = vpop.f32.mrf.mxu0
        %v4834 = vpop.f32.mrf.mxu0
        %v4835 = vadd.f32 %v4514, %v4834
        %v4836 = vpop.f32.mrf.mxu0
        %4837 = vmatprep.mubr.bf16.mxu0 0
        %4838 = vmatmul.mubr.bf16.gmra.mxu0 %v2424
        %v4839 = vpop.f32.mrf.mxu0
        %v4840 = vadd.f32 %v4519, %v4839
        %v4841 = vpop.f32.mrf.mxu0
        %v4842 = vpop.f32.mrf.mxu0
        %v4843 = vadd.f32 %v4522, %v4842
        %v4844 = vpop.f32.mrf.mxu0
        %4845 = vmatprep.mubr.bf16.mxu0 0
        %4846 = vmatmul.mubr.bf16.gmra.mxu0 %v2427
        %v4847 = vpop.f32.mrf.mxu0
        %v4848 = vadd.f32 %v4527, %v4847
        %v4849 = vpop.f32.mrf.mxu0
        %v4850 = vpop.f32.mrf.mxu0
        %v4851 = vadd.f32 %v4530, %v4850
        %v4852 = vpop.f32.mrf.mxu0
        %4853 = vmatprep.mubr.bf16.mxu0 0
        %4854 = vmatmul.mubr.bf16.gmra.mxu0 %v2430
        %v4855 = vpop.f32.mrf.mxu0
        %v4856 = vadd.f32 %v4535, %v4855
        %v4857 = vpop.f32.mrf.mxu0
        %v4858 = vpop.f32.mrf.mxu0
        %v4859 = vadd.f32 %v4538, %v4858
        %v4860 = vpop.f32.mrf.mxu0
        %4861 = vmatprep.mubr.bf16.mxu0 0
        %4862 = vmatmul.mubr.bf16.gmra.mxu0 %v2433
        %v4863 = vpop.f32.mrf.mxu0
        %v4864 = vadd.f32 %v4543, %v4863
        %v4865 = vpop.f32.mrf.mxu0
        %v4866 = vpop.f32.mrf.mxu0
        %v4867 = vadd.f32 %v4546, %v4866
        %v4868 = vpop.f32.mrf.mxu0
        %4869 = vmatprep.mubr.bf16.mxu0 0
        %4870 = vmatmul.mubr.bf16.gmra.mxu0 %v2436
        %v4871 = vpop.f32.mrf.mxu0
        %v4872 = vadd.f32 %v4551, %v4871
        %v4873 = vpop.f32.mrf.mxu0
        %v4874 = vpop.f32.mrf.mxu0
        %v4875 = vadd.f32 %v4554, %v4874
        %v4876 = vpop.f32.mrf.mxu0
        %4877 = vmatprep.mubr.bf16.mxu0 0
        %4878 = vmatmul.mubr.bf16.gmra.mxu0 %v2439
        %v4879 = vpop.f32.mrf.mxu0
        %v4880 = vadd.f32 %v4559, %v4879
        %v4881 = vpop.f32.mrf.mxu0
        %v4882 = vpop.f32.mrf.mxu0
        %v4883 = vadd.f32 %v4562, %v4882
        %v4884 = vpop.f32.mrf.mxu0
        %4885 = vmatprep.mubr.bf16.mxu0 0
        %4886 = vmatmul.mubr.bf16.gmra.mxu0 %v2442
        %v4887 = vpop.f32.mrf.mxu0
        %v4888 = vadd.f32 %v4567, %v4887
        %v4889 = vpop.f32.mrf.mxu0
        %v4890 = vpop.f32.mrf.mxu0
        %v4891 = vadd.f32 %v4570, %v4890
        %v4892 = vpop.f32.mrf.mxu0
        %4893 = vmatprep.mubr.bf16.mxu0 0
        %4894 = vmatmul.mubr.bf16.gmra.mxu0 %v4125
        %v4895 = vpop.f32.mrf.mxu0
        %v4896 = vadd.f32 %v4575, %v4895
        %v4897 = vpop.f32.mrf.mxu0
        %v4898 = vpop.f32.mrf.mxu0
        %v4899 = vadd.f32 %v4578, %v4898
        %v4900 = vpop.f32.mrf.mxu0
        %4901 = vmatprep.mubr.bf16.mxu0 0
        %4902 = vmatmul.mubr.bf16.gmra.mxu0 %v4128
        %v4903 = vpop.f32.mrf.mxu0
        %v4904 = vadd.f32 %v4583, %v4903
        %v4905 = vpop.f32.mrf.mxu0
        %v4906 = vpop.f32.mrf.mxu0
        %v4907 = vadd.f32 %v4586, %v4906
        %v4908 = vpop.f32.mrf.mxu0
        %4909 = vmatprep.mubr.bf16.mxu0 0
        %4910 = vmatmul.mubr.bf16.gmra.mxu0 %v4131
        %v4911 = vpop.f32.mrf.mxu0
        %v4912 = vadd.f32 %v4591, %v4911
        %v4913 = vpop.f32.mrf.mxu0
        %v4914 = vpop.f32.mrf.mxu0
        %v4915 = vadd.f32 %v4594, %v4914
        %v4916 = vpop.f32.mrf.mxu0
        %4917 = vdwg.mxu0
        %v4918 = vadd.f32 %v3837, %v4632
        %v4919 = vadd.f32 %v3840, %v4635
        %v4920 = vadd.f32 %v3845, %v4640
        %v4921 = vadd.f32 %v3848, %v4643
        %v4922 = vadd.f32 %v3853, %v4648
        %v4923 = vadd.f32 %v3856, %v4651
        %v4924 = vadd.f32 %v3861, %v4656
        %v4925 = vadd.f32 %v3864, %v4659
        %v4926 = vadd.f32 %v3869, %v4664
        %v4927 = vadd.f32 %v3872, %v4667
        %v4928 = vadd.f32 %v3877, %v4672
        %v4929 = vadd.f32 %v3880, %v4675
        %v4930 = vadd.f32 %v3885, %v4680
        %v4931 = vadd.f32 %v3888, %v4683
        %v4932 = vadd.f32 %v3893, %v4688
        %v4933 = vadd.f32 %v3896, %v4691
        %v4934 = vadd.f32 %v3901, %v4696
        %v4935 = vadd.f32 %v3904, %v4699
        %v4936 = vadd.f32 %v3909, %v4704
        %v4937 = vadd.f32 %v3912, %v4707
        %v4938 = vadd.f32 %v3917, %v4712
        %v4939 = vadd.f32 %v3920, %v4715
        %v4940 = vadd.f32 %v3925, %v4720
        %v4941 = vadd.f32 %v3928, %v4723
        %v4942 = vadd.f32 %v3933, %v4728
        %v4943 = vadd.f32 %v3936, %v4731
        %v4944 = vadd.f32 %v3941, %v4736
        %v4945 = vadd.f32 %v3944, %v4739
        %v4946 = vadd.f32 %v3949, %v4744
        %v4947 = vadd.f32 %v3952, %v4747
        %v4948 = vadd.f32 %v3957, %v4752
        %v4949 = vadd.f32 %v3960, %v4755
        %v4950 = vadd.f32 %v3965, %v4760
        %v4951 = vadd.f32 %v3968, %v4763
        %v4952 = vadd.f32 %v3973, %v4768
        %v4953 = vadd.f32 %v3976, %v4771
        %v4954 = vadd.f32 %v3981, %v4776
        %v4955 = vadd.f32 %v3984, %v4779
        %v4956 = vadd.f32 %v3989, %v4784
        %v4957 = vadd.f32 %v3992, %v4787
        %v4958 = vadd.f32 %v3997, %v4792
        %v4959 = vadd.f32 %v4000, %v4795
        %v4960 = vadd.f32 %v4005, %v4800
        %v4961 = vadd.f32 %v4008, %v4803
        %v4962 = vadd.f32 %v4013, %v4808
        %v4963 = vadd.f32 %v4016, %v4811
        %v4964 = vadd.f32 %v4021, %v4816
        %v4965 = vadd.f32 %v4024, %v4819
        %v4966 = vadd.f32 %v4029, %v4824
        %v4967 = vadd.f32 %v4032, %v4827
        %v4968 = vadd.f32 %v4037, %v4832
        %v4969 = vadd.f32 %v4040, %v4835
        %v4970 = vadd.f32 %v4045, %v4840
        %v4971 = vadd.f32 %v4048, %v4843
        %v4972 = vadd.f32 %v4053, %v4848
        %v4973 = vadd.f32 %v4056, %v4851
        %v4974 = vadd.f32 %v4061, %v4856
        %v4975 = vadd.f32 %v4064, %v4859
        %v4976 = vadd.f32 %v4069, %v4864
        %v4977 = vadd.f32 %v4072, %v4867
        %v4978 = vadd.f32 %v4077, %v4872
        %v4979 = vadd.f32 %v4080, %v4875
        %v4980 = vadd.f32 %v4085, %v4880
        %v4981 = vadd.f32 %v4088, %v4883
        %v4982 = vadd.f32 %v4093, %v4888
        %v4983 = vadd.f32 %v4096, %v4891
        %v4984 = vadd.f32 %v4101, %v4896
        %v4985 = vadd.f32 %v4104, %v4899
        %v4986 = vadd.f32 %v4109, %v4904
        %v4987 = vadd.f32 %v4112, %v4907
        %v4988 = vadd.f32 %v4117, %v4912
        %v4989 = vadd.f32 %v4120, %v4915
        %v4991 = vlaneseq
        %v4992 = vshrl.u32 %v4991, 7
        %v4993 = vsub.s32 0, %v4992
        %v4994 = vrot.slane %v534, %v4993
        %v4996 = vadd.f32 %v4918, %v4994
        %v4997 = vadd.f32 %v4919, %v4994
        %v4998 = vadd.f32 %v4920, %v4994
        %v4999 = vadd.f32 %v4921, %v4994
        %v5000 = vadd.f32 %v4922, %v4994
        %v5001 = vadd.f32 %v4923, %v4994
        %v5002 = vadd.f32 %v4924, %v4994
        %v5003 = vadd.f32 %v4925, %v4994
        %v5004 = vadd.f32 %v4926, %v4994
        %v5005 = vadd.f32 %v4927, %v4994
        %v5006 = vadd.f32 %v4928, %v4994
        %v5007 = vadd.f32 %v4929, %v4994
        %v5008 = vadd.f32 %v4930, %v4994
        %v5009 = vadd.f32 %v4931, %v4994
        %v5010 = vadd.f32 %v4932, %v4994
        %v5011 = vadd.f32 %v4933, %v4994
        %v5012 = vadd.f32 %v4934, %v4994
        %v5013 = vadd.f32 %v4935, %v4994
        %v5014 = vadd.f32 %v4936, %v4994
        %v5015 = vadd.f32 %v4937, %v4994
        %v5016 = vadd.f32 %v4938, %v4994
        %v5017 = vadd.f32 %v4939, %v4994
        %v5018 = vadd.f32 %v4940, %v4994
        %v5019 = vadd.f32 %v4941, %v4994
        %v5020 = vadd.f32 %v4942, %v4994
        %v5021 = vadd.f32 %v4943, %v4994
        %v5022 = vadd.f32 %v4944, %v4994
        %v5023 = vadd.f32 %v4945, %v4994
        %v5024 = vadd.f32 %v4946, %v4994
        %v5025 = vadd.f32 %v4947, %v4994
        %v5026 = vadd.f32 %v4948, %v4994
        %v5027 = vadd.f32 %v4949, %v4994
        %v5028 = vadd.f32 %v4950, %v4994
        %v5029 = vadd.f32 %v4951, %v4994
        %v5030 = vadd.f32 %v4952, %v4994
        %v5031 = vadd.f32 %v4953, %v4994
        %v5032 = vadd.f32 %v4954, %v4994
        %v5033 = vadd.f32 %v4955, %v4994
        %v5034 = vadd.f32 %v4956, %v4994
        %v5035 = vadd.f32 %v4957, %v4994
        %v5036 = vadd.f32 %v4958, %v4994
        %v5037 = vadd.f32 %v4959, %v4994
        %v5038 = vadd.f32 %v4960, %v4994
        %v5039 = vadd.f32 %v4961, %v4994
        %v5040 = vadd.f32 %v4962, %v4994
        %v5041 = vadd.f32 %v4963, %v4994
        %v5042 = vadd.f32 %v4964, %v4994
        %v5043 = vadd.f32 %v4965, %v4994
        %v5044 = vadd.f32 %v4966, %v4994
        %v5045 = vadd.f32 %v4967, %v4994
        %v5046 = vadd.f32 %v4968, %v4994
        %v5047 = vadd.f32 %v4969, %v4994
        %v5048 = vadd.f32 %v4970, %v4994
        %v5049 = vadd.f32 %v4971, %v4994
        %v5050 = vadd.f32 %v4972, %v4994
        %v5051 = vadd.f32 %v4973, %v4994
        %v5052 = vadd.f32 %v4974, %v4994
        %v5053 = vadd.f32 %v4975, %v4994
        %v5054 = vadd.f32 %v4976, %v4994
        %v5055 = vadd.f32 %v4977, %v4994
        %v5056 = vadd.f32 %v4978, %v4994
        %v5057 = vadd.f32 %v4979, %v4994
        %v5058 = vadd.f32 %v4980, %v4994
        %v5059 = vadd.f32 %v4981, %v4994
        %v5060 = vadd.f32 %v4982, %v4994
        %v5061 = vadd.f32 %v4983, %v4994
        %v5062 = vadd.f32 %v4984, %v4994
        %v5063 = vadd.f32 %v4985, %v4994
        %v5064 = vadd.f32 %v4986, %v4994
        %v5065 = vadd.f32 %v4987, %v4994
        %v5066 = vadd.f32 %v4988, %v4994
        %v5067 = vadd.f32 %v4989, %v4994
        %v5068 = vmax.f32 %v4996, 0.0
        %v5069 = vmax.f32 %v4997, 0.0
        %v5070 = vmax.f32 %v4998, 0.0
        %v5071 = vmax.f32 %v4999, 0.0
        %v5072 = vmax.f32 %v5000, 0.0
        %v5073 = vmax.f32 %v5001, 0.0
        %v5074 = vmax.f32 %v5002, 0.0
        %v5075 = vmax.f32 %v5003, 0.0
        %v5076 = vmax.f32 %v5004, 0.0
        %v5077 = vmax.f32 %v5005, 0.0
        %v5078 = vmax.f32 %v5006, 0.0
        %v5079 = vmax.f32 %v5007, 0.0
        %v5080 = vmax.f32 %v5008, 0.0
        %v5081 = vmax.f32 %v5009, 0.0
        %v5082 = vmax.f32 %v5010, 0.0
        %v5083 = vmax.f32 %v5011, 0.0
        %v5084 = vmax.f32 %v5012, 0.0
        %v5085 = vmax.f32 %v5013, 0.0
        %v5086 = vmax.f32 %v5014, 0.0
        %v5087 = vmax.f32 %v5015, 0.0
        %v5088 = vmax.f32 %v5016, 0.0
        %v5089 = vmax.f32 %v5017, 0.0
        %v5090 = vmax.f32 %v5018, 0.0
        %v5091 = vmax.f32 %v5019, 0.0
        %v5092 = vmax.f32 %v5020, 0.0
        %v5093 = vmax.f32 %v5021, 0.0
        %v5094 = vmax.f32 %v5022, 0.0
        %v5095 = vmax.f32 %v5023, 0.0
        %v5096 = vmax.f32 %v5024, 0.0
        %v5097 = vmax.f32 %v5025, 0.0
        %v5098 = vmax.f32 %v5026, 0.0
        %v5099 = vmax.f32 %v5027, 0.0
        %v5100 = vmax.f32 %v5028, 0.0
        %v5101 = vmax.f32 %v5029, 0.0
        %v5102 = vmax.f32 %v5030, 0.0
        %v5103 = vmax.f32 %v5031, 0.0
        %v5104 = vmax.f32 %v5032, 0.0
        %v5105 = vmax.f32 %v5033, 0.0
        %v5106 = vmax.f32 %v5034, 0.0
        %v5107 = vmax.f32 %v5035, 0.0
        %v5108 = vmax.f32 %v5036, 0.0
        %v5109 = vmax.f32 %v5037, 0.0
        %v5110 = vmax.f32 %v5038, 0.0
        %v5111 = vmax.f32 %v5039, 0.0
        %v5112 = vmax.f32 %v5040, 0.0
        %v5113 = vmax.f32 %v5041, 0.0
        %v5114 = vmax.f32 %v5042, 0.0
        %v5115 = vmax.f32 %v5043, 0.0
        %v5116 = vmax.f32 %v5044, 0.0
        %v5117 = vmax.f32 %v5045, 0.0
        %v5118 = vmax.f32 %v5046, 0.0
        %v5119 = vmax.f32 %v5047, 0.0
        %v5120 = vmax.f32 %v5048, 0.0
        %v5121 = vmax.f32 %v5049, 0.0
        %v5122 = vmax.f32 %v5050, 0.0
        %v5123 = vmax.f32 %v5051, 0.0
        %v5124 = vmax.f32 %v5052, 0.0
        %v5125 = vmax.f32 %v5053, 0.0
        %v5126 = vmax.f32 %v5054, 0.0
        %v5127 = vmax.f32 %v5055, 0.0
        %v5128 = vmax.f32 %v5056, 0.0
        %v5129 = vmax.f32 %v5057, 0.0
        %v5130 = vmax.f32 %v5058, 0.0
        %v5131 = vmax.f32 %v5059, 0.0
        %v5132 = vmax.f32 %v5060, 0.0
        %v5133 = vmax.f32 %v5061, 0.0
        %v5134 = vmax.f32 %v5062, 0.0
        %v5135 = vmax.f32 %v5063, 0.0
        %v5136 = vmax.f32 %v5064, 0.0
        %v5137 = vmax.f32 %v5065, 0.0
        %v5138 = vmax.f32 %v5066, 0.0
        %v5139 = vmax.f32 %v5067, 0.0
        %v5140 = vpack.c.bf16 %v5069, %v5068
        %v5141 = vpack.c.bf16 %v5071, %v5070
        %v5142 = vpack.c.bf16 %v5073, %v5072
        %v5143 = vpack.c.bf16 %v5075, %v5074
        %v5144 = vpack.c.bf16 %v5077, %v5076
        %v5145 = vpack.c.bf16 %v5079, %v5078
        %v5146 = vpack.c.bf16 %v5081, %v5080
        %v5147 = vpack.c.bf16 %v5083, %v5082
        %v5148 = vpack.c.bf16 %v5085, %v5084
        %v5149 = vpack.c.bf16 %v5087, %v5086
        %v5150 = vpack.c.bf16 %v5089, %v5088
        %v5151 = vpack.c.bf16 %v5091, %v5090
        %v5152 = vpack.c.bf16 %v5093, %v5092
        %v5153 = vpack.c.bf16 %v5095, %v5094
        %v5154 = vpack.c.bf16 %v5097, %v5096
        %v5155 = vpack.c.bf16 %v5099, %v5098
        %v5156 = vpack.c.bf16 %v5101, %v5100
        %v5157 = vpack.c.bf16 %v5103, %v5102
        %v5158 = vpack.c.bf16 %v5105, %v5104
        %v5159 = vpack.c.bf16 %v5107, %v5106
        %v5160 = vpack.c.bf16 %v5109, %v5108
        %v5161 = vpack.c.bf16 %v5111, %v5110
        %v5162 = vpack.c.bf16 %v5113, %v5112
        %v5163 = vpack.c.bf16 %v5115, %v5114
        %v5164 = vpack.c.bf16 %v5117, %v5116
        %v5165 = vpack.c.bf16 %v5119, %v5118
        %v5166 = vpack.c.bf16 %v5121, %v5120
        %v5167 = vpack.c.bf16 %v5123, %v5122
        %v5168 = vpack.c.bf16 %v5125, %v5124
        %v5169 = vpack.c.bf16 %v5127, %v5126
        %v5170 = vpack.c.bf16 %v5129, %v5128
        %v5171 = vpack.c.bf16 %v5131, %v5130
        %v5172 = vpack.c.bf16 %v5133, %v5132
        %v5173 = vpack.c.bf16 %v5135, %v5134
        %v5174 = vpack.c.bf16 %v5137, %v5136
        %v5175 = vpack.c.bf16 %v5139, %v5138
        %v5177 = vlaneseq
        %v5178 = vshrl.u32 %v5177, 7
        %v5179 = vsub.s32 0, %v5178
        %v5180 = vrot.slane %v535, %v5179
        %v5198 = vunpack.c.l.b16 %v517
        %v5199 = vunpack.c.l.b16 %v518
        %v5200 = vunpack.c.l.b16 %v519
        %v5201 = vunpack.c.l.b16 %v520
        %v5202 = vunpack.c.l.b16 %v521
        %v5203 = vunpack.c.l.b16 %v522
        %v5204 = vunpack.c.l.b16 %v523
        %v5205 = vunpack.c.l.b16 %v524
        %v5206 = vunpack.c.l.b16 %v525
        %v5207 = vunpack.c.l.b16 %v526
        %v5208 = vunpack.c.l.b16 %v527
        %v5209 = vunpack.c.l.b16 %v528
        %v5210 = vunpack.c.l.b16 %v529
        %v5211 = vunpack.c.l.b16 %v530
        %v5212 = vunpack.c.l.b16 %v531
        %v5213 = vunpack.c.l.b16 %v532
        %v5214 = vpack.c.b16 %v5199, %v5198
        %v5215 = vpack.c.b16 %v5201, %v5200
        %v5216 = vpack.c.b16 %v5203, %v5202
        %v5217 = vpack.c.b16 %v5205, %v5204
        %v5218 = vpack.c.b16 %v5207, %v5206
        %v5219 = vpack.c.b16 %v5209, %v5208
        %v5220 = vpack.c.b16 %v5211, %v5210
        %v5221 = vpack.c.b16 %v5213, %v5212
        %5230 = vmatprep.subr.bf16.mxu0 0
        %5231 = vmatpush1.bf16.msra.mxu0 %v5221
        %5232 = vmatprep.subr.bf16.mxu0 0
        %5233 = vmatpush1.bf16.msra.mxu0 %v5220
        %5234 = vmatprep.subr.bf16.mxu0 0
        %5235 = vmatpush1.bf16.msra.mxu0 %v5219
        %5236 = vmatprep.subr.bf16.mxu0 0
        %5237 = vmatpush1.bf16.msra.mxu0 %v5218
        %5238 = vmatprep.subr.bf16.mxu0 0
        %5239 = vmatpush1.bf16.msra.mxu0 %v5217
        %5240 = vmatprep.subr.bf16.mxu0 0
        %5241 = vmatpush1.bf16.msra.mxu0 %v5216
        %5242 = vmatprep.subr.bf16.mxu0 0
        %5243 = vmatpush1.bf16.msra.mxu0 %v5215
        %5244 = vmatprep.subr.bf16.mxu0 0
        %5245 = vmatpush1.bf16.msra.mxu0 %v5214
        %5246 = vmatprep.subr.bf16.mxu0 0
        %5247 = vmatpush2.bf16.msra.mxu0 0
        %5248 = vmatprep.subr.bf16.mxu0 0
        %5249 = vmatpush2.bf16.msra.mxu0 0
        %5250 = vmatprep.subr.bf16.mxu0 0
        %5251 = vmatpush2.bf16.msra.mxu0 0
        %5252 = vmatprep.subr.bf16.mxu0 0
        %5253 = vmatpush2.bf16.msra.mxu0 0
        %5254 = vmatprep.subr.bf16.mxu0 0
        %5255 = vmatpush2.bf16.msra.mxu0 0
        %5256 = vmatprep.subr.bf16.mxu0 0
        %5257 = vmatpush2.bf16.msra.mxu0 0
        %5258 = vmatprep.subr.bf16.mxu0 0
        %5259 = vmatpush2.bf16.msra.mxu0 0
        %5260 = vmatprep.subr.bf16.mxu0 0
        %5261 = vmatpush2.bf16.msra.mxu0 0
        %5262 = vmatprep.mubr.bf16.mxu0 0
        %5263 = vmatmul.mubr.bf16.gmra.mxu0 %v5140
        %v5264 = vpop.f32.mrf.mxu0
        %v5265 = vadd.f32 %v5180, %v5264
        %v5266 = vpop.f32.mrf.mxu0
        %v5267 = vpop.f32.mrf.mxu0
        %v5268 = vadd.f32 %v5180, %v5267
        %v5269 = vpop.f32.mrf.mxu0
        %5270 = vmatprep.mubr.bf16.mxu0 0
        %5271 = vmatmul.mubr.bf16.gmra.mxu0 %v5141
        %v5272 = vpop.f32.mrf.mxu0
        %v5273 = vadd.f32 %v5180, %v5272
        %v5274 = vpop.f32.mrf.mxu0
        %v5275 = vpop.f32.mrf.mxu0
        %v5276 = vadd.f32 %v5180, %v5275
        %v5277 = vpop.f32.mrf.mxu0
        %5278 = vmatprep.mubr.bf16.mxu0 0
        %5279 = vmatmul.mubr.bf16.gmra.mxu0 %v5142
        %v5280 = vpop.f32.mrf.mxu0
        %v5281 = vadd.f32 %v5180, %v5280
        %v5282 = vpop.f32.mrf.mxu0
        %v5283 = vpop.f32.mrf.mxu0
        %v5284 = vadd.f32 %v5180, %v5283
        %v5285 = vpop.f32.mrf.mxu0
        %5286 = vmatprep.mubr.bf16.mxu0 0
        %5287 = vmatmul.mubr.bf16.gmra.mxu0 %v5143
        %v5288 = vpop.f32.mrf.mxu0
        %v5289 = vadd.f32 %v5180, %v5288
        %v5290 = vpop.f32.mrf.mxu0
        %v5291 = vpop.f32.mrf.mxu0
        %v5292 = vadd.f32 %v5180, %v5291
        %v5293 = vpop.f32.mrf.mxu0
        %5294 = vmatprep.mubr.bf16.mxu0 0
        %5295 = vmatmul.mubr.bf16.gmra.mxu0 %v5144
        %v5296 = vpop.f32.mrf.mxu0
        %v5297 = vadd.f32 %v5180, %v5296
        %v5298 = vpop.f32.mrf.mxu0
        %v5299 = vpop.f32.mrf.mxu0
        %v5300 = vadd.f32 %v5180, %v5299
        %v5301 = vpop.f32.mrf.mxu0
        %5302 = vmatprep.mubr.bf16.mxu0 0
        %5303 = vmatmul.mubr.bf16.gmra.mxu0 %v5145
        %v5304 = vpop.f32.mrf.mxu0
        %v5305 = vadd.f32 %v5180, %v5304
        %v5306 = vpop.f32.mrf.mxu0
        %v5307 = vpop.f32.mrf.mxu0
        %v5308 = vadd.f32 %v5180, %v5307
        %v5309 = vpop.f32.mrf.mxu0
        %5310 = vmatprep.mubr.bf16.mxu0 0
        %5311 = vmatmul.mubr.bf16.gmra.mxu0 %v5146
        %v5312 = vpop.f32.mrf.mxu0
        %v5313 = vadd.f32 %v5180, %v5312
        %v5314 = vpop.f32.mrf.mxu0
        %v5315 = vpop.f32.mrf.mxu0
        %v5316 = vadd.f32 %v5180, %v5315
        %v5317 = vpop.f32.mrf.mxu0
        %5318 = vmatprep.mubr.bf16.mxu0 0
        %5319 = vmatmul.mubr.bf16.gmra.mxu0 %v5147
        %v5320 = vpop.f32.mrf.mxu0
        %v5321 = vadd.f32 %v5180, %v5320
        %v5322 = vpop.f32.mrf.mxu0
        %v5323 = vpop.f32.mrf.mxu0
        %v5324 = vadd.f32 %v5180, %v5323
        %v5325 = vpop.f32.mrf.mxu0
        %5326 = vmatprep.mubr.bf16.mxu0 0
        %5327 = vmatmul.mubr.bf16.gmra.mxu0 %v5148
        %v5328 = vpop.f32.mrf.mxu0
        %v5329 = vadd.f32 %v5180, %v5328
        %v5330 = vpop.f32.mrf.mxu0
        %v5331 = vpop.f32.mrf.mxu0
        %v5332 = vadd.f32 %v5180, %v5331
        %v5333 = vpop.f32.mrf.mxu0
        %5334 = vmatprep.mubr.bf16.mxu0 0
        %5335 = vmatmul.mubr.bf16.gmra.mxu0 %v5149
        %v5336 = vpop.f32.mrf.mxu0
        %v5337 = vadd.f32 %v5180, %v5336
        %v5338 = vpop.f32.mrf.mxu0
        %v5339 = vpop.f32.mrf.mxu0
        %v5340 = vadd.f32 %v5180, %v5339
        %v5341 = vpop.f32.mrf.mxu0
        %5342 = vmatprep.mubr.bf16.mxu0 0
        %5343 = vmatmul.mubr.bf16.gmra.mxu0 %v5150
        %v5344 = vpop.f32.mrf.mxu0
        %v5345 = vadd.f32 %v5180, %v5344
        %v5346 = vpop.f32.mrf.mxu0
        %v5347 = vpop.f32.mrf.mxu0
        %v5348 = vadd.f32 %v5180, %v5347
        %v5349 = vpop.f32.mrf.mxu0
        %5350 = vmatprep.mubr.bf16.mxu0 0
        %5351 = vmatmul.mubr.bf16.gmra.mxu0 %v5151
        %v5352 = vpop.f32.mrf.mxu0
        %v5353 = vadd.f32 %v5180, %v5352
        %v5354 = vpop.f32.mrf.mxu0
        %v5355 = vpop.f32.mrf.mxu0
        %v5356 = vadd.f32 %v5180, %v5355
        %v5357 = vpop.f32.mrf.mxu0
        %5358 = vmatprep.mubr.bf16.mxu0 0
        %5359 = vmatmul.mubr.bf16.gmra.mxu0 %v5152
        %v5360 = vpop.f32.mrf.mxu0
        %v5361 = vadd.f32 %v5180, %v5360
        %v5362 = vpop.f32.mrf.mxu0
        %v5363 = vpop.f32.mrf.mxu0
        %v5364 = vadd.f32 %v5180, %v5363
        %v5365 = vpop.f32.mrf.mxu0
        %5366 = vmatprep.mubr.bf16.mxu0 0
        %5367 = vmatmul.mubr.bf16.gmra.mxu0 %v5153
        %v5368 = vpop.f32.mrf.mxu0
        %v5369 = vadd.f32 %v5180, %v5368
        %v5370 = vpop.f32.mrf.mxu0
        %v5371 = vpop.f32.mrf.mxu0
        %v5372 = vadd.f32 %v5180, %v5371
        %v5373 = vpop.f32.mrf.mxu0
        %5374 = vmatprep.mubr.bf16.mxu0 0
        %5375 = vmatmul.mubr.bf16.gmra.mxu0 %v5154
        %v5376 = vpop.f32.mrf.mxu0
        %v5377 = vadd.f32 %v5180, %v5376
        %v5378 = vpop.f32.mrf.mxu0
        %v5379 = vpop.f32.mrf.mxu0
        %v5380 = vadd.f32 %v5180, %v5379
        %v5381 = vpop.f32.mrf.mxu0
        %5382 = vmatprep.mubr.bf16.mxu0 0
        %5383 = vmatmul.mubr.bf16.gmra.mxu0 %v5155
        %v5384 = vpop.f32.mrf.mxu0
        %v5385 = vadd.f32 %v5180, %v5384
        %v5386 = vpop.f32.mrf.mxu0
        %v5387 = vpop.f32.mrf.mxu0
        %v5388 = vadd.f32 %v5180, %v5387
        %v5389 = vpop.f32.mrf.mxu0
        %5390 = vmatprep.mubr.bf16.mxu0 0
        %5391 = vmatmul.mubr.bf16.gmra.mxu0 %v5156
        %v5392 = vpop.f32.mrf.mxu0
        %v5393 = vadd.f32 %v5180, %v5392
        %v5394 = vpop.f32.mrf.mxu0
        %v5395 = vpop.f32.mrf.mxu0
        %v5396 = vadd.f32 %v5180, %v5395
        %v5397 = vpop.f32.mrf.mxu0
        %5398 = vmatprep.mubr.bf16.mxu0 0
        %5399 = vmatmul.mubr.bf16.gmra.mxu0 %v5157
        %v5400 = vpop.f32.mrf.mxu0
        %v5401 = vadd.f32 %v5180, %v5400
        %v5402 = vpop.f32.mrf.mxu0
        %v5403 = vpop.f32.mrf.mxu0
        %v5404 = vadd.f32 %v5180, %v5403
        %v5405 = vpop.f32.mrf.mxu0
        %5406 = vmatprep.mubr.bf16.mxu0 0
        %5407 = vmatmul.mubr.bf16.gmra.mxu0 %v5158
        %v5408 = vpop.f32.mrf.mxu0
        %v5409 = vadd.f32 %v5180, %v5408
        %v5410 = vpop.f32.mrf.mxu0
        %v5411 = vpop.f32.mrf.mxu0
        %v5412 = vadd.f32 %v5180, %v5411
        %v5413 = vpop.f32.mrf.mxu0
        %5414 = vmatprep.mubr.bf16.mxu0 0
        %5415 = vmatmul.mubr.bf16.gmra.mxu0 %v5159
        %v5416 = vpop.f32.mrf.mxu0
        %v5417 = vadd.f32 %v5180, %v5416
        %v5418 = vpop.f32.mrf.mxu0
        %v5419 = vpop.f32.mrf.mxu0
        %v5420 = vadd.f32 %v5180, %v5419
        %v5421 = vpop.f32.mrf.mxu0
        %5422 = vmatprep.mubr.bf16.mxu0 0
        %5423 = vmatmul.mubr.bf16.gmra.mxu0 %v5160
        %v5424 = vpop.f32.mrf.mxu0
        %v5425 = vadd.f32 %v5180, %v5424
        %v5426 = vpop.f32.mrf.mxu0
        %v5427 = vpop.f32.mrf.mxu0
        %v5428 = vadd.f32 %v5180, %v5427
        %v5429 = vpop.f32.mrf.mxu0
        %5430 = vmatprep.mubr.bf16.mxu0 0
        %5431 = vmatmul.mubr.bf16.gmra.mxu0 %v5161
        %v5432 = vpop.f32.mrf.mxu0
        %v5433 = vadd.f32 %v5180, %v5432
        %v5434 = vpop.f32.mrf.mxu0
        %v5435 = vpop.f32.mrf.mxu0
        %v5436 = vadd.f32 %v5180, %v5435
        %v5437 = vpop.f32.mrf.mxu0
        %5438 = vmatprep.mubr.bf16.mxu0 0
        %5439 = vmatmul.mubr.bf16.gmra.mxu0 %v5162
        %v5440 = vpop.f32.mrf.mxu0
        %v5441 = vadd.f32 %v5180, %v5440
        %v5442 = vpop.f32.mrf.mxu0
        %v5443 = vpop.f32.mrf.mxu0
        %v5444 = vadd.f32 %v5180, %v5443
        %v5445 = vpop.f32.mrf.mxu0
        %5446 = vmatprep.mubr.bf16.mxu0 0
        %5447 = vmatmul.mubr.bf16.gmra.mxu0 %v5163
        %v5448 = vpop.f32.mrf.mxu0
        %v5449 = vadd.f32 %v5180, %v5448
        %v5450 = vpop.f32.mrf.mxu0
        %v5451 = vpop.f32.mrf.mxu0
        %v5452 = vadd.f32 %v5180, %v5451
        %v5453 = vpop.f32.mrf.mxu0
        %5454 = vmatprep.mubr.bf16.mxu0 0
        %5455 = vmatmul.mubr.bf16.gmra.mxu0 %v5164
        %v5456 = vpop.f32.mrf.mxu0
        %v5457 = vadd.f32 %v5180, %v5456
        %v5458 = vpop.f32.mrf.mxu0
        %v5459 = vpop.f32.mrf.mxu0
        %v5460 = vadd.f32 %v5180, %v5459
        %v5461 = vpop.f32.mrf.mxu0
        %5462 = vmatprep.mubr.bf16.mxu0 0
        %5463 = vmatmul.mubr.bf16.gmra.mxu0 %v5165
        %v5464 = vpop.f32.mrf.mxu0
        %v5465 = vadd.f32 %v5180, %v5464
        %v5466 = vpop.f32.mrf.mxu0
        %v5467 = vpop.f32.mrf.mxu0
        %v5468 = vadd.f32 %v5180, %v5467
        %v5469 = vpop.f32.mrf.mxu0
        %5470 = vmatprep.mubr.bf16.mxu0 0
        %5471 = vmatmul.mubr.bf16.gmra.mxu0 %v5166
        %v5472 = vpop.f32.mrf.mxu0
        %v5473 = vadd.f32 %v5180, %v5472
        %v5474 = vpop.f32.mrf.mxu0
        %v5475 = vpop.f32.mrf.mxu0
        %v5476 = vadd.f32 %v5180, %v5475
        %v5477 = vpop.f32.mrf.mxu0
        %5478 = vmatprep.mubr.bf16.mxu0 0
        %5479 = vmatmul.mubr.bf16.gmra.mxu0 %v5167
        %v5480 = vpop.f32.mrf.mxu0
        %v5481 = vadd.f32 %v5180, %v5480
        %v5482 = vpop.f32.mrf.mxu0
        %v5483 = vpop.f32.mrf.mxu0
        %v5484 = vadd.f32 %v5180, %v5483
        %v5485 = vpop.f32.mrf.mxu0
        %5486 = vmatprep.mubr.bf16.mxu0 0
        %5487 = vmatmul.mubr.bf16.gmra.mxu0 %v5168
        %v5488 = vpop.f32.mrf.mxu0
        %v5489 = vadd.f32 %v5180, %v5488
        %v5490 = vpop.f32.mrf.mxu0
        %v5491 = vpop.f32.mrf.mxu0
        %v5492 = vadd.f32 %v5180, %v5491
        %v5493 = vpop.f32.mrf.mxu0
        %5494 = vmatprep.mubr.bf16.mxu0 0
        %5495 = vmatmul.mubr.bf16.gmra.mxu0 %v5169
        %v5496 = vpop.f32.mrf.mxu0
        %v5497 = vadd.f32 %v5180, %v5496
        %v5498 = vpop.f32.mrf.mxu0
        %v5499 = vpop.f32.mrf.mxu0
        %v5500 = vadd.f32 %v5180, %v5499
        %v5501 = vpop.f32.mrf.mxu0
        %5502 = vmatprep.mubr.bf16.mxu0 0
        %5503 = vmatmul.mubr.bf16.gmra.mxu0 %v5170
        %v5504 = vpop.f32.mrf.mxu0
        %v5505 = vadd.f32 %v5180, %v5504
        %v5506 = vpop.f32.mrf.mxu0
        %v5507 = vpop.f32.mrf.mxu0
        %v5508 = vadd.f32 %v5180, %v5507
        %v5509 = vpop.f32.mrf.mxu0
        %5510 = vmatprep.mubr.bf16.mxu0 0
        %5511 = vmatmul.mubr.bf16.gmra.mxu0 %v5171
        %v5512 = vpop.f32.mrf.mxu0
        %v5513 = vadd.f32 %v5180, %v5512
        %v5514 = vpop.f32.mrf.mxu0
        %v5515 = vpop.f32.mrf.mxu0
        %v5516 = vadd.f32 %v5180, %v5515
        %v5517 = vpop.f32.mrf.mxu0
        %5518 = vmatprep.mubr.bf16.mxu0 0
        %5519 = vmatmul.mubr.bf16.gmra.mxu0 %v5172
        %v5520 = vpop.f32.mrf.mxu0
        %v5521 = vadd.f32 %v5180, %v5520
        %v5522 = vpop.f32.mrf.mxu0
        %v5523 = vpop.f32.mrf.mxu0
        %v5524 = vadd.f32 %v5180, %v5523
        %v5525 = vpop.f32.mrf.mxu0
        %5526 = vmatprep.mubr.bf16.mxu0 0
        %5527 = vmatmul.mubr.bf16.gmra.mxu0 %v5173
        %v5528 = vpop.f32.mrf.mxu0
        %v5529 = vadd.f32 %v5180, %v5528
        %v5530 = vpop.f32.mrf.mxu0
        %v5531 = vpop.f32.mrf.mxu0
        %v5532 = vadd.f32 %v5180, %v5531
        %v5533 = vpop.f32.mrf.mxu0
        %5534 = vmatprep.mubr.bf16.mxu0 0
        %5535 = vmatmul.mubr.bf16.gmra.mxu0 %v5174
        %v5536 = vpop.f32.mrf.mxu0
        %v5537 = vadd.f32 %v5180, %v5536
        %v5538 = vpop.f32.mrf.mxu0
        %v5539 = vpop.f32.mrf.mxu0
        %v5540 = vadd.f32 %v5180, %v5539
        %v5541 = vpop.f32.mrf.mxu0
        %5542 = vmatprep.mubr.bf16.mxu0 0
        %5543 = vmatmul.mubr.bf16.gmra.mxu0 %v5175
        %v5544 = vpop.f32.mrf.mxu0
        %v5545 = vadd.f32 %v5180, %v5544
        %v5546 = vpop.f32.mrf.mxu0
        %v5547 = vpop.f32.mrf.mxu0
        %v5548 = vadd.f32 %v5180, %v5547
        %v5549 = vpop.f32.mrf.mxu0
        %5550 = vdwg.mxu0
        %v5551 = vunpack.c.l.bf16 %v540
        %v5552 = vunpack.c.l.bf16 %v541
        %v5553 = vunpack.c.l.bf16 %v542
        %v5554 = vunpack.c.l.bf16 %v543
        %v5555 = vunpack.c.l.bf16 %v544
        %v5556 = vunpack.c.l.bf16 %v545
        %v5557 = vunpack.c.l.bf16 %v546
        %v5558 = vunpack.c.l.bf16 %v547
        %v5559 = vunpack.c.l.bf16 %v548
        %v5560 = vunpack.c.l.bf16 %v549
        %v5561 = vunpack.c.l.bf16 %v550
        %v5562 = vunpack.c.l.bf16 %v551
        %v5563 = vunpack.c.l.bf16 %v552
        %v5564 = vunpack.c.l.bf16 %v553
        %v5565 = vunpack.c.l.bf16 %v554
        %v5566 = vunpack.c.l.bf16 %v555
        %v5567 = vunpack.c.l.bf16 %v556
        %v5568 = vunpack.c.l.bf16 %v557
        %v5569 = vunpack.c.l.bf16 %v558
        %v5570 = vunpack.c.l.bf16 %v559
        %v5571 = vunpack.c.l.bf16 %v560
        %v5572 = vunpack.c.l.bf16 %v561
        %v5573 = vunpack.c.l.bf16 %v562
        %v5574 = vunpack.c.l.bf16 %v563
        %v5575 = vunpack.c.l.bf16 %v564
        %v5576 = vunpack.c.l.bf16 %v565
        %v5577 = vunpack.c.l.bf16 %v566
        %v5578 = vunpack.c.l.bf16 %v567
        %v5579 = vunpack.c.l.bf16 %v568
        %v5580 = vunpack.c.l.bf16 %v569
        %v5581 = vunpack.c.l.bf16 %v570
        %v5582 = vunpack.c.l.bf16 %v571
        %v5583 = vunpack.c.l.bf16 %v572
        %v5584 = vunpack.c.l.bf16 %v573
        %v5585 = vunpack.c.l.bf16 %v574
        %v5586 = vunpack.c.l.bf16 %v575
        %v5587 = vunpack.c.l.bf16 %v576
        %v5588 = vunpack.c.l.bf16 %v577
        %v5589 = vunpack.c.l.bf16 %v578
        %v5590 = vunpack.c.l.bf16 %v579
        %v5591 = vunpack.c.l.bf16 %v580
        %v5592 = vunpack.c.l.bf16 %v581
        %v5593 = vunpack.c.l.bf16 %v582
        %v5594 = vunpack.c.l.bf16 %v583
        %v5595 = vunpack.c.l.bf16 %v584
        %v5596 = vunpack.c.l.bf16 %v585
        %v5597 = vunpack.c.l.bf16 %v586
        %v5598 = vunpack.c.l.bf16 %v587
        %v5599 = vunpack.c.l.bf16 %v588
        %v5600 = vunpack.c.l.bf16 %v589
        %v5601 = vunpack.c.l.bf16 %v590
        %v5602 = vunpack.c.l.bf16 %v591
        %v5603 = vunpack.c.l.bf16 %v592
        %v5604 = vunpack.c.l.bf16 %v593
        %v5605 = vunpack.c.l.bf16 %v594
        %v5606 = vunpack.c.l.bf16 %v595
        %v5607 = vunpack.c.l.bf16 %v596
        %v5608 = vunpack.c.l.bf16 %v597
        %v5609 = vunpack.c.l.bf16 %v598
        %v5610 = vunpack.c.l.bf16 %v599
        %v5611 = vunpack.c.l.bf16 %v600
        %v5612 = vunpack.c.l.bf16 %v601
        %v5613 = vunpack.c.l.bf16 %v602
        %v5614 = vunpack.c.l.bf16 %v603
        %v5615 = vunpack.c.l.bf16 %v604
        %v5616 = vunpack.c.l.bf16 %v605
        %v5617 = vunpack.c.l.bf16 %v606
        %v5618 = vunpack.c.l.bf16 %v607
        %v5619 = vunpack.c.l.bf16 %v608
        %v5620 = vunpack.c.l.bf16 %v609
        %v5621 = vunpack.c.l.bf16 %v610
        %v5622 = vunpack.c.l.bf16 %v611
        %v5623 = vadd.f32 %v5265, %v5551
        %v5624 = vadd.f32 %v5268, %v5552
        %v5625 = vadd.f32 %v5273, %v5553
        %v5626 = vadd.f32 %v5276, %v5554
        %v5627 = vadd.f32 %v5281, %v5555
        %v5628 = vadd.f32 %v5284, %v5556
        %v5629 = vadd.f32 %v5289, %v5557
        %v5630 = vadd.f32 %v5292, %v5558
        %v5631 = vadd.f32 %v5297, %v5559
        %v5632 = vadd.f32 %v5300, %v5560
        %v5633 = vadd.f32 %v5305, %v5561
        %v5634 = vadd.f32 %v5308, %v5562
        %v5635 = vadd.f32 %v5313, %v5563
        %v5636 = vadd.f32 %v5316, %v5564
        %v5637 = vadd.f32 %v5321, %v5565
        %v5638 = vadd.f32 %v5324, %v5566
        %v5639 = vadd.f32 %v5329, %v5567
        %v5640 = vadd.f32 %v5332, %v5568
        %v5641 = vadd.f32 %v5337, %v5569
        %v5642 = vadd.f32 %v5340, %v5570
        %v5643 = vadd.f32 %v5345, %v5571
        %v5644 = vadd.f32 %v5348, %v5572
        %v5645 = vadd.f32 %v5353, %v5573
        %v5646 = vadd.f32 %v5356, %v5574
        %v5647 = vadd.f32 %v5361, %v5575
        %v5648 = vadd.f32 %v5364, %v5576
        %v5649 = vadd.f32 %v5369, %v5577
        %v5650 = vadd.f32 %v5372, %v5578
        %v5651 = vadd.f32 %v5377, %v5579
        %v5652 = vadd.f32 %v5380, %v5580
        %v5653 = vadd.f32 %v5385, %v5581
        %v5654 = vadd.f32 %v5388, %v5582
        %v5655 = vadd.f32 %v5393, %v5583
        %v5656 = vadd.f32 %v5396, %v5584
        %v5657 = vadd.f32 %v5401, %v5585
        %v5658 = vadd.f32 %v5404, %v5586
        %v5659 = vadd.f32 %v5409, %v5587
        %v5660 = vadd.f32 %v5412, %v5588
        %v5661 = vadd.f32 %v5417, %v5589
        %v5662 = vadd.f32 %v5420, %v5590
        %v5663 = vadd.f32 %v5425, %v5591
        %v5664 = vadd.f32 %v5428, %v5592
        %v5665 = vadd.f32 %v5433, %v5593
        %v5666 = vadd.f32 %v5436, %v5594
        %v5667 = vadd.f32 %v5441, %v5595
        %v5668 = vadd.f32 %v5444, %v5596
        %v5669 = vadd.f32 %v5449, %v5597
        %v5670 = vadd.f32 %v5452, %v5598
        %v5671 = vadd.f32 %v5457, %v5599
        %v5672 = vadd.f32 %v5460, %v5600
        %v5673 = vadd.f32 %v5465, %v5601
        %v5674 = vadd.f32 %v5468, %v5602
        %v5675 = vadd.f32 %v5473, %v5603
        %v5676 = vadd.f32 %v5476, %v5604
        %v5677 = vadd.f32 %v5481, %v5605
        %v5678 = vadd.f32 %v5484, %v5606
        %v5679 = vadd.f32 %v5489, %v5607
        %v5680 = vadd.f32 %v5492, %v5608
        %v5681 = vadd.f32 %v5497, %v5609
        %v5682 = vadd.f32 %v5500, %v5610
        %v5683 = vadd.f32 %v5505, %v5611
        %v5684 = vadd.f32 %v5508, %v5612
        %v5685 = vadd.f32 %v5513, %v5613
        %v5686 = vadd.f32 %v5516, %v5614
        %v5687 = vadd.f32 %v5521, %v5615
        %v5688 = vadd.f32 %v5524, %v5616
        %v5689 = vadd.f32 %v5529, %v5617
        %v5690 = vadd.f32 %v5532, %v5618
        %v5691 = vadd.f32 %v5537, %v5619
        %v5692 = vadd.f32 %v5540, %v5620
        %v5693 = vadd.f32 %v5545, %v5621
        %v5694 = vadd.f32 %v5548, %v5622
        %v5695 = vmax.f32 %v5623, 0.0
        %v5696 = vmax.f32 %v5624, 0.0
        %v5697 = vmax.f32 %v5625, 0.0
        %v5698 = vmax.f32 %v5626, 0.0
        %v5699 = vmax.f32 %v5627, 0.0
        %v5700 = vmax.f32 %v5628, 0.0
        %v5701 = vmax.f32 %v5629, 0.0
        %v5702 = vmax.f32 %v5630, 0.0
        %v5703 = vmax.f32 %v5631, 0.0
        %v5704 = vmax.f32 %v5632, 0.0
        %v5705 = vmax.f32 %v5633, 0.0
        %v5706 = vmax.f32 %v5634, 0.0
        %v5707 = vmax.f32 %v5635, 0.0
        %v5708 = vmax.f32 %v5636, 0.0
        %v5709 = vmax.f32 %v5637, 0.0
        %v5710 = vmax.f32 %v5638, 0.0
        %v5711 = vmax.f32 %v5639, 0.0
        %v5712 = vmax.f32 %v5640, 0.0
        %v5713 = vmax.f32 %v5641, 0.0
        %v5714 = vmax.f32 %v5642, 0.0
        %v5715 = vmax.f32 %v5643, 0.0
        %v5716 = vmax.f32 %v5644, 0.0
        %v5717 = vmax.f32 %v5645, 0.0
        %v5718 = vmax.f32 %v5646, 0.0
        %v5719 = vmax.f32 %v5647, 0.0
        %v5720 = vmax.f32 %v5648, 0.0
        %v5721 = vmax.f32 %v5649, 0.0
        %v5722 = vmax.f32 %v5650, 0.0
        %v5723 = vmax.f32 %v5651, 0.0
        %v5724 = vmax.f32 %v5652, 0.0
        %v5725 = vmax.f32 %v5653, 0.0
        %v5726 = vmax.f32 %v5654, 0.0
        %v5727 = vmax.f32 %v5655, 0.0
        %v5728 = vmax.f32 %v5656, 0.0
        %v5729 = vmax.f32 %v5657, 0.0
        %v5730 = vmax.f32 %v5658, 0.0
        %v5731 = vmax.f32 %v5659, 0.0
        %v5732 = vmax.f32 %v5660, 0.0
        %v5733 = vmax.f32 %v5661, 0.0
        %v5734 = vmax.f32 %v5662, 0.0
        %v5735 = vmax.f32 %v5663, 0.0
        %v5736 = vmax.f32 %v5664, 0.0
        %v5737 = vmax.f32 %v5665, 0.0
        %v5738 = vmax.f32 %v5666, 0.0
        %v5739 = vmax.f32 %v5667, 0.0
        %v5740 = vmax.f32 %v5668, 0.0
        %v5741 = vmax.f32 %v5669, 0.0
        %v5742 = vmax.f32 %v5670, 0.0
        %v5743 = vmax.f32 %v5671, 0.0
        %v5744 = vmax.f32 %v5672, 0.0
        %v5745 = vmax.f32 %v5673, 0.0
        %v5746 = vmax.f32 %v5674, 0.0
        %v5747 = vmax.f32 %v5675, 0.0
        %v5748 = vmax.f32 %v5676, 0.0
        %v5749 = vmax.f32 %v5677, 0.0
        %v5750 = vmax.f32 %v5678, 0.0
        %v5751 = vmax.f32 %v5679, 0.0
        %v5752 = vmax.f32 %v5680, 0.0
        %v5753 = vmax.f32 %v5681, 0.0
        %v5754 = vmax.f32 %v5682, 0.0
        %v5755 = vmax.f32 %v5683, 0.0
        %v5756 = vmax.f32 %v5684, 0.0
        %v5757 = vmax.f32 %v5685, 0.0
        %v5758 = vmax.f32 %v5686, 0.0
        %v5759 = vmax.f32 %v5687, 0.0
        %v5760 = vmax.f32 %v5688, 0.0
        %v5761 = vmax.f32 %v5689, 0.0
        %v5762 = vmax.f32 %v5690, 0.0
        %v5763 = vmax.f32 %v5691, 0.0
        %v5764 = vmax.f32 %v5692, 0.0
        %v5765 = vmax.f32 %v5693, 0.0
        %v5766 = vmax.f32 %v5694, 0.0
        %v5767 = vpack.c.bf16 %v5696, %v5695
        %v5768 = vpack.c.bf16 %v5697, %v5697
        %v5769 = vpack.c.bf16 %v5699, %v5698
        %v5770 = vpack.c.bf16 %v5700, %v5700
        %v5771 = vpack.c.bf16 %v5702, %v5701
        %v5772 = vpack.c.bf16 %v5703, %v5703
        %v5773 = vpack.c.bf16 %v5705, %v5704
        %v5774 = vpack.c.bf16 %v5706, %v5706
        %v5775 = vpack.c.bf16 %v5708, %v5707
        %v5776 = vpack.c.bf16 %v5709, %v5709
        %v5777 = vpack.c.bf16 %v5711, %v5710
        %v5778 = vpack.c.bf16 %v5712, %v5712
        %v5779 = vpack.c.bf16 %v5714, %v5713
        %v5780 = vpack.c.bf16 %v5715, %v5715
        %v5781 = vpack.c.bf16 %v5717, %v5716
        %v5782 = vpack.c.bf16 %v5718, %v5718
        %v5783 = vpack.c.bf16 %v5720, %v5719
        %v5784 = vpack.c.bf16 %v5721, %v5721
        %v5785 = vpack.c.bf16 %v5723, %v5722
        %v5786 = vpack.c.bf16 %v5724, %v5724
        %v5787 = vpack.c.bf16 %v5726, %v5725
        %v5788 = vpack.c.bf16 %v5727, %v5727
        %v5789 = vpack.c.bf16 %v5729, %v5728
        %v5790 = vpack.c.bf16 %v5730, %v5730
        %v5791 = vpack.c.bf16 %v5732, %v5731
        %v5792 = vpack.c.bf16 %v5733, %v5733
        %v5793 = vpack.c.bf16 %v5735, %v5734
        %v5794 = vpack.c.bf16 %v5736, %v5736
        %v5795 = vpack.c.bf16 %v5738, %v5737
        %v5796 = vpack.c.bf16 %v5739, %v5739
        %v5797 = vpack.c.bf16 %v5741, %v5740
        %v5798 = vpack.c.bf16 %v5742, %v5742
        %v5799 = vpack.c.bf16 %v5744, %v5743
        %v5800 = vpack.c.bf16 %v5745, %v5745
        %v5801 = vpack.c.bf16 %v5747, %v5746
        %v5802 = vpack.c.bf16 %v5748, %v5748
        %v5803 = vpack.c.bf16 %v5750, %v5749
        %v5804 = vpack.c.bf16 %v5751, %v5751
        %v5805 = vpack.c.bf16 %v5753, %v5752
        %v5806 = vpack.c.bf16 %v5754, %v5754
        %v5807 = vpack.c.bf16 %v5756, %v5755
        %v5808 = vpack.c.bf16 %v5757, %v5757
        %v5809 = vpack.c.bf16 %v5759, %v5758
        %v5810 = vpack.c.bf16 %v5760, %v5760
        %v5811 = vpack.c.bf16 %v5762, %v5761
        %v5812 = vpack.c.bf16 %v5763, %v5763
        %v5813 = vpack.c.bf16 %v5765, %v5764
        %v5814 = vpack.c.bf16 %v5766, %v5766
        %v5863 = vunpack.c.l.b16 %v5767
        %v5864 = vunpack.c.h.b16 %v5767
        %v5865 = vunpack.c.l.b16 %v5768
        %v5866 = vunpack.c.l.b16 %v5769
        %v5867 = vunpack.c.h.b16 %v5769
        %v5868 = vunpack.c.l.b16 %v5770
        %v5869 = vunpack.c.l.b16 %v5771
        %v5870 = vunpack.c.h.b16 %v5771
        %v5871 = vunpack.c.l.b16 %v5772
        %v5872 = vunpack.c.l.b16 %v5773
        %v5873 = vunpack.c.h.b16 %v5773
        %v5874 = vunpack.c.l.b16 %v5774
        %v5875 = vunpack.c.l.b16 %v5775
        %v5876 = vunpack.c.h.b16 %v5775
        %v5877 = vunpack.c.l.b16 %v5776
        %v5878 = vunpack.c.l.b16 %v5777
        %v5879 = vunpack.c.h.b16 %v5777
        %v5880 = vunpack.c.l.b16 %v5778
        %v5881 = vunpack.c.l.b16 %v5779
        %v5882 = vunpack.c.h.b16 %v5779
        %v5883 = vunpack.c.l.b16 %v5780
        %v5884 = vunpack.c.l.b16 %v5781
        %v5885 = vunpack.c.h.b16 %v5781
        %v5886 = vunpack.c.l.b16 %v5782
        %v5887 = vunpack.c.l.b16 %v5783
        %v5888 = vunpack.c.h.b16 %v5783
        %v5889 = vunpack.c.l.b16 %v5784
        %v5890 = vunpack.c.l.b16 %v5785
        %v5891 = vunpack.c.h.b16 %v5785
        %v5892 = vunpack.c.l.b16 %v5786
        %v5893 = vunpack.c.l.b16 %v5787
        %v5894 = vunpack.c.h.b16 %v5787
        %v5895 = vunpack.c.l.b16 %v5788
        %v5896 = vunpack.c.l.b16 %v5789
        %v5897 = vunpack.c.h.b16 %v5789
        %v5898 = vunpack.c.l.b16 %v5790
        %v5899 = vunpack.c.l.b16 %v5791
        %v5900 = vunpack.c.h.b16 %v5791
        %v5901 = vunpack.c.l.b16 %v5792
        %v5902 = vunpack.c.l.b16 %v5793
        %v5903 = vunpack.c.h.b16 %v5793
        %v5904 = vunpack.c.l.b16 %v5794
        %v5905 = vunpack.c.l.b16 %v5795
        %v5906 = vunpack.c.h.b16 %v5795
        %v5907 = vunpack.c.l.b16 %v5796
        %v5908 = vunpack.c.l.b16 %v5797
        %v5909 = vunpack.c.h.b16 %v5797
        %v5910 = vunpack.c.l.b16 %v5798
        %v5911 = vunpack.c.l.b16 %v5799
        %v5912 = vunpack.c.h.b16 %v5799
        %v5913 = vunpack.c.l.b16 %v5800
        %v5914 = vunpack.c.l.b16 %v5801
        %v5915 = vunpack.c.h.b16 %v5801
        %v5916 = vunpack.c.l.b16 %v5802
        %v5917 = vunpack.c.l.b16 %v5803
        %v5918 = vunpack.c.h.b16 %v5803
        %v5919 = vunpack.c.l.b16 %v5804
        %v5920 = vunpack.c.l.b16 %v5805
        %v5921 = vunpack.c.h.b16 %v5805
        %v5922 = vunpack.c.l.b16 %v5806
        %v5923 = vunpack.c.l.b16 %v5807
        %v5924 = vunpack.c.h.b16 %v5807
        %v5925 = vunpack.c.l.b16 %v5808
        %v5926 = vunpack.c.l.b16 %v5809
        %v5927 = vunpack.c.h.b16 %v5809
        %v5928 = vunpack.c.l.b16 %v5810
        %v5929 = vunpack.c.l.b16 %v5811
        %v5930 = vunpack.c.h.b16 %v5811
        %v5931 = vunpack.c.l.b16 %v5812
        %v5932 = vunpack.c.l.b16 %v5813
        %v5933 = vunpack.c.h.b16 %v5813
        %v5934 = vunpack.c.l.b16 %v5814
        %v5935 = vpack.c.b16 %v5863, %v5863
        %v5936 = vpack.c.b16 %v5864, %v5864
        %v5937 = vpack.c.b16 %v5865, %v5865
        %v5938 = vpack.c.b16 %v5866, %v5866
        %v5939 = vpack.c.b16 %v5867, %v5867
        %v5940 = vpack.c.b16 %v5868, %v5868
        %v5941 = vpack.c.b16 %v5869, %v5869
        %v5942 = vpack.c.b16 %v5870, %v5870
        %v5943 = vpack.c.b16 %v5871, %v5871
        %v5944 = vpack.c.b16 %v5872, %v5872
        %v5945 = vpack.c.b16 %v5873, %v5873
        %v5946 = vpack.c.b16 %v5874, %v5874
        %v5947 = vpack.c.b16 %v5875, %v5875
        %v5948 = vpack.c.b16 %v5876, %v5876
        %v5949 = vpack.c.b16 %v5877, %v5877
        %v5950 = vpack.c.b16 %v5878, %v5878
        %v5951 = vpack.c.b16 %v5879, %v5879
        %v5952 = vpack.c.b16 %v5880, %v5880
        %v5953 = vpack.c.b16 %v5881, %v5881
        %v5954 = vpack.c.b16 %v5882, %v5882
        %v5955 = vpack.c.b16 %v5883, %v5883
        %v5956 = vpack.c.b16 %v5884, %v5884
        %v5957 = vpack.c.b16 %v5885, %v5885
        %v5958 = vpack.c.b16 %v5886, %v5886
        %v5959 = vpack.c.b16 %v5887, %v5887
        %v5960 = vpack.c.b16 %v5888, %v5888
        %v5961 = vpack.c.b16 %v5889, %v5889
        %v5962 = vpack.c.b16 %v5890, %v5890
        %v5963 = vpack.c.b16 %v5891, %v5891
        %v5964 = vpack.c.b16 %v5892, %v5892
        %v5965 = vpack.c.b16 %v5893, %v5893
        %v5966 = vpack.c.b16 %v5894, %v5894
        %v5967 = vpack.c.b16 %v5895, %v5895
        %v5968 = vpack.c.b16 %v5896, %v5896
        %v5969 = vpack.c.b16 %v5897, %v5897
        %v5970 = vpack.c.b16 %v5898, %v5898
        %v5971 = vpack.c.b16 %v5899, %v5899
        %v5972 = vpack.c.b16 %v5900, %v5900
        %v5973 = vpack.c.b16 %v5901, %v5901
        %v5974 = vpack.c.b16 %v5902, %v5902
        %v5975 = vpack.c.b16 %v5903, %v5903
        %v5976 = vpack.c.b16 %v5904, %v5904
        %v5977 = vpack.c.b16 %v5905, %v5905
        %v5978 = vpack.c.b16 %v5906, %v5906
        %v5979 = vpack.c.b16 %v5907, %v5907
        %v5980 = vpack.c.b16 %v5908, %v5908
        %v5981 = vpack.c.b16 %v5909, %v5909
        %v5982 = vpack.c.b16 %v5910, %v5910
        %v5983 = vpack.c.b16 %v5911, %v5911
        %v5984 = vpack.c.b16 %v5912, %v5912
        %v5985 = vpack.c.b16 %v5913, %v5913
        %v5986 = vpack.c.b16 %v5914, %v5914
        %v5987 = vpack.c.b16 %v5915, %v5915
        %v5988 = vpack.c.b16 %v5916, %v5916
        %v5989 = vpack.c.b16 %v5917, %v5917
        %v5990 = vpack.c.b16 %v5918, %v5918
        %v5991 = vpack.c.b16 %v5919, %v5919
        %v5992 = vpack.c.b16 %v5920, %v5920
        %v5993 = vpack.c.b16 %v5921, %v5921
        %v5994 = vpack.c.b16 %v5922, %v5922
        %v5995 = vpack.c.b16 %v5923, %v5923
        %v5996 = vpack.c.b16 %v5924, %v5924
        %v5997 = vpack.c.b16 %v5925, %v5925
        %v5998 = vpack.c.b16 %v5926, %v5926
        %v5999 = vpack.c.b16 %v5927, %v5927
        %v6000 = vpack.c.b16 %v5928, %v5928
        %v6001 = vpack.c.b16 %v5929, %v5929
        %v6002 = vpack.c.b16 %v5930, %v5930
        %v6003 = vpack.c.b16 %v5931, %v5931
        %v6004 = vpack.c.b16 %v5932, %v5932
        %v6005 = vpack.c.b16 %v5933, %v5933
        %v6006 = vpack.c.b16 %v5934, %v5934
        %6079 = vst [vmem:[%s354] sm:$0xf] %v5935
        %6080 = vst [vmem:[%s354 + $0x4] sm:$0xf] %v5936
        %6081 = vst [vmem:[%s354 + $0x8] sm:$0xf] %v5937
        %6082 = vst [vmem:[%s354 + $0xc] sm:$0xf] %v5938
        %6083 = vst [vmem:[%s354 + $0x10] sm:$0xf] %v5939
        %6084 = vst [vmem:[%s354 + $0x14] sm:$0xf] %v5940
        %6085 = vst [vmem:[%s354 + $0x18] sm:$0xf] %v5941
        %6086 = vst [vmem:[%s354 + $0x1c] sm:$0xf] %v5942
        %6087 = vst [vmem:[%s354 + $0x20] sm:$0xf] %v5943
        %6088 = vst [vmem:[%s354 + $0x24] sm:$0xf] %v5944
        %6089 = vst [vmem:[%s354 + $0x28] sm:$0xf] %v5945
        %6090 = vst [vmem:[%s354 + $0x2c] sm:$0xf] %v5946
        %6091 = vst [vmem:[%s354 + $0x30] sm:$0xf] %v5947
        %6092 = vst [vmem:[%s354 + $0x34] sm:$0xf] %v5948
        %6093 = vst [vmem:[%s354 + $0x38] sm:$0xf] %v5949
        %6094 = vst [vmem:[%s354 + $0x3c] sm:$0xf] %v5950
        %6095 = vst [vmem:[%s354 + $0x40] sm:$0xf] %v5951
        %6096 = vst [vmem:[%s354 + $0x44] sm:$0xf] %v5952
        %6097 = vst [vmem:[%s354 + $0x48] sm:$0xf] %v5953
        %6098 = vst [vmem:[%s354 + $0x4c] sm:$0xf] %v5954
        %6099 = vst [vmem:[%s354 + $0x50] sm:$0xf] %v5955
        %6100 = vst [vmem:[%s354 + $0x54] sm:$0xf] %v5956
        %6101 = vst [vmem:[%s354 + $0x58] sm:$0xf] %v5957
        %6102 = vst [vmem:[%s354 + $0x5c] sm:$0xf] %v5958
        %6103 = vst [vmem:[%s354 + $0x60] sm:$0xf] %v5959
        %6104 = vst [vmem:[%s354 + $0x64] sm:$0xf] %v5960
        %6105 = vst [vmem:[%s354 + $0x68] sm:$0xf] %v5961
        %6106 = vst [vmem:[%s354 + $0x6c] sm:$0xf] %v5962
        %6107 = vst [vmem:[%s354 + $0x70] sm:$0xf] %v5963
        %6108 = vst [vmem:[%s354 + $0x74] sm:$0xf] %v5964
        %6109 = vst [vmem:[%s354 + $0x78] sm:$0xf] %v5965
        %6110 = vst [vmem:[%s354 + $0x7c] sm:$0xf] %v5966
        %6111 = vst [vmem:[%s354 + $0x80] sm:$0xf] %v5967
        %6112 = vst [vmem:[%s354 + $0x84] sm:$0xf] %v5968
        %6113 = vst [vmem:[%s354 + $0x88] sm:$0xf] %v5969
        %6114 = vst [vmem:[%s354 + $0x8c] sm:$0xf] %v5970
        %6115 = vst [vmem:[%s354 + $0x90] sm:$0xf] %v5971
        %6116 = vst [vmem:[%s354 + $0x94] sm:$0xf] %v5972
        %6117 = vst [vmem:[%s354 + $0x98] sm:$0xf] %v5973
        %6118 = vst [vmem:[%s354 + $0x9c] sm:$0xf] %v5974
        %6119 = vst [vmem:[%s354 + $0xa0] sm:$0xf] %v5975
        %6120 = vst [vmem:[%s354 + $0xa4] sm:$0xf] %v5976
        %6121 = vst [vmem:[%s354 + $0xa8] sm:$0xf] %v5977
        %6122 = vst [vmem:[%s354 + $0xac] sm:$0xf] %v5978
        %6123 = vst [vmem:[%s354 + $0xb0] sm:$0xf] %v5979
        %6124 = vst [vmem:[%s354 + $0xb4] sm:$0xf] %v5980
        %6125 = vst [vmem:[%s354 + $0xb8] sm:$0xf] %v5981
        %6126 = vst [vmem:[%s354 + $0xbc] sm:$0xf] %v5982
        %6127 = vst [vmem:[%s354 + $0xc0] sm:$0xf] %v5983
        %6128 = vst [vmem:[%s354 + $0xc4] sm:$0xf] %v5984
        %6129 = vst [vmem:[%s354 + $0xc8] sm:$0xf] %v5985
        %6130 = vst [vmem:[%s354 + $0xcc] sm:$0xf] %v5986
        %6131 = vst [vmem:[%s354 + $0xd0] sm:$0xf] %v5987
        %6132 = vst [vmem:[%s354 + $0xd4] sm:$0xf] %v5988
        %6133 = vst [vmem:[%s354 + $0xd8] sm:$0xf] %v5989
        %6134 = vst [vmem:[%s354 + $0xdc] sm:$0xf] %v5990
        %6135 = vst [vmem:[%s354 + $0xe0] sm:$0xf] %v5991
        %6136 = vst [vmem:[%s354 + $0xe4] sm:$0xf] %v5992
        %6137 = vst [vmem:[%s354 + $0xe8] sm:$0xf] %v5993
        %6138 = vst [vmem:[%s354 + $0xec] sm:$0xf] %v5994
        %6139 = vst [vmem:[%s354 + $0xf0] sm:$0xf] %v5995
        %6140 = vst [vmem:[%s354 + $0xf4] sm:$0xf] %v5996
        %6141 = vst [vmem:[%s354 + $0xf8] sm:$0xf] %v5997
        %6142 = vst [vmem:[%s354 + $0xfc] sm:$0xf] %v5998
        %6143 = vst [vmem:[%s354 + $0x100] sm:$0xf] %v5999
        %6144 = vst [vmem:[%s354 + $0x104] sm:$0xf] %v6000
        %6145 = vst [vmem:[%s354 + $0x108] sm:$0xf] %v6001
        %6146 = vst [vmem:[%s354 + $0x10c] sm:$0xf] %v6002
        %6147 = vst [vmem:[%s354 + $0x110] sm:$0xf] %v6003
        %6148 = vst [vmem:[%s354 + $0x114] sm:$0xf] %v6004
        %6149 = vst [vmem:[%s354 + $0x118] sm:$0xf] %v6005
        %6150 = vst [vmem:[%s354 + $0x11c] sm:$0xf] %v6006
        %s6151 = sand.u32 %s200, 1
        %s6152 = scalar_lea.sflag [#allocation4], %s6151
        %s6153 = sand.u32 %s200, 1
        %s6154 = smul.addr %s6153, 288
        %s6155 = scalar_lea.vmem [#allocation10], %s6154
        // Predicated region
        $region65: #{tpu_custom_call.1} parent=47 // pred_check
          %p6156 = pneg %p210
        $region66: #{tpu_custom_call.1} parent=47 // pred_check_branch
          %6158 = sbr.rel (%p6156) target = $region68
        $region67: #{tpu_custom_call.1} parent=47 // pred_region
          %s6159 = smul.u32 24, %s31
          %s6161 = ssub.s32 4608, 4608
          %6162 = vsyncadd %s6152, %s6161
          %s6163 = smul.addr %s6159, 3
          %s6164 = smul.addr %s30, 72
          %s6165 = sadd.s32 %s6163, %s6164
          %s6166 = smul.addr %s6165, 64
          %s6167 = scalar_lea.hbm %s7, %s6166
          %s6168 = sshll.u32 %s6155, 4
          %s6169 = int_to_ptr.vmem [resolvable:$true] %s6168
          %6174 = dma.vmem_to_hbm [thread:$0]  %s6169, 4608, %s6167, %s6152, 64, 64, 4
        $region68: #{tpu_custom_call.1} parent=47 // pred_fallthru
          _
      $region48: #{tpu_custom_call.1} parent=5 // pred_fallthru
        _
      %p6175 = scmp.le.s32.totalorder 2, %s21
      // Predicated region
      $region69: #{tpu_custom_call.1} parent=5 // pred_check
        %p6176 = pneg %p6175
      $region70: #{tpu_custom_call.1} parent=5 // pred_check_branch
        %6178 = sbr.rel (%p6176) target = $region72
      $region71: #{tpu_custom_call.1} parent=5 // pred_region
        %s6179 = ssub.s32 %s21, 2
        // Predicated region
        $region73: #{tpu_custom_call.1} parent=71 // pred_check
          %p6180 = pneg %p216
        $region74: #{tpu_custom_call.1} parent=71 // pred_check_branch
          %6182 = sbr.rel (%p6180) target = $region76
        $region75: #{tpu_custom_call.1} parent=71 // pred_region
          %s6183 = sand.u32 %s201, 1
          %s6184 = scalar_lea.sflag [#allocation4], %s6183
          %s6185 = sand.u32 %s201, 1
          %s6186 = smul.addr %s6185, 288
          %s6187 = scalar_lea.vmem [#allocation10], %s6186
          %6188 = dma.done %s6184, 4608
        $region76: #{tpu_custom_call.1} parent=71 // pred_fallthru
          _
      $region72: #{tpu_custom_call.1} parent=5 // pred_fallthru
        _
    $region6: #{tpu_custom_call.1} parent=1 // loop_footer
      %s25 = sadd.s32 1, %s21
    $region7: #{tpu_custom_call.1} parent=1 // loop_footer_branch
      %20 = sbr.rel target = $region3
    $region8: #{tpu_custom_call.1} parent=1 // loop_exit
      _
    %6189 = vsyncpa [#allocation3], 1
    %s6190 = scalar_lea.sflag [#allocation3], 1
    %6191 = vsyncpa %s6190, 1
    %6192 = vsyncpa [#allocation6], 1
    %6193 = vsyncpa [#allocation9], 1
    %6194 = vsyncpa [#allocation4], 1
    %s6195 = scalar_lea.sflag [#allocation4], 1
    %6196 = vsyncpa %s6195, 1

</llo_original>
